<compile_context>
chip_gen: v7x
topology: tpu7x:2x2x1
jax: 0.10.0
libtpu: 0.0.40
codegen_flags: <defaults>
</compile_context>

<pallas_src>
import math
import functools

import jax
import jax.numpy as jnp
from jax.experimental import pallas as pl
from jax.experimental.pallas import tpu as pltpu


# Inter-layer activation dtype in HBM (halves activation DMA traffic).
_ACT_DTYPE = jnp.bfloat16


def _vmem_limit_bytes():
    # Generation-aware scoped-VMEM limit: ~75% of physical, capped at 100 MiB
    # (v5e/v6e: ~96-100 MiB of 128 MiB physical; v7x: ~48 MiB of 64 MiB).
    try:
        cap = pltpu.get_tpu_info().vmem_capacity_bytes
    except Exception:
        cap = 64 * 1024 * 1024
    return int(min(cap * 3 // 4, 100 * 1024 * 1024))


_VMEM_LIMIT = _vmem_limit_bytes()

_SQRT_2_OVER_PI = 0.7978845608028654


def _gelu(x):
    # tanh-approximation GELU: jnp.tanh lowers to the EUP slot, freeing VALU
    # bundles in the conv epilogue (review suggestion).  Deviates from
    # PyTorch's exact erf GELU by < ~1e-3 absolute.
    return 0.5 * x * (1.0 + jnp.tanh(_SQRT_2_OVER_PI * (x + 0.044715 * x * x * x)))


# ----------------------------------------------------------------------------
# Tiled matmul + bias (used by the 1x1 init / finalize convs)
# ----------------------------------------------------------------------------
def _matmul_bias_fast_kernel(x_ref, w_ref, b_ref, o_ref):
    # K fits one block: no accumulator scratch, no init/finalize phases.
    o_ref[...] = (jnp.dot(x_ref[...], w_ref[...],
                          preferred_element_type=jnp.float32)
                  + b_ref[...]).astype(o_ref.dtype)


def _matmul_bias_acc_kernel(x_ref, w_ref, b_ref, o_ref, acc_ref):
    @pl.when(pl.program_id(2) == 0)
    def _init():
        acc_ref[...] = jnp.zeros_like(acc_ref)

    acc_ref[...] += jnp.dot(x_ref[...], w_ref[...],
                            preferred_element_type=jnp.float32)

    @pl.when(pl.program_id(2) == pl.num_programs(2) - 1)
    def _finalize():
        o_ref[...] = (acc_ref[...] + b_ref[...]).astype(o_ref.dtype)


def _round_up(x, m):
    return ((x + m - 1) // m) * m


def _pick_tile(dim, candidates):
    for c in candidates:
        if dim >= c and dim % c == 0:
            return c
    return dim   # full-dim block is always a legal block extent


def matmul_bias(x, w, b, out_dtype=jnp.float32):
    """(M, K) @ (K, N) + b, tiled over (M, N[, K]) with bf16 MXU operands."""
    M, K = x.shape
    N = w.shape[1]

    # bf16 MXU operands (f32 accumulation); skip for the degenerate K=1 case.
    if K >= 8:
        x = x.astype(jnp.bfloat16)
        w = w.astype(jnp.bfloat16)
    b2 = b.reshape(1, N).astype(jnp.float32)

    # M tiling: prefer large tiles and zero-pad the remainder instead of
    # falling back to tiny tm (per-step overhead dominates small-M otherwise).
    if M >= 512:
        tm = 512
    elif M >= 256:
        tm = 256
    else:
        tm = _round_up(M, 8)
    Mp = _round_up(M, tm)
    if Mp != M:
        x = jnp.pad(x, ((0, Mp - M), (0, 0)))

    tk = _pick_tile(K, (512, 256, 128))
    tn = _pick_tile(N, (512, 256, 128))
    gm, gn, gk = Mp // tm, N // tn, K // tk

    # Guard against a silently huge single block (review correctness note).
    est = (tm * tk + tk * tn + 2 * tm * tn) * 4 * 2   # double-buffered, f32 bound
    assert est <= _VMEM_LIMIT, f"matmul_bias tile exceeds VMEM budget: {est} B"

    if gk == 1:
        out = pl.pallas_call(
            _matmul_bias_fast_kernel,
            grid=(gm, gn),
            in_specs=[
                pl.BlockSpec((tm, tk), lambda i, j: (i, 0)),
                pl.BlockSpec((tk, tn), lambda i, j: (0, j)),
                pl.BlockSpec((1, tn), lambda i, j: (0, j)),
            ],
            out_specs=pl.BlockSpec((tm, tn), lambda i, j: (i, j)),
            out_shape=jax.ShapeDtypeStruct((Mp, N), out_dtype),
            compiler_params=pltpu.CompilerParams(
                dimension_semantics=("parallel", "parallel"),
                vmem_limit_bytes=_VMEM_LIMIT),
        )(x, w, b2)
    else:
        out = pl.pallas_call(
            _matmul_bias_acc_kernel,
            grid=(gm, gn, gk),
            in_specs=[
                pl.BlockSpec((tm, tk), lambda i, j, k: (i, k)),
                pl.BlockSpec((tk, tn), lambda i, j, k: (k, j)),
                pl.BlockSpec((1, tn), lambda i, j, k: (0, j)),
            ],
            out_specs=pl.BlockSpec((tm, tn), lambda i, j, k: (i, j)),
            out_shape=jax.ShapeDtypeStruct((Mp, N), out_dtype),
            scratch_shapes=[pltpu.VMEM((tm, tn), jnp.float32)],
            compiler_params=pltpu.CompilerParams(
                dimension_semantics=("parallel", "parallel", "arbitrary"),
                vmem_limit_bytes=_VMEM_LIMIT),
        )(x, w, b2)
    return out[:M] if Mp != M else out


def conv1x1(y, w, b, out_dtype=_ACT_DTYPE):
    B, H, W, Cin = y.shape
    out = matmul_bias(y.reshape(B * H * W, Cin), w, b, out_dtype=out_dtype)
    return out.reshape(B, H, W, w.shape[1])


# ----------------------------------------------------------------------------
# Fused 5x5 conv + bias + InstanceNorm + GELU
#   [+ fused strided 1x1 shortcut conv as a 2nd output]  (conv1 of a block)
#   [+ fused residual add + final GELU]                   (conv2 of a block)
# ----------------------------------------------------------------------------
def _conv5x5_kernel(*refs, sh, sw, Ho, Wo, Cin, eps, has_resid, has_shortcut):
    it = iter(refs)
    x_ref = next(it)      # (1, P*Ha, Wa, Cin)  phase-split padded input, bf16
    w_ref = next(it)      # (25*Cin, Cout)      im2col-ordered weight, bf16
    b_ref = next(it)      # (1, Cout) f32
    g_ref = next(it)      # (1, Cout) f32 InstanceNorm gamma
    bt_ref = next(it)     # (1, Cout) f32 InstanceNorm beta
    scw_ref = next(it) if has_shortcut else None   # (Cin, Cout) bf16
    scb_ref = next(it) if has_shortcut else None   # (1, Cout)  f32
    r_ref = next(it) if has_resid else None        # (1, S, Cout) bf16
    o_ref = next(it)                               # (1, S, Cout)
    sco_ref = next(it) if has_shortcut else None   # (1, S, Cout)
    col_ref = next(it)                             # (S, 25*Cin) VMEM scratch

    S = Ho * Wo
    Ha = Ho + 4 // sh

    # Build the im2col tile ONCE in VMEM (write-only slices).  The single big
    # K=25*Cin matmul below replaces 25 K=Cin matmuls and 25 accumulator
    # read-modify-write round trips (review items 2/3/11).
    center = None
    for kh in range(5):
        ph, ah = kh % sh, kh // sh
        for kw in range(5):
            pw, bw = kw % sw, kw // sw
            row0 = (ph * sw + pw) * Ha + ah
            patch = x_ref[0, row0:row0 + Ho, bw:bw + Wo, :].reshape(S, Cin)
            k = kh * 5 + kw
            col_ref[:, k * Cin:(k + 1) * Cin] = patch
            if kh == 2 and kw == 2:
                center = patch   # == x[i*sh, j*sw, :] : reused for the shortcut

    acc = jnp.dot(col_ref[...], w_ref[...],
                  preferred_element_type=jnp.float32)          # (S, Cout) f32

    # bias + InstanceNorm2d (affine, biased variance) + GELU, all in f32
    y = acc + b_ref[...]
    mean = jnp.mean(y, axis=0, keepdims=True)
    var = jnp.mean(jnp.square(y - mean), axis=0, keepdims=True)
    y = (y - mean) * jax.lax.rsqrt(var + eps)
    y = _gelu(y * g_ref[...] + bt_ref[...])
    if has_resid:
        y = _gelu(y + r_ref[0].astype(jnp.float32))
    o_ref[0] = y.astype(o_ref.dtype)

    if has_shortcut:
        sc = jnp.dot(center, scw_ref[...],
                     preferred_element_type=jnp.float32) + scb_ref[...]
        sco_ref[0] = sc.astype(sco_ref.dtype)


def conv5x5_block(x_nhwc, w, b, gamma, beta, stride, residual=None,
                  shortcut_w=None, shortcut_b=None, eps=1e-5):
    """Fused Conv2d(5x5, padding=2, stride) + bias + InstanceNorm2d(affine) + GELU.

    Optionally also emits the strided 1x1 shortcut conv as a second output
    (conv1 of a ResidualBlock) and/or fuses `residual` add + final GELU
    (conv2 of a ResidualBlock).  One batch element per grid step.

    TODO(synk): for production mel sizes on v7x (64 MiB VMEM) this wants a
    second grid axis over output-row tiles plus a two-pass InstanceNorm; the
    per-batch whole-image residency is fine at the sizes exercised here.
    """
    B, H, W, Cin = x_nhwc.shape
    sh, sw = stride
    Cout = w.shape[-1]
    Ho, Wo = -(-H // sh), -(-W // sw)
    Ha, Wa = Ho + 4 // sh, Wo + 4 // sw
    S = Ho * Wo
    P = sh * sw
    has_shortcut = shortcut_w is not None
    has_resid = residual is not None

    # Pad to (Ha*sh, Wa*sw) and split the stride phases so the kernel only
    # needs unstrided static slices; skipped entirely when stride == (1, 1).
    # TODO(synk): emit the next layer's phase-split layout from the producing
    # kernel's epilogue to avoid this XLA-side pad/transpose pass.
    x_pad = jnp.pad(x_nhwc, ((0, 0), (2, Ha * sh - H - 2),
                             (2, Wa * sw - W - 2), (0, 0)))
    if P == 1:
        xp = x_pad
    else:
        xp = x_pad.reshape(B, Ha, sh, Wa, sw, Cin)
        xp = jnp.transpose(xp, (0, 2, 4, 1, 3, 5)).reshape(B, P * Ha, Wa, Cin)
    xp = xp.astype(jnp.bfloat16)

    kern = functools.partial(_conv5x5_kernel, sh=sh, sw=sw, Ho=Ho, Wo=Wo,
                             Cin=Cin, eps=eps, has_resid=has_resid,
                             has_shortcut=has_shortcut)

    in_specs = [
        pl.BlockSpec((1, P * Ha, Wa, Cin), lambda bb: (bb, 0, 0, 0)),
        pl.BlockSpec((25 * Cin, Cout), lambda bb: (0, 0)),
        pl.BlockSpec((1, Cout), lambda bb: (0, 0)),
        pl.BlockSpec((1, Cout), lambda bb: (0, 0)),
        pl.BlockSpec((1, Cout), lambda bb: (0, 0)),
    ]
    args = [xp,
            w.reshape(25 * Cin, Cout).astype(jnp.bfloat16),
            b.reshape(1, Cout).astype(jnp.float32),
            gamma.reshape(1, Cout).astype(jnp.float32),
            beta.reshape(1, Cout).astype(jnp.float32)]
    if has_shortcut:
        in_specs += [pl.BlockSpec((Cin, Cout), lambda bb: (0, 0)),
                     pl.BlockSpec((1, Cout), lambda bb: (0, 0))]
        args += [shortcut_w.astype(jnp.bfloat16),
                 shortcut_b.reshape(1, Cout).astype(jnp.float32)]
    if has_resid:
        in_specs.append(pl.BlockSpec((1, S, Cout), lambda bb: (bb, 0, 0)))
        args.append(residual.reshape(B, S, Cout))

    out_spec = pl.BlockSpec((1, S, Cout), lambda bb: (bb, 0, 0))
    if has_shortcut:
        out_shape = (jax.ShapeDtypeStruct((B, S, Cout), _ACT_DTYPE),
                     jax.ShapeDtypeStruct((B, S, Cout), _ACT_DTYPE))
        out_specs = (out_spec, out_spec)
    else:
        out_shape = jax.ShapeDtypeStruct((B, S, Cout), _ACT_DTYPE)
        out_specs = out_spec

    res = pl.pallas_call(
        kern,
        grid=(B,),
        in_specs=in_specs,
        out_specs=out_specs,
        out_shape=out_shape,
        scratch_shapes=[pltpu.VMEM((S, 25 * Cin), jnp.bfloat16)],
        compiler_params=pltpu.CompilerParams(
            dimension_semantics=("parallel",),
            vmem_limit_bytes=_VMEM_LIMIT),
    )(*args)

    if has_shortcut:
        out, ident = res
        return out.reshape(B, Ho, Wo, Cout), ident
    return res.reshape(B, Ho, Wo, Cout)


# ----------------------------------------------------------------------------
# Fully fused CrossAttn2d (mel proj + pos + QKV + softmax + out proj + residual)
# grid=(B,) so v7x shards batches across its two TensorCores.
# ----------------------------------------------------------------------------
def _cross_attn_kernel(y_ref, x_ref, posq_ref, posc_ref, melw_ref, melb_ref,
                       wq_ref, wk_ref, wv_ref, wo_ref,
                       bq_ref, bk_ref, bv_ref, bo_ref, o_ref,
                       *, attn_scale, resid_scale):
    y = y_ref[0].astype(jnp.float32)                              # (Lq, C)
    q_in = (y + posq_ref[0]).astype(jnp.bfloat16)

    ctx = jnp.dot(x_ref[0].astype(jnp.bfloat16), melw_ref[...],
                  preferred_element_type=jnp.float32) + melb_ref[...]
    ctx = (ctx + posc_ref[0]).astype(jnp.bfloat16)                # (T, C)

    q = jnp.dot(q_in, wq_ref[...], preferred_element_type=jnp.float32) + bq_ref[...]
    k = jnp.dot(ctx, wk_ref[...], preferred_element_type=jnp.float32) + bk_ref[...]
    v = jnp.dot(ctx, wv_ref[...], preferred_element_type=jnp.float32) + bv_ref[...]

    # scores: contract the last dims directly (no K transpose); softmax in f32
    # with an EXACT divide (review correctness note on the approx reciprocal).
    s = jax.lax.dot_general(q.astype(jnp.bfloat16), k.astype(jnp.bfloat16),
                            (((1,), (1,)), ((), ())),
                            preferred_element_type=jnp.float32) * attn_scale
    s = s - jnp.max(s, axis=-1, keepdims=True)
    p = jnp.exp(s)
    p = p / jnp.sum(p, axis=-1, keepdims=True)

    av = jnp.dot(p.astype(jnp.bfloat16), v.astype(jnp.bfloat16),
                 preferred_element_type=jnp.float32)
    out = jnp.dot(av.astype(jnp.bfloat16), wo_ref[...],
                  preferred_element_type=jnp.float32) + bo_ref[...]
    o_ref[0] = (y + resid_scale * out).astype(o_ref.dtype)


def cross_attn_fuse(y_blc, x_btm, pos_q, pos_ctx, mel_w, mel_b,
                    wq, wk, wv, wo, bq, bk, bv, bo, attn_scale, resid_scale):
    B, Lq, C = y_blc.shape
    _, T, Mel = x_btm.shape
    bf16 = jnp.bfloat16
    kern = functools.partial(_cross_attn_kernel,
                             attn_scale=attn_scale, resid_scale=resid_scale)

    def _bcast2(shp):
        return pl.BlockSpec(shp, lambda b: (0, 0))

    return pl.pallas_call(
        kern,
        grid=(B,),
        in_specs=[
            pl.BlockSpec((1, Lq, C), lambda b: (b, 0, 0)),
            pl.BlockSpec((1, T, Mel), lambda b: (b, 0, 0)),
            pl.BlockSpec((1, Lq, C), lambda b: (0, 0, 0)),
            pl.BlockSpec((1, T, C), lambda b: (0, 0, 0)),
            _bcast2((Mel, C)), _bcast2((1, C)),
            _bcast2((C, C)), _bcast2((C, C)), _bcast2((C, C)), _bcast2((C, C)),
            _bcast2((1, C)), _bcast2((1, C)), _bcast2((1, C)), _bcast2((1, C)),
        ],
        out_specs=pl.BlockSpec((1, Lq, C), lambda b: (b, 0, 0)),
        out_shape=jax.ShapeDtypeStruct((B, Lq, C), jnp.float32),
        compiler_params=pltpu.CompilerParams(
            dimension_semantics=("parallel",),
            vmem_limit_bytes=_VMEM_LIMIT),
    )(y_blc, x_btm,
      pos_q.astype(jnp.float32), pos_ctx.astype(jnp.float32),
      mel_w.astype(bf16), mel_b.reshape(1, C).astype(jnp.float32),
      wq.astype(bf16), wk.astype(bf16), wv.astype(bf16), wo.astype(bf16),
      bq.reshape(1, C).astype(jnp.float32), bk.reshape(1, C).astype(jnp.float32),
      bv.reshape(1, C).astype(jnp.float32), bo.reshape(1, C).astype(jnp.float32))


# ----------------------------------------------------------------------------
# Model structure (plain-JAX glue around the Pallas kernels)
# ----------------------------------------------------------------------------
def residual_block(y, p, stride):
    # conv1 (strided) + IN + GELU; the strided 1x1 shortcut conv is emitted as
    # a fused second output (no standalone strided slice / 1x1-conv pass).
    h, ident = conv5x5_block(y, p["conv1_w"], p["conv1_b"], p["g1"], p["b1"],
                             stride, shortcut_w=p["sc_w"], shortcut_b=p["sc_b"])
    # conv2 + IN + GELU + shortcut add + final GELU, all fused in one kernel.
    return conv5x5_block(h, p["conv2_w"], p["conv2_b"], p["g2"], p["b2"],
                         (1, 1), residual=ident)


def block_configs(input_size, output_size, base_dim, max_dim):
    in_ch = base_dim
    cur = tuple(input_size)
    cfgs = []
    while cur[0] > output_size[0] or cur[1] > output_size[1]:
        sh = 2 if cur[0] > output_size[0] else 1
        sw = 2 if cur[1] > output_size[1] else 1
        out_ch = min(base_dim * 2, max_dim)
        cfgs.append((in_ch, out_ch, sh, sw))
        in_ch = out_ch
        cur = (math.ceil(cur[0] / sh), math.ceil(cur[1] / sw))
    return cfgs, in_ch


def segment_encoder_forward(params, x, block_strides):
    """x: (B, T, M) -> (B, output_channels, H', W')  (NCHW like the module)."""
    B, T, Mel = x.shape

    # initialize: Conv2d(1, base_dim, 1)
    y = conv1x1(x[..., None], params["init_w"], params["init_b"])

    # residual downsampling blocks
    for blk, stride in zip(params["blocks"], block_strides):
        y = residual_block(y, blk, stride)

    # finalize: Conv2d(out_dim, output_channels, 1)
    y = conv1x1(y, params["final_w"], params["final_b"])
    _, Ho, Wo, C = y.shape
    Lq = Ho * Wo

    # CrossAttn2d fuse (eval mode: dropout is a no-op)
    fused = cross_attn_fuse(
        y.reshape(B, Lq, C), x,
        params["pos_q"][:, :Lq], params["pos_ctx"][:, :T],
        params["mel_w"], params["mel_b"],
        params["wq"], params["wk"], params["wv"], params["wo"],
        params["bq"], params["bk"], params["bv"], params["bo"],
        attn_scale=1.0 / math.sqrt(C), resid_scale=0.5)

    # back to the PyTorch NCHW convention
    return jnp.transpose(fused.reshape(B, Ho, Wo, C), (0, 3, 1, 2))


# ----------------------------------------------------------------------------
# Deterministic parameter initialization (synthetic; shapes follow __init__)
# ----------------------------------------------------------------------------
def init_params(key, input_size, output_size, output_channels,
                base_dim=8, max_dim=512):
    keys = iter(jax.random.split(key, 64))
    nxt = lambda: next(keys)
    p = {}
    p["init_w"] = 0.1 * jax.random.normal(nxt(), (1, base_dim), jnp.float32)
    p["init_b"] = 0.1 * jax.random.normal(nxt(), (base_dim,), jnp.float32)

    cfgs, out_dim = block_configs(input_size, output_size, base_dim, max_dim)
    blocks = []
    for (cin, cout, _sh, _sw) in cfgs:
        blocks.append({
            "conv1_w": 0.05 * jax.random.normal(nxt(), (5, 5, cin, cout), jnp.float32),
            "conv1_b": 0.05 * jax.random.normal(nxt(), (cout,), jnp.float32),
            "g1": jnp.ones((cout,), jnp.float32),
            "b1": jnp.zeros((cout,), jnp.float32),
            "conv2_w": 0.05 * jax.random.normal(nxt(), (5, 5, cout, cout), jnp.float32),
            "conv2_b": 0.05 * jax.random.normal(nxt(), (cout,), jnp.float32),
            "g2": jnp.ones((cout,), jnp.float32),
            "b2": jnp.zeros((cout,), jnp.float32),
            "sc_w": 0.1 * jax.random.normal(nxt(), (cin, cout), jnp.float32),
            "sc_b": 0.1 * jax.random.normal(nxt(), (cout,), jnp.float32),
        })
    p["blocks"] = blocks

    p["final_w"] = 0.1 * jax.random.normal(nxt(), (out_dim, output_channels), jnp.float32)
    p["final_b"] = 0.1 * jax.random.normal(nxt(), (output_channels,), jnp.float32)

    C = output_channels
    Lq = output_size[0] * output_size[1]
    p["pos_q"] = jax.random.normal(nxt(), (1, Lq, C), jnp.float32)
    p["mel_w"] = 0.1 * jax.random.normal(nxt(), (input_size[1], C), jnp.float32)
    p["mel_b"] = 0.1 * jax.random.normal(nxt(), (C,), jnp.float32)
    p["pos_ctx"] = jax.random.normal(nxt(), (1, input_size[0], C), jnp.float32)
    for name in ("wq", "wk", "wv", "wo"):
        p[name] = 0.1 * jax.random.normal(nxt(), (C, C), jnp.float32)
    for name in ("bq", "bk", "bv", "bo"):
        p[name] = 0.05 * jax.random.normal(nxt(), (C,), jnp.float32)
    return p


# ----------------------------------------------------------------------------
if __name__ == "__main__":
    B = 2
    input_size = (16, 16)      # (T, mel bins) — also the initial spatial grid
    output_size = (8, 8)       # -> one residual block with stride (2, 2)
    output_channels = 8
    base_dim = 8

    root = jax.random.PRNGKey(0)
    pkey, xkey = jax.random.split(root)
    params = init_params(pkey, input_size, output_size, output_channels,
                         base_dim=base_dim)
    x = jax.random.normal(xkey, (B,) + input_size, dtype=jnp.float32)

    cfgs, _ = block_configs(input_size, output_size, base_dim, 512)
    strides = tuple((sh, sw) for (_, _, sh, sw) in cfgs)

    fwd = jax.jit(functools.partial(segment_encoder_forward, block_strides=strides))
    out = jax.block_until_ready(fwd(params, x))

    assert out.shape == (B, output_channels) + tuple(output_size), out.shape
    assert bool(jnp.all(jnp.isfinite(out)))
    print("KERNEL_OK")
</pallas_src>

<mosaic_0001>
module attributes {stable_mosaic.version = 11 : i64} {
  func.func @_matmul_bias_fast_kernel(%arg0: i32, %arg1: i32, %arg2: memref<512x1xf32, #tpu.memory_space<vmem>>, %arg3: memref<1x8xf32, #tpu.memory_space<vmem>>, %arg4: memref<1x8xf32, #tpu.memory_space<vmem>>, %arg5: memref<512x8xbf16, #tpu.memory_space<vmem>>) attributes {dimension_semantics = [#tpu.dimension_semantics<parallel>, #tpu.dimension_semantics<parallel>], iteration_bounds = array<i64: 1, 1>, scalar_prefetch = 0 : i64, scratch_operands = 0 : i64, tpu.core_type = #tpu.core_type<tc>, window_params = [{transform_indices = @transform_0, window_bounds = array<i64: 512, 1>}, {transform_indices = @transform_1, window_bounds = array<i64: 1, 8>}, {transform_indices = @transform_2, window_bounds = array<i64: 1, 8>}, {transform_indices = @transform_3, window_bounds = array<i64: 512, 8>}]} {
    %c0 = arith.constant 0 : index
    %c0_0 = arith.constant 0 : index
    %0 = vector.load %arg2[%c0, %c0_0] : memref<512x1xf32, #tpu.memory_space<vmem>>, vector<512x1xf32>
    %c0_1 = arith.constant 0 : index
    %c0_2 = arith.constant 0 : index
    %1 = vector.load %arg3[%c0_1, %c0_2] : memref<1x8xf32, #tpu.memory_space<vmem>>, vector<1x8xf32>
    %cst = arith.constant dense<0.000000e+00> : vector<512x8xf32>
    %2 = tpu.matmul %0, %1, %cst {dimension_numbers = #tpu.dot_dimension_numbers<[1], [0], [0], [1], [0, 0, 1, 1], [], []>} : vector<512x1xf32>, vector<1x8xf32>, vector<512x8xf32> -> vector<512x8xf32>
    %c0_3 = arith.constant 0 : index
    %c0_4 = arith.constant 0 : index
    %3 = vector.load %arg4[%c0_3, %c0_4] : memref<1x8xf32, #tpu.memory_space<vmem>>, vector<1x8xf32>
    %4 = vector.broadcast %3 : vector<1x8xf32> to vector<512x8xf32>
    %5 = arith.addf %2, %4 : vector<512x8xf32>
    %6 = arith.truncf %5 : vector<512x8xf32> to vector<512x8xbf16>
    %c0_5 = arith.constant 0 : index
    %c0_6 = arith.constant 0 : index
    %7 = vector.load %arg5[%c0_5, %c0_6] : memref<512x8xbf16, #tpu.memory_space<vmem>>, vector<512x8xbf16>
    tpu.vector_store %arg5[%c0_5, %c0_6], %6 {strides = array<i32>} : memref<512x8xbf16, #tpu.memory_space<vmem>>, vector<512x8xbf16>,
    return
  }
  func.func @transform_0(%arg0: i32, %arg1: i32) -> (i32, i32) {
    %c0_i32 = arith.constant 0 : i32
    %c0_i32_0 = arith.constant 0 : i32
    return %arg0, %c0_i32 : i32, i32
  }
  func.func @transform_1(%arg0: i32, %arg1: i32) -> (i32, i32) {
    %c0_i32 = arith.constant 0 : i32
    %c0_i32_0 = arith.constant 0 : i32
    return %c0_i32, %arg1 : i32, i32
  }
  func.func @transform_2(%arg0: i32, %arg1: i32) -> (i32, i32) {
    %c0_i32 = arith.constant 0 : i32
    %c0_i32_0 = arith.constant 0 : i32
    return %c0_i32, %arg1 : i32, i32
  }
  func.func @transform_3(%arg0: i32, %arg1: i32) -> (i32, i32) {
    %c0_i32 = arith.constant 0 : i32
    return %arg0, %arg1 : i32, i32
  }
}

module attributes {stable_mosaic.version = 11 : i64} {
  func.func @_conv5x5_kernel(%arg0: i32, %arg1: memref<1x40x10x8xbf16, #tpu.memory_space<vmem>>, %arg2: memref<200x16xbf16, #tpu.memory_space<vmem>>, %arg3: memref<1x16xf32, #tpu.memory_space<vmem>>, %arg4: memref<1x16xf32, #tpu.memory_space<vmem>>, %arg5: memref<1x16xf32, #tpu.memory_space<vmem>>, %arg6: memref<8x16xbf16, #tpu.memory_space<vmem>>, %arg7: memref<1x16xf32, #tpu.memory_space<vmem>>, %arg8: memref<1x64x16xbf16, #tpu.memory_space<vmem>>, %arg9: memref<1x64x16xbf16, #tpu.memory_space<vmem>>, %arg10: memref<64x200xbf16, #tpu.memory_space<vmem>>) attributes {dimension_semantics = [#tpu.dimension_semantics<parallel>], iteration_bounds = array<i64: 2>, scalar_prefetch = 0 : i64, scratch_operands = 1 : i64, tpu.core_type = #tpu.core_type<tc>, window_params = [{transform_indices = @transform_0, window_bounds = array<i64: 1, 40, 10, 8>}, {pipeline_mode = #tpu.pipeline_mode<synchronous>, transform_indices = @transform_1, window_bounds = array<i64: 200, 16>}, {pipeline_mode = #tpu.pipeline_mode<synchronous>, transform_indices = @transform_2, window_bounds = array<i64: 1, 16>}, {pipeline_mode = #tpu.pipeline_mode<synchronous>, transform_indices = @transform_3, window_bounds = array<i64: 1, 16>}, {pipeline_mode = #tpu.pipeline_mode<synchronous>, transform_indices = @transform_4, window_bounds = array<i64: 1, 16>}, {pipeline_mode = #tpu.pipeline_mode<synchronous>, transform_indices = @transform_5, window_bounds = array<i64: 8, 16>}, {pipeline_mode = #tpu.pipeline_mode<synchronous>, transform_indices = @transform_6, window_bounds = array<i64: 1, 16>}, {transform_indices = @transform_7, window_bounds = array<i64: 1, 64, 16>}, {transform_indices = @transform_8, window_bounds = array<i64: 1, 64, 16>}]} {
    %c0 = arith.constant 0 : index
    %c0_0 = arith.constant 0 : index
    %c0_1 = arith.constant 0 : index
    %c0_2 = arith.constant 0 : index
    %0 = vector.load %arg1[%c0, %c0_0, %c0_1, %c0_2] : memref<1x40x10x8xbf16, #tpu.memory_space<vmem>>, vector<1x8x8x8xbf16>
    %1 = vector.shape_cast %0 : vector<1x8x8x8xbf16> to vector<8x8x8xbf16>
    %2 = vector.shape_cast %1 : vector<8x8x8xbf16> to vector<64x8xbf16>
    %c0_3 = arith.constant 0 : index
    %c0_4 = arith.constant 0 : index
    %3 = vector.load %arg10[%c0_3, %c0_4] : memref<64x200xbf16, #tpu.memory_space<vmem>>, vector<64x8xbf16>
    tpu.vector_store %arg10[%c0_3, %c0_4], %2 {strides = array<i32>} : memref<64x200xbf16, #tpu.memory_space<vmem>>, vector<64x8xbf16>,
    %c0_5 = arith.constant 0 : index
    %c10 = arith.constant 10 : index
    %c0_6 = arith.constant 0 : index
    %c0_7 = arith.constant 0 : index
    %4 = vector.load %arg1[%c0_5, %c10, %c0_6, %c0_7] : memref<1x40x10x8xbf16, #tpu.memory_space<vmem>>, vector<1x8x8x8xbf16>
    %5 = vector.shape_cast %4 : vector<1x8x8x8xbf16> to vector<8x8x8xbf16>
    %6 = vector.shape_cast %5 : vector<8x8x8xbf16> to vector<64x8xbf16>
    %c0_8 = arith.constant 0 : index
    %c8 = arith.constant 8 : index
    %7 = vector.load %arg10[%c0_8, %c8] : memref<64x200xbf16, #tpu.memory_space<vmem>>, vector<64x8xbf16>
    tpu.vector_store %arg10[%c0_8, %c8], %6 {strides = array<i32>} : memref<64x200xbf16, #tpu.memory_space<vmem>>, vector<64x8xbf16>,
    %c0_9 = arith.constant 0 : index
    %c0_10 = arith.constant 0 : index
    %c1 = arith.constant 1 : index
    %c0_11 = arith.constant 0 : index
    %8 = vector.load %arg1[%c0_9, %c0_10, %c1, %c0_11] : memref<1x40x10x8xbf16, #tpu.memory_space<vmem>>, vector<1x8x8x8xbf16>
    %9 = vector.shape_cast %8 : vector<1x8x8x8xbf16> to vector<8x8x8xbf16>
    %10 = vector.shape_cast %9 : vector<8x8x8xbf16> to vector<64x8xbf16>
    %c0_12 = arith.constant 0 : index
    %c16 = arith.constant 16 : index
    %11 = vector.load %arg10[%c0_12, %c16] : memref<64x200xbf16, #tpu.memory_space<vmem>>, vector<64x8xbf16>
    tpu.vector_store %arg10[%c0_12, %c16], %10 {strides = array<i32>} : memref<64x200xbf16, #tpu.memory_space<vmem>>, vector<64x8xbf16>,
    %c0_13 = arith.constant 0 : index
    %c10_14 = arith.constant 10 : index
    %c1_15 = arith.constant 1 : index
    %c0_16 = arith.constant 0 : index
    %12 = vector.load %arg1[%c0_13, %c10_14, %c1_15, %c0_16] : memref<1x40x10x8xbf16, #tpu.memory_space<vmem>>, vector<1x8x8x8xbf16>
    %13 = vector.shape_cast %12 : vector<1x8x8x8xbf16> to vector<8x8x8xbf16>
    %14 = vector.shape_cast %13 : vector<8x8x8xbf16> to vector<64x8xbf16>
    %c0_17 = arith.constant 0 : index
    %c24 = arith.constant 24 : index
    %15 = vector.load %arg10[%c0_17, %c24] : memref<64x200xbf16, #tpu.memory_space<vmem>>, vector<64x8xbf16>
    tpu.vector_store %arg10[%c0_17, %c24], %14 {strides = array<i32>} : memref<64x200xbf16, #tpu.memory_space<vmem>>, vector<64x8xbf16>,
    %c0_18 = arith.constant 0 : index
    %c0_19 = arith.constant 0 : index
    %c2 = arith.constant 2 : index
    %c0_20 = arith.constant 0 : index
    %16 = vector.load %arg1[%c0_18, %c0_19, %c2, %c0_20] : memref<1x40x10x8xbf16, #tpu.memory_space<vmem>>, vector<1x8x8x8xbf16>
    %17 = vector.shape_cast %16 : vector<1x8x8x8xbf16> to vector<8x8x8xbf16>
    %18 = vector.shape_cast %17 : vector<8x8x8xbf16> to vector<64x8xbf16>
    %c0_21 = arith.constant 0 : index
    %c32 = arith.constant 32 : index
    %19 = vector.load %arg10[%c0_21, %c32] : memref<64x200xbf16, #tpu.memory_space<vmem>>, vector<64x8xbf16>
    tpu.vector_store %arg10[%c0_21, %c32], %18 {strides = array<i32>} : memref<64x200xbf16, #tpu.memory_space<vmem>>, vector<64x8xbf16>,
    %c0_22 = arith.constant 0 : index
    %c20 = arith.constant 20 : index
    %c0_23 = arith.constant 0 : index
    %c0_24 = arith.constant 0 : index
    %20 = vector.load %arg1[%c0_22, %c20, %c0_23, %c0_24] : memref<1x40x10x8xbf16, #tpu.memory_space<vmem>>, vector<1x8x8x8xbf16>
    %21 = vector.shape_cast %20 : vector<1x8x8x8xbf16> to vector<8x8x8xbf16>
    %22 = vector.shape_cast %21 : vector<8x8x8xbf16> to vector<64x8xbf16>
    %c0_25 = arith.constant 0 : index
    %c40 = arith.constant 40 : index
    %23 = vector.load %arg10[%c0_25, %c40] : memref<64x200xbf16, #tpu.memory_space<vmem>>, vector<64x8xbf16>
    tpu.vector_store %arg10[%c0_25, %c40], %22 {strides = array<i32>} : memref<64x200xbf16, #tpu.memory_space<vmem>>, vector<64x8xbf16>,
    %c0_26 = arith.constant 0 : index
    %c30 = arith.constant 30 : index
    %c0_27 = arith.constant 0 : index
    %c0_28 = arith.constant 0 : index
    %24 = vector.load %arg1[%c0_26, %c30, %c0_27, %c0_28] : memref<1x40x10x8xbf16, #tpu.memory_space<vmem>>, vector<1x8x8x8xbf16>
    %25 = vector.shape_cast %24 : vector<1x8x8x8xbf16> to vector<8x8x8xbf16>
    %26 = vector.shape_cast %25 : vector<8x8x8xbf16> to vector<64x8xbf16>
    %c0_29 = arith.constant 0 : index
    %c48 = arith.constant 48 : index
    %27 = vector.load %arg10[%c0_29, %c48] : memref<64x200xbf16, #tpu.memory_space<vmem>>, vector<64x8xbf16>
    tpu.vector_store %arg10[%c0_29, %c48], %26 {strides = array<i32>} : memref<64x200xbf16, #tpu.memory_space<vmem>>, vector<64x8xbf16>,
    %c0_30 = arith.constant 0 : index
    %c20_31 = arith.constant 20 : index
    %c1_32 = arith.constant 1 : index
    %c0_33 = arith.constant 0 : index
    %28 = vector.load %arg1[%c0_30, %c20_31, %c1_32, %c0_33] : memref<1x40x10x8xbf16, #tpu.memory_space<vmem>>, vector<1x8x8x8xbf16>
    %29 = vector.shape_cast %28 : vector<1x8x8x8xbf16> to vector<8x8x8xbf16>
    %30 = vector.shape_cast %29 : vector<8x8x8xbf16> to vector<64x8xbf16>
    %c0_34 = arith.constant 0 : index
    %c56 = arith.constant 56 : index
    %31 = vector.load %arg10[%c0_34, %c56] : memref<64x200xbf16, #tpu.memory_space<vmem>>, vector<64x8xbf16>
    tpu.vector_store %arg10[%c0_34, %c56], %30 {strides = array<i32>} : memref<64x200xbf16, #tpu.memory_space<vmem>>, vector<64x8xbf16>,
    %c0_35 = arith.constant 0 : index
    %c30_36 = arith.constant 30 : index
    %c1_37 = arith.constant 1 : index
    %c0_38 = arith.constant 0 : index
    %32 = vector.load %arg1[%c0_35, %c30_36, %c1_37, %c0_38] : memref<1x40x10x8xbf16, #tpu.memory_space<vmem>>, vector<1x8x8x8xbf16>
    %33 = vector.shape_cast %32 : vector<1x8x8x8xbf16> to vector<8x8x8xbf16>
    %34 = vector.shape_cast %33 : vector<8x8x8xbf16> to vector<64x8xbf16>
    %c0_39 = arith.constant 0 : index
    %c64 = arith.constant 64 : index
    %35 = vector.load %arg10[%c0_39, %c64] : memref<64x200xbf16, #tpu.memory_space<vmem>>, vector<64x8xbf16>
    tpu.vector_store %arg10[%c0_39, %c64], %34 {strides = array<i32>} : memref<64x200xbf16, #tpu.memory_space<vmem>>, vector<64x8xbf16>,
    %c0_40 = arith.constant 0 : index
    %c20_41 = arith.constant 20 : index
    %c2_42 = arith.constant 2 : index
    %c0_43 = arith.constant 0 : index
    %36 = vector.load %arg1[%c0_40, %c20_41, %c2_42, %c0_43] : memref<1x40x10x8xbf16, #tpu.memory_space<vmem>>, vector<1x8x8x8xbf16>
    %37 = vector.shape_cast %36 : vector<1x8x8x8xbf16> to vector<8x8x8xbf16>
    %38 = vector.shape_cast %37 : vector<8x8x8xbf16> to vector<64x8xbf16>
    %c0_44 = arith.constant 0 : index
    %c72 = arith.constant 72 : index
    %39 = vector.load %arg10[%c0_44, %c72] : memref<64x200xbf16, #tpu.memory_space<vmem>>, vector<64x8xbf16>
    tpu.vector_store %arg10[%c0_44, %c72], %38 {strides = array<i32>} : memref<64x200xbf16, #tpu.memory_space<vmem>>, vector<64x8xbf16>,
    %c0_45 = arith.constant 0 : index
    %c1_46 = arith.constant 1 : index
    %c0_47 = arith.constant 0 : index
    %c0_48 = arith.constant 0 : index
    %40 = vector.load %arg1[%c0_45, %c1_46, %c0_47, %c0_48] : memref<1x40x10x8xbf16, #tpu.memory_space<vmem>>, vector<1x8x8x8xbf16>
    %41 = vector.shape_cast %40 : vector<1x8x8x8xbf16> to vector<8x8x8xbf16>
    %42 = vector.shape_cast %41 : vector<8x8x8xbf16> to vector<64x8xbf16>
    %c0_49 = arith.constant 0 : index
    %c80 = arith.constant 80 : index
    %43 = vector.load %arg10[%c0_49, %c80] : memref<64x200xbf16, #tpu.memory_space<vmem>>, vector<64x8xbf16>
    tpu.vector_store %arg10[%c0_49, %c80], %42 {strides = array<i32>} : memref<64x200xbf16, #tpu.memory_space<vmem>>, vector<64x8xbf16>,
    %c0_50 = arith.constant 0 : index
    %c11 = arith.constant 11 : index
    %c0_51 = arith.constant 0 : index
    %c0_52 = arith.constant 0 : index
    %44 = vector.load %arg1[%c0_50, %c11, %c0_51, %c0_52] : memref<1x40x10x8xbf16, #tpu.memory_space<vmem>>, vector<1x8x8x8xbf16>
    %45 = vector.shape_cast %44 : vector<1x8x8x8xbf16> to vector<8x8x8xbf16>
    %46 = vector.shape_cast %45 : vector<8x8x8xbf16> to vector<64x8xbf16>
    %c0_53 = arith.constant 0 : index
    %c88 = arith.constant 88 : index
    %47 = vector.load %arg10[%c0_53, %c88] : memref<64x200xbf16, #tpu.memory_space<vmem>>, vector<64x8xbf16>
    tpu.vector_store %arg10[%c0_53, %c88], %46 {strides = array<i32>} : memref<64x200xbf16, #tpu.memory_space<vmem>>, vector<64x8xbf16>,
    %c0_54 = arith.constant 0 : index
    %c1_55 = arith.constant 1 : index
    %c1_56 = arith.constant 1 : index
    %c0_57 = arith.constant 0 : index
    %48 = vector.load %arg1[%c0_54, %c1_55, %c1_56, %c0_57] : memref<1x40x10x8xbf16, #tpu.memory_space<vmem>>, vector<1x8x8x8xbf16>
    %49 = vector.shape_cast %48 : vector<1x8x8x8xbf16> to vector<8x8x8xbf16>
    %50 = vector.shape_cast %49 : vector<8x8x8xbf16> to vector<64x8xbf16>
    %c0_58 = arith.constant 0 : index
    %c96 = arith.constant 96 : index
    %51 = vector.load %arg10[%c0_58, %c96] : memref<64x200xbf16, #tpu.memory_space<vmem>>, vector<64x8xbf16>
    tpu.vector_store %arg10[%c0_58, %c96], %50 {strides = array<i32>} : memref<64x200xbf16, #tpu.memory_space<vmem>>, vector<64x8xbf16>,
    %c0_59 = arith.constant 0 : index
    %c11_60 = arith.constant 11 : index
    %c1_61 = arith.constant 1 : index
    %c0_62 = arith.constant 0 : index
    %52 = vector.load %arg1[%c0_59, %c11_60, %c1_61, %c0_62] : memref<1x40x10x8xbf16, #tpu.memory_space<vmem>>, vector<1x8x8x8xbf16>
    %53 = vector.shape_cast %52 : vector<1x8x8x8xbf16> to vector<8x8x8xbf16>
    %54 = vector.shape_cast %53 : vector<8x8x8xbf16> to vector<64x8xbf16>
    %c0_63 = arith.constant 0 : index
    %c104 = arith.constant 104 : index
    %55 = vector.load %arg10[%c0_63, %c104] : memref<64x200xbf16, #tpu.memory_space<vmem>>, vector<64x8xbf16>
    tpu.vector_store %arg10[%c0_63, %c104], %54 {strides = array<i32>} : memref<64x200xbf16, #tpu.memory_space<vmem>>, vector<64x8xbf16>,
    %c0_64 = arith.constant 0 : index
    %c1_65 = arith.constant 1 : index
    %c2_66 = arith.constant 2 : index
    %c0_67 = arith.constant 0 : index
    %56 = vector.load %arg1[%c0_64, %c1_65, %c2_66, %c0_67] : memref<1x40x10x8xbf16, #tpu.memory_space<vmem>>, vector<1x8x8x8xbf16>
    %57 = vector.shape_cast %56 : vector<1x8x8x8xbf16> to vector<8x8x8xbf16>
    %58 = vector.shape_cast %57 : vector<8x8x8xbf16> to vector<64x8xbf16>
    %c0_68 = arith.constant 0 : index
    %c112 = arith.constant 112 : index
    %59 = vector.load %arg10[%c0_68, %c112] : memref<64x200xbf16, #tpu.memory_space<vmem>>, vector<64x8xbf16>
    tpu.vector_store %arg10[%c0_68, %c112], %58 {strides = array<i32>} : memref<64x200xbf16, #tpu.memory_space<vmem>>, vector<64x8xbf16>,
    %c0_69 = arith.constant 0 : index
    %c21 = arith.constant 21 : index
    %c0_70 = arith.constant 0 : index
    %c0_71 = arith.constant 0 : index
    %60 = vector.load %arg1[%c0_69, %c21, %c0_70, %c0_71] : memref<1x40x10x8xbf16, #tpu.memory_space<vmem>>, vector<1x8x8x8xbf16>
    %61 = vector.shape_cast %60 : vector<1x8x8x8xbf16> to vector<8x8x8xbf16>
    %62 = vector.shape_cast %61 : vector<8x8x8xbf16> to vector<64x8xbf16>
    %c0_72 = arith.constant 0 : index
    %c120 = arith.constant 120 : index
    %63 = vector.load %arg10[%c0_72, %c120] : memref<64x200xbf16, #tpu.memory_space<vmem>>, vector<64x8xbf16>
    tpu.vector_store %arg10[%c0_72, %c120], %62 {strides = array<i32>} : memref<64x200xbf16, #tpu.memory_space<vmem>>, vector<64x8xbf16>,
    %c0_73 = arith.constant 0 : index
    %c31 = arith.constant 31 : index
    %c0_74 = arith.constant 0 : index
    %c0_75 = arith.constant 0 : index
    %64 = vector.load %arg1[%c0_73, %c31, %c0_74, %c0_75] : memref<1x40x10x8xbf16, #tpu.memory_space<vmem>>, vector<1x8x8x8xbf16>
    %65 = vector.shape_cast %64 : vector<1x8x8x8xbf16> to vector<8x8x8xbf16>
    %66 = vector.shape_cast %65 : vector<8x8x8xbf16> to vector<64x8xbf16>
    %c0_76 = arith.constant 0 : index
    %c128 = arith.constant 128 : index
    %67 = vector.load %arg10[%c0_76, %c128] : memref<64x200xbf16, #tpu.memory_space<vmem>>, vector<64x8xbf16>
    tpu.vector_store %arg10[%c0_76, %c128], %66 {strides = array<i32>} : memref<64x200xbf16, #tpu.memory_space<vmem>>, vector<64x8xbf16>,
    %c0_77 = arith.constant 0 : index
    %c21_78 = arith.constant 21 : index
    %c1_79 = arith.constant 1 : index
    %c0_80 = arith.constant 0 : index
    %68 = vector.load %arg1[%c0_77, %c21_78, %c1_79, %c0_80] : memref<1x40x10x8xbf16, #tpu.memory_space<vmem>>, vector<1x8x8x8xbf16>
    %69 = vector.shape_cast %68 : vector<1x8x8x8xbf16> to vector<8x8x8xbf16>
    %70 = vector.shape_cast %69 : vector<8x8x8xbf16> to vector<64x8xbf16>
    %c0_81 = arith.constant 0 : index
    %c136 = arith.constant 136 : index
    %71 = vector.load %arg10[%c0_81, %c136] : memref<64x200xbf16, #tpu.memory_space<vmem>>, vector<64x8xbf16>
    tpu.vector_store %arg10[%c0_81, %c136], %70 {strides = array<i32>} : memref<64x200xbf16, #tpu.memory_space<vmem>>, vector<64x8xbf16>,
    %c0_82 = arith.constant 0 : index
    %c31_83 = arith.constant 31 : index
    %c1_84 = arith.constant 1 : index
    %c0_85 = arith.constant 0 : index
    %72 = vector.load %arg1[%c0_82, %c31_83, %c1_84, %c0_85] : memref<1x40x10x8xbf16, #tpu.memory_space<vmem>>, vector<1x8x8x8xbf16>
    %73 = vector.shape_cast %72 : vector<1x8x8x8xbf16> to vector<8x8x8xbf16>
    %74 = vector.shape_cast %73 : vector<8x8x8xbf16> to vector<64x8xbf16>
    %c0_86 = arith.constant 0 : index
    %c144 = arith.constant 144 : index
    %75 = vector.load %arg10[%c0_86, %c144] : memref<64x200xbf16, #tpu.memory_space<vmem>>, vector<64x8xbf16>
    tpu.vector_store %arg10[%c0_86, %c144], %74 {strides = array<i32>} : memref<64x200xbf16, #tpu.memory_space<vmem>>, vector<64x8xbf16>,
    %c0_87 = arith.constant 0 : index
    %c21_88 = arith.constant 21 : index
    %c2_89 = arith.constant 2 : index
    %c0_90 = arith.constant 0 : index
    %76 = vector.load %arg1[%c0_87, %c21_88, %c2_89, %c0_90] : memref<1x40x10x8xbf16, #tpu.memory_space<vmem>>, vector<1x8x8x8xbf16>
    %77 = vector.shape_cast %76 : vector<1x8x8x8xbf16> to vector<8x8x8xbf16>
    %78 = vector.shape_cast %77 : vector<8x8x8xbf16> to vector<64x8xbf16>
    %c0_91 = arith.constant 0 : index
    %c152 = arith.constant 152 : index
    %79 = vector.load %arg10[%c0_91, %c152] : memref<64x200xbf16, #tpu.memory_space<vmem>>, vector<64x8xbf16>
    tpu.vector_store %arg10[%c0_91, %c152], %78 {strides = array<i32>} : memref<64x200xbf16, #tpu.memory_space<vmem>>, vector<64x8xbf16>,
    %c0_92 = arith.constant 0 : index
    %c2_93 = arith.constant 2 : index
    %c0_94 = arith.constant 0 : index
    %c0_95 = arith.constant 0 : index
    %80 = vector.load %arg1[%c0_92, %c2_93, %c0_94, %c0_95] : memref<1x40x10x8xbf16, #tpu.memory_space<vmem>>, vector<1x8x8x8xbf16>
    %81 = vector.shape_cast %80 : vector<1x8x8x8xbf16> to vector<8x8x8xbf16>
    %82 = vector.shape_cast %81 : vector<8x8x8xbf16> to vector<64x8xbf16>
    %c0_96 = arith.constant 0 : index
    %c160 = arith.constant 160 : index
    %83 = vector.load %arg10[%c0_96, %c160] : memref<64x200xbf16, #tpu.memory_space<vmem>>, vector<64x8xbf16>
    tpu.vector_store %arg10[%c0_96, %c160], %82 {strides = array<i32>} : memref<64x200xbf16, #tpu.memory_space<vmem>>, vector<64x8xbf16>,
    %c0_97 = arith.constant 0 : index
    %c12 = arith.constant 12 : index
    %c0_98 = arith.constant 0 : index
    %c0_99 = arith.constant 0 : index
    %84 = vector.load %arg1[%c0_97, %c12, %c0_98, %c0_99] : memref<1x40x10x8xbf16, #tpu.memory_space<vmem>>, vector<1x8x8x8xbf16>
    %85 = vector.shape_cast %84 : vector<1x8x8x8xbf16> to vector<8x8x8xbf16>
    %86 = vector.shape_cast %85 : vector<8x8x8xbf16> to vector<64x8xbf16>
    %c0_100 = arith.constant 0 : index
    %c168 = arith.constant 168 : index
    %87 = vector.load %arg10[%c0_100, %c168] : memref<64x200xbf16, #tpu.memory_space<vmem>>, vector<64x8xbf16>
    tpu.vector_store %arg10[%c0_100, %c168], %86 {strides = array<i32>} : memref<64x200xbf16, #tpu.memory_space<vmem>>, vector<64x8xbf16>,
    %c0_101 = arith.constant 0 : index
    %c2_102 = arith.constant 2 : index
    %c1_103 = arith.constant 1 : index
    %c0_104 = arith.constant 0 : index
    %88 = vector.load %arg1[%c0_101, %c2_102, %c1_103, %c0_104] : memref<1x40x10x8xbf16, #tpu.memory_space<vmem>>, vector<1x8x8x8xbf16>
    %89 = vector.shape_cast %88 : vector<1x8x8x8xbf16> to vector<8x8x8xbf16>
    %90 = vector.shape_cast %89 : vector<8x8x8xbf16> to vector<64x8xbf16>
    %c0_105 = arith.constant 0 : index
    %c176 = arith.constant 176 : index
    %91 = vector.load %arg10[%c0_105, %c176] : memref<64x200xbf16, #tpu.memory_space<vmem>>, vector<64x8xbf16>
    tpu.vector_store %arg10[%c0_105, %c176], %90 {strides = array<i32>} : memref<64x200xbf16, #tpu.memory_space<vmem>>, vector<64x8xbf16>,
    %c0_106 = arith.constant 0 : index
    %c12_107 = arith.constant 12 : index
    %c1_108 = arith.constant 1 : index
    %c0_109 = arith.constant 0 : index
    %92 = vector.load %arg1[%c0_106, %c12_107, %c1_108, %c0_109] : memref<1x40x10x8xbf16, #tpu.memory_space<vmem>>, vector<1x8x8x8xbf16>
    %93 = vector.shape_cast %92 : vector<1x8x8x8xbf16> to vector<8x8x8xbf16>
    %94 = vector.shape_cast %93 : vector<8x8x8xbf16> to vector<64x8xbf16>
    %c0_110 = arith.constant 0 : index
    %c184 = arith.constant 184 : index
    %95 = vector.load %arg10[%c0_110, %c184] : memref<64x200xbf16, #tpu.memory_space<vmem>>, vector<64x8xbf16>
    tpu.vector_store %arg10[%c0_110, %c184], %94 {strides = array<i32>} : memref<64x200xbf16, #tpu.memory_space<vmem>>, vector<64x8xbf16>,
    %c0_111 = arith.constant 0 : index
    %c2_112 = arith.constant 2 : index
    %c2_113 = arith.constant 2 : index
    %c0_114 = arith.constant 0 : index
    %96 = vector.load %arg1[%c0_111, %c2_112, %c2_113, %c0_114] : memref<1x40x10x8xbf16, #tpu.memory_space<vmem>>, vector<1x8x8x8xbf16>
    %97 = vector.shape_cast %96 : vector<1x8x8x8xbf16> to vector<8x8x8xbf16>
    %98 = vector.shape_cast %97 : vector<8x8x8xbf16> to vector<64x8xbf16>
    %c0_115 = arith.constant 0 : index
    %c192 = arith.constant 192 : index
    %99 = vector.load %arg10[%c0_115, %c192] : memref<64x200xbf16, #tpu.memory_space<vmem>>, vector<64x8xbf16>
    tpu.vector_store %arg10[%c0_115, %c192], %98 {strides = array<i32>} : memref<64x200xbf16, #tpu.memory_space<vmem>>, vector<64x8xbf16>,
    %c0_116 = arith.constant 0 : index
    %c0_117 = arith.constant 0 : index
    %100 = vector.load %arg10[%c0_116, %c0_117] : memref<64x200xbf16, #tpu.memory_space<vmem>>, vector<64x200xbf16>
    %c0_118 = arith.constant 0 : index
    %c0_119 = arith.constant 0 : index
    %101 = vector.load %arg2[%c0_118, %c0_119] : memref<200x16xbf16, #tpu.memory_space<vmem>>, vector<200x16xbf16>
    %cst = arith.constant dense<0.000000e+00> : vector<64x16xf32>
    %102 = tpu.matmul %100, %101, %cst {dimension_numbers = #tpu.dot_dimension_numbers<[1], [0], [0], [1], [0, 0, 1, 1], [], []>} : vector<64x200xbf16>, vector<200x16xbf16>, vector<64x16xf32> -> vector<64x16xf32>
    %c0_120 = arith.constant 0 : index
    %c0_121 = arith.constant 0 : index
    %103 = vector.load %arg3[%c0_120, %c0_121] : memref<1x16xf32, #tpu.memory_space<vmem>>, vector<1x16xf32>
    %104 = vector.broadcast %103 : vector<1x16xf32> to vector<64x16xf32>
    %105 = arith.addf %102, %104 : vector<64x16xf32>
    %cst_122 = arith.constant dense<0.000000e+00> : vector<16xf32>
    %106 = vector.multi_reduction <add>, %105, %cst_122 [0] : vector<64x16xf32> to vector<16xf32>
    %107 = vector.shape_cast %106 : vector<16xf32> to vector<1x16xf32>
    %cst_123 = arith.constant 6.400000e+01 : f32
    %108 = vector.broadcast %cst_123 : f32 to vector<1x16xf32>
    %109 = arith.divf %107, %108 : vector<1x16xf32>
    %110 = vector.broadcast %109 : vector<1x16xf32> to vector<64x16xf32>
    %111 = arith.subf %105, %110 : vector<64x16xf32>
    %112 = arith.mulf %111, %111 : vector<64x16xf32>
    %cst_124 = arith.constant dense<0.000000e+00> : vector<16xf32>
    %113 = vector.multi_reduction <add>, %112, %cst_124 [0] : vector<64x16xf32> to vector<16xf32>
    %114 = vector.shape_cast %113 : vector<16xf32> to vector<1x16xf32>
    %cst_125 = arith.constant 6.400000e+01 : f32
    %115 = vector.broadcast %cst_125 : f32 to vector<1x16xf32>
    %116 = arith.divf %114, %115 : vector<1x16xf32>
    %117 = vector.broadcast %109 : vector<1x16xf32> to vector<64x16xf32>
    %118 = arith.subf %105, %117 : vector<64x16xf32>
    %cst_126 = arith.constant 9.99999974E-6 : f32
    %119 = vector.broadcast %cst_126 : f32 to vector<1x16xf32>
    %120 = arith.addf %116, %119 : vector<1x16xf32>
    %121 = math.rsqrt %120 : vector<1x16xf32>
    %122 = vector.broadcast %121 : vector<1x16xf32> to vector<64x16xf32>
    %123 = arith.mulf %118, %122 : vector<64x16xf32>
    %c0_127 = arith.constant 0 : index
    %c0_128 = arith.constant 0 : index
    %124 = vector.load %arg4[%c0_127, %c0_128] : memref<1x16xf32, #tpu.memory_space<vmem>>, vector<1x16xf32>
    %125 = vector.broadcast %124 : vector<1x16xf32> to vector<64x16xf32>
    %126 = arith.mulf %123, %125 : vector<64x16xf32>
    %c0_129 = arith.constant 0 : index
    %c0_130 = arith.constant 0 : index
    %127 = vector.load %arg5[%c0_129, %c0_130] : memref<1x16xf32, #tpu.memory_space<vmem>>, vector<1x16xf32>
    %128 = vector.broadcast %127 : vector<1x16xf32> to vector<64x16xf32>
    %129 = arith.addf %126, %128 : vector<64x16xf32>
    %cst_131 = arith.constant 5.000000e-01 : f32
    %130 = vector.broadcast %cst_131 : f32 to vector<64x16xf32>
    %131 = arith.mulf %130, %129 : vector<64x16xf32>
    %cst_132 = arith.constant 4.471500e-02 : f32
    %132 = vector.broadcast %cst_132 : f32 to vector<64x16xf32>
    %133 = arith.mulf %132, %129 : vector<64x16xf32>
    %134 = arith.mulf %133, %129 : vector<64x16xf32>
    %135 = arith.mulf %134, %129 : vector<64x16xf32>
    %136 = arith.addf %129, %135 : vector<64x16xf32>
    %cst_133 = arith.constant 0.797884583 : f32
    %137 = vector.broadcast %cst_133 : f32 to vector<64x16xf32>
    %138 = arith.mulf %137, %136 : vector<64x16xf32>
    %139 = math.tanh %138 : vector<64x16xf32>
    %cst_134 = arith.constant 1.000000e+00 : f32
    %140 = vector.broadcast %cst_134 : f32 to vector<64x16xf32>
    %141 = arith.addf %140, %139 : vector<64x16xf32>
    %142 = arith.mulf %131, %141 : vector<64x16xf32>
    %143 = arith.truncf %142 : vector<64x16xf32> to vector<64x16xbf16>
    %c0_135 = arith.constant 0 : index
    %c0_136 = arith.constant 0 : index
    %c0_137 = arith.constant 0 : index
    %144 = vector.load %arg8[%c0_135, %c0_136, %c0_137] : memref<1x64x16xbf16, #tpu.memory_space<vmem>>, vector<1x64x16xbf16>
    %145 = vector.shape_cast %144 : vector<1x64x16xbf16> to vector<64x16xbf16>
    %146 = vector.shape_cast %143 : vector<64x16xbf16> to vector<1x64x16xbf16>
    tpu.vector_store %arg8[%c0_135, %c0_136, %c0_137], %146 {strides = array<i32>} : memref<1x64x16xbf16, #tpu.memory_space<vmem>>, vector<1x64x16xbf16>,
    %c0_138 = arith.constant 0 : index
    %c0_139 = arith.constant 0 : index
    %147 = vector.load %arg6[%c0_138, %c0_139] : memref<8x16xbf16, #tpu.memory_space<vmem>>, vector<8x16xbf16>
    %cst_140 = arith.constant dense<0.000000e+00> : vector<64x16xf32>
    %148 = tpu.matmul %50, %147, %cst_140 {dimension_numbers = #tpu.dot_dimension_numbers<[1], [0], [0], [1], [0, 0, 1, 1], [], []>} : vector<64x8xbf16>, vector<8x16xbf16>, vector<64x16xf32> -> vector<64x16xf32>
    %c0_141 = arith.constant 0 : index
    %c0_142 = arith.constant 0 : index
    %149 = vector.load %arg7[%c0_141, %c0_142] : memref<1x16xf32, #tpu.memory_space<vmem>>, vector<1x16xf32>
    %150 = vector.broadcast %149 : vector<1x16xf32> to vector<64x16xf32>
    %151 = arith.addf %148, %150 : vector<64x16xf32>
    %152 = arith.truncf %151 : vector<64x16xf32> to vector<64x16xbf16>
    %c0_143 = arith.constant 0 : index
    %c0_144 = arith.constant 0 : index
    %c0_145 = arith.constant 0 : index
    %153 = vector.load %arg9[%c0_143, %c0_144, %c0_145] : memref<1x64x16xbf16, #tpu.memory_space<vmem>>, vector<1x64x16xbf16>
    %154 = vector.shape_cast %153 : vector<1x64x16xbf16> to vector<64x16xbf16>
    %155 = vector.shape_cast %152 : vector<64x16xbf16> to vector<1x64x16xbf16>
    tpu.vector_store %arg9[%c0_143, %c0_144, %c0_145], %155 {strides = array<i32>} : memref<1x64x16xbf16, #tpu.memory_space<vmem>>, vector<1x64x16xbf16>,
    return
  }
  func.func @transform_0(%arg0: i32) -> (i32, i32, i32, i32) {
    %c0_i32 = arith.constant 0 : i32
    %c0_i32_0 = arith.constant 0 : i32
    %c0_i32_1 = arith.constant 0 : i32
    %c0_i32_2 = arith.constant 0 : i32
    return %arg0, %c0_i32, %c0_i32_0, %c0_i32_1 : i32, i32, i32, i32
  }
  func.func @transform_1(%arg0: i32) -> (i32, i32) {
    %c0_i32 = arith.constant 0 : i32
    %c0_i32_0 = arith.constant 0 : i32
    %c0_i32_1 = arith.constant 0 : i32
    return %c0_i32, %c0_i32_0 : i32, i32
  }
  func.func @transform_2(%arg0: i32) -> (i32, i32) {
    %c0_i32 = arith.constant 0 : i32
    %c0_i32_0 = arith.constant 0 : i32
    %c0_i32_1 = arith.constant 0 : i32
    return %c0_i32, %c0_i32_0 : i32, i32
  }
  func.func @transform_3(%arg0: i32) -> (i32, i32) {
    %c0_i32 = arith.constant 0 : i32
    %c0_i32_0 = arith.constant 0 : i32
    %c0_i32_1 = arith.constant 0 : i32
    return %c0_i32, %c0_i32_0 : i32, i32
  }
  func.func @transform_4(%arg0: i32) -> (i32, i32) {
    %c0_i32 = arith.constant 0 : i32
    %c0_i32_0 = arith.constant 0 : i32
    %c0_i32_1 = arith.constant 0 : i32
    return %c0_i32, %c0_i32_0 : i32, i32
  }
  func.func @transform_5(%arg0: i32) -> (i32, i32) {
    %c0_i32 = arith.constant 0 : i32
    %c0_i32_0 = arith.constant 0 : i32
    %c0_i32_1 = arith.constant 0 : i32
    return %c0_i32, %c0_i32_0 : i32, i32
  }
  func.func @transform_6(%arg0: i32) -> (i32, i32) {
    %c0_i32 = arith.constant 0 : i32
    %c0_i32_0 = arith.constant 0 : i32
    %c0_i32_1 = arith.constant 0 : i32
    return %c0_i32, %c0_i32_0 : i32, i32
  }
  func.func @transform_7(%arg0: i32) -> (i32, i32, i32) {
    %c0_i32 = arith.constant 0 : i32
    %c0_i32_0 = arith.constant 0 : i32
    %c0_i32_1 = arith.constant 0 : i32
    return %arg0, %c0_i32, %c0_i32_0 : i32, i32, i32
  }
  func.func @transform_8(%arg0: i32) -> (i32, i32, i32) {
    %c0_i32 = arith.constant 0 : i32
    %c0_i32_0 = arith.constant 0 : i32
    %c0_i32_1 = arith.constant 0 : i32
    return %arg0, %c0_i32, %c0_i32_0 : i32, i32, i32
  }
}

module attributes {stable_mosaic.version = 11 : i64} {
  func.func @_matmul_bias_fast_kernel(%arg0: i32, %arg1: i32, %arg2: memref<128x16xbf16, #tpu.memory_space<vmem>>, %arg3: memref<16x8xbf16, #tpu.memory_space<vmem>>, %arg4: memref<1x8xf32, #tpu.memory_space<vmem>>, %arg5: memref<128x8xbf16, #tpu.memory_space<vmem>>) attributes {dimension_semantics = [#tpu.dimension_semantics<parallel>, #tpu.dimension_semantics<parallel>], iteration_bounds = array<i64: 1, 1>, scalar_prefetch = 0 : i64, scratch_operands = 0 : i64, tpu.core_type = #tpu.core_type<tc>, window_params = [{transform_indices = @transform_0, window_bounds = array<i64: 128, 16>}, {transform_indices = @transform_1, window_bounds = array<i64: 16, 8>}, {transform_indices = @transform_2, window_bounds = array<i64: 1, 8>}, {transform_indices = @transform_3, window_bounds = array<i64: 128, 8>}]} {
    %c0 = arith.constant 0 : index
    %c0_0 = arith.constant 0 : index
    %0 = vector.load %arg2[%c0, %c0_0] : memref<128x16xbf16, #tpu.memory_space<vmem>>, vector<128x16xbf16>
    %c0_1 = arith.constant 0 : index
    %c0_2 = arith.constant 0 : index
    %1 = vector.load %arg3[%c0_1, %c0_2] : memref<16x8xbf16, #tpu.memory_space<vmem>>, vector<16x8xbf16>
    %cst = arith.constant dense<0.000000e+00> : vector<128x8xf32>
    %2 = tpu.matmul %0, %1, %cst {dimension_numbers = #tpu.dot_dimension_numbers<[1], [0], [0], [1], [0, 0, 1, 1], [], []>} : vector<128x16xbf16>, vector<16x8xbf16>, vector<128x8xf32> -> vector<128x8xf32>
    %c0_3 = arith.constant 0 : index
    %c0_4 = arith.constant 0 : index
    %3 = vector.load %arg4[%c0_3, %c0_4] : memref<1x8xf32, #tpu.memory_space<vmem>>, vector<1x8xf32>
    %4 = vector.broadcast %3 : vector<1x8xf32> to vector<128x8xf32>
    %5 = arith.addf %2, %4 : vector<128x8xf32>
    %6 = arith.truncf %5 : vector<128x8xf32> to vector<128x8xbf16>
    %c0_5 = arith.constant 0 : index
    %c0_6 = arith.constant 0 : index
    %7 = vector.load %arg5[%c0_5, %c0_6] : memref<128x8xbf16, #tpu.memory_space<vmem>>, vector<128x8xbf16>
    tpu.vector_store %arg5[%c0_5, %c0_6], %6 {strides = array<i32>} : memref<128x8xbf16, #tpu.memory_space<vmem>>, vector<128x8xbf16>,
    return
  }
  func.func @transform_0(%arg0: i32, %arg1: i32) -> (i32, i32) {
    %c0_i32 = arith.constant 0 : i32
    %c0_i32_0 = arith.constant 0 : i32
    return %arg0, %c0_i32 : i32, i32
  }
  func.func @transform_1(%arg0: i32, %arg1: i32) -> (i32, i32) {
    %c0_i32 = arith.constant 0 : i32
    %c0_i32_0 = arith.constant 0 : i32
    return %c0_i32, %arg1 : i32, i32
  }
  func.func @transform_2(%arg0: i32, %arg1: i32) -> (i32, i32) {
    %c0_i32 = arith.constant 0 : i32
    %c0_i32_0 = arith.constant 0 : i32
    return %c0_i32, %arg1 : i32, i32
  }
  func.func @transform_3(%arg0: i32, %arg1: i32) -> (i32, i32) {
    %c0_i32 = arith.constant 0 : i32
    return %arg0, %arg1 : i32, i32
  }
}

module attributes {stable_mosaic.version = 11 : i64} {
  func.func @_cross_attn_kernel(%arg0: i32, %arg1: memref<1x64x8xbf16, #tpu.memory_space<vmem>>, %arg2: memref<1x16x16xf32, #tpu.memory_space<vmem>>, %arg3: memref<1x64x8xf32, #tpu.memory_space<vmem>>, %arg4: memref<1x16x8xf32, #tpu.memory_space<vmem>>, %arg5: memref<16x8xbf16, #tpu.memory_space<vmem>>, %arg6: memref<1x8xf32, #tpu.memory_space<vmem>>, %arg7: memref<8x8xbf16, #tpu.memory_space<vmem>>, %arg8: memref<8x8xbf16, #tpu.memory_space<vmem>>, %arg9: memref<8x8xbf16, #tpu.memory_space<vmem>>, %arg10: memref<8x8xbf16, #tpu.memory_space<vmem>>, %arg11: memref<1x8xf32, #tpu.memory_space<vmem>>, %arg12: memref<1x8xf32, #tpu.memory_space<vmem>>, %arg13: memref<1x8xf32, #tpu.memory_space<vmem>>, %arg14: memref<1x8xf32, #tpu.memory_space<vmem>>, %arg15: memref<1x64x8xf32, #tpu.memory_space<vmem>>) attributes {dimension_semantics = [#tpu.dimension_semantics<parallel>], iteration_bounds = array<i64: 2>, scalar_prefetch = 0 : i64, scratch_operands = 0 : i64, tpu.core_type = #tpu.core_type<tc>, window_params = [{transform_indices = @transform_0, window_bounds = array<i64: 1, 64, 8>}, {transform_indices = @transform_1, window_bounds = array<i64: 1, 16, 16>}, {pipeline_mode = #tpu.pipeline_mode<synchronous>, transform_indices = @transform_2, window_bounds = array<i64: 1, 64, 8>}, {pipeline_mode = #tpu.pipeline_mode<synchronous>, transform_indices = @transform_3, window_bounds = array<i64: 1, 16, 8>}, {pipeline_mode = #tpu.pipeline_mode<synchronous>, transform_indices = @transform_4, window_bounds = array<i64: 16, 8>}, {pipeline_mode = #tpu.pipeline_mode<synchronous>, transform_indices = @transform_5, window_bounds = array<i64: 1, 8>}, {pipeline_mode = #tpu.pipeline_mode<synchronous>, transform_indices = @transform_6, window_bounds = array<i64: 8, 8>}, {pipeline_mode = #tpu.pipeline_mode<synchronous>, transform_indices = @transform_7, window_bounds = array<i64: 8, 8>}, {pipeline_mode = #tpu.pipeline_mode<synchronous>, transform_indices = @transform_8, window_bounds = array<i64: 8, 8>}, {pipeline_mode = #tpu.pipeline_mode<synchronous>, transform_indices = @transform_9, window_bounds = array<i64: 8, 8>}, {pipeline_mode = #tpu.pipeline_mode<synchronous>, transform_indices = @transform_10, window_bounds = array<i64: 1, 8>}, {pipeline_mode = #tpu.pipeline_mode<synchronous>, transform_indices = @transform_11, window_bounds = array<i64: 1, 8>}, {pipeline_mode = #tpu.pipeline_mode<synchronous>, transform_indices = @transform_12, window_bounds = array<i64: 1, 8>}, {pipeline_mode = #tpu.pipeline_mode<synchronous>, transform_indices = @transform_13, window_bounds = array<i64: 1, 8>}, {transform_indices = @transform_14, window_bounds = array<i64: 1, 64, 8>}]} {
    %c0 = arith.constant 0 : index
    %c0_0 = arith.constant 0 : index
    %c0_1 = arith.constant 0 : index
    %0 = vector.load %arg1[%c0, %c0_0, %c0_1] : memref<1x64x8xbf16, #tpu.memory_space<vmem>>, vector<1x64x8xbf16>
    %1 = vector.shape_cast %0 : vector<1x64x8xbf16> to vector<64x8xbf16>
    %2 = arith.extf %1 : vector<64x8xbf16> to vector<64x8xf32>
    %c0_2 = arith.constant 0 : index
    %c0_3 = arith.constant 0 : index
    %c0_4 = arith.constant 0 : index
    %3 = vector.load %arg3[%c0_2, %c0_3, %c0_4] : memref<1x64x8xf32, #tpu.memory_space<vmem>>, vector<1x64x8xf32>
    %4 = vector.shape_cast %3 : vector<1x64x8xf32> to vector<64x8xf32>
    %5 = arith.addf %2, %4 : vector<64x8xf32>
    %6 = arith.truncf %5 : vector<64x8xf32> to vector<64x8xbf16>
    %c0_5 = arith.constant 0 : index
    %c0_6 = arith.constant 0 : index
    %c0_7 = arith.constant 0 : index
    %7 = vector.load %arg2[%c0_5, %c0_6, %c0_7] : memref<1x16x16xf32, #tpu.memory_space<vmem>>, vector<1x16x16xf32>
    %8 = vector.shape_cast %7 : vector<1x16x16xf32> to vector<16x16xf32>
    %9 = arith.truncf %8 : vector<16x16xf32> to vector<16x16xbf16>
    %c0_8 = arith.constant 0 : index
    %c0_9 = arith.constant 0 : index
    %10 = vector.load %arg5[%c0_8, %c0_9] : memref<16x8xbf16, #tpu.memory_space<vmem>>, vector<16x8xbf16>
    %cst = arith.constant dense<0.000000e+00> : vector<16x8xf32>
    %11 = tpu.matmul %9, %10, %cst {dimension_numbers = #tpu.dot_dimension_numbers<[1], [0], [0], [1], [0, 0, 1, 1], [], []>} : vector<16x16xbf16>, vector<16x8xbf16>, vector<16x8xf32> -> vector<16x8xf32>
    %c0_10 = arith.constant 0 : index
    %c0_11 = arith.constant 0 : index
    %12 = vector.load %arg6[%c0_10, %c0_11] : memref<1x8xf32, #tpu.memory_space<vmem>>, vector<1x8xf32>
    %13 = vector.broadcast %12 : vector<1x8xf32> to vector<16x8xf32>
    %14 = arith.addf %11, %13 : vector<16x8xf32>
    %c0_12 = arith.constant 0 : index
    %c0_13 = arith.constant 0 : index
    %c0_14 = arith.constant 0 : index
    %15 = vector.load %arg4[%c0_12, %c0_13, %c0_14] : memref<1x16x8xf32, #tpu.memory_space<vmem>>, vector<1x16x8xf32>
    %16 = vector.shape_cast %15 : vector<1x16x8xf32> to vector<16x8xf32>
    %17 = arith.addf %14, %16 : vector<16x8xf32>
    %18 = arith.truncf %17 : vector<16x8xf32> to vector<16x8xbf16>
    %c0_15 = arith.constant 0 : index
    %c0_16 = arith.constant 0 : index
    %19 = vector.load %arg7[%c0_15, %c0_16] : memref<8x8xbf16, #tpu.memory_space<vmem>>, vector<8x8xbf16>
    %cst_17 = arith.constant dense<0.000000e+00> : vector<64x8xf32>
    %20 = tpu.matmul %6, %19, %cst_17 {dimension_numbers = #tpu.dot_dimension_numbers<[1], [0], [0], [1], [0, 0, 1, 1], [], []>} : vector<64x8xbf16>, vector<8x8xbf16>, vector<64x8xf32> -> vector<64x8xf32>
    %c0_18 = arith.constant 0 : index
    %c0_19 = arith.constant 0 : index
    %21 = vector.load %arg11[%c0_18, %c0_19] : memref<1x8xf32, #tpu.memory_space<vmem>>, vector<1x8xf32>
    %22 = vector.broadcast %21 : vector<1x8xf32> to vector<64x8xf32>
    %23 = arith.addf %20, %22 : vector<64x8xf32>
    %c0_20 = arith.constant 0 : index
    %c0_21 = arith.constant 0 : index
    %24 = vector.load %arg8[%c0_20, %c0_21] : memref<8x8xbf16, #tpu.memory_space<vmem>>, vector<8x8xbf16>
    %cst_22 = arith.constant dense<0.000000e+00> : vector<16x8xf32>
    %25 = tpu.matmul %18, %24, %cst_22 {dimension_numbers = #tpu.dot_dimension_numbers<[1], [0], [0], [1], [0, 0, 1, 1], [], []>} : vector<16x8xbf16>, vector<8x8xbf16>, vector<16x8xf32> -> vector<16x8xf32>
    %c0_23 = arith.constant 0 : index
    %c0_24 = arith.constant 0 : index
    %26 = vector.load %arg12[%c0_23, %c0_24] : memref<1x8xf32, #tpu.memory_space<vmem>>, vector<1x8xf32>
    %27 = vector.broadcast %26 : vector<1x8xf32> to vector<16x8xf32>
    %28 = arith.addf %25, %27 : vector<16x8xf32>
    %c0_25 = arith.constant 0 : index
    %c0_26 = arith.constant 0 : index
    %29 = vector.load %arg9[%c0_25, %c0_26] : memref<8x8xbf16, #tpu.memory_space<vmem>>, vector<8x8xbf16>
    %cst_27 = arith.constant dense<0.000000e+00> : vector<16x8xf32>
    %30 = tpu.matmul %18, %29, %cst_27 {dimension_numbers = #tpu.dot_dimension_numbers<[1], [0], [0], [1], [0, 0, 1, 1], [], []>} : vector<16x8xbf16>, vector<8x8xbf16>, vector<16x8xf32> -> vector<16x8xf32>
    %c0_28 = arith.constant 0 : index
    %c0_29 = arith.constant 0 : index
    %31 = vector.load %arg13[%c0_28, %c0_29] : memref<1x8xf32, #tpu.memory_space<vmem>>, vector<1x8xf32>
    %32 = vector.broadcast %31 : vector<1x8xf32> to vector<16x8xf32>
    %33 = arith.addf %30, %32 : vector<16x8xf32>
    %34 = arith.truncf %23 : vector<64x8xf32> to vector<64x8xbf16>
    %35 = arith.truncf %28 : vector<16x8xf32> to vector<16x8xbf16>
    %cst_30 = arith.constant dense<0.000000e+00> : vector<64x16xf32>
    %36 = tpu.matmul %34, %35, %cst_30 {dimension_numbers = #tpu.dot_dimension_numbers<[1], [1], [0], [0], [0, 0, 1, 0], [], []>} : vector<64x8xbf16>, vector<16x8xbf16>, vector<64x16xf32> -> vector<64x16xf32>
    %cst_31 = arith.constant 0.353553385 : f32
    %37 = vector.broadcast %cst_31 : f32 to vector<64x16xf32>
    %38 = arith.mulf %36, %37 : vector<64x16xf32>
    %cst_32 = arith.constant dense<0xFF800000> : vector<64xf32>
    %39 = vector.multi_reduction <maximumf>, %38, %cst_32 [1] : vector<64x16xf32> to vector<64xf32>
    %40 = vector.shape_cast %39 : vector<64xf32> to vector<64x1xf32>
    %41 = vector.broadcast %40 : vector<64x1xf32> to vector<64x16xf32>
    %42 = arith.subf %38, %41 : vector<64x16xf32>
    %43 = math.exp %42 : vector<64x16xf32>
    %cst_33 = arith.constant dense<0.000000e+00> : vector<64xf32>
    %44 = vector.multi_reduction <add>, %43, %cst_33 [1] : vector<64x16xf32> to vector<64xf32>
    %45 = vector.shape_cast %44 : vector<64xf32> to vector<64x1xf32>
    %46 = vector.broadcast %45 : vector<64x1xf32> to vector<64x16xf32>
    %47 = arith.divf %43, %46 : vector<64x16xf32>
    %48 = arith.truncf %47 : vector<64x16xf32> to vector<64x16xbf16>
    %49 = arith.truncf %33 : vector<16x8xf32> to vector<16x8xbf16>
    %cst_34 = arith.constant dense<0.000000e+00> : vector<64x8xf32>
    %50 = tpu.matmul %48, %49, %cst_34 {dimension_numbers = #tpu.dot_dimension_numbers<[1], [0], [0], [1], [0, 0, 1, 1], [], []>} : vector<64x16xbf16>, vector<16x8xbf16>, vector<64x8xf32> -> vector<64x8xf32>
    %51 = arith.truncf %50 : vector<64x8xf32> to vector<64x8xbf16>
    %c0_35 = arith.constant 0 : index
    %c0_36 = arith.constant 0 : index
    %52 = vector.load %arg10[%c0_35, %c0_36] : memref<8x8xbf16, #tpu.memory_space<vmem>>, vector<8x8xbf16>
    %cst_37 = arith.constant dense<0.000000e+00> : vector<64x8xf32>
    %53 = tpu.matmul %51, %52, %cst_37 {dimension_numbers = #tpu.dot_dimension_numbers<[1], [0], [0], [1], [0, 0, 1, 1], [], []>} : vector<64x8xbf16>, vector<8x8xbf16>, vector<64x8xf32> -> vector<64x8xf32>
    %c0_38 = arith.constant 0 : index
    %c0_39 = arith.constant 0 : index
    %54 = vector.load %arg14[%c0_38, %c0_39] : memref<1x8xf32, #tpu.memory_space<vmem>>, vector<1x8xf32>
    %55 = vector.broadcast %54 : vector<1x8xf32> to vector<64x8xf32>
    %56 = arith.addf %53, %55 : vector<64x8xf32>
    %cst_40 = arith.constant 5.000000e-01 : f32
    %57 = vector.broadcast %cst_40 : f32 to vector<64x8xf32>
    %58 = arith.mulf %57, %56 : vector<64x8xf32>
    %59 = arith.addf %2, %58 : vector<64x8xf32>
    %c0_41 = arith.constant 0 : index
    %c0_42 = arith.constant 0 : index
    %c0_43 = arith.constant 0 : index
    %60 = vector.load %arg15[%c0_41, %c0_42, %c0_43] : memref<1x64x8xf32, #tpu.memory_space<vmem>>, vector<1x64x8xf32>
    %61 = vector.shape_cast %60 : vector<1x64x8xf32> to vector<64x8xf32>
    %62 = vector.shape_cast %59 : vector<64x8xf32> to vector<1x64x8xf32>
    tpu.vector_store %arg15[%c0_41, %c0_42, %c0_43], %62 {strides = array<i32>} : memref<1x64x8xf32, #tpu.memory_space<vmem>>, vector<1x64x8xf32>,
    return
  }
  func.func @transform_0(%arg0: i32) -> (i32, i32, i32) {
    %c0_i32 = arith.constant 0 : i32
    %c0_i32_0 = arith.constant 0 : i32
    %c0_i32_1 = arith.constant 0 : i32
    return %arg0, %c0_i32, %c0_i32_0 : i32, i32, i32
  }
  func.func @transform_1(%arg0: i32) -> (i32, i32, i32) {
    %c0_i32 = arith.constant 0 : i32
    %c0_i32_0 = arith.constant 0 : i32
    %c0_i32_1 = arith.constant 0 : i32
    return %arg0, %c0_i32, %c0_i32_0 : i32, i32, i32
  }
  func.func @transform_2(%arg0: i32) -> (i32, i32, i32) {
    %c0_i32 = arith.constant 0 : i32
    %c0_i32_0 = arith.constant 0 : i32
    %c0_i32_1 = arith.constant 0 : i32
    %c0_i32_2 = arith.constant 0 : i32
    return %c0_i32, %c0_i32_0, %c0_i32_1 : i32, i32, i32
  }
  func.func @transform_3(%arg0: i32) -> (i32, i32, i32) {
    %c0_i32 = arith.constant 0 : i32
    %c0_i32_0 = arith.constant 0 : i32
    %c0_i32_1 = arith.constant 0 : i32
    %c0_i32_2 = arith.constant 0 : i32
    return %c0_i32, %c0_i32_0, %c0_i32_1 : i32, i32, i32
  }
  func.func @transform_4(%arg0: i32) -> (i32, i32) {
    %c0_i32 = arith.constant 0 : i32
    %c0_i32_0 = arith.constant 0 : i32
    %c0_i32_1 = arith.constant 0 : i32
    return %c0_i32, %c0_i32_0 : i32, i32
  }
  func.func @transform_5(%arg0: i32) -> (i32, i32) {
    %c0_i32 = arith.constant 0 : i32
    %c0_i32_0 = arith.constant 0 : i32
    %c0_i32_1 = arith.constant 0 : i32
    return %c0_i32, %c0_i32_0 : i32, i32
  }
  func.func @transform_6(%arg0: i32) -> (i32, i32) {
    %c0_i32 = arith.constant 0 : i32
    %c0_i32_0 = arith.constant 0 : i32
    %c0_i32_1 = arith.constant 0 : i32
    return %c0_i32, %c0_i32_0 : i32, i32
  }
  func.func @transform_7(%arg0: i32) -> (i32, i32) {
    %c0_i32 = arith.constant 0 : i32
    %c0_i32_0 = arith.constant 0 : i32
    %c0_i32_1 = arith.constant 0 : i32
    return %c0_i32, %c0_i32_0 : i32, i32
  }
  func.func @transform_8(%arg0: i32) -> (i32, i32) {
    %c0_i32 = arith.constant 0 : i32
    %c0_i32_0 = arith.constant 0 : i32
    %c0_i32_1 = arith.constant 0 : i32
    return %c0_i32, %c0_i32_0 : i32, i32
  }
  func.func @transform_9(%arg0: i32) -> (i32, i32) {
    %c0_i32 = arith.constant 0 : i32
    %c0_i32_0 = arith.constant 0 : i32
    %c0_i32_1 = arith.constant 0 : i32
    return %c0_i32, %c0_i32_0 : i32, i32
  }
  func.func @transform_10(%arg0: i32) -> (i32, i32) {
    %c0_i32 = arith.constant 0 : i32
    %c0_i32_0 = arith.constant 0 : i32
    %c0_i32_1 = arith.constant 0 : i32
    return %c0_i32, %c0_i32_0 : i32, i32
  }
  func.func @transform_11(%arg0: i32) -> (i32, i32) {
    %c0_i32 = arith.constant 0 : i32
    %c0_i32_0 = arith.constant 0 : i32
    %c0_i32_1 = arith.constant 0 : i32
    return %c0_i32, %c0_i32_0 : i32, i32
  }
  func.func @transform_12(%arg0: i32) -> (i32, i32) {
    %c0_i32 = arith.constant 0 : i32
    %c0_i32_0 = arith.constant 0 : i32
    %c0_i32_1 = arith.constant 0 : i32
    return %c0_i32, %c0_i32_0 : i32, i32
  }
  func.func @transform_13(%arg0: i32) -> (i32, i32) {
    %c0_i32 = arith.constant 0 : i32
    %c0_i32_0 = arith.constant 0 : i32
    %c0_i32_1 = arith.constant 0 : i32
    return %c0_i32, %c0_i32_0 : i32, i32
  }
  func.func @transform_14(%arg0: i32) -> (i32, i32, i32) {
    %c0_i32 = arith.constant 0 : i32
    %c0_i32_0 = arith.constant 0 : i32
    %c0_i32_1 = arith.constant 0 : i32
    return %arg0, %c0_i32, %c0_i32_0 : i32, i32, i32
  }
}

module attributes {stable_mosaic.version = 11 : i64} {
  func.func @_conv5x5_kernel(%arg0: i32, %arg1: memref<1x12x12x16xbf16, #tpu.memory_space<vmem>>, %arg2: memref<400x16xbf16, #tpu.memory_space<vmem>>, %arg3: memref<1x16xf32, #tpu.memory_space<vmem>>, %arg4: memref<1x16xf32, #tpu.memory_space<vmem>>, %arg5: memref<1x16xf32, #tpu.memory_space<vmem>>, %arg6: memref<1x64x16xbf16, #tpu.memory_space<vmem>>, %arg7: memref<1x64x16xbf16, #tpu.memory_space<vmem>>, %arg8: memref<64x400xbf16, #tpu.memory_space<vmem>>) attributes {dimension_semantics = [#tpu.dimension_semantics<parallel>], iteration_bounds = array<i64: 2>, scalar_prefetch = 0 : i64, scratch_operands = 1 : i64, tpu.core_type = #tpu.core_type<tc>, window_params = [{transform_indices = @transform_0, window_bounds = array<i64: 1, 12, 12, 16>}, {pipeline_mode = #tpu.pipeline_mode<synchronous>, transform_indices = @transform_1, window_bounds = array<i64: 400, 16>}, {pipeline_mode = #tpu.pipeline_mode<synchronous>, transform_indices = @transform_2, window_bounds = array<i64: 1, 16>}, {pipeline_mode = #tpu.pipeline_mode<synchronous>, transform_indices = @transform_3, window_bounds = array<i64: 1, 16>}, {pipeline_mode = #tpu.pipeline_mode<synchronous>, transform_indices = @transform_4, window_bounds = array<i64: 1, 16>}, {transform_indices = @transform_5, window_bounds = array<i64: 1, 64, 16>}, {transform_indices = @transform_6, window_bounds = array<i64: 1, 64, 16>}]} {
    %c0 = arith.constant 0 : index
    %c0_0 = arith.constant 0 : index
    %c0_1 = arith.constant 0 : index
    %c0_2 = arith.constant 0 : index
    %0 = vector.load %arg1[%c0, %c0_0, %c0_1, %c0_2] : memref<1x12x12x16xbf16, #tpu.memory_space<vmem>>, vector<1x8x8x16xbf16>
    %1 = vector.shape_cast %0 : vector<1x8x8x16xbf16> to vector<8x8x16xbf16>
    %2 = vector.shape_cast %1 : vector<8x8x16xbf16> to vector<64x16xbf16>
    %c0_3 = arith.constant 0 : index
    %c0_4 = arith.constant 0 : index
    %3 = vector.load %arg8[%c0_3, %c0_4] : memref<64x400xbf16, #tpu.memory_space<vmem>>, vector<64x16xbf16>
    tpu.vector_store %arg8[%c0_3, %c0_4], %2 {strides = array<i32>} : memref<64x400xbf16, #tpu.memory_space<vmem>>, vector<64x16xbf16>,
    %c0_5 = arith.constant 0 : index
    %c0_6 = arith.constant 0 : index
    %c1 = arith.constant 1 : index
    %c0_7 = arith.constant 0 : index
    %4 = vector.load %arg1[%c0_5, %c0_6, %c1, %c0_7] : memref<1x12x12x16xbf16, #tpu.memory_space<vmem>>, vector<1x8x8x16xbf16>
    %5 = vector.shape_cast %4 : vector<1x8x8x16xbf16> to vector<8x8x16xbf16>
    %6 = vector.shape_cast %5 : vector<8x8x16xbf16> to vector<64x16xbf16>
    %c0_8 = arith.constant 0 : index
    %c16 = arith.constant 16 : index
    %7 = vector.load %arg8[%c0_8, %c16] : memref<64x400xbf16, #tpu.memory_space<vmem>>, vector<64x16xbf16>
    tpu.vector_store %arg8[%c0_8, %c16], %6 {strides = array<i32>} : memref<64x400xbf16, #tpu.memory_space<vmem>>, vector<64x16xbf16>,
    %c0_9 = arith.constant 0 : index
    %c0_10 = arith.constant 0 : index
    %c2 = arith.constant 2 : index
    %c0_11 = arith.constant 0 : index
    %8 = vector.load %arg1[%c0_9, %c0_10, %c2, %c0_11] : memref<1x12x12x16xbf16, #tpu.memory_space<vmem>>, vector<1x8x8x16xbf16>
    %9 = vector.shape_cast %8 : vector<1x8x8x16xbf16> to vector<8x8x16xbf16>
    %10 = vector.shape_cast %9 : vector<8x8x16xbf16> to vector<64x16xbf16>
    %c0_12 = arith.constant 0 : index
    %c32 = arith.constant 32 : index
    %11 = vector.load %arg8[%c0_12, %c32] : memref<64x400xbf16, #tpu.memory_space<vmem>>, vector<64x16xbf16>
    tpu.vector_store %arg8[%c0_12, %c32], %10 {strides = array<i32>} : memref<64x400xbf16, #tpu.memory_space<vmem>>, vector<64x16xbf16>,
    %c0_13 = arith.constant 0 : index
    %c0_14 = arith.constant 0 : index
    %c3 = arith.constant 3 : index
    %c0_15 = arith.constant 0 : index
    %12 = vector.load %arg1[%c0_13, %c0_14, %c3, %c0_15] : memref<1x12x12x16xbf16, #tpu.memory_space<vmem>>, vector<1x8x8x16xbf16>
    %13 = vector.shape_cast %12 : vector<1x8x8x16xbf16> to vector<8x8x16xbf16>
    %14 = vector.shape_cast %13 : vector<8x8x16xbf16> to vector<64x16xbf16>
    %c0_16 = arith.constant 0 : index
    %c48 = arith.constant 48 : index
    %15 = vector.load %arg8[%c0_16, %c48] : memref<64x400xbf16, #tpu.memory_space<vmem>>, vector<64x16xbf16>
    tpu.vector_store %arg8[%c0_16, %c48], %14 {strides = array<i32>} : memref<64x400xbf16, #tpu.memory_space<vmem>>, vector<64x16xbf16>,
    %c0_17 = arith.constant 0 : index
    %c0_18 = arith.constant 0 : index
    %c4 = arith.constant 4 : index
    %c0_19 = arith.constant 0 : index
    %16 = vector.load %arg1[%c0_17, %c0_18, %c4, %c0_19] : memref<1x12x12x16xbf16, #tpu.memory_space<vmem>>, vector<1x8x8x16xbf16>
    %17 = vector.shape_cast %16 : vector<1x8x8x16xbf16> to vector<8x8x16xbf16>
    %18 = vector.shape_cast %17 : vector<8x8x16xbf16> to vector<64x16xbf16>
    %c0_20 = arith.constant 0 : index
    %c64 = arith.constant 64 : index
    %19 = vector.load %arg8[%c0_20, %c64] : memref<64x400xbf16, #tpu.memory_space<vmem>>, vector<64x16xbf16>
    tpu.vector_store %arg8[%c0_20, %c64], %18 {strides = array<i32>} : memref<64x400xbf16, #tpu.memory_space<vmem>>, vector<64x16xbf16>,
    %c0_21 = arith.constant 0 : index
    %c1_22 = arith.constant 1 : index
    %c0_23 = arith.constant 0 : index
    %c0_24 = arith.constant 0 : index
    %20 = vector.load %arg1[%c0_21, %c1_22, %c0_23, %c0_24] : memref<1x12x12x16xbf16, #tpu.memory_space<vmem>>, vector<1x8x8x16xbf16>
    %21 = vector.shape_cast %20 : vector<1x8x8x16xbf16> to vector<8x8x16xbf16>
    %22 = vector.shape_cast %21 : vector<8x8x16xbf16> to vector<64x16xbf16>
    %c0_25 = arith.constant 0 : index
    %c80 = arith.constant 80 : index
    %23 = vector.load %arg8[%c0_25, %c80] : memref<64x400xbf16, #tpu.memory_space<vmem>>, vector<64x16xbf16>
    tpu.vector_store %arg8[%c0_25, %c80], %22 {strides = array<i32>} : memref<64x400xbf16, #tpu.memory_space<vmem>>, vector<64x16xbf16>,
    %c0_26 = arith.constant 0 : index
    %c1_27 = arith.constant 1 : index
    %c1_28 = arith.constant 1 : index
    %c0_29 = arith.constant 0 : index
    %24 = vector.load %arg1[%c0_26, %c1_27, %c1_28, %c0_29] : memref<1x12x12x16xbf16, #tpu.memory_space<vmem>>, vector<1x8x8x16xbf16>
    %25 = vector.shape_cast %24 : vector<1x8x8x16xbf16> to vector<8x8x16xbf16>
    %26 = vector.shape_cast %25 : vector<8x8x16xbf16> to vector<64x16xbf16>
    %c0_30 = arith.constant 0 : index
    %c96 = arith.constant 96 : index
    %27 = vector.load %arg8[%c0_30, %c96] : memref<64x400xbf16, #tpu.memory_space<vmem>>, vector<64x16xbf16>
    tpu.vector_store %arg8[%c0_30, %c96], %26 {strides = array<i32>} : memref<64x400xbf16, #tpu.memory_space<vmem>>, vector<64x16xbf16>,
    %c0_31 = arith.constant 0 : index
    %c1_32 = arith.constant 1 : index
    %c2_33 = arith.constant 2 : index
    %c0_34 = arith.constant 0 : index
    %28 = vector.load %arg1[%c0_31, %c1_32, %c2_33, %c0_34] : memref<1x12x12x16xbf16, #tpu.memory_space<vmem>>, vector<1x8x8x16xbf16>
    %29 = vector.shape_cast %28 : vector<1x8x8x16xbf16> to vector<8x8x16xbf16>
    %30 = vector.shape_cast %29 : vector<8x8x16xbf16> to vector<64x16xbf16>
    %c0_35 = arith.constant 0 : index
    %c112 = arith.constant 112 : index
    %31 = vector.load %arg8[%c0_35, %c112] : memref<64x400xbf16, #tpu.memory_space<vmem>>, vector<64x16xbf16>
    tpu.vector_store %arg8[%c0_35, %c112], %30 {strides = array<i32>} : memref<64x400xbf16, #tpu.memory_space<vmem>>, vector<64x16xbf16>,
    %c0_36 = arith.constant 0 : index
    %c1_37 = arith.constant 1 : index
    %c3_38 = arith.constant 3 : index
    %c0_39 = arith.constant 0 : index
    %32 = vector.load %arg1[%c0_36, %c1_37, %c3_38, %c0_39] : memref<1x12x12x16xbf16, #tpu.memory_space<vmem>>, vector<1x8x8x16xbf16>
    %33 = vector.shape_cast %32 : vector<1x8x8x16xbf16> to vector<8x8x16xbf16>
    %34 = vector.shape_cast %33 : vector<8x8x16xbf16> to vector<64x16xbf16>
    %c0_40 = arith.constant 0 : index
    %c128 = arith.constant 128 : index
    %35 = vector.load %arg8[%c0_40, %c128] : memref<64x400xbf16, #tpu.memory_space<vmem>>, vector<64x16xbf16>
    tpu.vector_store %arg8[%c0_40, %c128], %34 {strides = array<i32>} : memref<64x400xbf16, #tpu.memory_space<vmem>>, vector<64x16xbf16>,
    %c0_41 = arith.constant 0 : index
    %c1_42 = arith.constant 1 : index
    %c4_43 = arith.constant 4 : index
    %c0_44 = arith.constant 0 : index
    %36 = vector.load %arg1[%c0_41, %c1_42, %c4_43, %c0_44] : memref<1x12x12x16xbf16, #tpu.memory_space<vmem>>, vector<1x8x8x16xbf16>
    %37 = vector.shape_cast %36 : vector<1x8x8x16xbf16> to vector<8x8x16xbf16>
    %38 = vector.shape_cast %37 : vector<8x8x16xbf16> to vector<64x16xbf16>
    %c0_45 = arith.constant 0 : index
    %c144 = arith.constant 144 : index
    %39 = vector.load %arg8[%c0_45, %c144] : memref<64x400xbf16, #tpu.memory_space<vmem>>, vector<64x16xbf16>
    tpu.vector_store %arg8[%c0_45, %c144], %38 {strides = array<i32>} : memref<64x400xbf16, #tpu.memory_space<vmem>>, vector<64x16xbf16>,
    %c0_46 = arith.constant 0 : index
    %c2_47 = arith.constant 2 : index
    %c0_48 = arith.constant 0 : index
    %c0_49 = arith.constant 0 : index
    %40 = vector.load %arg1[%c0_46, %c2_47, %c0_48, %c0_49] : memref<1x12x12x16xbf16, #tpu.memory_space<vmem>>, vector<1x8x8x16xbf16>
    %41 = vector.shape_cast %40 : vector<1x8x8x16xbf16> to vector<8x8x16xbf16>
    %42 = vector.shape_cast %41 : vector<8x8x16xbf16> to vector<64x16xbf16>
    %c0_50 = arith.constant 0 : index
    %c160 = arith.constant 160 : index
    %43 = vector.load %arg8[%c0_50, %c160] : memref<64x400xbf16, #tpu.memory_space<vmem>>, vector<64x16xbf16>
    tpu.vector_store %arg8[%c0_50, %c160], %42 {strides = array<i32>} : memref<64x400xbf16, #tpu.memory_space<vmem>>, vector<64x16xbf16>,
    %c0_51 = arith.constant 0 : index
    %c2_52 = arith.constant 2 : index
    %c1_53 = arith.constant 1 : index
    %c0_54 = arith.constant 0 : index
    %44 = vector.load %arg1[%c0_51, %c2_52, %c1_53, %c0_54] : memref<1x12x12x16xbf16, #tpu.memory_space<vmem>>, vector<1x8x8x16xbf16>
    %45 = vector.shape_cast %44 : vector<1x8x8x16xbf16> to vector<8x8x16xbf16>
    %46 = vector.shape_cast %45 : vector<8x8x16xbf16> to vector<64x16xbf16>
    %c0_55 = arith.constant 0 : index
    %c176 = arith.constant 176 : index
    %47 = vector.load %arg8[%c0_55, %c176] : memref<64x400xbf16, #tpu.memory_space<vmem>>, vector<64x16xbf16>
    tpu.vector_store %arg8[%c0_55, %c176], %46 {strides = array<i32>} : memref<64x400xbf16, #tpu.memory_space<vmem>>, vector<64x16xbf16>,
    %c0_56 = arith.constant 0 : index
    %c2_57 = arith.constant 2 : index
    %c2_58 = arith.constant 2 : index
    %c0_59 = arith.constant 0 : index
    %48 = vector.load %arg1[%c0_56, %c2_57, %c2_58, %c0_59] : memref<1x12x12x16xbf16, #tpu.memory_space<vmem>>, vector<1x8x8x16xbf16>
    %49 = vector.shape_cast %48 : vector<1x8x8x16xbf16> to vector<8x8x16xbf16>
    %50 = vector.shape_cast %49 : vector<8x8x16xbf16> to vector<64x16xbf16>
    %c0_60 = arith.constant 0 : index
    %c192 = arith.constant 192 : index
    %51 = vector.load %arg8[%c0_60, %c192] : memref<64x400xbf16, #tpu.memory_space<vmem>>, vector<64x16xbf16>
    tpu.vector_store %arg8[%c0_60, %c192], %50 {strides = array<i32>} : memref<64x400xbf16, #tpu.memory_space<vmem>>, vector<64x16xbf16>,
    %c0_61 = arith.constant 0 : index
    %c2_62 = arith.constant 2 : index
    %c3_63 = arith.constant 3 : index
    %c0_64 = arith.constant 0 : index
    %52 = vector.load %arg1[%c0_61, %c2_62, %c3_63, %c0_64] : memref<1x12x12x16xbf16, #tpu.memory_space<vmem>>, vector<1x8x8x16xbf16>
    %53 = vector.shape_cast %52 : vector<1x8x8x16xbf16> to vector<8x8x16xbf16>
    %54 = vector.shape_cast %53 : vector<8x8x16xbf16> to vector<64x16xbf16>
    %c0_65 = arith.constant 0 : index
    %c208 = arith.constant 208 : index
    %55 = vector.load %arg8[%c0_65, %c208] : memref<64x400xbf16, #tpu.memory_space<vmem>>, vector<64x16xbf16>
    tpu.vector_store %arg8[%c0_65, %c208], %54 {strides = array<i32>} : memref<64x400xbf16, #tpu.memory_space<vmem>>, vector<64x16xbf16>,
    %c0_66 = arith.constant 0 : index
    %c2_67 = arith.constant 2 : index
    %c4_68 = arith.constant 4 : index
    %c0_69 = arith.constant 0 : index
    %56 = vector.load %arg1[%c0_66, %c2_67, %c4_68, %c0_69] : memref<1x12x12x16xbf16, #tpu.memory_space<vmem>>, vector<1x8x8x16xbf16>
    %57 = vector.shape_cast %56 : vector<1x8x8x16xbf16> to vector<8x8x16xbf16>
    %58 = vector.shape_cast %57 : vector<8x8x16xbf16> to vector<64x16xbf16>
    %c0_70 = arith.constant 0 : index
    %c224 = arith.constant 224 : index
    %59 = vector.load %arg8[%c0_70, %c224] : memref<64x400xbf16, #tpu.memory_space<vmem>>, vector<64x16xbf16>
    tpu.vector_store %arg8[%c0_70, %c224], %58 {strides = array<i32>} : memref<64x400xbf16, #tpu.memory_space<vmem>>, vector<64x16xbf16>,
    %c0_71 = arith.constant 0 : index
    %c3_72 = arith.constant 3 : index
    %c0_73 = arith.constant 0 : index
    %c0_74 = arith.constant 0 : index
    %60 = vector.load %arg1[%c0_71, %c3_72, %c0_73, %c0_74] : memref<1x12x12x16xbf16, #tpu.memory_space<vmem>>, vector<1x8x8x16xbf16>
    %61 = vector.shape_cast %60 : vector<1x8x8x16xbf16> to vector<8x8x16xbf16>
    %62 = vector.shape_cast %61 : vector<8x8x16xbf16> to vector<64x16xbf16>
    %c0_75 = arith.constant 0 : index
    %c240 = arith.constant 240 : index
    %63 = vector.load %arg8[%c0_75, %c240] : memref<64x400xbf16, #tpu.memory_space<vmem>>, vector<64x16xbf16>
    tpu.vector_store %arg8[%c0_75, %c240], %62 {strides = array<i32>} : memref<64x400xbf16, #tpu.memory_space<vmem>>, vector<64x16xbf16>,
    %c0_76 = arith.constant 0 : index
    %c3_77 = arith.constant 3 : index
    %c1_78 = arith.constant 1 : index
    %c0_79 = arith.constant 0 : index
    %64 = vector.load %arg1[%c0_76, %c3_77, %c1_78, %c0_79] : memref<1x12x12x16xbf16, #tpu.memory_space<vmem>>, vector<1x8x8x16xbf16>
    %65 = vector.shape_cast %64 : vector<1x8x8x16xbf16> to vector<8x8x16xbf16>
    %66 = vector.shape_cast %65 : vector<8x8x16xbf16> to vector<64x16xbf16>
    %c0_80 = arith.constant 0 : index
    %c256 = arith.constant 256 : index
    %67 = vector.load %arg8[%c0_80, %c256] : memref<64x400xbf16, #tpu.memory_space<vmem>>, vector<64x16xbf16>
    tpu.vector_store %arg8[%c0_80, %c256], %66 {strides = array<i32>} : memref<64x400xbf16, #tpu.memory_space<vmem>>, vector<64x16xbf16>,
    %c0_81 = arith.constant 0 : index
    %c3_82 = arith.constant 3 : index
    %c2_83 = arith.constant 2 : index
    %c0_84 = arith.constant 0 : index
    %68 = vector.load %arg1[%c0_81, %c3_82, %c2_83, %c0_84] : memref<1x12x12x16xbf16, #tpu.memory_space<vmem>>, vector<1x8x8x16xbf16>
    %69 = vector.shape_cast %68 : vector<1x8x8x16xbf16> to vector<8x8x16xbf16>
    %70 = vector.shape_cast %69 : vector<8x8x16xbf16> to vector<64x16xbf16>
    %c0_85 = arith.constant 0 : index
    %c272 = arith.constant 272 : index
    %71 = vector.load %arg8[%c0_85, %c272] : memref<64x400xbf16, #tpu.memory_space<vmem>>, vector<64x16xbf16>
    tpu.vector_store %arg8[%c0_85, %c272], %70 {strides = array<i32>} : memref<64x400xbf16, #tpu.memory_space<vmem>>, vector<64x16xbf16>,
    %c0_86 = arith.constant 0 : index
    %c3_87 = arith.constant 3 : index
    %c3_88 = arith.constant 3 : index
    %c0_89 = arith.constant 0 : index
    %72 = vector.load %arg1[%c0_86, %c3_87, %c3_88, %c0_89] : memref<1x12x12x16xbf16, #tpu.memory_space<vmem>>, vector<1x8x8x16xbf16>
    %73 = vector.shape_cast %72 : vector<1x8x8x16xbf16> to vector<8x8x16xbf16>
    %74 = vector.shape_cast %73 : vector<8x8x16xbf16> to vector<64x16xbf16>
    %c0_90 = arith.constant 0 : index
    %c288 = arith.constant 288 : index
    %75 = vector.load %arg8[%c0_90, %c288] : memref<64x400xbf16, #tpu.memory_space<vmem>>, vector<64x16xbf16>
    tpu.vector_store %arg8[%c0_90, %c288], %74 {strides = array<i32>} : memref<64x400xbf16, #tpu.memory_space<vmem>>, vector<64x16xbf16>,
    %c0_91 = arith.constant 0 : index
    %c3_92 = arith.constant 3 : index
    %c4_93 = arith.constant 4 : index
    %c0_94 = arith.constant 0 : index
    %76 = vector.load %arg1[%c0_91, %c3_92, %c4_93, %c0_94] : memref<1x12x12x16xbf16, #tpu.memory_space<vmem>>, vector<1x8x8x16xbf16>
    %77 = vector.shape_cast %76 : vector<1x8x8x16xbf16> to vector<8x8x16xbf16>
    %78 = vector.shape_cast %77 : vector<8x8x16xbf16> to vector<64x16xbf16>
    %c0_95 = arith.constant 0 : index
    %c304 = arith.constant 304 : index
    %79 = vector.load %arg8[%c0_95, %c304] : memref<64x400xbf16, #tpu.memory_space<vmem>>, vector<64x16xbf16>
    tpu.vector_store %arg8[%c0_95, %c304], %78 {strides = array<i32>} : memref<64x400xbf16, #tpu.memory_space<vmem>>, vector<64x16xbf16>,
    %c0_96 = arith.constant 0 : index
    %c4_97 = arith.constant 4 : index
    %c0_98 = arith.constant 0 : index
    %c0_99 = arith.constant 0 : index
    %80 = vector.load %arg1[%c0_96, %c4_97, %c0_98, %c0_99] : memref<1x12x12x16xbf16, #tpu.memory_space<vmem>>, vector<1x8x8x16xbf16>
    %81 = vector.shape_cast %80 : vector<1x8x8x16xbf16> to vector<8x8x16xbf16>
    %82 = vector.shape_cast %81 : vector<8x8x16xbf16> to vector<64x16xbf16>
    %c0_100 = arith.constant 0 : index
    %c320 = arith.constant 320 : index
    %83 = vector.load %arg8[%c0_100, %c320] : memref<64x400xbf16, #tpu.memory_space<vmem>>, vector<64x16xbf16>
    tpu.vector_store %arg8[%c0_100, %c320], %82 {strides = array<i32>} : memref<64x400xbf16, #tpu.memory_space<vmem>>, vector<64x16xbf16>,
    %c0_101 = arith.constant 0 : index
    %c4_102 = arith.constant 4 : index
    %c1_103 = arith.constant 1 : index
    %c0_104 = arith.constant 0 : index
    %84 = vector.load %arg1[%c0_101, %c4_102, %c1_103, %c0_104] : memref<1x12x12x16xbf16, #tpu.memory_space<vmem>>, vector<1x8x8x16xbf16>
    %85 = vector.shape_cast %84 : vector<1x8x8x16xbf16> to vector<8x8x16xbf16>
    %86 = vector.shape_cast %85 : vector<8x8x16xbf16> to vector<64x16xbf16>
    %c0_105 = arith.constant 0 : index
    %c336 = arith.constant 336 : index
    %87 = vector.load %arg8[%c0_105, %c336] : memref<64x400xbf16, #tpu.memory_space<vmem>>, vector<64x16xbf16>
    tpu.vector_store %arg8[%c0_105, %c336], %86 {strides = array<i32>} : memref<64x400xbf16, #tpu.memory_space<vmem>>, vector<64x16xbf16>,
    %c0_106 = arith.constant 0 : index
    %c4_107 = arith.constant 4 : index
    %c2_108 = arith.constant 2 : index
    %c0_109 = arith.constant 0 : index
    %88 = vector.load %arg1[%c0_106, %c4_107, %c2_108, %c0_109] : memref<1x12x12x16xbf16, #tpu.memory_space<vmem>>, vector<1x8x8x16xbf16>
    %89 = vector.shape_cast %88 : vector<1x8x8x16xbf16> to vector<8x8x16xbf16>
    %90 = vector.shape_cast %89 : vector<8x8x16xbf16> to vector<64x16xbf16>
    %c0_110 = arith.constant 0 : index
    %c352 = arith.constant 352 : index
    %91 = vector.load %arg8[%c0_110, %c352] : memref<64x400xbf16, #tpu.memory_space<vmem>>, vector<64x16xbf16>
    tpu.vector_store %arg8[%c0_110, %c352], %90 {strides = array<i32>} : memref<64x400xbf16, #tpu.memory_space<vmem>>, vector<64x16xbf16>,
    %c0_111 = arith.constant 0 : index
    %c4_112 = arith.constant 4 : index
    %c3_113 = arith.constant 3 : index
    %c0_114 = arith.constant 0 : index
    %92 = vector.load %arg1[%c0_111, %c4_112, %c3_113, %c0_114] : memref<1x12x12x16xbf16, #tpu.memory_space<vmem>>, vector<1x8x8x16xbf16>
    %93 = vector.shape_cast %92 : vector<1x8x8x16xbf16> to vector<8x8x16xbf16>
    %94 = vector.shape_cast %93 : vector<8x8x16xbf16> to vector<64x16xbf16>
    %c0_115 = arith.constant 0 : index
    %c368 = arith.constant 368 : index
    %95 = vector.load %arg8[%c0_115, %c368] : memref<64x400xbf16, #tpu.memory_space<vmem>>, vector<64x16xbf16>
    tpu.vector_store %arg8[%c0_115, %c368], %94 {strides = array<i32>} : memref<64x400xbf16, #tpu.memory_space<vmem>>, vector<64x16xbf16>,
    %c0_116 = arith.constant 0 : index
    %c4_117 = arith.constant 4 : index
    %c4_118 = arith.constant 4 : index
    %c0_119 = arith.constant 0 : index
    %96 = vector.load %arg1[%c0_116, %c4_117, %c4_118, %c0_119] : memref<1x12x12x16xbf16, #tpu.memory_space<vmem>>, vector<1x8x8x16xbf16>
    %97 = vector.shape_cast %96 : vector<1x8x8x16xbf16> to vector<8x8x16xbf16>
    %98 = vector.shape_cast %97 : vector<8x8x16xbf16> to vector<64x16xbf16>
    %c0_120 = arith.constant 0 : index
    %c384 = arith.constant 384 : index
    %99 = vector.load %arg8[%c0_120, %c384] : memref<64x400xbf16, #tpu.memory_space<vmem>>, vector<64x16xbf16>
    tpu.vector_store %arg8[%c0_120, %c384], %98 {strides = array<i32>} : memref<64x400xbf16, #tpu.memory_space<vmem>>, vector<64x16xbf16>,
    %c0_121 = arith.constant 0 : index
    %c0_122 = arith.constant 0 : index
    %100 = vector.load %arg8[%c0_121, %c0_122] : memref<64x400xbf16, #tpu.memory_space<vmem>>, vector<64x400xbf16>
    %c0_123 = arith.constant 0 : index
    %c0_124 = arith.constant 0 : index
    %101 = vector.load %arg2[%c0_123, %c0_124] : memref<400x16xbf16, #tpu.memory_space<vmem>>, vector<400x16xbf16>
    %cst = arith.constant dense<0.000000e+00> : vector<64x16xf32>
    %102 = tpu.matmul %100, %101, %cst {dimension_numbers = #tpu.dot_dimension_numbers<[1], [0], [0], [1], [0, 0, 1, 1], [], []>} : vector<64x400xbf16>, vector<400x16xbf16>, vector<64x16xf32> -> vector<64x16xf32>
    %c0_125 = arith.constant 0 : index
    %c0_126 = arith.constant 0 : index
    %103 = vector.load %arg3[%c0_125, %c0_126] : memref<1x16xf32, #tpu.memory_space<vmem>>, vector<1x16xf32>
    %104 = vector.broadcast %103 : vector<1x16xf32> to vector<64x16xf32>
    %105 = arith.addf %102, %104 : vector<64x16xf32>
    %cst_127 = arith.constant dense<0.000000e+00> : vector<16xf32>
    %106 = vector.multi_reduction <add>, %105, %cst_127 [0] : vector<64x16xf32> to vector<16xf32>
    %107 = vector.shape_cast %106 : vector<16xf32> to vector<1x16xf32>
    %cst_128 = arith.constant 6.400000e+01 : f32
    %108 = vector.broadcast %cst_128 : f32 to vector<1x16xf32>
    %109 = arith.divf %107, %108 : vector<1x16xf32>
    %110 = vector.broadcast %109 : vector<1x16xf32> to vector<64x16xf32>
    %111 = arith.subf %105, %110 : vector<64x16xf32>
    %112 = arith.mulf %111, %111 : vector<64x16xf32>
    %cst_129 = arith.constant dense<0.000000e+00> : vector<16xf32>
    %113 = vector.multi_reduction <add>, %112, %cst_129 [0] : vector<64x16xf32> to vector<16xf32>
    %114 = vector.shape_cast %113 : vector<16xf32> to vector<1x16xf32>
    %cst_130 = arith.constant 6.400000e+01 : f32
    %115 = vector.broadcast %cst_130 : f32 to vector<1x16xf32>
    %116 = arith.divf %114, %115 : vector<1x16xf32>
    %117 = vector.broadcast %109 : vector<1x16xf32> to vector<64x16xf32>
    %118 = arith.subf %105, %117 : vector<64x16xf32>
    %cst_131 = arith.constant 9.99999974E-6 : f32
    %119 = vector.broadcast %cst_131 : f32 to vector<1x16xf32>
    %120 = arith.addf %116, %119 : vector<1x16xf32>
    %121 = math.rsqrt %120 : vector<1x16xf32>
    %122 = vector.broadcast %121 : vector<1x16xf32> to vector<64x16xf32>
    %123 = arith.mulf %118, %122 : vector<64x16xf32>
    %c0_132 = arith.constant 0 : index
    %c0_133 = arith.constant 0 : index
    %124 = vector.load %arg4[%c0_132, %c0_133] : memref<1x16xf32, #tpu.memory_space<vmem>>, vector<1x16xf32>
    %125 = vector.broadcast %124 : vector<1x16xf32> to vector<64x16xf32>
    %126 = arith.mulf %123, %125 : vector<64x16xf32>
    %c0_134 = arith.constant 0 : index
    %c0_135 = arith.constant 0 : index
    %127 = vector.load %arg5[%c0_134, %c0_135] : memref<1x16xf32, #tpu.memory_space<vmem>>, vector<1x16xf32>
    %128 = vector.broadcast %127 : vector<1x16xf32> to vector<64x16xf32>
    %129 = arith.addf %126, %128 : vector<64x16xf32>
    %cst_136 = arith.constant 5.000000e-01 : f32
    %130 = vector.broadcast %cst_136 : f32 to vector<64x16xf32>
    %131 = arith.mulf %130, %129 : vector<64x16xf32>
    %cst_137 = arith.constant 4.471500e-02 : f32
    %132 = vector.broadcast %cst_137 : f32 to vector<64x16xf32>
    %133 = arith.mulf %132, %129 : vector<64x16xf32>
    %134 = arith.mulf %133, %129 : vector<64x16xf32>
    %135 = arith.mulf %134, %129 : vector<64x16xf32>
    %136 = arith.addf %129, %135 : vector<64x16xf32>
    %cst_138 = arith.constant 0.797884583 : f32
    %137 = vector.broadcast %cst_138 : f32 to vector<64x16xf32>
    %138 = arith.mulf %137, %136 : vector<64x16xf32>
    %139 = math.tanh %138 : vector<64x16xf32>
    %cst_139 = arith.constant 1.000000e+00 : f32
    %140 = vector.broadcast %cst_139 : f32 to vector<64x16xf32>
    %141 = arith.addf %140, %139 : vector<64x16xf32>
    %142 = arith.mulf %131, %141 : vector<64x16xf32>
    %c0_140 = arith.constant 0 : index
    %c0_141 = arith.constant 0 : index
    %c0_142 = arith.constant 0 : index
    %143 = vector.load %arg6[%c0_140, %c0_141, %c0_142] : memref<1x64x16xbf16, #tpu.memory_space<vmem>>, vector<1x64x16xbf16>
    %144 = vector.shape_cast %143 : vector<1x64x16xbf16> to vector<64x16xbf16>
    %145 = arith.extf %144 : vector<64x16xbf16> to vector<64x16xf32>
    %146 = arith.addf %142, %145 : vector<64x16xf32>
    %cst_143 = arith.constant 5.000000e-01 : f32
    %147 = vector.broadcast %cst_143 : f32 to vector<64x16xf32>
    %148 = arith.mulf %147, %146 : vector<64x16xf32>
    %cst_144 = arith.constant 4.471500e-02 : f32
    %149 = vector.broadcast %cst_144 : f32 to vector<64x16xf32>
    %150 = arith.mulf %149, %146 : vector<64x16xf32>
    %151 = arith.mulf %150, %146 : vector<64x16xf32>
    %152 = arith.mulf %151, %146 : vector<64x16xf32>
    %153 = arith.addf %146, %152 : vector<64x16xf32>
    %cst_145 = arith.constant 0.797884583 : f32
    %154 = vector.broadcast %cst_145 : f32 to vector<64x16xf32>
    %155 = arith.mulf %154, %153 : vector<64x16xf32>
    %156 = math.tanh %155 : vector<64x16xf32>
    %cst_146 = arith.constant 1.000000e+00 : f32
    %157 = vector.broadcast %cst_146 : f32 to vector<64x16xf32>
    %158 = arith.addf %157, %156 : vector<64x16xf32>
    %159 = arith.mulf %148, %158 : vector<64x16xf32>
    %160 = arith.truncf %159 : vector<64x16xf32> to vector<64x16xbf16>
    %c0_147 = arith.constant 0 : index
    %c0_148 = arith.constant 0 : index
    %c0_149 = arith.constant 0 : index
    %161 = vector.load %arg7[%c0_147, %c0_148, %c0_149] : memref<1x64x16xbf16, #tpu.memory_space<vmem>>, vector<1x64x16xbf16>
    %162 = vector.shape_cast %161 : vector<1x64x16xbf16> to vector<64x16xbf16>
    %163 = vector.shape_cast %160 : vector<64x16xbf16> to vector<1x64x16xbf16>
    tpu.vector_store %arg7[%c0_147, %c0_148, %c0_149], %163 {strides = array<i32>} : memref<1x64x16xbf16, #tpu.memory_space<vmem>>, vector<1x64x16xbf16>,
    return
  }
  func.func @transform_0(%arg0: i32) -> (i32, i32, i32, i32) {
    %c0_i32 = arith.constant 0 : i32
    %c0_i32_0 = arith.constant 0 : i32
    %c0_i32_1 = arith.constant 0 : i32
    %c0_i32_2 = arith.constant 0 : i32
    return %arg0, %c0_i32, %c0_i32_0, %c0_i32_1 : i32, i32, i32, i32
  }
  func.func @transform_1(%arg0: i32) -> (i32, i32) {
    %c0_i32 = arith.constant 0 : i32
    %c0_i32_0 = arith.constant 0 : i32
    %c0_i32_1 = arith.constant 0 : i32
    return %c0_i32, %c0_i32_0 : i32, i32
  }
  func.func @transform_2(%arg0: i32) -> (i32, i32) {
    %c0_i32 = arith.constant 0 : i32
    %c0_i32_0 = arith.constant 0 : i32
    %c0_i32_1 = arith.constant 0 : i32
    return %c0_i32, %c0_i32_0 : i32, i32
  }
  func.func @transform_3(%arg0: i32) -> (i32, i32) {
    %c0_i32 = arith.constant 0 : i32
    %c0_i32_0 = arith.constant 0 : i32
    %c0_i32_1 = arith.constant 0 : i32
    return %c0_i32, %c0_i32_0 : i32, i32
  }
  func.func @transform_4(%arg0: i32) -> (i32, i32) {
    %c0_i32 = arith.constant 0 : i32
    %c0_i32_0 = arith.constant 0 : i32
    %c0_i32_1 = arith.constant 0 : i32
    return %c0_i32, %c0_i32_0 : i32, i32
  }
  func.func @transform_5(%arg0: i32) -> (i32, i32, i32) {
    %c0_i32 = arith.constant 0 : i32
    %c0_i32_0 = arith.constant 0 : i32
    %c0_i32_1 = arith.constant 0 : i32
    return %arg0, %c0_i32, %c0_i32_0 : i32, i32, i32
  }
  func.func @transform_6(%arg0: i32) -> (i32, i32, i32) {
    %c0_i32 = arith.constant 0 : i32
    %c0_i32_0 = arith.constant 0 : i32
    %c0_i32_1 = arith.constant 0 : i32
    return %arg0, %c0_i32, %c0_i32_0 : i32, i32, i32
  }
}

</mosaic_0001>

<llo_original>
// kernel: segment_encoder_forward.5
$region0: #{segment_encoder_forward.5}
  #allocation0 [shape = 'u32[]', space=smem, size = 0x4, offset = 0x4, fixed_abs, tag = 'smem constant byte address 0x4 - core index']
  #allocation1 [shape = 'u32[144,128]{1,0:T(1,128)}', space=vmem, size = 0x12000, scoped, tag = 'internal scratch']
  %s0 = inlined_call_operand.vmem [shape: f32[512,1], index: 0, kind: input, shape index: {}]
  %s1 = inlined_call_operand.vmem [shape: f32[1,8], index: 1, kind: input, shape index: {}]
  %s2 = inlined_call_operand.vmem [shape: f32[1,8], index: 2, kind: input, shape index: {}]
  %s3 = inlined_call_operand.vmem [shape: bf16[512,8], index: 3, kind: output, shape index: {}]
  %s4 = sld [smem:[#allocation0]]
  $region22: #{segment_encoder_forward.5} parent=0
    _
  %s6 = ssub.s32 1, %s4
  %s7 = scalar_select 0, %s6, %s4
  // Predicated region
  $region2: #{segment_encoder_forward.5} parent=0 // pred_check
    _
  $region3: #{segment_encoder_forward.5} parent=0 // pred_check_branch
    %9 = sbr.rel (0) target = $region5
  $region4: #{segment_encoder_forward.5} parent=0 // pred_region
    _
  $region5: #{segment_encoder_forward.5} parent=0 // pred_fallthru
    _
  // Predicated region
  $region6: #{segment_encoder_forward.5} parent=0 // pred_check
    _
  $region7: #{segment_encoder_forward.5} parent=0 // pred_check_branch
    %11 = sbr.rel (0) target = $region9
  $region8: #{segment_encoder_forward.5} parent=0 // pred_region
    _
  $region9: #{segment_encoder_forward.5} parent=0 // pred_fallthru
    _
  // Predicated region
  $region10: #{segment_encoder_forward.5} parent=0 // pred_check
    _
  $region11: #{segment_encoder_forward.5} parent=0 // pred_check_branch
    %13 = sbr.rel (0) target = $region13
  $region12: #{segment_encoder_forward.5} parent=0 // pred_region
    _
  $region13: #{segment_encoder_forward.5} parent=0 // pred_fallthru
    _
  %v14 = vld [vmem:[%s0] sm:$0xff]
  %v15 = vld [vmem:[%s0 + $0x8] sm:$0xff]
  %v16 = vld [vmem:[%s0 + $0x10] sm:$0xff]
  %v17 = vld [vmem:[%s0 + $0x18] sm:$0xff]
  %v18 = vld [vmem:[%s0 + $0x20] sm:$0xff]
  %v19 = vld [vmem:[%s0 + $0x28] sm:$0xff]
  %v20 = vld [vmem:[%s0 + $0x30] sm:$0xff]
  %v21 = vld [vmem:[%s0 + $0x38] sm:$0xff]
  %v22 = vld [vmem:[%s0 + $0x40] sm:$0xff]
  %v23 = vld [vmem:[%s0 + $0x48] sm:$0xff]
  %v24 = vld [vmem:[%s0 + $0x50] sm:$0xff]
  %v25 = vld [vmem:[%s0 + $0x58] sm:$0xff]
  %v26 = vld [vmem:[%s0 + $0x60] sm:$0xff]
  %v27 = vld [vmem:[%s0 + $0x68] sm:$0xff]
  %v28 = vld [vmem:[%s0 + $0x70] sm:$0xff]
  %v29 = vld [vmem:[%s0 + $0x78] sm:$0xff]
  %v30 = vld [vmem:[%s0 + $0x80] sm:$0xff]
  %v31 = vld [vmem:[%s0 + $0x88] sm:$0xff]
  %v32 = vld [vmem:[%s0 + $0x90] sm:$0xff]
  %v33 = vld [vmem:[%s0 + $0x98] sm:$0xff]
  %v34 = vld [vmem:[%s0 + $0xa0] sm:$0xff]
  %v35 = vld [vmem:[%s0 + $0xa8] sm:$0xff]
  %v36 = vld [vmem:[%s0 + $0xb0] sm:$0xff]
  %v37 = vld [vmem:[%s0 + $0xb8] sm:$0xff]
  %v38 = vld [vmem:[%s0 + $0xc0] sm:$0xff]
  %v39 = vld [vmem:[%s0 + $0xc8] sm:$0xff]
  %v40 = vld [vmem:[%s0 + $0xd0] sm:$0xff]
  %v41 = vld [vmem:[%s0 + $0xd8] sm:$0xff]
  %v42 = vld [vmem:[%s0 + $0xe0] sm:$0xff]
  %v43 = vld [vmem:[%s0 + $0xe8] sm:$0xff]
  %v44 = vld [vmem:[%s0 + $0xf0] sm:$0xff]
  %v45 = vld [vmem:[%s0 + $0xf8] sm:$0xff]
  %v46 = vld [vmem:[%s0 + $0x100] sm:$0xff]
  %v47 = vld [vmem:[%s0 + $0x108] sm:$0xff]
  %v48 = vld [vmem:[%s0 + $0x110] sm:$0xff]
  %v49 = vld [vmem:[%s0 + $0x118] sm:$0xff]
  %v50 = vld [vmem:[%s0 + $0x120] sm:$0xff]
  %v51 = vld [vmem:[%s0 + $0x128] sm:$0xff]
  %v52 = vld [vmem:[%s0 + $0x130] sm:$0xff]
  %v53 = vld [vmem:[%s0 + $0x138] sm:$0xff]
  %v54 = vld [vmem:[%s0 + $0x140] sm:$0xff]
  %v55 = vld [vmem:[%s0 + $0x148] sm:$0xff]
  %v56 = vld [vmem:[%s0 + $0x150] sm:$0xff]
  %v57 = vld [vmem:[%s0 + $0x158] sm:$0xff]
  %v58 = vld [vmem:[%s0 + $0x160] sm:$0xff]
  %v59 = vld [vmem:[%s0 + $0x168] sm:$0xff]
  %v60 = vld [vmem:[%s0 + $0x170] sm:$0xff]
  %v61 = vld [vmem:[%s0 + $0x178] sm:$0xff]
  %v62 = vld [vmem:[%s0 + $0x180] sm:$0xff]
  %v63 = vld [vmem:[%s0 + $0x188] sm:$0xff]
  %v64 = vld [vmem:[%s0 + $0x190] sm:$0xff]
  %v65 = vld [vmem:[%s0 + $0x198] sm:$0xff]
  %v66 = vld [vmem:[%s0 + $0x1a0] sm:$0xff]
  %v67 = vld [vmem:[%s0 + $0x1a8] sm:$0xff]
  %v68 = vld [vmem:[%s0 + $0x1b0] sm:$0xff]
  %v69 = vld [vmem:[%s0 + $0x1b8] sm:$0xff]
  %v70 = vld [vmem:[%s0 + $0x1c0] sm:$0xff]
  %v71 = vld [vmem:[%s0 + $0x1c8] sm:$0xff]
  %v72 = vld [vmem:[%s0 + $0x1d0] sm:$0xff]
  %v73 = vld [vmem:[%s0 + $0x1d8] sm:$0xff]
  %v74 = vld [vmem:[%s0 + $0x1e0] sm:$0xff]
  %v75 = vld [vmem:[%s0 + $0x1e8] sm:$0xff]
  %v76 = vld [vmem:[%s0 + $0x1f0] sm:$0xff]
  %v77 = vld [vmem:[%s0 + $0x1f8] sm:$0xff]
  %v78 = vld [vmem:[%s1] sm:$0x1]
  %v79 = vld [vmem:[%s2] sm:$0x1]
  %v81 = vlaneseq
  %v82 = vshrl.u32 %v81, 7
  %v83 = vsub.s32 0, %v82
  %v84 = vrot.slane %v79, %v83
  %vm86 = vcmask 7168
  %v88 = vsel %vm86, %v14, 0
  %v91 = vsel %vm86, %v15, 0
  %v94 = vsel %vm86, %v16, 0
  %v97 = vsel %vm86, %v17, 0
  %v100 = vsel %vm86, %v18, 0
  %v103 = vsel %vm86, %v19, 0
  %v106 = vsel %vm86, %v20, 0
  %v109 = vsel %vm86, %v21, 0
  %v112 = vsel %vm86, %v22, 0
  %v115 = vsel %vm86, %v23, 0
  %v118 = vsel %vm86, %v24, 0
  %v121 = vsel %vm86, %v25, 0
  %v124 = vsel %vm86, %v26, 0
  %v127 = vsel %vm86, %v27, 0
  %v130 = vsel %vm86, %v28, 0
  %v133 = vsel %vm86, %v29, 0
  %v136 = vsel %vm86, %v30, 0
  %v139 = vsel %vm86, %v31, 0
  %v142 = vsel %vm86, %v32, 0
  %v145 = vsel %vm86, %v33, 0
  %v148 = vsel %vm86, %v34, 0
  %v151 = vsel %vm86, %v35, 0
  %v154 = vsel %vm86, %v36, 0
  %v157 = vsel %vm86, %v37, 0
  %v160 = vsel %vm86, %v38, 0
  %v163 = vsel %vm86, %v39, 0
  %v166 = vsel %vm86, %v40, 0
  %v169 = vsel %vm86, %v41, 0
  %v172 = vsel %vm86, %v42, 0
  %v175 = vsel %vm86, %v43, 0
  %v178 = vsel %vm86, %v44, 0
  %v181 = vsel %vm86, %v45, 0
  %v184 = vsel %vm86, %v46, 0
  %v187 = vsel %vm86, %v47, 0
  %v190 = vsel %vm86, %v48, 0
  %v193 = vsel %vm86, %v49, 0
  %v196 = vsel %vm86, %v50, 0
  %v199 = vsel %vm86, %v51, 0
  %v202 = vsel %vm86, %v52, 0
  %v205 = vsel %vm86, %v53, 0
  %v208 = vsel %vm86, %v54, 0
  %v211 = vsel %vm86, %v55, 0
  %v214 = vsel %vm86, %v56, 0
  %v217 = vsel %vm86, %v57, 0
  %v220 = vsel %vm86, %v58, 0
  %v223 = vsel %vm86, %v59, 0
  %v226 = vsel %vm86, %v60, 0
  %v229 = vsel %vm86, %v61, 0
  %v232 = vsel %vm86, %v62, 0
  %v235 = vsel %vm86, %v63, 0
  %v238 = vsel %vm86, %v64, 0
  %v241 = vsel %vm86, %v65, 0
  %v244 = vsel %vm86, %v66, 0
  %v247 = vsel %vm86, %v67, 0
  %v250 = vsel %vm86, %v68, 0
  %v253 = vsel %vm86, %v69, 0
  %v256 = vsel %vm86, %v70, 0
  %v259 = vsel %vm86, %v71, 0
  %v262 = vsel %vm86, %v72, 0
  %v265 = vsel %vm86, %v73, 0
  %v268 = vsel %vm86, %v74, 0
  %v271 = vsel %vm86, %v75, 0
  %v274 = vsel %vm86, %v76, 0
  %v277 = vsel %vm86, %v77, 0
  %vm279 = vcmask 1040384
  %v281 = vsel %vm279, %v78, 0
  %283 = vmatprep.subr.mxu0 0.0
  %284 = vmatpush1.msra.mxu0 %v281
  %285 = vmatprep.subr.mxu0 0.0
  %286 = vmatpush1.msra.mxu0 0.0
  %287 = vmatprep.subr.mxu0 0.0
  %288 = vmatpush1.msra.mxu0 0.0
  %289 = vmatprep.subr.mxu0 0.0
  %290 = vmatpush1.msra.mxu0 0.0
  %291 = vmatprep.subr.mxu0 0.0
  %292 = vmatpush1.msra.mxu0 0.0
  %293 = vmatprep.subr.mxu0 0.0
  %294 = vmatpush1.msra.mxu0 0.0
  %295 = vmatprep.subr.mxu0 0.0
  %296 = vmatpush1.msra.mxu0 0.0
  %297 = vmatprep.subr.mxu0 0.0
  %298 = vmatpush1.msra.mxu0 0.0
  %299 = vmatprep.subr.mxu0 0.0
  %300 = vmatpush1.msra.mxu0 0.0
  %301 = vmatprep.subr.mxu0 0.0
  %302 = vmatpush1.msra.mxu0 0.0
  %303 = vmatprep.subr.mxu0 0.0
  %304 = vmatpush1.msra.mxu0 0.0
  %305 = vmatprep.subr.mxu0 0.0
  %306 = vmatpush1.msra.mxu0 0.0
  %307 = vmatprep.subr.mxu0 0.0
  %308 = vmatpush1.msra.mxu0 0.0
  %309 = vmatprep.subr.mxu0 0.0
  %310 = vmatpush1.msra.mxu0 0.0
  %311 = vmatprep.subr.mxu0 0.0
  %312 = vmatpush1.msra.mxu0 0.0
  %313 = vmatprep.subr.mxu0 0.0
  %314 = vmatpush1.msra.mxu0 0.0
  %315 = vmatprep.subr.mxu0 0.0
  %316 = vmatpush1.msra.mxu0 0.0
  %317 = vmatprep.subr.mxu0 0.0
  %318 = vmatpush1.msra.mxu0 0.0
  %319 = vmatprep.subr.mxu0 0.0
  %320 = vmatpush1.msra.mxu0 0.0
  %321 = vmatprep.subr.mxu0 0.0
  %322 = vmatpush1.msra.mxu0 0.0
  %323 = vmatprep.subr.mxu0 0.0
  %324 = vmatpush1.msra.mxu0 0.0
  %325 = vmatprep.subr.mxu0 0.0
  %326 = vmatpush1.msra.mxu0 0.0
  %327 = vmatprep.subr.mxu0 0.0
  %328 = vmatpush1.msra.mxu0 0.0
  %329 = vmatprep.subr.mxu0 0.0
  %330 = vmatpush1.msra.mxu0 0.0
  %331 = vmatprep.subr.mxu0 0.0
  %332 = vmatpush1.msra.mxu0 0.0
  %333 = vmatprep.subr.mxu0 0.0
  %334 = vmatpush1.msra.mxu0 0.0
  %335 = vmatprep.subr.mxu0 0.0
  %336 = vmatpush1.msra.mxu0 0.0
  %337 = vmatprep.subr.mxu0 0.0
  %338 = vmatpush1.msra.mxu0 0.0
  %339 = vmatprep.subr.mxu0 0.0
  %340 = vmatpush1.msra.mxu0 0.0
  %341 = vmatprep.subr.mxu0 0.0
  %342 = vmatpush1.msra.mxu0 0.0
  %343 = vmatprep.subr.mxu0 0.0
  %344 = vmatpush1.msra.mxu0 0.0
  %345 = vmatprep.subr.mxu0 0.0
  %346 = vmatpush1.msra.mxu0 0.0
  %347 = vmatprep.mubr.f32.mxu0 0.0
  %348 = vmatmul.mubr.f32.gmra.mrb[0].mxu0 %v88
  %v349 = vpop.f32.mrb[0].mxu0
  %v350 = vadd.f32 %v84, %v349
  %v351 = vpop.f32.mrb[0].mxu0
  %352 = vmatprep.mubr.f32.mxu0 0.0
  %353 = vmatmul.mubr.f32.gmra.mrb[0].mxu0 %v91
  %v354 = vpop.f32.mrb[0].mxu0
  %v355 = vadd.f32 %v84, %v354
  %v356 = vpop.f32.mrb[0].mxu0
  %357 = vmatprep.mubr.f32.mxu0 0.0
  %358 = vmatmul.mubr.f32.gmra.mrb[0].mxu0 %v94
  %v359 = vpop.f32.mrb[0].mxu0
  %v360 = vadd.f32 %v84, %v359
  %v361 = vpop.f32.mrb[0].mxu0
  %362 = vmatprep.mubr.f32.mxu0 0.0
  %363 = vmatmul.mubr.f32.gmra.mrb[0].mxu0 %v97
  %v364 = vpop.f32.mrb[0].mxu0
  %v365 = vadd.f32 %v84, %v364
  %v366 = vpop.f32.mrb[0].mxu0
  %367 = vmatprep.mubr.f32.mxu0 0.0
  %368 = vmatmul.mubr.f32.gmra.mrb[0].mxu0 %v100
  %v369 = vpop.f32.mrb[0].mxu0
  %v370 = vadd.f32 %v84, %v369
  %v371 = vpop.f32.mrb[0].mxu0
  %372 = vmatprep.mubr.f32.mxu0 0.0
  %373 = vmatmul.mubr.f32.gmra.mrb[0].mxu0 %v103
  %v374 = vpop.f32.mrb[0].mxu0
  %v375 = vadd.f32 %v84, %v374
  %v376 = vpop.f32.mrb[0].mxu0
  %377 = vmatprep.mubr.f32.mxu0 0.0
  %378 = vmatmul.mubr.f32.gmra.mrb[0].mxu0 %v106
  %v379 = vpop.f32.mrb[0].mxu0
  %v380 = vadd.f32 %v84, %v379
  %v381 = vpop.f32.mrb[0].mxu0
  %382 = vmatprep.mubr.f32.mxu0 0.0
  %383 = vmatmul.mubr.f32.gmra.mrb[0].mxu0 %v109
  %v384 = vpop.f32.mrb[0].mxu0
  %v385 = vadd.f32 %v84, %v384
  %v386 = vpop.f32.mrb[0].mxu0
  %387 = vmatprep.mubr.f32.mxu0 0.0
  %388 = vmatmul.mubr.f32.gmra.mrb[0].mxu0 %v112
  %v389 = vpop.f32.mrb[0].mxu0
  %v390 = vadd.f32 %v84, %v389
  %v391 = vpop.f32.mrb[0].mxu0
  %392 = vmatprep.mubr.f32.mxu0 0.0
  %393 = vmatmul.mubr.f32.gmra.mrb[0].mxu0 %v115
  %v394 = vpop.f32.mrb[0].mxu0
  %v395 = vadd.f32 %v84, %v394
  %v396 = vpop.f32.mrb[0].mxu0
  %397 = vmatprep.mubr.f32.mxu0 0.0
  %398 = vmatmul.mubr.f32.gmra.mrb[0].mxu0 %v118
  %v399 = vpop.f32.mrb[0].mxu0
  %v400 = vadd.f32 %v84, %v399
  %v401 = vpop.f32.mrb[0].mxu0
  %402 = vmatprep.mubr.f32.mxu0 0.0
  %403 = vmatmul.mubr.f32.gmra.mrb[0].mxu0 %v121
  %v404 = vpop.f32.mrb[0].mxu0
  %v405 = vadd.f32 %v84, %v404
  %v406 = vpop.f32.mrb[0].mxu0
  %407 = vmatprep.mubr.f32.mxu0 0.0
  %408 = vmatmul.mubr.f32.gmra.mrb[0].mxu0 %v124
  %v409 = vpop.f32.mrb[0].mxu0
  %v410 = vadd.f32 %v84, %v409
  %v411 = vpop.f32.mrb[0].mxu0
  %412 = vmatprep.mubr.f32.mxu0 0.0
  %413 = vmatmul.mubr.f32.gmra.mrb[0].mxu0 %v127
  %v414 = vpop.f32.mrb[0].mxu0
  %v415 = vadd.f32 %v84, %v414
  %v416 = vpop.f32.mrb[0].mxu0
  %417 = vmatprep.mubr.f32.mxu0 0.0
  %418 = vmatmul.mubr.f32.gmra.mrb[0].mxu0 %v130
  %v419 = vpop.f32.mrb[0].mxu0
  %v420 = vadd.f32 %v84, %v419
  %v421 = vpop.f32.mrb[0].mxu0
  %422 = vmatprep.mubr.f32.mxu0 0.0
  %423 = vmatmul.mubr.f32.gmra.mrb[0].mxu0 %v133
  %v424 = vpop.f32.mrb[0].mxu0
  %v425 = vadd.f32 %v84, %v424
  %v426 = vpop.f32.mrb[0].mxu0
  %427 = vmatprep.mubr.f32.mxu0 0.0
  %428 = vmatmul.mubr.f32.gmra.mrb[0].mxu0 %v136
  %v429 = vpop.f32.mrb[0].mxu0
  %v430 = vadd.f32 %v84, %v429
  %v431 = vpop.f32.mrb[0].mxu0
  %432 = vmatprep.mubr.f32.mxu0 0.0
  %433 = vmatmul.mubr.f32.gmra.mrb[0].mxu0 %v139
  %v434 = vpop.f32.mrb[0].mxu0
  %v435 = vadd.f32 %v84, %v434
  %v436 = vpop.f32.mrb[0].mxu0
  %437 = vmatprep.mubr.f32.mxu0 0.0
  %438 = vmatmul.mubr.f32.gmra.mrb[0].mxu0 %v142
  %v439 = vpop.f32.mrb[0].mxu0
  %v440 = vadd.f32 %v84, %v439
  %v441 = vpop.f32.mrb[0].mxu0
  %442 = vmatprep.mubr.f32.mxu0 0.0
  %443 = vmatmul.mubr.f32.gmra.mrb[0].mxu0 %v145
  %v444 = vpop.f32.mrb[0].mxu0
  %v445 = vadd.f32 %v84, %v444
  %v446 = vpop.f32.mrb[0].mxu0
  %447 = vmatprep.mubr.f32.mxu0 0.0
  %448 = vmatmul.mubr.f32.gmra.mrb[0].mxu0 %v148
  %v449 = vpop.f32.mrb[0].mxu0
  %v450 = vadd.f32 %v84, %v449
  %v451 = vpop.f32.mrb[0].mxu0
  %452 = vmatprep.mubr.f32.mxu0 0.0
  %453 = vmatmul.mubr.f32.gmra.mrb[0].mxu0 %v151
  %v454 = vpop.f32.mrb[0].mxu0
  %v455 = vadd.f32 %v84, %v454
  %v456 = vpop.f32.mrb[0].mxu0
  %457 = vmatprep.mubr.f32.mxu0 0.0
  %458 = vmatmul.mubr.f32.gmra.mrb[0].mxu0 %v154
  %v459 = vpop.f32.mrb[0].mxu0
  %v460 = vadd.f32 %v84, %v459
  %v461 = vpop.f32.mrb[0].mxu0
  %462 = vmatprep.mubr.f32.mxu0 0.0
  %463 = vmatmul.mubr.f32.gmra.mrb[0].mxu0 %v157
  %v464 = vpop.f32.mrb[0].mxu0
  %v465 = vadd.f32 %v84, %v464
  %v466 = vpop.f32.mrb[0].mxu0
  %467 = vmatprep.mubr.f32.mxu0 0.0
  %468 = vmatmul.mubr.f32.gmra.mrb[0].mxu0 %v160
  %v469 = vpop.f32.mrb[0].mxu0
  %v470 = vadd.f32 %v84, %v469
  %v471 = vpop.f32.mrb[0].mxu0
  %472 = vmatprep.mubr.f32.mxu0 0.0
  %473 = vmatmul.mubr.f32.gmra.mrb[0].mxu0 %v163
  %v474 = vpop.f32.mrb[0].mxu0
  %v475 = vadd.f32 %v84, %v474
  %v476 = vpop.f32.mrb[0].mxu0
  %477 = vmatprep.mubr.f32.mxu0 0.0
  %478 = vmatmul.mubr.f32.gmra.mrb[0].mxu0 %v166
  %v479 = vpop.f32.mrb[0].mxu0
  %v480 = vadd.f32 %v84, %v479
  %v481 = vpop.f32.mrb[0].mxu0
  %482 = vmatprep.mubr.f32.mxu0 0.0
  %483 = vmatmul.mubr.f32.gmra.mrb[0].mxu0 %v169
  %v484 = vpop.f32.mrb[0].mxu0
  %v485 = vadd.f32 %v84, %v484
  %v486 = vpop.f32.mrb[0].mxu0
  %487 = vmatprep.mubr.f32.mxu0 0.0
  %488 = vmatmul.mubr.f32.gmra.mrb[0].mxu0 %v172
  %v489 = vpop.f32.mrb[0].mxu0
  %v490 = vadd.f32 %v84, %v489
  %v491 = vpop.f32.mrb[0].mxu0
  %492 = vmatprep.mubr.f32.mxu0 0.0
  %493 = vmatmul.mubr.f32.gmra.mrb[0].mxu0 %v175
  %v494 = vpop.f32.mrb[0].mxu0
  %v495 = vadd.f32 %v84, %v494
  %v496 = vpop.f32.mrb[0].mxu0
  %497 = vmatprep.mubr.f32.mxu0 0.0
  %498 = vmatmul.mubr.f32.gmra.mrb[0].mxu0 %v178
  %v499 = vpop.f32.mrb[0].mxu0
  %v500 = vadd.f32 %v84, %v499
  %v501 = vpop.f32.mrb[0].mxu0
  %502 = vmatprep.mubr.f32.mxu0 0.0
  %503 = vmatmul.mubr.f32.gmra.mrb[0].mxu0 %v181
  %v504 = vpop.f32.mrb[0].mxu0
  %v505 = vadd.f32 %v84, %v504
  %v506 = vpop.f32.mrb[0].mxu0
  %507 = vmatprep.mubr.f32.mxu0 0.0
  %508 = vmatmul.mubr.f32.gmra.mrb[0].mxu0 %v184
  %v509 = vpop.f32.mrb[0].mxu0
  %v510 = vadd.f32 %v84, %v509
  %v511 = vpop.f32.mrb[0].mxu0
  %512 = vmatprep.mubr.f32.mxu0 0.0
  %513 = vmatmul.mubr.f32.gmra.mrb[0].mxu0 %v187
  %v514 = vpop.f32.mrb[0].mxu0
  %v515 = vadd.f32 %v84, %v514
  %v516 = vpop.f32.mrb[0].mxu0
  %517 = vmatprep.mubr.f32.mxu0 0.0
  %518 = vmatmul.mubr.f32.gmra.mrb[0].mxu0 %v190
  %v519 = vpop.f32.mrb[0].mxu0
  %v520 = vadd.f32 %v84, %v519
  %v521 = vpop.f32.mrb[0].mxu0
  %522 = vmatprep.mubr.f32.mxu0 0.0
  %523 = vmatmul.mubr.f32.gmra.mrb[0].mxu0 %v193
  %v524 = vpop.f32.mrb[0].mxu0
  %v525 = vadd.f32 %v84, %v524
  %v526 = vpop.f32.mrb[0].mxu0
  %527 = vmatprep.mubr.f32.mxu0 0.0
  %528 = vmatmul.mubr.f32.gmra.mrb[0].mxu0 %v196
  %v529 = vpop.f32.mrb[0].mxu0
  %v530 = vadd.f32 %v84, %v529
  %v531 = vpop.f32.mrb[0].mxu0
  %532 = vmatprep.mubr.f32.mxu0 0.0
  %533 = vmatmul.mubr.f32.gmra.mrb[0].mxu0 %v199
  %v534 = vpop.f32.mrb[0].mxu0
  %v535 = vadd.f32 %v84, %v534
  %v536 = vpop.f32.mrb[0].mxu0
  %537 = vmatprep.mubr.f32.mxu0 0.0
  %538 = vmatmul.mubr.f32.gmra.mrb[0].mxu0 %v202
  %v539 = vpop.f32.mrb[0].mxu0
  %v540 = vadd.f32 %v84, %v539
  %v541 = vpop.f32.mrb[0].mxu0
  %542 = vmatprep.mubr.f32.mxu0 0.0
  %543 = vmatmul.mubr.f32.gmra.mrb[0].mxu0 %v205
  %v544 = vpop.f32.mrb[0].mxu0
  %v545 = vadd.f32 %v84, %v544
  %v546 = vpop.f32.mrb[0].mxu0
  %547 = vmatprep.mubr.f32.mxu0 0.0
  %548 = vmatmul.mubr.f32.gmra.mrb[0].mxu0 %v208
  %v549 = vpop.f32.mrb[0].mxu0
  %v550 = vadd.f32 %v84, %v549
  %v551 = vpop.f32.mrb[0].mxu0
  %552 = vmatprep.mubr.f32.mxu0 0.0
  %553 = vmatmul.mubr.f32.gmra.mrb[0].mxu0 %v211
  %v554 = vpop.f32.mrb[0].mxu0
  %v555 = vadd.f32 %v84, %v554
  %v556 = vpop.f32.mrb[0].mxu0
  %557 = vmatprep.mubr.f32.mxu0 0.0
  %558 = vmatmul.mubr.f32.gmra.mrb[0].mxu0 %v214
  %v559 = vpop.f32.mrb[0].mxu0
  %v560 = vadd.f32 %v84, %v559
  %v561 = vpop.f32.mrb[0].mxu0
  %562 = vmatprep.mubr.f32.mxu0 0.0
  %563 = vmatmul.mubr.f32.gmra.mrb[0].mxu0 %v217
  %v564 = vpop.f32.mrb[0].mxu0
  %v565 = vadd.f32 %v84, %v564
  %v566 = vpop.f32.mrb[0].mxu0
  %567 = vmatprep.mubr.f32.mxu0 0.0
  %568 = vmatmul.mubr.f32.gmra.mrb[0].mxu0 %v220
  %v569 = vpop.f32.mrb[0].mxu0
  %v570 = vadd.f32 %v84, %v569
  %v571 = vpop.f32.mrb[0].mxu0
  %572 = vmatprep.mubr.f32.mxu0 0.0
  %573 = vmatmul.mubr.f32.gmra.mrb[0].mxu0 %v223
  %v574 = vpop.f32.mrb[0].mxu0
  %v575 = vadd.f32 %v84, %v574
  %v576 = vpop.f32.mrb[0].mxu0
  %577 = vmatprep.mubr.f32.mxu0 0.0
  %578 = vmatmul.mubr.f32.gmra.mrb[0].mxu0 %v226
  %v579 = vpop.f32.mrb[0].mxu0
  %v580 = vadd.f32 %v84, %v579
  %v581 = vpop.f32.mrb[0].mxu0
  %582 = vmatprep.mubr.f32.mxu0 0.0
  %583 = vmatmul.mubr.f32.gmra.mrb[0].mxu0 %v229
  %v584 = vpop.f32.mrb[0].mxu0
  %v585 = vadd.f32 %v84, %v584
  %v586 = vpop.f32.mrb[0].mxu0
  %587 = vmatprep.mubr.f32.mxu0 0.0
  %588 = vmatmul.mubr.f32.gmra.mrb[0].mxu0 %v232
  %v589 = vpop.f32.mrb[0].mxu0
  %v590 = vadd.f32 %v84, %v589
  %v591 = vpop.f32.mrb[0].mxu0
  %592 = vmatprep.mubr.f32.mxu0 0.0
  %593 = vmatmul.mubr.f32.gmra.mrb[0].mxu0 %v235
  %v594 = vpop.f32.mrb[0].mxu0
  %v595 = vadd.f32 %v84, %v594
  %v596 = vpop.f32.mrb[0].mxu0
  %597 = vmatprep.mubr.f32.mxu0 0.0
  %598 = vmatmul.mubr.f32.gmra.mrb[0].mxu0 %v238
  %v599 = vpop.f32.mrb[0].mxu0
  %v600 = vadd.f32 %v84, %v599
  %v601 = vpop.f32.mrb[0].mxu0
  %602 = vmatprep.mubr.f32.mxu0 0.0
  %603 = vmatmul.mubr.f32.gmra.mrb[0].mxu0 %v241
  %v604 = vpop.f32.mrb[0].mxu0
  %v605 = vadd.f32 %v84, %v604
  %v606 = vpop.f32.mrb[0].mxu0
  %607 = vmatprep.mubr.f32.mxu0 0.0
  %608 = vmatmul.mubr.f32.gmra.mrb[0].mxu0 %v244
  %v609 = vpop.f32.mrb[0].mxu0
  %v610 = vadd.f32 %v84, %v609
  %v611 = vpop.f32.mrb[0].mxu0
  %612 = vmatprep.mubr.f32.mxu0 0.0
  %613 = vmatmul.mubr.f32.gmra.mrb[0].mxu0 %v247
  %v614 = vpop.f32.mrb[0].mxu0
  %v615 = vadd.f32 %v84, %v614
  %v616 = vpop.f32.mrb[0].mxu0
  %617 = vmatprep.mubr.f32.mxu0 0.0
  %618 = vmatmul.mubr.f32.gmra.mrb[0].mxu0 %v250
  %v619 = vpop.f32.mrb[0].mxu0
  %v620 = vadd.f32 %v84, %v619
  %v621 = vpop.f32.mrb[0].mxu0
  %622 = vmatprep.mubr.f32.mxu0 0.0
  %623 = vmatmul.mubr.f32.gmra.mrb[0].mxu0 %v253
  %v624 = vpop.f32.mrb[0].mxu0
  %v625 = vadd.f32 %v84, %v624
  %v626 = vpop.f32.mrb[0].mxu0
  %627 = vmatprep.mubr.f32.mxu0 0.0
  %628 = vmatmul.mubr.f32.gmra.mrb[0].mxu0 %v256
  %v629 = vpop.f32.mrb[0].mxu0
  %v630 = vadd.f32 %v84, %v629
  %v631 = vpop.f32.mrb[0].mxu0
  %632 = vmatprep.mubr.f32.mxu0 0.0
  %633 = vmatmul.mubr.f32.gmra.mrb[0].mxu0 %v259
  %v634 = vpop.f32.mrb[0].mxu0
  %v635 = vadd.f32 %v84, %v634
  %v636 = vpop.f32.mrb[0].mxu0
  %637 = vmatprep.mubr.f32.mxu0 0.0
  %638 = vmatmul.mubr.f32.gmra.mrb[0].mxu0 %v262
  %v639 = vpop.f32.mrb[0].mxu0
  %v640 = vadd.f32 %v84, %v639
  %v641 = vpop.f32.mrb[0].mxu0
  %642 = vmatprep.mubr.f32.mxu0 0.0
  %643 = vmatmul.mubr.f32.gmra.mrb[0].mxu0 %v265
  %v644 = vpop.f32.mrb[0].mxu0
  %v645 = vadd.f32 %v84, %v644
  %v646 = vpop.f32.mrb[0].mxu0
  %647 = vmatprep.mubr.f32.mxu0 0.0
  %648 = vmatmul.mubr.f32.gmra.mrb[0].mxu0 %v268
  %v649 = vpop.f32.mrb[0].mxu0
  %v650 = vadd.f32 %v84, %v649
  %v651 = vpop.f32.mrb[0].mxu0
  %652 = vmatprep.mubr.f32.mxu0 0.0
  %653 = vmatmul.mubr.f32.gmra.mrb[0].mxu0 %v271
  %v654 = vpop.f32.mrb[0].mxu0
  %v655 = vadd.f32 %v84, %v654
  %v656 = vpop.f32.mrb[0].mxu0
  %657 = vmatprep.mubr.f32.mxu0 0.0
  %658 = vmatmul.mubr.f32.gmra.mrb[0].mxu0 %v274
  %v659 = vpop.f32.mrb[0].mxu0
  %v660 = vadd.f32 %v84, %v659
  %v661 = vpop.f32.mrb[0].mxu0
  %662 = vmatprep.mubr.f32.mxu0 0.0
  %663 = vmatmul.mubr.f32.gmra.mrb[0].mxu0 %v277
  %v664 = vpop.f32.mrb[0].mxu0
  %v665 = vadd.f32 %v84, %v664
  %v666 = vpop.f32.mrb[0].mxu0
  %667 = vdwg.mxu0
  %v668 = vpack.c.bf16 %v355, %v350
  %v669 = vpack.c.bf16 %v365, %v360
  %v670 = vpack.c.bf16 %v375, %v370
  %v671 = vpack.c.bf16 %v385, %v380
  %v672 = vpack.c.bf16 %v395, %v390
  %v673 = vpack.c.bf16 %v405, %v400
  %v674 = vpack.c.bf16 %v415, %v410
  %v675 = vpack.c.bf16 %v425, %v420
  %v676 = vpack.c.bf16 %v435, %v430
  %v677 = vpack.c.bf16 %v445, %v440
  %v678 = vpack.c.bf16 %v455, %v450
  %v679 = vpack.c.bf16 %v465, %v460
  %v680 = vpack.c.bf16 %v475, %v470
  %v681 = vpack.c.bf16 %v485, %v480
  %v682 = vpack.c.bf16 %v495, %v490
  %v683 = vpack.c.bf16 %v505, %v500
  %v684 = vpack.c.bf16 %v515, %v510
  %v685 = vpack.c.bf16 %v525, %v520
  %v686 = vpack.c.bf16 %v535, %v530
  %v687 = vpack.c.bf16 %v545, %v540
  %v688 = vpack.c.bf16 %v555, %v550
  %v689 = vpack.c.bf16 %v565, %v560
  %v690 = vpack.c.bf16 %v575, %v570
  %v691 = vpack.c.bf16 %v585, %v580
  %v692 = vpack.c.bf16 %v595, %v590
  %v693 = vpack.c.bf16 %v605, %v600
  %v694 = vpack.c.bf16 %v615, %v610
  %v695 = vpack.c.bf16 %v625, %v620
  %v696 = vpack.c.bf16 %v635, %v630
  %v697 = vpack.c.bf16 %v645, %v640
  %v698 = vpack.c.bf16 %v655, %v650
  %v699 = vpack.c.bf16 %v665, %v660
  %v732 = vunpack.c.l.b16 %v668
  %v733 = vunpack.c.h.b16 %v668
  %v734 = vunpack.c.l.b16 %v669
  %v735 = vunpack.c.h.b16 %v669
  %v736 = vunpack.c.l.b16 %v670
  %v737 = vunpack.c.h.b16 %v670
  %v738 = vunpack.c.l.b16 %v671
  %v739 = vunpack.c.h.b16 %v671
  %v740 = vunpack.c.l.b16 %v672
  %v741 = vunpack.c.h.b16 %v672
  %v742 = vunpack.c.l.b16 %v673
  %v743 = vunpack.c.h.b16 %v673
  %v744 = vunpack.c.l.b16 %v674
  %v745 = vunpack.c.h.b16 %v674
  %v746 = vunpack.c.l.b16 %v675
  %v747 = vunpack.c.h.b16 %v675
  %v748 = vunpack.c.l.b16 %v676
  %v749 = vunpack.c.h.b16 %v676
  %v750 = vunpack.c.l.b16 %v677
  %v751 = vunpack.c.h.b16 %v677
  %v752 = vunpack.c.l.b16 %v678
  %v753 = vunpack.c.h.b16 %v678
  %v754 = vunpack.c.l.b16 %v679
  %v755 = vunpack.c.h.b16 %v679
  %v756 = vunpack.c.l.b16 %v680
  %v757 = vunpack.c.h.b16 %v680
  %v758 = vunpack.c.l.b16 %v681
  %v759 = vunpack.c.h.b16 %v681
  %v760 = vunpack.c.l.b16 %v682
  %v761 = vunpack.c.h.b16 %v682
  %v762 = vunpack.c.l.b16 %v683
  %v763 = vunpack.c.h.b16 %v683
  %v764 = vunpack.c.l.b16 %v684
  %v765 = vunpack.c.h.b16 %v684
  %v766 = vunpack.c.l.b16 %v685
  %v767 = vunpack.c.h.b16 %v685
  %v768 = vunpack.c.l.b16 %v686
  %v769 = vunpack.c.h.b16 %v686
  %v770 = vunpack.c.l.b16 %v687
  %v771 = vunpack.c.h.b16 %v687
  %v772 = vunpack.c.l.b16 %v688
  %v773 = vunpack.c.h.b16 %v688
  %v774 = vunpack.c.l.b16 %v689
  %v775 = vunpack.c.h.b16 %v689
  %v776 = vunpack.c.l.b16 %v690
  %v777 = vunpack.c.h.b16 %v690
  %v778 = vunpack.c.l.b16 %v691
  %v779 = vunpack.c.h.b16 %v691
  %v780 = vunpack.c.l.b16 %v692
  %v781 = vunpack.c.h.b16 %v692
  %v782 = vunpack.c.l.b16 %v693
  %v783 = vunpack.c.h.b16 %v693
  %v784 = vunpack.c.l.b16 %v694
  %v785 = vunpack.c.h.b16 %v694
  %v786 = vunpack.c.l.b16 %v695
  %v787 = vunpack.c.h.b16 %v695
  %v788 = vunpack.c.l.b16 %v696
  %v789 = vunpack.c.h.b16 %v696
  %v790 = vunpack.c.l.b16 %v697
  %v791 = vunpack.c.h.b16 %v697
  %v792 = vunpack.c.l.b16 %v698
  %v793 = vunpack.c.h.b16 %v698
  %v794 = vunpack.c.l.b16 %v699
  %v795 = vunpack.c.h.b16 %v699
  %v796 = vpack.c.b16 %v732, %v732
  %v797 = vpack.c.b16 %v733, %v733
  %v798 = vpack.c.b16 %v734, %v734
  %v799 = vpack.c.b16 %v735, %v735
  %v800 = vpack.c.b16 %v736, %v736
  %v801 = vpack.c.b16 %v737, %v737
  %v802 = vpack.c.b16 %v738, %v738
  %v803 = vpack.c.b16 %v739, %v739
  %v804 = vpack.c.b16 %v740, %v740
  %v805 = vpack.c.b16 %v741, %v741
  %v806 = vpack.c.b16 %v742, %v742
  %v807 = vpack.c.b16 %v743, %v743
  %v808 = vpack.c.b16 %v744, %v744
  %v809 = vpack.c.b16 %v745, %v745
  %v810 = vpack.c.b16 %v746, %v746
  %v811 = vpack.c.b16 %v747, %v747
  %v812 = vpack.c.b16 %v748, %v748
  %v813 = vpack.c.b16 %v749, %v749
  %v814 = vpack.c.b16 %v750, %v750
  %v815 = vpack.c.b16 %v751, %v751
  %v816 = vpack.c.b16 %v752, %v752
  %v817 = vpack.c.b16 %v753, %v753
  %v818 = vpack.c.b16 %v754, %v754
  %v819 = vpack.c.b16 %v755, %v755
  %v820 = vpack.c.b16 %v756, %v756
  %v821 = vpack.c.b16 %v757, %v757
  %v822 = vpack.c.b16 %v758, %v758
  %v823 = vpack.c.b16 %v759, %v759
  %v824 = vpack.c.b16 %v760, %v760
  %v825 = vpack.c.b16 %v761, %v761
  %v826 = vpack.c.b16 %v762, %v762
  %v827 = vpack.c.b16 %v763, %v763
  %v828 = vpack.c.b16 %v764, %v764
  %v829 = vpack.c.b16 %v765, %v765
  %v830 = vpack.c.b16 %v766, %v766
  %v831 = vpack.c.b16 %v767, %v767
  %v832 = vpack.c.b16 %v768, %v768
  %v833 = vpack.c.b16 %v769, %v769
  %v834 = vpack.c.b16 %v770, %v770
  %v835 = vpack.c.b16 %v771, %v771
  %v836 = vpack.c.b16 %v772, %v772
  %v837 = vpack.c.b16 %v773, %v773
  %v838 = vpack.c.b16 %v774, %v774
  %v839 = vpack.c.b16 %v775, %v775
  %v840 = vpack.c.b16 %v776, %v776
  %v841 = vpack.c.b16 %v777, %v777
  %v842 = vpack.c.b16 %v778, %v778
  %v843 = vpack.c.b16 %v779, %v779
  %v844 = vpack.c.b16 %v780, %v780
  %v845 = vpack.c.b16 %v781, %v781
  %v846 = vpack.c.b16 %v782, %v782
  %v847 = vpack.c.b16 %v783, %v783
  %v848 = vpack.c.b16 %v784, %v784
  %v849 = vpack.c.b16 %v785, %v785
  %v850 = vpack.c.b16 %v786, %v786
  %v851 = vpack.c.b16 %v787, %v787
  %v852 = vpack.c.b16 %v788, %v788
  %v853 = vpack.c.b16 %v789, %v789
  %v854 = vpack.c.b16 %v790, %v790
  %v855 = vpack.c.b16 %v791, %v791
  %v856 = vpack.c.b16 %v792, %v792
  %v857 = vpack.c.b16 %v793, %v793
  %v858 = vpack.c.b16 %v794, %v794
  %v859 = vpack.c.b16 %v795, %v795
  %vm924 = vcmask 60416
  %925 = vst.msk [vmem:[%s3] sm:$0xf] %vm924, %v796
  %926 = vst.msk [vmem:[%s3 + $0x4] sm:$0xf] %vm924, %v797
  %927 = vst.msk [vmem:[%s3 + $0x8] sm:$0xf] %vm924, %v798
  %928 = vst.msk [vmem:[%s3 + $0xc] sm:$0xf] %vm924, %v799
  %929 = vst.msk [vmem:[%s3 + $0x10] sm:$0xf] %vm924, %v800
  %930 = vst.msk [vmem:[%s3 + $0x14] sm:$0xf] %vm924, %v801
  %931 = vst.msk [vmem:[%s3 + $0x18] sm:$0xf] %vm924, %v802
  %932 = vst.msk [vmem:[%s3 + $0x1c] sm:$0xf] %vm924, %v803
  %933 = vst.msk [vmem:[%s3 + $0x20] sm:$0xf] %vm924, %v804
  %934 = vst.msk [vmem:[%s3 + $0x24] sm:$0xf] %vm924, %v805
  %935 = vst.msk [vmem:[%s3 + $0x28] sm:$0xf] %vm924, %v806
  %936 = vst.msk [vmem:[%s3 + $0x2c] sm:$0xf] %vm924, %v807
  %937 = vst.msk [vmem:[%s3 + $0x30] sm:$0xf] %vm924, %v808
  %938 = vst.msk [vmem:[%s3 + $0x34] sm:$0xf] %vm924, %v809
  %939 = vst.msk [vmem:[%s3 + $0x38] sm:$0xf] %vm924, %v810
  %940 = vst.msk [vmem:[%s3 + $0x3c] sm:$0xf] %vm924, %v811
  %941 = vst.msk [vmem:[%s3 + $0x40] sm:$0xf] %vm924, %v812
  %942 = vst.msk [vmem:[%s3 + $0x44] sm:$0xf] %vm924, %v813
  %943 = vst.msk [vmem:[%s3 + $0x48] sm:$0xf] %vm924, %v814
  %944 = vst.msk [vmem:[%s3 + $0x4c] sm:$0xf] %vm924, %v815
  %945 = vst.msk [vmem:[%s3 + $0x50] sm:$0xf] %vm924, %v816
  %946 = vst.msk [vmem:[%s3 + $0x54] sm:$0xf] %vm924, %v817
  %947 = vst.msk [vmem:[%s3 + $0x58] sm:$0xf] %vm924, %v818
  %948 = vst.msk [vmem:[%s3 + $0x5c] sm:$0xf] %vm924, %v819
  %949 = vst.msk [vmem:[%s3 + $0x60] sm:$0xf] %vm924, %v820
  %950 = vst.msk [vmem:[%s3 + $0x64] sm:$0xf] %vm924, %v821
  %951 = vst.msk [vmem:[%s3 + $0x68] sm:$0xf] %vm924, %v822
  %952 = vst.msk [vmem:[%s3 + $0x6c] sm:$0xf] %vm924, %v823
  %953 = vst.msk [vmem:[%s3 + $0x70] sm:$0xf] %vm924, %v824
  %954 = vst.msk [vmem:[%s3 + $0x74] sm:$0xf] %vm924, %v825
  %955 = vst.msk [vmem:[%s3 + $0x78] sm:$0xf] %vm924, %v826
  %956 = vst.msk [vmem:[%s3 + $0x7c] sm:$0xf] %vm924, %v827
  %957 = vst.msk [vmem:[%s3 + $0x80] sm:$0xf] %vm924, %v828
  %958 = vst.msk [vmem:[%s3 + $0x84] sm:$0xf] %vm924, %v829
  %959 = vst.msk [vmem:[%s3 + $0x88] sm:$0xf] %vm924, %v830
  %960 = vst.msk [vmem:[%s3 + $0x8c] sm:$0xf] %vm924, %v831
  %961 = vst.msk [vmem:[%s3 + $0x90] sm:$0xf] %vm924, %v832
  %962 = vst.msk [vmem:[%s3 + $0x94] sm:$0xf] %vm924, %v833
  %963 = vst.msk [vmem:[%s3 + $0x98] sm:$0xf] %vm924, %v834
  %964 = vst.msk [vmem:[%s3 + $0x9c] sm:$0xf] %vm924, %v835
  %965 = vst.msk [vmem:[%s3 + $0xa0] sm:$0xf] %vm924, %v836
  %966 = vst.msk [vmem:[%s3 + $0xa4] sm:$0xf] %vm924, %v837
  %967 = vst.msk [vmem:[%s3 + $0xa8] sm:$0xf] %vm924, %v838
  %968 = vst.msk [vmem:[%s3 + $0xac] sm:$0xf] %vm924, %v839
  %969 = vst.msk [vmem:[%s3 + $0xb0] sm:$0xf] %vm924, %v840
  %970 = vst.msk [vmem:[%s3 + $0xb4] sm:$0xf] %vm924, %v841
  %971 = vst.msk [vmem:[%s3 + $0xb8] sm:$0xf] %vm924, %v842
  %972 = vst.msk [vmem:[%s3 + $0xbc] sm:$0xf] %vm924, %v843
  %973 = vst.msk [vmem:[%s3 + $0xc0] sm:$0xf] %vm924, %v844
  %974 = vst.msk [vmem:[%s3 + $0xc4] sm:$0xf] %vm924, %v845
  %975 = vst.msk [vmem:[%s3 + $0xc8] sm:$0xf] %vm924, %v846
  %976 = vst.msk [vmem:[%s3 + $0xcc] sm:$0xf] %vm924, %v847
  %977 = vst.msk [vmem:[%s3 + $0xd0] sm:$0xf] %vm924, %v848
  %978 = vst.msk [vmem:[%s3 + $0xd4] sm:$0xf] %vm924, %v849
  %979 = vst.msk [vmem:[%s3 + $0xd8] sm:$0xf] %vm924, %v850
  %980 = vst.msk [vmem:[%s3 + $0xdc] sm:$0xf] %vm924, %v851
  %981 = vst.msk [vmem:[%s3 + $0xe0] sm:$0xf] %vm924, %v852
  %982 = vst.msk [vmem:[%s3 + $0xe4] sm:$0xf] %vm924, %v853
  %983 = vst.msk [vmem:[%s3 + $0xe8] sm:$0xf] %vm924, %v854
  %984 = vst.msk [vmem:[%s3 + $0xec] sm:$0xf] %vm924, %v855
  %985 = vst.msk [vmem:[%s3 + $0xf0] sm:$0xf] %vm924, %v856
  %986 = vst.msk [vmem:[%s3 + $0xf4] sm:$0xf] %vm924, %v857
  %987 = vst.msk [vmem:[%s3 + $0xf8] sm:$0xf] %vm924, %v858
  %988 = vst.msk [vmem:[%s3 + $0xfc] sm:$0xf] %vm924, %v859
  // Predicated region
  $region14: #{segment_encoder_forward.5} parent=0 // pred_check
    _
  $region15: #{segment_encoder_forward.5} parent=0 // pred_check_branch
    %990 = sbr.rel (0) target = $region17
  $region16: #{segment_encoder_forward.5} parent=0 // pred_region
    _
  $region17: #{segment_encoder_forward.5} parent=0 // pred_fallthru
    _
  // Predicated region
  $region18: #{segment_encoder_forward.5} parent=0 // pred_check
    _
  $region19: #{segment_encoder_forward.5} parent=0 // pred_check_branch
    %992 = sbr.rel (0) target = $region21
  $region20: #{segment_encoder_forward.5} parent=0 // pred_region
    _
  $region21: #{segment_encoder_forward.5} parent=0 // pred_fallthru
    _

// kernel: segment_encoder_forward.8
$region0: #{segment_encoder_forward.8}
  #allocation0 [shape = 'u32[]', space=smem, size = 0x4, offset = 0x4, fixed_abs, tag = 'smem constant byte address 0x4 - core index']
  #allocation1 [shape = 'u32[144,128]{1,0:T(1,128)}', space=vmem, size = 0x12000, scoped, tag = 'internal scratch']
  %s0 = inlined_call_operand.vmem [shape: bf16[128,16], index: 0, kind: input, shape index: {}]
  %s1 = inlined_call_operand.vmem [shape: bf16[16,8], index: 1, kind: input, shape index: {}]
  %s2 = inlined_call_operand.vmem [shape: f32[1,8], index: 2, kind: input, shape index: {}]
  %s3 = inlined_call_operand.vmem [shape: bf16[128,8], index: 3, kind: output, shape index: {}]
  %s4 = sld [smem:[#allocation0]]
  $region22: #{segment_encoder_forward.8} parent=0
    _
  %s6 = ssub.s32 1, %s4
  %s7 = scalar_select 0, %s6, %s4
  // Predicated region
  $region2: #{segment_encoder_forward.8} parent=0 // pred_check
    _
  $region3: #{segment_encoder_forward.8} parent=0 // pred_check_branch
    %9 = sbr.rel (0) target = $region5
  $region4: #{segment_encoder_forward.8} parent=0 // pred_region
    _
  $region5: #{segment_encoder_forward.8} parent=0 // pred_fallthru
    _
  // Predicated region
  $region6: #{segment_encoder_forward.8} parent=0 // pred_check
    _
  $region7: #{segment_encoder_forward.8} parent=0 // pred_check_branch
    %11 = sbr.rel (0) target = $region9
  $region8: #{segment_encoder_forward.8} parent=0 // pred_region
    _
  $region9: #{segment_encoder_forward.8} parent=0 // pred_fallthru
    _
  // Predicated region
  $region10: #{segment_encoder_forward.8} parent=0 // pred_check
    _
  $region11: #{segment_encoder_forward.8} parent=0 // pred_check_branch
    %13 = sbr.rel (0) target = $region13
  $region12: #{segment_encoder_forward.8} parent=0 // pred_region
    _
  $region13: #{segment_encoder_forward.8} parent=0 // pred_fallthru
    _
  %v15 = vld [vmem:[%s0] sm:$0xf]
  %v16 = vld [vmem:[%s0 + $0x4] sm:$0xf]
  %v17 = vld [vmem:[%s0 + $0x8] sm:$0xf]
  %v18 = vld [vmem:[%s0 + $0xc] sm:$0xf]
  %v19 = vld [vmem:[%s0 + $0x10] sm:$0xf]
  %v20 = vld [vmem:[%s0 + $0x14] sm:$0xf]
  %v21 = vld [vmem:[%s0 + $0x18] sm:$0xf]
  %v22 = vld [vmem:[%s0 + $0x1c] sm:$0xf]
  %v23 = vld [vmem:[%s0 + $0x20] sm:$0xf]
  %v24 = vld [vmem:[%s0 + $0x24] sm:$0xf]
  %v25 = vld [vmem:[%s0 + $0x28] sm:$0xf]
  %v26 = vld [vmem:[%s0 + $0x2c] sm:$0xf]
  %v27 = vld [vmem:[%s0 + $0x30] sm:$0xf]
  %v28 = vld [vmem:[%s0 + $0x34] sm:$0xf]
  %v29 = vld [vmem:[%s0 + $0x38] sm:$0xf]
  %v30 = vld [vmem:[%s0 + $0x3c] sm:$0xf]
  %v31 = vld [vmem:[%s1] sm:$0xf]
  %v32 = vld [vmem:[%s1 + $0x4] sm:$0xf]
  %v33 = vld [vmem:[%s2] sm:$0x1]
  %v35 = vlaneseq
  %v36 = vshrl.u32 %v35, 7
  %v37 = vsub.s32 0, %v36
  %v38 = vrot.slane %v33, %v37
  %v56 = vunpack.c.l.b16 %v15
  %v57 = vunpack.c.l.b16 %v16
  %v58 = vunpack.c.l.b16 %v17
  %v59 = vunpack.c.l.b16 %v18
  %v60 = vunpack.c.l.b16 %v19
  %v61 = vunpack.c.l.b16 %v20
  %v62 = vunpack.c.l.b16 %v21
  %v63 = vunpack.c.l.b16 %v22
  %v64 = vunpack.c.l.b16 %v23
  %v65 = vunpack.c.l.b16 %v24
  %v66 = vunpack.c.l.b16 %v25
  %v67 = vunpack.c.l.b16 %v26
  %v68 = vunpack.c.l.b16 %v27
  %v69 = vunpack.c.l.b16 %v28
  %v70 = vunpack.c.l.b16 %v29
  %v71 = vunpack.c.l.b16 %v30
  %v72 = vpack.c.b16 %v57, %v56
  %v73 = vpack.c.b16 %v59, %v58
  %v74 = vpack.c.b16 %v61, %v60
  %v75 = vpack.c.b16 %v63, %v62
  %v76 = vpack.c.b16 %v65, %v64
  %v77 = vpack.c.b16 %v67, %v66
  %v78 = vpack.c.b16 %v69, %v68
  %v79 = vpack.c.b16 %v71, %v70
  %v82 = vunpack.c.l.b16 %v31
  %v83 = vunpack.c.l.b16 %v32
  %v84 = vpack.c.b16 %v83, %v82
  %vm86 = vcmask 130048
  %v88 = vsel %vm86, %v72, 0
  %v91 = vsel %vm86, %v73, 0
  %v94 = vsel %vm86, %v74, 0
  %v97 = vsel %vm86, %v75, 0
  %v100 = vsel %vm86, %v76, 0
  %v103 = vsel %vm86, %v77, 0
  %v106 = vsel %vm86, %v78, 0
  %v109 = vsel %vm86, %v79, 0
  %111 = vmatprep.subr.bf16.mxu0 0
  %112 = vmatpush1.bf16.msra.mxu0 %v84
  %113 = vmatprep.subr.bf16.mxu0 0
  %114 = vmatpush1.bf16.msra.mxu0 0
  %115 = vmatprep.subr.bf16.mxu0 0
  %116 = vmatpush1.bf16.msra.mxu0 0
  %117 = vmatprep.subr.bf16.mxu0 0
  %118 = vmatpush1.bf16.msra.mxu0 0
  %119 = vmatprep.subr.bf16.mxu0 0
  %120 = vmatpush1.bf16.msra.mxu0 0
  %121 = vmatprep.subr.bf16.mxu0 0
  %122 = vmatpush1.bf16.msra.mxu0 0
  %123 = vmatprep.subr.bf16.mxu0 0
  %124 = vmatpush1.bf16.msra.mxu0 0
  %125 = vmatprep.subr.bf16.mxu0 0
  %126 = vmatpush1.bf16.msra.mxu0 0
  %127 = vmatprep.subr.bf16.mxu0 0
  %128 = vmatpush1.bf16.msra.mxu0 0
  %129 = vmatprep.subr.bf16.mxu0 0
  %130 = vmatpush1.bf16.msra.mxu0 0
  %131 = vmatprep.subr.bf16.mxu0 0
  %132 = vmatpush1.bf16.msra.mxu0 0
  %133 = vmatprep.subr.bf16.mxu0 0
  %134 = vmatpush1.bf16.msra.mxu0 0
  %135 = vmatprep.subr.bf16.mxu0 0
  %136 = vmatpush1.bf16.msra.mxu0 0
  %137 = vmatprep.subr.bf16.mxu0 0
  %138 = vmatpush1.bf16.msra.mxu0 0
  %139 = vmatprep.subr.bf16.mxu0 0
  %140 = vmatpush1.bf16.msra.mxu0 0
  %141 = vmatprep.subr.bf16.mxu0 0
  %142 = vmatpush1.bf16.msra.mxu0 0
  %143 = vmatprep.mubr.bf16.mxu0 0
  %144 = vmatmul.mubr.bf16.gmra.mrb[0].mxu0 %v88
  %v145 = vpop.f32.mrb[0].mxu0
  %v146 = vadd.f32 %v38, %v145
  %v147 = vpop.f32.mrb[0].mxu0
  %v148 = vpop.f32.mrb[0].mxu0
  %v149 = vadd.f32 %v38, %v148
  %v150 = vpop.f32.mrb[0].mxu0
  %151 = vmatprep.mubr.bf16.mxu0 0
  %152 = vmatmul.mubr.bf16.gmra.mrb[0].mxu0 %v91
  %v153 = vpop.f32.mrb[0].mxu0
  %v154 = vadd.f32 %v38, %v153
  %v155 = vpop.f32.mrb[0].mxu0
  %v156 = vpop.f32.mrb[0].mxu0
  %v157 = vadd.f32 %v38, %v156
  %v158 = vpop.f32.mrb[0].mxu0
  %159 = vmatprep.mubr.bf16.mxu0 0
  %160 = vmatmul.mubr.bf16.gmra.mrb[0].mxu0 %v94
  %v161 = vpop.f32.mrb[0].mxu0
  %v162 = vadd.f32 %v38, %v161
  %v163 = vpop.f32.mrb[0].mxu0
  %v164 = vpop.f32.mrb[0].mxu0
  %v165 = vadd.f32 %v38, %v164
  %v166 = vpop.f32.mrb[0].mxu0
  %167 = vmatprep.mubr.bf16.mxu0 0
  %168 = vmatmul.mubr.bf16.gmra.mrb[0].mxu0 %v97
  %v169 = vpop.f32.mrb[0].mxu0
  %v170 = vadd.f32 %v38, %v169
  %v171 = vpop.f32.mrb[0].mxu0
  %v172 = vpop.f32.mrb[0].mxu0
  %v173 = vadd.f32 %v38, %v172
  %v174 = vpop.f32.mrb[0].mxu0
  %175 = vmatprep.mubr.bf16.mxu0 0
  %176 = vmatmul.mubr.bf16.gmra.mrb[0].mxu0 %v100
  %v177 = vpop.f32.mrb[0].mxu0
  %v178 = vadd.f32 %v38, %v177
  %v179 = vpop.f32.mrb[0].mxu0
  %v180 = vpop.f32.mrb[0].mxu0
  %v181 = vadd.f32 %v38, %v180
  %v182 = vpop.f32.mrb[0].mxu0
  %183 = vmatprep.mubr.bf16.mxu0 0
  %184 = vmatmul.mubr.bf16.gmra.mrb[0].mxu0 %v103
  %v185 = vpop.f32.mrb[0].mxu0
  %v186 = vadd.f32 %v38, %v185
  %v187 = vpop.f32.mrb[0].mxu0
  %v188 = vpop.f32.mrb[0].mxu0
  %v189 = vadd.f32 %v38, %v188
  %v190 = vpop.f32.mrb[0].mxu0
  %191 = vmatprep.mubr.bf16.mxu0 0
  %192 = vmatmul.mubr.bf16.gmra.mrb[0].mxu0 %v106
  %v193 = vpop.f32.mrb[0].mxu0
  %v194 = vadd.f32 %v38, %v193
  %v195 = vpop.f32.mrb[0].mxu0
  %v196 = vpop.f32.mrb[0].mxu0
  %v197 = vadd.f32 %v38, %v196
  %v198 = vpop.f32.mrb[0].mxu0
  %199 = vmatprep.mubr.bf16.mxu0 0
  %200 = vmatmul.mubr.bf16.gmra.mrb[0].mxu0 %v109
  %v201 = vpop.f32.mrb[0].mxu0
  %v202 = vadd.f32 %v38, %v201
  %v203 = vpop.f32.mrb[0].mxu0
  %v204 = vpop.f32.mrb[0].mxu0
  %v205 = vadd.f32 %v38, %v204
  %v206 = vpop.f32.mrb[0].mxu0
  %207 = vdwg.mxu0
  %v208 = vpack.c.bf16 %v149, %v146
  %v209 = vpack.c.bf16 %v157, %v154
  %v210 = vpack.c.bf16 %v165, %v162
  %v211 = vpack.c.bf16 %v173, %v170
  %v212 = vpack.c.bf16 %v181, %v178
  %v213 = vpack.c.bf16 %v189, %v186
  %v214 = vpack.c.bf16 %v197, %v194
  %v215 = vpack.c.bf16 %v205, %v202
  %v224 = vunpack.c.l.b16 %v208
  %v225 = vunpack.c.h.b16 %v208
  %v226 = vunpack.c.l.b16 %v209
  %v227 = vunpack.c.h.b16 %v209
  %v228 = vunpack.c.l.b16 %v210
  %v229 = vunpack.c.h.b16 %v210
  %v230 = vunpack.c.l.b16 %v211
  %v231 = vunpack.c.h.b16 %v211
  %v232 = vunpack.c.l.b16 %v212
  %v233 = vunpack.c.h.b16 %v212
  %v234 = vunpack.c.l.b16 %v213
  %v235 = vunpack.c.h.b16 %v213
  %v236 = vunpack.c.l.b16 %v214
  %v237 = vunpack.c.h.b16 %v214
  %v238 = vunpack.c.l.b16 %v215
  %v239 = vunpack.c.h.b16 %v215
  %v240 = vpack.c.b16 %v224, %v224
  %v241 = vpack.c.b16 %v225, %v225
  %v242 = vpack.c.b16 %v226, %v226
  %v243 = vpack.c.b16 %v227, %v227
  %v244 = vpack.c.b16 %v228, %v228
  %v245 = vpack.c.b16 %v229, %v229
  %v246 = vpack.c.b16 %v230, %v230
  %v247 = vpack.c.b16 %v231, %v231
  %v248 = vpack.c.b16 %v232, %v232
  %v249 = vpack.c.b16 %v233, %v233
  %v250 = vpack.c.b16 %v234, %v234
  %v251 = vpack.c.b16 %v235, %v235
  %v252 = vpack.c.b16 %v236, %v236
  %v253 = vpack.c.b16 %v237, %v237
  %v254 = vpack.c.b16 %v238, %v238
  %v255 = vpack.c.b16 %v239, %v239
  %vm272 = vcmask 60416
  %273 = vst.msk [vmem:[%s3] sm:$0xf] %vm272, %v240
  %274 = vst.msk [vmem:[%s3 + $0x4] sm:$0xf] %vm272, %v241
  %275 = vst.msk [vmem:[%s3 + $0x8] sm:$0xf] %vm272, %v242
  %276 = vst.msk [vmem:[%s3 + $0xc] sm:$0xf] %vm272, %v243
  %277 = vst.msk [vmem:[%s3 + $0x10] sm:$0xf] %vm272, %v244
  %278 = vst.msk [vmem:[%s3 + $0x14] sm:$0xf] %vm272, %v245
  %279 = vst.msk [vmem:[%s3 + $0x18] sm:$0xf] %vm272, %v246
  %280 = vst.msk [vmem:[%s3 + $0x1c] sm:$0xf] %vm272, %v247
  %281 = vst.msk [vmem:[%s3 + $0x20] sm:$0xf] %vm272, %v248
  %282 = vst.msk [vmem:[%s3 + $0x24] sm:$0xf] %vm272, %v249
  %283 = vst.msk [vmem:[%s3 + $0x28] sm:$0xf] %vm272, %v250
  %284 = vst.msk [vmem:[%s3 + $0x2c] sm:$0xf] %vm272, %v251
  %285 = vst.msk [vmem:[%s3 + $0x30] sm:$0xf] %vm272, %v252
  %286 = vst.msk [vmem:[%s3 + $0x34] sm:$0xf] %vm272, %v253
  %287 = vst.msk [vmem:[%s3 + $0x38] sm:$0xf] %vm272, %v254
  %288 = vst.msk [vmem:[%s3 + $0x3c] sm:$0xf] %vm272, %v255
  // Predicated region
  $region14: #{segment_encoder_forward.8} parent=0 // pred_check
    _
  $region15: #{segment_encoder_forward.8} parent=0 // pred_check_branch
    %290 = sbr.rel (0) target = $region17
  $region16: #{segment_encoder_forward.8} parent=0 // pred_region
    _
  $region17: #{segment_encoder_forward.8} parent=0 // pred_fallthru
    _
  // Predicated region
  $region18: #{segment_encoder_forward.8} parent=0 // pred_check
    _
  $region19: #{segment_encoder_forward.8} parent=0 // pred_check_branch
    %292 = sbr.rel (0) target = $region21
  $region20: #{segment_encoder_forward.8} parent=0 // pred_region
    _
  $region21: #{segment_encoder_forward.8} parent=0 // pred_fallthru
    _

// kernel: segment_encoder_forward.9
$region0: #{segment_encoder_forward.9}
  #allocation0 [shape = 'u32[]', space=smem, size = 0x4, offset = 0x4, fixed_abs, tag = 'smem constant byte address 0x4 - core index']
  #allocation1 [shape = 'u32[144,128]{1,0:T(1,128)}', space=vmem, size = 0x12000, scoped, tag = 'internal scratch']
  %s0 = inlined_call_operand.vmem [shape: bf16[2,64,8], index: 0, kind: input, shape index: {}]
  %s1 = inlined_call_operand.vmem [shape: f32[2,16,16], index: 1, kind: input, shape index: {}]
  %s2 = inlined_call_operand.vmem [shape: f32[1,64,8], index: 2, kind: input, shape index: {}]
  %s3 = inlined_call_operand.vmem [shape: f32[1,16,8], index: 3, kind: input, shape index: {}]
  %s4 = inlined_call_operand.vmem [shape: bf16[16,8], index: 4, kind: input, shape index: {}]
  %s5 = inlined_call_operand.vmem [shape: f32[1,8], index: 5, kind: input, shape index: {}]
  %s6 = inlined_call_operand.vmem [shape: bf16[8,8], index: 6, kind: input, shape index: {}]
  %s7 = inlined_call_operand.vmem [shape: bf16[8,8], index: 7, kind: input, shape index: {}]
  %s8 = inlined_call_operand.vmem [shape: bf16[8,8], index: 8, kind: input, shape index: {}]
  %s9 = inlined_call_operand.vmem [shape: bf16[8,8], index: 9, kind: input, shape index: {}]
  %s10 = inlined_call_operand.vmem [shape: f32[1,8], index: 10, kind: input, shape index: {}]
  %s11 = inlined_call_operand.vmem [shape: f32[1,8], index: 11, kind: input, shape index: {}]
  %s12 = inlined_call_operand.vmem [shape: f32[1,8], index: 12, kind: input, shape index: {}]
  %s13 = inlined_call_operand.vmem [shape: f32[1,8], index: 13, kind: input, shape index: {}]
  %s14 = inlined_call_operand.vmem [shape: f32[2,64,8], index: 14, kind: output, shape index: {}]
  %s15 = sld [smem:[#allocation0]]
  $region89: #{segment_encoder_forward.9} parent=0
    _
  %s17 = ssub.s32 1, %s15
  %s18 = scalar_select 0, %s17, %s15
  loop: start=0, step=1, limit=4
  $region2: #{segment_encoder_forward.9} parent=0 // loop_pre_header
    _
  $region3: #{segment_encoder_forward.9} parent=0 // loop_header
    %s20 = sphi 0, %s24
    %p21 = scmp.ge.s32.totalorder %s20, 4
    %s30 = sphi 0, %s32
    %s33 = sphi 0, %s30
    %s34 = sphi 0, %s33
    %s50 = sphi 0, %s34
    %s56 = sphi 0, %s58
    %s59 = sphi 0, %s56
    %s60 = sphi 0, %s59
    %s76 = sphi 0, %s60
    %s80 = sphi 0, %s80
    %s82 = sphi 0, %s80
    %s83 = sphi 0, %s82
    %s97 = sphi 0, %s83
    %s101 = sphi 0, %s101
    %s103 = sphi 0, %s101
    %s104 = sphi 0, %s103
    %s118 = sphi 0, %s104
    %s122 = sphi 0, %s122
    %s124 = sphi 0, %s122
    %s125 = sphi 0, %s124
    %s139 = sphi 0, %s125
    %s143 = sphi 0, %s143
    %s145 = sphi 0, %s143
    %s146 = sphi 0, %s145
    %s160 = sphi 0, %s146
    %s164 = sphi 0, %s164
    %s166 = sphi 0, %s164
    %s167 = sphi 0, %s166
    %s181 = sphi 0, %s167
    %s185 = sphi 0, %s185
    %s187 = sphi 0, %s185
    %s188 = sphi 0, %s187
    %s202 = sphi 0, %s188
    %s206 = sphi 0, %s206
    %s208 = sphi 0, %s206
    %s209 = sphi 0, %s208
    %s223 = sphi 0, %s209
    %s227 = sphi 0, %s227
    %s229 = sphi 0, %s227
    %s230 = sphi 0, %s229
    %s244 = sphi 0, %s230
    %s248 = sphi 0, %s248
    %s250 = sphi 0, %s248
    %s251 = sphi 0, %s250
    %s265 = sphi 0, %s251
    %s269 = sphi 0, %s269
    %s271 = sphi 0, %s269
    %s272 = sphi 0, %s271
    %s286 = sphi 0, %s272
    %s290 = sphi 0, %s290
    %s292 = sphi 0, %s290
    %s293 = sphi 0, %s292
    %s307 = sphi 0, %s293
    %s311 = sphi 0, %s311
    %s313 = sphi 0, %s311
    %s314 = sphi 0, %s313
    %s328 = sphi 0, %s314
    %s334 = sphi 0, %s336
    %s337 = sphi 0, %s334
    %s338 = sphi 0, %s337
    %s354 = sphi 0, %s338
  $region4: #{segment_encoder_forward.9} parent=0 // loop_header_branch
    %23 = sbr.rel (%p21) target = $region8
  $region5: #{segment_encoder_forward.9} parent=0 // loop_body
    %s25 = ssub.s32 %s20, 1
    %s26 = ssub.s32 %s20, 2
    %s27 = sadd.s32 %s20, 1
    %s28 = ssub.s32 %s20, %s27
    %p29 = scmp.eq.s32.totalorder %s28, 0
    %s31 = sadd.s32 %s30, 1
    %s32 = scalar_select %p29, %s30, %s31
    %p35 = pneg %p29
    %p36 = scmp.eq.s32.totalorder %s20, 1
    %p37 = por %p35, %p36
    %p38 = scmp.ne.s32.totalorder %s30, %s33
    %p39 = scmp.eq.s32.totalorder %s20, 0
    %p40 = por %p38, %p39
    %p41 = scmp.ne.s32.totalorder %s30, %s33
    %p42 = scmp.eq.s32.totalorder %s25, 1
    %p43 = por %p41, %p42
    %p44 = scmp.ne.s32.totalorder %s33, %s34
    %p45 = scmp.eq.s32.totalorder %s25, 0
    %p46 = por %p44, %p45
    %p47 = scmp.ne.s32.totalorder %s33, %s34
    %p48 = scmp.eq.s32.totalorder %s26, 1
    %p49 = por %p47, %p48
    %p51 = scmp.ne.s32.totalorder %s34, %s50
    %p52 = scmp.eq.s32.totalorder %s26, 0
    %p53 = por %p51, %p52
    %s54 = ssub.s32 %s20, %s27
    %p55 = scmp.eq.s32.totalorder %s54, 0
    %s57 = sadd.s32 %s56, 1
    %s58 = scalar_select %p55, %s56, %s57
    %p61 = pneg %p55
    %p62 = scmp.eq.s32.totalorder %s20, 1
    %p63 = por %p61, %p62
    %p64 = scmp.ne.s32.totalorder %s56, %s59
    %p65 = scmp.eq.s32.totalorder %s20, 0
    %p66 = por %p64, %p65
    %p67 = scmp.ne.s32.totalorder %s56, %s59
    %p68 = scmp.eq.s32.totalorder %s25, 1
    %p69 = por %p67, %p68
    %p70 = scmp.ne.s32.totalorder %s59, %s60
    %p71 = scmp.eq.s32.totalorder %s25, 0
    %p72 = por %p70, %p71
    %p73 = scmp.ne.s32.totalorder %s59, %s60
    %p74 = scmp.eq.s32.totalorder %s26, 1
    %p75 = por %p73, %p74
    %p77 = scmp.ne.s32.totalorder %s60, %s76
    %p78 = scmp.eq.s32.totalorder %s26, 0
    %p79 = por %p77, %p78
    %s81 = sadd.s32 %s80, 1
    %p84 = scmp.eq.s32.totalorder %s20, 1
    %p85 = scmp.ne.s32.totalorder %s80, %s82
    %p86 = scmp.eq.s32.totalorder %s20, 0
    %p87 = por %p85, %p86
    %p88 = scmp.ne.s32.totalorder %s80, %s82
    %p89 = scmp.eq.s32.totalorder %s25, 1
    %p90 = por %p88, %p89
    %p91 = scmp.ne.s32.totalorder %s82, %s83
    %p92 = scmp.eq.s32.totalorder %s25, 0
    %p93 = por %p91, %p92
    %p94 = scmp.ne.s32.totalorder %s82, %s83
    %p95 = scmp.eq.s32.totalorder %s26, 1
    %p96 = por %p94, %p95
    %p98 = scmp.ne.s32.totalorder %s83, %s97
    %p99 = scmp.eq.s32.totalorder %s26, 0
    %p100 = por %p98, %p99
    %s102 = sadd.s32 %s101, 1
    %p105 = scmp.eq.s32.totalorder %s20, 1
    %p106 = scmp.ne.s32.totalorder %s101, %s103
    %p107 = scmp.eq.s32.totalorder %s20, 0
    %p108 = por %p106, %p107
    %p109 = scmp.ne.s32.totalorder %s101, %s103
    %p110 = scmp.eq.s32.totalorder %s25, 1
    %p111 = por %p109, %p110
    %p112 = scmp.ne.s32.totalorder %s103, %s104
    %p113 = scmp.eq.s32.totalorder %s25, 0
    %p114 = por %p112, %p113
    %p115 = scmp.ne.s32.totalorder %s103, %s104
    %p116 = scmp.eq.s32.totalorder %s26, 1
    %p117 = por %p115, %p116
    %p119 = scmp.ne.s32.totalorder %s104, %s118
    %p120 = scmp.eq.s32.totalorder %s26, 0
    %p121 = por %p119, %p120
    %s123 = sadd.s32 %s122, 1
    %p126 = scmp.eq.s32.totalorder %s20, 1
    %p127 = scmp.ne.s32.totalorder %s122, %s124
    %p128 = scmp.eq.s32.totalorder %s20, 0
    %p129 = por %p127, %p128
    %p130 = scmp.ne.s32.totalorder %s122, %s124
    %p131 = scmp.eq.s32.totalorder %s25, 1
    %p132 = por %p130, %p131
    %p133 = scmp.ne.s32.totalorder %s124, %s125
    %p134 = scmp.eq.s32.totalorder %s25, 0
    %p135 = por %p133, %p134
    %p136 = scmp.ne.s32.totalorder %s124, %s125
    %p137 = scmp.eq.s32.totalorder %s26, 1
    %p138 = por %p136, %p137
    %p140 = scmp.ne.s32.totalorder %s125, %s139
    %p141 = scmp.eq.s32.totalorder %s26, 0
    %p142 = por %p140, %p141
    %s144 = sadd.s32 %s143, 1
    %p147 = scmp.eq.s32.totalorder %s20, 1
    %p148 = scmp.ne.s32.totalorder %s143, %s145
    %p149 = scmp.eq.s32.totalorder %s20, 0
    %p150 = por %p148, %p149
    %p151 = scmp.ne.s32.totalorder %s143, %s145
    %p152 = scmp.eq.s32.totalorder %s25, 1
    %p153 = por %p151, %p152
    %p154 = scmp.ne.s32.totalorder %s145, %s146
    %p155 = scmp.eq.s32.totalorder %s25, 0
    %p156 = por %p154, %p155
    %p157 = scmp.ne.s32.totalorder %s145, %s146
    %p158 = scmp.eq.s32.totalorder %s26, 1
    %p159 = por %p157, %p158
    %p161 = scmp.ne.s32.totalorder %s146, %s160
    %p162 = scmp.eq.s32.totalorder %s26, 0
    %p163 = por %p161, %p162
    %s165 = sadd.s32 %s164, 1
    %p168 = scmp.eq.s32.totalorder %s20, 1
    %p169 = scmp.ne.s32.totalorder %s164, %s166
    %p170 = scmp.eq.s32.totalorder %s20, 0
    %p171 = por %p169, %p170
    %p172 = scmp.ne.s32.totalorder %s164, %s166
    %p173 = scmp.eq.s32.totalorder %s25, 1
    %p174 = por %p172, %p173
    %p175 = scmp.ne.s32.totalorder %s166, %s167
    %p176 = scmp.eq.s32.totalorder %s25, 0
    %p177 = por %p175, %p176
    %p178 = scmp.ne.s32.totalorder %s166, %s167
    %p179 = scmp.eq.s32.totalorder %s26, 1
    %p180 = por %p178, %p179
    %p182 = scmp.ne.s32.totalorder %s167, %s181
    %p183 = scmp.eq.s32.totalorder %s26, 0
    %p184 = por %p182, %p183
    %s186 = sadd.s32 %s185, 1
    %p189 = scmp.eq.s32.totalorder %s20, 1
    %p190 = scmp.ne.s32.totalorder %s185, %s187
    %p191 = scmp.eq.s32.totalorder %s20, 0
    %p192 = por %p190, %p191
    %p193 = scmp.ne.s32.totalorder %s185, %s187
    %p194 = scmp.eq.s32.totalorder %s25, 1
    %p195 = por %p193, %p194
    %p196 = scmp.ne.s32.totalorder %s187, %s188
    %p197 = scmp.eq.s32.totalorder %s25, 0
    %p198 = por %p196, %p197
    %p199 = scmp.ne.s32.totalorder %s187, %s188
    %p200 = scmp.eq.s32.totalorder %s26, 1
    %p201 = por %p199, %p200
    %p203 = scmp.ne.s32.totalorder %s188, %s202
    %p204 = scmp.eq.s32.totalorder %s26, 0
    %p205 = por %p203, %p204
    %s207 = sadd.s32 %s206, 1
    %p210 = scmp.eq.s32.totalorder %s20, 1
    %p211 = scmp.ne.s32.totalorder %s206, %s208
    %p212 = scmp.eq.s32.totalorder %s20, 0
    %p213 = por %p211, %p212
    %p214 = scmp.ne.s32.totalorder %s206, %s208
    %p215 = scmp.eq.s32.totalorder %s25, 1
    %p216 = por %p214, %p215
    %p217 = scmp.ne.s32.totalorder %s208, %s209
    %p218 = scmp.eq.s32.totalorder %s25, 0
    %p219 = por %p217, %p218
    %p220 = scmp.ne.s32.totalorder %s208, %s209
    %p221 = scmp.eq.s32.totalorder %s26, 1
    %p222 = por %p220, %p221
    %p224 = scmp.ne.s32.totalorder %s209, %s223
    %p225 = scmp.eq.s32.totalorder %s26, 0
    %p226 = por %p224, %p225
    %s228 = sadd.s32 %s227, 1
    %p231 = scmp.eq.s32.totalorder %s20, 1
    %p232 = scmp.ne.s32.totalorder %s227, %s229
    %p233 = scmp.eq.s32.totalorder %s20, 0
    %p234 = por %p232, %p233
    %p235 = scmp.ne.s32.totalorder %s227, %s229
    %p236 = scmp.eq.s32.totalorder %s25, 1
    %p237 = por %p235, %p236
    %p238 = scmp.ne.s32.totalorder %s229, %s230
    %p239 = scmp.eq.s32.totalorder %s25, 0
    %p240 = por %p238, %p239
    %p241 = scmp.ne.s32.totalorder %s229, %s230
    %p242 = scmp.eq.s32.totalorder %s26, 1
    %p243 = por %p241, %p242
    %p245 = scmp.ne.s32.totalorder %s230, %s244
    %p246 = scmp.eq.s32.totalorder %s26, 0
    %p247 = por %p245, %p246
    %s249 = sadd.s32 %s248, 1
    %p252 = scmp.eq.s32.totalorder %s20, 1
    %p253 = scmp.ne.s32.totalorder %s248, %s250
    %p254 = scmp.eq.s32.totalorder %s20, 0
    %p255 = por %p253, %p254
    %p256 = scmp.ne.s32.totalorder %s248, %s250
    %p257 = scmp.eq.s32.totalorder %s25, 1
    %p258 = por %p256, %p257
    %p259 = scmp.ne.s32.totalorder %s250, %s251
    %p260 = scmp.eq.s32.totalorder %s25, 0
    %p261 = por %p259, %p260
    %p262 = scmp.ne.s32.totalorder %s250, %s251
    %p263 = scmp.eq.s32.totalorder %s26, 1
    %p264 = por %p262, %p263
    %p266 = scmp.ne.s32.totalorder %s251, %s265
    %p267 = scmp.eq.s32.totalorder %s26, 0
    %p268 = por %p266, %p267
    %s270 = sadd.s32 %s269, 1
    %p273 = scmp.eq.s32.totalorder %s20, 1
    %p274 = scmp.ne.s32.totalorder %s269, %s271
    %p275 = scmp.eq.s32.totalorder %s20, 0
    %p276 = por %p274, %p275
    %p277 = scmp.ne.s32.totalorder %s269, %s271
    %p278 = scmp.eq.s32.totalorder %s25, 1
    %p279 = por %p277, %p278
    %p280 = scmp.ne.s32.totalorder %s271, %s272
    %p281 = scmp.eq.s32.totalorder %s25, 0
    %p282 = por %p280, %p281
    %p283 = scmp.ne.s32.totalorder %s271, %s272
    %p284 = scmp.eq.s32.totalorder %s26, 1
    %p285 = por %p283, %p284
    %p287 = scmp.ne.s32.totalorder %s272, %s286
    %p288 = scmp.eq.s32.totalorder %s26, 0
    %p289 = por %p287, %p288
    %s291 = sadd.s32 %s290, 1
    %p294 = scmp.eq.s32.totalorder %s20, 1
    %p295 = scmp.ne.s32.totalorder %s290, %s292
    %p296 = scmp.eq.s32.totalorder %s20, 0
    %p297 = por %p295, %p296
    %p298 = scmp.ne.s32.totalorder %s290, %s292
    %p299 = scmp.eq.s32.totalorder %s25, 1
    %p300 = por %p298, %p299
    %p301 = scmp.ne.s32.totalorder %s292, %s293
    %p302 = scmp.eq.s32.totalorder %s25, 0
    %p303 = por %p301, %p302
    %p304 = scmp.ne.s32.totalorder %s292, %s293
    %p305 = scmp.eq.s32.totalorder %s26, 1
    %p306 = por %p304, %p305
    %p308 = scmp.ne.s32.totalorder %s293, %s307
    %p309 = scmp.eq.s32.totalorder %s26, 0
    %p310 = por %p308, %p309
    %s312 = sadd.s32 %s311, 1
    %p315 = scmp.eq.s32.totalorder %s20, 1
    %p316 = scmp.ne.s32.totalorder %s311, %s313
    %p317 = scmp.eq.s32.totalorder %s20, 0
    %p318 = por %p316, %p317
    %p319 = scmp.ne.s32.totalorder %s311, %s313
    %p320 = scmp.eq.s32.totalorder %s25, 1
    %p321 = por %p319, %p320
    %p322 = scmp.ne.s32.totalorder %s313, %s314
    %p323 = scmp.eq.s32.totalorder %s25, 0
    %p324 = por %p322, %p323
    %p325 = scmp.ne.s32.totalorder %s313, %s314
    %p326 = scmp.eq.s32.totalorder %s26, 1
    %p327 = por %p325, %p326
    %p329 = scmp.ne.s32.totalorder %s314, %s328
    %p330 = scmp.eq.s32.totalorder %s26, 0
    %p331 = por %p329, %p330
    %s332 = ssub.s32 %s20, %s27
    %p333 = scmp.eq.s32.totalorder %s332, 0
    %s335 = sadd.s32 %s334, 1
    %s336 = scalar_select %p333, %s334, %s335
    %p339 = pneg %p333
    %p340 = scmp.eq.s32.totalorder %s20, 1
    %p341 = por %p339, %p340
    %p342 = scmp.ne.s32.totalorder %s334, %s337
    %p343 = scmp.eq.s32.totalorder %s20, 0
    %p344 = por %p342, %p343
    %p345 = scmp.ne.s32.totalorder %s334, %s337
    %p346 = scmp.eq.s32.totalorder %s25, 1
    %p347 = por %p345, %p346
    %p348 = scmp.ne.s32.totalorder %s337, %s338
    %p349 = scmp.eq.s32.totalorder %s25, 0
    %p350 = por %p348, %p349
    %p351 = scmp.ne.s32.totalorder %s337, %s338
    %p352 = scmp.eq.s32.totalorder %s26, 1
    %p353 = por %p351, %p352
    %p355 = scmp.ne.s32.totalorder %s338, %s354
    %p356 = scmp.eq.s32.totalorder %s26, 0
    %p357 = por %p355, %p356
    %p358 = scmp.le.s32.totalorder 1, %s20
    %p359 = scmp.lt.s32.totalorder %s20, 3
    %p360 = pnand %p358, %p359
    %p361 = pneg %p360
    // Predicated region
    $region9: #{segment_encoder_forward.9} parent=5 // pred_check
      _
    $region10: #{segment_encoder_forward.9} parent=5 // pred_check_branch
      %363 = sbr.rel (%p360) target = $region12
    $region11: #{segment_encoder_forward.9} parent=5 // pred_region
      %s364 = ssub.s32 %s20, 1
      // Predicated region
      $region13: #{segment_encoder_forward.9} parent=11 // pred_check
        %p365 = pneg %p93
      $region14: #{segment_encoder_forward.9} parent=11 // pred_check_branch
        %367 = sbr.rel (%p365) target = $region16
      $region15: #{segment_encoder_forward.9} parent=11 // pred_region
        _
      $region16: #{segment_encoder_forward.9} parent=11 // pred_fallthru
        _
      // Predicated region
      $region17: #{segment_encoder_forward.9} parent=11 // pred_check
        %p368 = pneg %p114
      $region18: #{segment_encoder_forward.9} parent=11 // pred_check_branch
        %370 = sbr.rel (%p368) target = $region20
      $region19: #{segment_encoder_forward.9} parent=11 // pred_region
        _
      $region20: #{segment_encoder_forward.9} parent=11 // pred_fallthru
        _
      // Predicated region
      $region21: #{segment_encoder_forward.9} parent=11 // pred_check
        %p371 = pneg %p135
      $region22: #{segment_encoder_forward.9} parent=11 // pred_check_branch
        %373 = sbr.rel (%p371) target = $region24
      $region23: #{segment_encoder_forward.9} parent=11 // pred_region
        _
      $region24: #{segment_encoder_forward.9} parent=11 // pred_fallthru
        _
      // Predicated region
      $region25: #{segment_encoder_forward.9} parent=11 // pred_check
        %p374 = pneg %p156
      $region26: #{segment_encoder_forward.9} parent=11 // pred_check_branch
        %376 = sbr.rel (%p374) target = $region28
      $region27: #{segment_encoder_forward.9} parent=11 // pred_region
        _
      $region28: #{segment_encoder_forward.9} parent=11 // pred_fallthru
        _
      // Predicated region
      $region29: #{segment_encoder_forward.9} parent=11 // pred_check
        %p377 = pneg %p177
      $region30: #{segment_encoder_forward.9} parent=11 // pred_check_branch
        %379 = sbr.rel (%p377) target = $region32
      $region31: #{segment_encoder_forward.9} parent=11 // pred_region
        _
      $region32: #{segment_encoder_forward.9} parent=11 // pred_fallthru
        _
      // Predicated region
      $region33: #{segment_encoder_forward.9} parent=11 // pred_check
        %p380 = pneg %p198
      $region34: #{segment_encoder_forward.9} parent=11 // pred_check_branch
        %382 = sbr.rel (%p380) target = $region36
      $region35: #{segment_encoder_forward.9} parent=11 // pred_region
        _
      $region36: #{segment_encoder_forward.9} parent=11 // pred_fallthru
        _
      // Predicated region
      $region37: #{segment_encoder_forward.9} parent=11 // pred_check
        %p383 = pneg %p219
      $region38: #{segment_encoder_forward.9} parent=11 // pred_check_branch
        %385 = sbr.rel (%p383) target = $region40
      $region39: #{segment_encoder_forward.9} parent=11 // pred_region
        _
      $region40: #{segment_encoder_forward.9} parent=11 // pred_fallthru
        _
      // Predicated region
      $region41: #{segment_encoder_forward.9} parent=11 // pred_check
        %p386 = pneg %p240
      $region42: #{segment_encoder_forward.9} parent=11 // pred_check_branch
        %388 = sbr.rel (%p386) target = $region44
      $region43: #{segment_encoder_forward.9} parent=11 // pred_region
        _
      $region44: #{segment_encoder_forward.9} parent=11 // pred_fallthru
        _
      // Predicated region
      $region45: #{segment_encoder_forward.9} parent=11 // pred_check
        %p389 = pneg %p261
      $region46: #{segment_encoder_forward.9} parent=11 // pred_check_branch
        %391 = sbr.rel (%p389) target = $region48
      $region47: #{segment_encoder_forward.9} parent=11 // pred_region
        _
      $region48: #{segment_encoder_forward.9} parent=11 // pred_fallthru
        _
      // Predicated region
      $region49: #{segment_encoder_forward.9} parent=11 // pred_check
        %p392 = pneg %p282
      $region50: #{segment_encoder_forward.9} parent=11 // pred_check_branch
        %394 = sbr.rel (%p392) target = $region52
      $region51: #{segment_encoder_forward.9} parent=11 // pred_region
        _
      $region52: #{segment_encoder_forward.9} parent=11 // pred_fallthru
        _
      // Predicated region
      $region53: #{segment_encoder_forward.9} parent=11 // pred_check
        %p395 = pneg %p303
      $region54: #{segment_encoder_forward.9} parent=11 // pred_check_branch
        %397 = sbr.rel (%p395) target = $region56
      $region55: #{segment_encoder_forward.9} parent=11 // pred_region
        _
      $region56: #{segment_encoder_forward.9} parent=11 // pred_fallthru
        _
      // Predicated region
      $region57: #{segment_encoder_forward.9} parent=11 // pred_check
        %p398 = pneg %p324
      $region58: #{segment_encoder_forward.9} parent=11 // pred_check_branch
        %400 = sbr.rel (%p398) target = $region60
      $region59: #{segment_encoder_forward.9} parent=11 // pred_region
        _
      $region60: #{segment_encoder_forward.9} parent=11 // pred_fallthru
        _
    $region12: #{segment_encoder_forward.9} parent=5 // pred_fallthru
      _
    %p401 = scmp.lt.s32.totalorder %s20, 2
    // Predicated region
    $region61: #{segment_encoder_forward.9} parent=5 // pred_check
      %p402 = pneg %p401
    $region62: #{segment_encoder_forward.9} parent=5 // pred_check_branch
      %404 = sbr.rel (%p402) target = $region64
    $region63: #{segment_encoder_forward.9} parent=5 // pred_region
      // Predicated region
      $region65: #{segment_encoder_forward.9} parent=63 // pred_check
        %p405 = pneg %p40
      $region66: #{segment_encoder_forward.9} parent=63 // pred_check_branch
        %407 = sbr.rel (%p405) target = $region68
      $region67: #{segment_encoder_forward.9} parent=63 // pred_region
        %p408 = scmp.lt.s32.totalorder %s20, 1
        %s409 = scalar_select %p408, %s20, 1
        %s410 = smul.addr %s409, 8
        %s411 = smul.addr %s410, 4
        %s412 = scalar_lea.vmem %s0, %s411
      $region68: #{segment_encoder_forward.9} parent=63 // pred_fallthru
        _
      // Predicated region
      $region69: #{segment_encoder_forward.9} parent=63 // pred_check
        %p413 = pneg %p66
      $region70: #{segment_encoder_forward.9} parent=63 // pred_check_branch
        %415 = sbr.rel (%p413) target = $region72
      $region71: #{segment_encoder_forward.9} parent=63 // pred_region
        %p416 = scmp.lt.s32.totalorder %s20, 1
        %s417 = scalar_select %p416, %s20, 1
        %s418 = smul.addr %s417, 2
        %s419 = smul.addr %s418, 8
        %s420 = scalar_lea.vmem %s1, %s419
      $region72: #{segment_encoder_forward.9} parent=63 // pred_fallthru
        _
    $region64: #{segment_encoder_forward.9} parent=5 // pred_fallthru
      _
    %p421 = scmp.le.s32.totalorder 1, %s20
    %p422 = scmp.lt.s32.totalorder %s20, 3
    %p423 = pnand %p421, %p422
    %p424 = pneg %p423
    // Predicated region
    $region73: #{segment_encoder_forward.9} parent=5 // pred_check
      _
    $region74: #{segment_encoder_forward.9} parent=5 // pred_check_branch
      %426 = sbr.rel (%p423) target = $region76
    $region75: #{segment_encoder_forward.9} parent=5 // pred_region
      %s427 = ssub.s32 %s20, 1
      %p428 = scmp.lt.s32.totalorder %s25, 1
      %s429 = scalar_select %p428, %s25, 1
      %s430 = smul.addr %s429, 8
      %s431 = smul.addr %s430, 4
      %s432 = scalar_lea.vmem %s0, %s431
      %p433 = pneg %p46
      %p434 = pneg %p43
      %p435 = scmp.lt.s32.totalorder %s25, 1
      %s436 = scalar_select %p435, %s25, 1
      %s437 = smul.addr %s436, 2
      %s438 = smul.addr %s437, 8
      %s439 = scalar_lea.vmem %s1, %s438
      %p440 = pneg %p72
      %p441 = pneg %p69
      %p442 = pneg %p93
      %p443 = pneg %p90
      %p444 = pneg %p114
      %p445 = pneg %p111
      %p446 = pneg %p135
      %p447 = pneg %p132
      %p448 = pneg %p156
      %p449 = pneg %p153
      %p450 = pneg %p177
      %p451 = pneg %p174
      %p452 = pneg %p198
      %p453 = pneg %p195
      %p454 = pneg %p219
      %p455 = pneg %p216
      %p456 = pneg %p240
      %p457 = pneg %p237
      %p458 = pneg %p261
      %p459 = pneg %p258
      %p460 = pneg %p282
      %p461 = pneg %p279
      %p462 = pneg %p303
      %p463 = pneg %p300
      %p464 = pneg %p324
      %p465 = pneg %p321
      %p466 = pneg %p350
      %p467 = pneg %p347
      %p468 = scmp.lt.s32.totalorder %s25, 1
      %s469 = scalar_select %p468, %s25, 1
      %s470 = smul.addr %s469, 8
      %s471 = smul.addr %s470, 8
      %s472 = scalar_lea.vmem %s14, %s471
      %p473 = scmp.lt.s32.totalorder %s25, 1
      %s474 = scalar_select %p473, %s25, 1
      %s475 = smul.addr %s474, 8
      %s476 = smul.addr %s475, 4
      %s477 = scalar_lea.vmem %s0, %s476
      %p478 = scmp.lt.s32.totalorder %s25, 1
      %s479 = scalar_select %p478, %s25, 1
      %s480 = smul.addr %s479, 2
      %s481 = smul.addr %s480, 8
      %s482 = scalar_lea.vmem %s1, %s481
      %p483 = scmp.lt.s32.totalorder %s25, 1
      %s484 = scalar_select %p483, %s25, 1
      %s485 = smul.addr %s484, 8
      %s486 = smul.addr %s485, 8
      %s487 = scalar_lea.vmem %s14, %s486
      %v489 = vld [vmem:[%s477] sm:$0xf]
      %v490 = vld [vmem:[%s477 + $0x4] sm:$0xf]
      %v491 = vld [vmem:[%s477 + $0x8] sm:$0xf]
      %v492 = vld [vmem:[%s477 + $0xc] sm:$0xf]
      %v493 = vld [vmem:[%s477 + $0x10] sm:$0xf]
      %v494 = vld [vmem:[%s477 + $0x14] sm:$0xf]
      %v495 = vld [vmem:[%s477 + $0x18] sm:$0xf]
      %v496 = vld [vmem:[%s477 + $0x1c] sm:$0xf]
      %v497 = vunpack.c.l.bf16 %v489
      %v498 = vunpack.c.l.bf16 %v490
      %v499 = vunpack.c.l.bf16 %v491
      %v500 = vunpack.c.l.bf16 %v492
      %v501 = vunpack.c.l.bf16 %v493
      %v502 = vunpack.c.l.bf16 %v494
      %v503 = vunpack.c.l.bf16 %v495
      %v504 = vunpack.c.l.bf16 %v496
      %v505 = vld [vmem:[%s2] sm:$0xff]
      %v506 = vld [vmem:[%s2 + $0x8] sm:$0xff]
      %v507 = vld [vmem:[%s2 + $0x10] sm:$0xff]
      %v508 = vld [vmem:[%s2 + $0x18] sm:$0xff]
      %v509 = vld [vmem:[%s2 + $0x20] sm:$0xff]
      %v510 = vld [vmem:[%s2 + $0x28] sm:$0xff]
      %v511 = vld [vmem:[%s2 + $0x30] sm:$0xff]
      %v512 = vld [vmem:[%s2 + $0x38] sm:$0xff]
      %v513 = vadd.f32 %v497, %v505
      %v514 = vadd.f32 %v498, %v506
      %v515 = vadd.f32 %v499, %v507
      %v516 = vadd.f32 %v500, %v508
      %v517 = vadd.f32 %v501, %v509
      %v518 = vadd.f32 %v502, %v510
      %v519 = vadd.f32 %v503, %v511
      %v520 = vadd.f32 %v504, %v512
      %v521 = vpack.c.bf16 %v514, %v513
      %v522 = vpack.c.bf16 %v516, %v515
      %v523 = vpack.c.bf16 %v518, %v517
      %v524 = vpack.c.bf16 %v520, %v519
      %v525 = vld [vmem:[%s482] sm:$0xff]
      %v526 = vld [vmem:[%s482 + $0x8] sm:$0xff]
      %v527 = vpack.c.bf16 %v526, %v525
      %v528 = vld [vmem:[%s4] sm:$0xf]
      %v529 = vld [vmem:[%s4 + $0x4] sm:$0xf]
      %v530 = vld [vmem:[%s5] sm:$0x1]
      %v532 = vlaneseq
      %v533 = vshrl.u32 %v532, 7
      %v534 = vsub.s32 0, %v533
      %v535 = vrot.slane %v530, %v534
      %v539 = vunpack.c.l.b16 %v528
      %v540 = vunpack.c.l.b16 %v529
      %v541 = vpack.c.b16 %v540, %v539
      %vm543 = vcmask 130048
      %v545 = vsel %vm543, %v527, 0
      %547 = vmatprep.subr.bf16.mxu0 0
      %548 = vmatpush1.bf16.msra.mxu0 %v541
      %549 = vmatprep.subr.bf16.mxu0 0
      %550 = vmatpush1.bf16.msra.mxu0 0
      %551 = vmatprep.subr.bf16.mxu0 0
      %552 = vmatpush1.bf16.msra.mxu0 0
      %553 = vmatprep.subr.bf16.mxu0 0
      %554 = vmatpush1.bf16.msra.mxu0 0
      %555 = vmatprep.subr.bf16.mxu0 0
      %556 = vmatpush1.bf16.msra.mxu0 0
      %557 = vmatprep.subr.bf16.mxu0 0
      %558 = vmatpush1.bf16.msra.mxu0 0
      %559 = vmatprep.subr.bf16.mxu0 0
      %560 = vmatpush1.bf16.msra.mxu0 0
      %561 = vmatprep.subr.bf16.mxu0 0
      %562 = vmatpush1.bf16.msra.mxu0 0
      %563 = vmatprep.subr.bf16.mxu0 0
      %564 = vmatpush1.bf16.msra.mxu0 0
      %565 = vmatprep.subr.bf16.mxu0 0
      %566 = vmatpush1.bf16.msra.mxu0 0
      %567 = vmatprep.subr.bf16.mxu0 0
      %568 = vmatpush1.bf16.msra.mxu0 0
      %569 = vmatprep.subr.bf16.mxu0 0
      %570 = vmatpush1.bf16.msra.mxu0 0
      %571 = vmatprep.subr.bf16.mxu0 0
      %572 = vmatpush1.bf16.msra.mxu0 0
      %573 = vmatprep.subr.bf16.mxu0 0
      %574 = vmatpush1.bf16.msra.mxu0 0
      %575 = vmatprep.subr.bf16.mxu0 0
      %576 = vmatpush1.bf16.msra.mxu0 0
      %577 = vmatprep.subr.bf16.mxu0 0
      %578 = vmatpush1.bf16.msra.mxu0 0
      %579 = vmatprep.mubr.bf16.mxu0 0
      %580 = vmatmul.mubr.bf16.gmra.mrb[0].mxu0 %v545
      %v581 = vpop.f32.mrb[0].mxu0
      %v582 = vadd.f32 %v535, %v581
      %v583 = vpop.f32.mrb[0].mxu0
      %v584 = vpop.f32.mrb[0].mxu0
      %v585 = vadd.f32 %v535, %v584
      %v586 = vpop.f32.mrb[0].mxu0
      %587 = vdwg.mxu0
      %v588 = vld [vmem:[%s3] sm:$0xff]
      %v589 = vld [vmem:[%s3 + $0x8] sm:$0xff]
      %v590 = vadd.f32 %v582, %v588
      %v591 = vadd.f32 %v585, %v589
      %v592 = vpack.c.bf16 %v591, %v590
      %v593 = vld [vmem:[%s6] sm:$0xf]
      %v594 = vld [vmem:[%s10] sm:$0x1]
      %v596 = vlaneseq
      %v597 = vshrl.u32 %v596, 7
      %v598 = vsub.s32 0, %v597
      %v599 = vrot.slane %v594, %v598
      %vm601 = vcmask 64512
      %v603 = vsel %vm601, %v521, 0
      %v606 = vsel %vm601, %v522, 0
      %v609 = vsel %vm601, %v523, 0
      %v612 = vsel %vm601, %v524, 0
      %vm614 = vcmask 1043456
      %v616 = vsel %vm614, %v593, 0
      %618 = vmatprep.subr.bf16.mxu0 0
      %619 = vmatpush1.bf16.msra.mxu0 %v616
      %620 = vmatprep.subr.bf16.mxu0 0
      %621 = vmatpush1.bf16.msra.mxu0 0
      %622 = vmatprep.subr.bf16.mxu0 0
      %623 = vmatpush1.bf16.msra.mxu0 0
      %624 = vmatprep.subr.bf16.mxu0 0
      %625 = vmatpush1.bf16.msra.mxu0 0
      %626 = vmatprep.subr.bf16.mxu0 0
      %627 = vmatpush1.bf16.msra.mxu0 0
      %628 = vmatprep.subr.bf16.mxu0 0
      %629 = vmatpush1.bf16.msra.mxu0 0
      %630 = vmatprep.subr.bf16.mxu0 0
      %631 = vmatpush1.bf16.msra.mxu0 0
      %632 = vmatprep.subr.bf16.mxu0 0
      %633 = vmatpush1.bf16.msra.mxu0 0
      %634 = vmatprep.subr.bf16.mxu0 0
      %635 = vmatpush1.bf16.msra.mxu0 0
      %636 = vmatprep.subr.bf16.mxu0 0
      %637 = vmatpush1.bf16.msra.mxu0 0
      %638 = vmatprep.subr.bf16.mxu0 0
      %639 = vmatpush1.bf16.msra.mxu0 0
      %640 = vmatprep.subr.bf16.mxu0 0
      %641 = vmatpush1.bf16.msra.mxu0 0
      %642 = vmatprep.subr.bf16.mxu0 0
      %643 = vmatpush1.bf16.msra.mxu0 0
      %644 = vmatprep.subr.bf16.mxu0 0
      %645 = vmatpush1.bf16.msra.mxu0 0
      %646 = vmatprep.subr.bf16.mxu0 0
      %647 = vmatpush1.bf16.msra.mxu0 0
      %648 = vmatprep.subr.bf16.mxu0 0
      %649 = vmatpush1.bf16.msra.mxu0 0
      %650 = vmatprep.mubr.bf16.mxu0 0
      %651 = vmatmul.mubr.bf16.gmra.mrb[0].mxu0 %v603
      %v652 = vpop.f32.mrb[0].mxu0
      %v653 = vadd.f32 %v599, %v652
      %v654 = vpop.f32.mrb[0].mxu0
      %v655 = vpop.f32.mrb[0].mxu0
      %v656 = vadd.f32 %v599, %v655
      %v657 = vpop.f32.mrb[0].mxu0
      %658 = vmatprep.mubr.bf16.mxu0 0
      %659 = vmatmul.mubr.bf16.gmra.mrb[0].mxu0 %v606
      %v660 = vpop.f32.mrb[0].mxu0
      %v661 = vadd.f32 %v599, %v660
      %v662 = vpop.f32.mrb[0].mxu0
      %v663 = vpop.f32.mrb[0].mxu0
      %v664 = vadd.f32 %v599, %v663
      %v665 = vpop.f32.mrb[0].mxu0
      %666 = vmatprep.mubr.bf16.mxu0 0
      %667 = vmatmul.mubr.bf16.gmra.mrb[0].mxu0 %v609
      %v668 = vpop.f32.mrb[0].mxu0
      %v669 = vadd.f32 %v599, %v668
      %v670 = vpop.f32.mrb[0].mxu0
      %v671 = vpop.f32.mrb[0].mxu0
      %v672 = vadd.f32 %v599, %v671
      %v673 = vpop.f32.mrb[0].mxu0
      %674 = vmatprep.mubr.bf16.mxu0 0
      %675 = vmatmul.mubr.bf16.gmra.mrb[0].mxu0 %v612
      %v676 = vpop.f32.mrb[0].mxu0
      %v677 = vadd.f32 %v599, %v676
      %v678 = vpop.f32.mrb[0].mxu0
      %v679 = vpop.f32.mrb[0].mxu0
      %v680 = vadd.f32 %v599, %v679
      %v681 = vpop.f32.mrb[0].mxu0
      %682 = vdwg.mxu0
      %v683 = vld [vmem:[%s7] sm:$0xf]
      %v684 = vld [vmem:[%s11] sm:$0x1]
      %v686 = vlaneseq
      %v687 = vshrl.u32 %v686, 7
      %v688 = vsub.s32 0, %v687
      %v689 = vrot.slane %v684, %v688
      %v692 = vsel %vm601, %v592, 0
      %v695 = vsel %vm614, %v683, 0
      %697 = vmatprep.subr.bf16.mxu0 0
      %698 = vmatpush1.bf16.msra.mxu0 %v695
      %699 = vmatprep.subr.bf16.mxu0 0
      %700 = vmatpush1.bf16.msra.mxu0 0
      %701 = vmatprep.subr.bf16.mxu0 0
      %702 = vmatpush1.bf16.msra.mxu0 0
      %703 = vmatprep.subr.bf16.mxu0 0
      %704 = vmatpush1.bf16.msra.mxu0 0
      %705 = vmatprep.subr.bf16.mxu0 0
      %706 = vmatpush1.bf16.msra.mxu0 0
      %707 = vmatprep.subr.bf16.mxu0 0
      %708 = vmatpush1.bf16.msra.mxu0 0
      %709 = vmatprep.subr.bf16.mxu0 0
      %710 = vmatpush1.bf16.msra.mxu0 0
      %711 = vmatprep.subr.bf16.mxu0 0
      %712 = vmatpush1.bf16.msra.mxu0 0
      %713 = vmatprep.subr.bf16.mxu0 0
      %714 = vmatpush1.bf16.msra.mxu0 0
      %715 = vmatprep.subr.bf16.mxu0 0
      %716 = vmatpush1.bf16.msra.mxu0 0
      %717 = vmatprep.subr.bf16.mxu0 0
      %718 = vmatpush1.bf16.msra.mxu0 0
      %719 = vmatprep.subr.bf16.mxu0 0
      %720 = vmatpush1.bf16.msra.mxu0 0
      %721 = vmatprep.subr.bf16.mxu0 0
      %722 = vmatpush1.bf16.msra.mxu0 0
      %723 = vmatprep.subr.bf16.mxu0 0
      %724 = vmatpush1.bf16.msra.mxu0 0
      %725 = vmatprep.subr.bf16.mxu0 0
      %726 = vmatpush1.bf16.msra.mxu0 0
      %727 = vmatprep.subr.bf16.mxu0 0
      %728 = vmatpush1.bf16.msra.mxu0 0
      %729 = vmatprep.mubr.bf16.mxu0 0
      %730 = vmatmul.mubr.bf16.gmra.mrb[0].mxu0 %v692
      %v731 = vpop.f32.mrb[0].mxu0
      %v732 = vadd.f32 %v689, %v731
      %v733 = vpop.f32.mrb[0].mxu0
      %v734 = vpop.f32.mrb[0].mxu0
      %v735 = vadd.f32 %v689, %v734
      %v736 = vpop.f32.mrb[0].mxu0
      %737 = vdwg.mxu0
      %v738 = vld [vmem:[%s8] sm:$0xf]
      %v739 = vld [vmem:[%s12] sm:$0x1]
      %v741 = vlaneseq
      %v742 = vshrl.u32 %v741, 7
      %v743 = vsub.s32 0, %v742
      %v744 = vrot.slane %v739, %v743
      %v747 = vsel %vm614, %v738, 0
      %749 = vmatprep.subr.bf16.mxu0 0
      %750 = vmatpush1.bf16.msra.mxu0 %v747
      %751 = vmatprep.subr.bf16.mxu0 0
      %752 = vmatpush1.bf16.msra.mxu0 0
      %753 = vmatprep.subr.bf16.mxu0 0
      %754 = vmatpush1.bf16.msra.mxu0 0
      %755 = vmatprep.subr.bf16.mxu0 0
      %756 = vmatpush1.bf16.msra.mxu0 0
      %757 = vmatprep.subr.bf16.mxu0 0
      %758 = vmatpush1.bf16.msra.mxu0 0
      %759 = vmatprep.subr.bf16.mxu0 0
      %760 = vmatpush1.bf16.msra.mxu0 0
      %761 = vmatprep.subr.bf16.mxu0 0
      %762 = vmatpush1.bf16.msra.mxu0 0
      %763 = vmatprep.subr.bf16.mxu0 0
      %764 = vmatpush1.bf16.msra.mxu0 0
      %765 = vmatprep.subr.bf16.mxu0 0
      %766 = vmatpush1.bf16.msra.mxu0 0
      %767 = vmatprep.subr.bf16.mxu0 0
      %768 = vmatpush1.bf16.msra.mxu0 0
      %769 = vmatprep.subr.bf16.mxu0 0
      %770 = vmatpush1.bf16.msra.mxu0 0
      %771 = vmatprep.subr.bf16.mxu0 0
      %772 = vmatpush1.bf16.msra.mxu0 0
      %773 = vmatprep.subr.bf16.mxu0 0
      %774 = vmatpush1.bf16.msra.mxu0 0
      %775 = vmatprep.subr.bf16.mxu0 0
      %776 = vmatpush1.bf16.msra.mxu0 0
      %777 = vmatprep.subr.bf16.mxu0 0
      %778 = vmatpush1.bf16.msra.mxu0 0
      %779 = vmatprep.subr.bf16.mxu0 0
      %780 = vmatpush1.bf16.msra.mxu0 0
      %781 = vmatprep.mubr.bf16.mxu0 0
      %782 = vmatmul.mubr.bf16.gmra.mrb[0].mxu0 %v692
      %v783 = vpop.f32.mrb[0].mxu0
      %v784 = vadd.f32 %v744, %v783
      %v785 = vpop.f32.mrb[0].mxu0
      %v786 = vpop.f32.mrb[0].mxu0
      %v787 = vadd.f32 %v744, %v786
      %v788 = vpop.f32.mrb[0].mxu0
      %789 = vdwg.mxu0
      %v790 = vpack.c.bf16 %v656, %v653
      %v791 = vpack.c.bf16 %v664, %v661
      %v792 = vpack.c.bf16 %v672, %v669
      %v793 = vpack.c.bf16 %v680, %v677
      %v794 = vpack.c.bf16 %v735, %v732
      %v796 = vsel %vm601, %v790, 0
      %v799 = vsel %vm601, %v791, 0
      %v802 = vsel %vm601, %v792, 0
      %v805 = vsel %vm601, %v793, 0
      %v808 = vsel %vm601, %v794, 0
      %810 = vmatprep.subr.bf16.mxu0 0
      %811 = vmatpush1.bf16.xpose.msra.mxu0 %v808
      %812 = vmatprep.subr.bf16.mxu0 0
      %813 = vmatpush1.bf16.xpose.msra.mxu0 0
      %814 = vmatprep.subr.bf16.mxu0 0
      %815 = vmatpush1.bf16.xpose.msra.mxu0 0
      %816 = vmatprep.subr.bf16.mxu0 0
      %817 = vmatpush1.bf16.xpose.msra.mxu0 0
      %818 = vmatprep.subr.bf16.mxu0 0
      %819 = vmatpush1.bf16.xpose.msra.mxu0 0
      %820 = vmatprep.subr.bf16.mxu0 0
      %821 = vmatpush1.bf16.xpose.msra.mxu0 0
      %822 = vmatprep.subr.bf16.mxu0 0
      %823 = vmatpush1.bf16.xpose.msra.mxu0 0
      %824 = vmatprep.subr.bf16.mxu0 0
      %825 = vmatpush1.bf16.xpose.msra.mxu0 0
      %826 = vmatprep.subr.bf16.mxu0 0
      %827 = vmatpush1.bf16.xpose.msra.mxu0 0
      %828 = vmatprep.subr.bf16.mxu0 0
      %829 = vmatpush1.bf16.xpose.msra.mxu0 0
      %830 = vmatprep.subr.bf16.mxu0 0
      %831 = vmatpush1.bf16.xpose.msra.mxu0 0
      %832 = vmatprep.subr.bf16.mxu0 0
      %833 = vmatpush1.bf16.xpose.msra.mxu0 0
      %834 = vmatprep.subr.bf16.mxu0 0
      %835 = vmatpush1.bf16.xpose.msra.mxu0 0
      %836 = vmatprep.subr.bf16.mxu0 0
      %837 = vmatpush1.bf16.xpose.msra.mxu0 0
      %838 = vmatprep.subr.bf16.mxu0 0
      %839 = vmatpush1.bf16.xpose.msra.mxu0 0
      %840 = vmatprep.subr.bf16.mxu0 0
      %841 = vmatpush1.bf16.xpose.msra.mxu0 0
      %842 = vmatprep.mubr.bf16.mxu0 0
      %843 = vmatmul.mubr.bf16.gmra.mrb[0].mxu0 %v796
      %v844 = vpop.f32.mrb[0].mxu0
      %v845 = vadd.f32 0.0, %v844
      %v846 = vpop.f32.mrb[0].mxu0
      %v847 = vpop.f32.mrb[0].mxu0
      %v848 = vadd.f32 0.0, %v847
      %v849 = vpop.f32.mrb[0].mxu0
      %850 = vmatprep.mubr.bf16.mxu0 0
      %851 = vmatmul.mubr.bf16.gmra.mrb[0].mxu0 %v799
      %v852 = vpop.f32.mrb[0].mxu0
      %v853 = vadd.f32 0.0, %v852
      %v854 = vpop.f32.mrb[0].mxu0
      %v855 = vpop.f32.mrb[0].mxu0
      %v856 = vadd.f32 0.0, %v855
      %v857 = vpop.f32.mrb[0].mxu0
      %858 = vmatprep.mubr.bf16.mxu0 0
      %859 = vmatmul.mubr.bf16.gmra.mrb[0].mxu0 %v802
      %v860 = vpop.f32.mrb[0].mxu0
      %v861 = vadd.f32 0.0, %v860
      %v862 = vpop.f32.mrb[0].mxu0
      %v863 = vpop.f32.mrb[0].mxu0
      %v864 = vadd.f32 0.0, %v863
      %v865 = vpop.f32.mrb[0].mxu0
      %866 = vmatprep.mubr.bf16.mxu0 0
      %867 = vmatmul.mubr.bf16.gmra.mrb[0].mxu0 %v805
      %v868 = vpop.f32.mrb[0].mxu0
      %v869 = vadd.f32 0.0, %v868
      %v870 = vpop.f32.mrb[0].mxu0
      %v871 = vpop.f32.mrb[0].mxu0
      %v872 = vadd.f32 0.0, %v871
      %v873 = vpop.f32.mrb[0].mxu0
      %874 = vdwg.mxu0
      %v875 = vmul.f32 %v845, 0.35355338
      %v876 = vmul.f32 %v848, 0.35355338
      %v877 = vmul.f32 %v853, 0.35355338
      %v878 = vmul.f32 %v856, 0.35355338
      %v879 = vmul.f32 %v861, 0.35355338
      %v880 = vmul.f32 %v864, 0.35355338
      %v881 = vmul.f32 %v869, 0.35355338
      %v882 = vmul.f32 %v872, 0.35355338
      %v883 = vsel %vm543, %v875, -inf
      %884 = vmax.xlane.f32.xlu0 %v883
      %v885 = vpop.xlane.xlu0 %884
      %v886 = vsel %vm543, %v876, -inf
      %887 = vmax.xlane.f32.xlu0 %v886
      %v888 = vpop.xlane.xlu0 %887
      %v889 = vsel %vm543, %v877, -inf
      %890 = vmax.xlane.f32.xlu0 %v889
      %v891 = vpop.xlane.xlu0 %890
      %v892 = vsel %vm543, %v878, -inf
      %893 = vmax.xlane.f32.xlu0 %v892
      %v894 = vpop.xlane.xlu0 %893
      %v895 = vsel %vm543, %v879, -inf
      %896 = vmax.xlane.f32.xlu0 %v895
      %v897 = vpop.xlane.xlu0 %896
      %v898 = vsel %vm543, %v880, -inf
      %899 = vmax.xlane.f32.xlu0 %v898
      %v900 = vpop.xlane.xlu0 %899
      %v901 = vsel %vm543, %v881, -inf
      %902 = vmax.xlane.f32.xlu0 %v901
      %v903 = vpop.xlane.xlu0 %902
      %v904 = vsel %vm543, %v882, -inf
      %905 = vmax.xlane.f32.xlu0 %v904
      %v906 = vpop.xlane.xlu0 %905
      %v907 = vsub.f32 %v875, %v885
      %v908 = vsub.f32 %v876, %v888
      %v909 = vsub.f32 %v877, %v891
      %v910 = vsub.f32 %v878, %v894
      %v911 = vsub.f32 %v879, %v897
      %v912 = vsub.f32 %v880, %v900
      %v913 = vsub.f32 %v881, %v903
      %v914 = vsub.f32 %v882, %v906
      %v915 = vmul.f32 %v907, 1.442695
      %v916 = vpow.pop %v915
      %v917 = vmul.f32 %v908, 1.442695
      %v918 = vpow.pop %v917
      %v919 = vmul.f32 %v909, 1.442695
      %v920 = vpow.pop %v919
      %v921 = vmul.f32 %v910, 1.442695
      %v922 = vpow.pop %v921
      %v923 = vmul.f32 %v911, 1.442695
      %v924 = vpow.pop %v923
      %v925 = vmul.f32 %v912, 1.442695
      %v926 = vpow.pop %v925
      %v927 = vmul.f32 %v913, 1.442695
      %v928 = vpow.pop %v927
      %v929 = vmul.f32 %v914, 1.442695
      %v930 = vpow.pop %v929
      %v931 = vsel %vm543, %v916, 0.0
      %932 = vadd.xlane.f32.xlu0 %v931
      %v933 = vpop.xlane.xlu0 %932
      %v934 = vsel %vm543, %v918, 0.0
      %935 = vadd.xlane.f32.xlu0 %v934
      %v936 = vpop.xlane.xlu0 %935
      %v937 = vsel %vm543, %v920, 0.0
      %938 = vadd.xlane.f32.xlu0 %v937
      %v939 = vpop.xlane.xlu0 %938
      %v940 = vsel %vm543, %v922, 0.0
      %941 = vadd.xlane.f32.xlu0 %v940
      %v942 = vpop.xlane.xlu0 %941
      %v943 = vsel %vm543, %v924, 0.0
      %944 = vadd.xlane.f32.xlu0 %v943
      %v945 = vpop.xlane.xlu0 %944
      %v946 = vsel %vm543, %v926, 0.0
      %947 = vadd.xlane.f32.xlu0 %v946
      %v948 = vpop.xlane.xlu0 %947
      %v949 = vsel %vm543, %v928, 0.0
      %950 = vadd.xlane.f32.xlu0 %v949
      %v951 = vpop.xlane.xlu0 %950
      %v952 = vsel %vm543, %v930, 0.0
      %953 = vadd.xlane.f32.xlu0 %v952
      %v954 = vpop.xlane.xlu0 %953
      %v955 = vrcp.pop %v933
      %v956 = vmul.f32 %v916, %v955
      %v957 = vrcp.pop %v936
      %v958 = vmul.f32 %v918, %v957
      %v959 = vrcp.pop %v939
      %v960 = vmul.f32 %v920, %v959
      %v961 = vrcp.pop %v942
      %v962 = vmul.f32 %v922, %v961
      %v963 = vrcp.pop %v945
      %v964 = vmul.f32 %v924, %v963
      %v965 = vrcp.pop %v948
      %v966 = vmul.f32 %v926, %v965
      %v967 = vrcp.pop %v951
      %v968 = vmul.f32 %v928, %v967
      %v969 = vrcp.pop %v954
      %v970 = vmul.f32 %v930, %v969
      %v971 = vpack.c.bf16 %v958, %v956
      %v972 = vpack.c.bf16 %v962, %v960
      %v973 = vpack.c.bf16 %v966, %v964
      %v974 = vpack.c.bf16 %v970, %v968
      %v975 = vpack.c.bf16 %v787, %v784
      %v977 = vsel %vm543, %v971, 0
      %v980 = vsel %vm543, %v972, 0
      %v983 = vsel %vm543, %v973, 0
      %v986 = vsel %vm543, %v974, 0
      %988 = vmatprep.subr.bf16.mxu0 0
      %989 = vmatpush1.bf16.msra.mxu0 %v975
      %990 = vmatprep.subr.bf16.mxu0 0
      %991 = vmatpush1.bf16.msra.mxu0 0
      %992 = vmatprep.subr.bf16.mxu0 0
      %993 = vmatpush1.bf16.msra.mxu0 0
      %994 = vmatprep.subr.bf16.mxu0 0
      %995 = vmatpush1.bf16.msra.mxu0 0
      %996 = vmatprep.subr.bf16.mxu0 0
      %997 = vmatpush1.bf16.msra.mxu0 0
      %998 = vmatprep.subr.bf16.mxu0 0
      %999 = vmatpush1.bf16.msra.mxu0 0
      %1000 = vmatprep.subr.bf16.mxu0 0
      %1001 = vmatpush1.bf16.msra.mxu0 0
      %1002 = vmatprep.subr.bf16.mxu0 0
      %1003 = vmatpush1.bf16.msra.mxu0 0
      %1004 = vmatprep.subr.bf16.mxu0 0
      %1005 = vmatpush1.bf16.msra.mxu0 0
      %1006 = vmatprep.subr.bf16.mxu0 0
      %1007 = vmatpush1.bf16.msra.mxu0 0
      %1008 = vmatprep.subr.bf16.mxu0 0
      %1009 = vmatpush1.bf16.msra.mxu0 0
      %1010 = vmatprep.subr.bf16.mxu0 0
      %1011 = vmatpush1.bf16.msra.mxu0 0
      %1012 = vmatprep.subr.bf16.mxu0 0
      %1013 = vmatpush1.bf16.msra.mxu0 0
      %1014 = vmatprep.subr.bf16.mxu0 0
      %1015 = vmatpush1.bf16.msra.mxu0 0
      %1016 = vmatprep.subr.bf16.mxu0 0
      %1017 = vmatpush1.bf16.msra.mxu0 0
      %1018 = vmatprep.subr.bf16.mxu0 0
      %1019 = vmatpush1.bf16.msra.mxu0 0
      %1020 = vmatprep.mubr.bf16.mxu0 0
      %1021 = vmatmul.mubr.bf16.gmra.mrb[0].mxu0 %v977
      %v1022 = vpop.f32.mrb[0].mxu0
      %v1023 = vadd.f32 0.0, %v1022
      %v1024 = vpop.f32.mrb[0].mxu0
      %v1025 = vpop.f32.mrb[0].mxu0
      %v1026 = vadd.f32 0.0, %v1025
      %v1027 = vpop.f32.mrb[0].mxu0
      %1028 = vmatprep.mubr.bf16.mxu0 0
      %1029 = vmatmul.mubr.bf16.gmra.mrb[0].mxu0 %v980
      %v1030 = vpop.f32.mrb[0].mxu0
      %v1031 = vadd.f32 0.0, %v1030
      %v1032 = vpop.f32.mrb[0].mxu0
      %v1033 = vpop.f32.mrb[0].mxu0
      %v1034 = vadd.f32 0.0, %v1033
      %v1035 = vpop.f32.mrb[0].mxu0
      %1036 = vmatprep.mubr.bf16.mxu0 0
      %1037 = vmatmul.mubr.bf16.gmra.mrb[0].mxu0 %v983
      %v1038 = vpop.f32.mrb[0].mxu0
      %v1039 = vadd.f32 0.0, %v1038
      %v1040 = vpop.f32.mrb[0].mxu0
      %v1041 = vpop.f32.mrb[0].mxu0
      %v1042 = vadd.f32 0.0, %v1041
      %v1043 = vpop.f32.mrb[0].mxu0
      %1044 = vmatprep.mubr.bf16.mxu0 0
      %1045 = vmatmul.mubr.bf16.gmra.mrb[0].mxu0 %v986
      %v1046 = vpop.f32.mrb[0].mxu0
      %v1047 = vadd.f32 0.0, %v1046
      %v1048 = vpop.f32.mrb[0].mxu0
      %v1049 = vpop.f32.mrb[0].mxu0
      %v1050 = vadd.f32 0.0, %v1049
      %v1051 = vpop.f32.mrb[0].mxu0
      %1052 = vdwg.mxu0
      %v1053 = vpack.c.bf16 %v1026, %v1023
      %v1054 = vpack.c.bf16 %v1034, %v1031
      %v1055 = vpack.c.bf16 %v1042, %v1039
      %v1056 = vpack.c.bf16 %v1050, %v1047
      %v1057 = vld [vmem:[%s9] sm:$0xf]
      %v1058 = vld [vmem:[%s13] sm:$0x1]
      %v1060 = vlaneseq
      %v1061 = vshrl.u32 %v1060, 7
      %v1062 = vsub.s32 0, %v1061
      %v1063 = vrot.slane %v1058, %v1062
      %v1066 = vsel %vm601, %v1053, 0
      %v1069 = vsel %vm601, %v1054, 0
      %v1072 = vsel %vm601, %v1055, 0
      %v1075 = vsel %vm601, %v1056, 0
      %v1078 = vsel %vm614, %v1057, 0
      %1080 = vmatprep.subr.bf16.mxu0 0
      %1081 = vmatpush1.bf16.msra.mxu0 %v1078
      %1082 = vmatprep.subr.bf16.mxu0 0
      %1083 = vmatpush1.bf16.msra.mxu0 0
      %1084 = vmatprep.subr.bf16.mxu0 0
      %1085 = vmatpush1.bf16.msra.mxu0 0
      %1086 = vmatprep.subr.bf16.mxu0 0
      %1087 = vmatpush1.bf16.msra.mxu0 0
      %1088 = vmatprep.subr.bf16.mxu0 0
      %1089 = vmatpush1.bf16.msra.mxu0 0
      %1090 = vmatprep.subr.bf16.mxu0 0
      %1091 = vmatpush1.bf16.msra.mxu0 0
      %1092 = vmatprep.subr.bf16.mxu0 0
      %1093 = vmatpush1.bf16.msra.mxu0 0
      %1094 = vmatprep.subr.bf16.mxu0 0
      %1095 = vmatpush1.bf16.msra.mxu0 0
      %1096 = vmatprep.subr.bf16.mxu0 0
      %1097 = vmatpush1.bf16.msra.mxu0 0
      %1098 = vmatprep.subr.bf16.mxu0 0
      %1099 = vmatpush1.bf16.msra.mxu0 0
      %1100 = vmatprep.subr.bf16.mxu0 0
      %1101 = vmatpush1.bf16.msra.mxu0 0
      %1102 = vmatprep.subr.bf16.mxu0 0
      %1103 = vmatpush1.bf16.msra.mxu0 0
      %1104 = vmatprep.subr.bf16.mxu0 0
      %1105 = vmatpush1.bf16.msra.mxu0 0
      %1106 = vmatprep.subr.bf16.mxu0 0
      %1107 = vmatpush1.bf16.msra.mxu0 0
      %1108 = vmatprep.subr.bf16.mxu0 0
      %1109 = vmatpush1.bf16.msra.mxu0 0
      %1110 = vmatprep.subr.bf16.mxu0 0
      %1111 = vmatpush1.bf16.msra.mxu0 0
      %1112 = vmatprep.mubr.bf16.mxu0 0
      %1113 = vmatmul.mubr.bf16.gmra.mrb[0].mxu0 %v1066
      %v1114 = vpop.f32.mrb[0].mxu0
      %v1115 = vadd.f32 %v1063, %v1114
      %v1116 = vpop.f32.mrb[0].mxu0
      %v1117 = vpop.f32.mrb[0].mxu0
      %v1118 = vadd.f32 %v1063, %v1117
      %v1119 = vpop.f32.mrb[0].mxu0
      %1120 = vmatprep.mubr.bf16.mxu0 0
      %1121 = vmatmul.mubr.bf16.gmra.mrb[0].mxu0 %v1069
      %v1122 = vpop.f32.mrb[0].mxu0
      %v1123 = vadd.f32 %v1063, %v1122
      %v1124 = vpop.f32.mrb[0].mxu0
      %v1125 = vpop.f32.mrb[0].mxu0
      %v1126 = vadd.f32 %v1063, %v1125
      %v1127 = vpop.f32.mrb[0].mxu0
      %1128 = vmatprep.mubr.bf16.mxu0 0
      %1129 = vmatmul.mubr.bf16.gmra.mrb[0].mxu0 %v1072
      %v1130 = vpop.f32.mrb[0].mxu0
      %v1131 = vadd.f32 %v1063, %v1130
      %v1132 = vpop.f32.mrb[0].mxu0
      %v1133 = vpop.f32.mrb[0].mxu0
      %v1134 = vadd.f32 %v1063, %v1133
      %v1135 = vpop.f32.mrb[0].mxu0
      %1136 = vmatprep.mubr.bf16.mxu0 0
      %1137 = vmatmul.mubr.bf16.gmra.mrb[0].mxu0 %v1075
      %v1138 = vpop.f32.mrb[0].mxu0
      %v1139 = vadd.f32 %v1063, %v1138
      %v1140 = vpop.f32.mrb[0].mxu0
      %v1141 = vpop.f32.mrb[0].mxu0
      %v1142 = vadd.f32 %v1063, %v1141
      %v1143 = vpop.f32.mrb[0].mxu0
      %1144 = vdwg.mxu0
      %v1145 = vmul.f32 %v1115, 0.5
      %v1146 = vmul.f32 %v1118, 0.5
      %v1147 = vmul.f32 %v1123, 0.5
      %v1148 = vmul.f32 %v1126, 0.5
      %v1149 = vmul.f32 %v1131, 0.5
      %v1150 = vmul.f32 %v1134, 0.5
      %v1151 = vmul.f32 %v1139, 0.5
      %v1152 = vmul.f32 %v1142, 0.5
      %v1153 = vadd.f32 %v497, %v1145
      %v1154 = vadd.f32 %v498, %v1146
      %v1155 = vadd.f32 %v499, %v1147
      %v1156 = vadd.f32 %v500, %v1148
      %v1157 = vadd.f32 %v501, %v1149
      %v1158 = vadd.f32 %v502, %v1150
      %v1159 = vadd.f32 %v503, %v1151
      %v1160 = vadd.f32 %v504, %v1152
      %1161 = vst.msk [vmem:[%s487] sm:$0xff] %vm601, %v1153
      %1162 = vst.msk [vmem:[%s487 + $0x8] sm:$0xff] %vm601, %v1154
      %1163 = vst.msk [vmem:[%s487 + $0x10] sm:$0xff] %vm601, %v1155
      %1164 = vst.msk [vmem:[%s487 + $0x18] sm:$0xff] %vm601, %v1156
      %1165 = vst.msk [vmem:[%s487 + $0x20] sm:$0xff] %vm601, %v1157
      %1166 = vst.msk [vmem:[%s487 + $0x28] sm:$0xff] %vm601, %v1158
      %1167 = vst.msk [vmem:[%s487 + $0x30] sm:$0xff] %vm601, %v1159
      %1168 = vst.msk [vmem:[%s487 + $0x38] sm:$0xff] %vm601, %v1160
      %p1169 = scmp.lt.s32.totalorder %s25, 1
      %s1170 = scalar_select %p1169, %s25, 1
      %s1171 = smul.addr %s1170, 8
      %s1172 = smul.addr %s1171, 8
      %s1173 = scalar_lea.vmem %s14, %s1172
      // Predicated region
      $region77: #{segment_encoder_forward.9} parent=75 // pred_check
        %p1174 = pneg %p347
      $region78: #{segment_encoder_forward.9} parent=75 // pred_check_branch
        %1176 = sbr.rel (%p1174) target = $region80
      $region79: #{segment_encoder_forward.9} parent=75 // pred_region
        _
      $region80: #{segment_encoder_forward.9} parent=75 // pred_fallthru
        _
    $region76: #{segment_encoder_forward.9} parent=5 // pred_fallthru
      _
    %p1177 = scmp.le.s32.totalorder 2, %s20
    // Predicated region
    $region81: #{segment_encoder_forward.9} parent=5 // pred_check
      %p1178 = pneg %p1177
    $region82: #{segment_encoder_forward.9} parent=5 // pred_check_branch
      %1180 = sbr.rel (%p1178) target = $region84
    $region83: #{segment_encoder_forward.9} parent=5 // pred_region
      %s1181 = ssub.s32 %s20, 2
      // Predicated region
      $region85: #{segment_encoder_forward.9} parent=83 // pred_check
        %p1182 = pneg %p353
      $region86: #{segment_encoder_forward.9} parent=83 // pred_check_branch
        %1184 = sbr.rel (%p1182) target = $region88
      $region87: #{segment_encoder_forward.9} parent=83 // pred_region
        %p1185 = scmp.lt.s32.totalorder %s26, 1
        %s1186 = scalar_select %p1185, %s26, 1
        %s1187 = smul.addr %s1186, 8
        %s1188 = smul.addr %s1187, 8
        %s1189 = scalar_lea.vmem %s14, %s1188
      $region88: #{segment_encoder_forward.9} parent=83 // pred_fallthru
        _
    $region84: #{segment_encoder_forward.9} parent=5 // pred_fallthru
      _
  $region6: #{segment_encoder_forward.9} parent=0 // loop_footer
    %s24 = sadd.s32 1, %s20
  $region7: #{segment_encoder_forward.9} parent=0 // loop_footer_branch
    %19 = sbr.rel target = $region3
  $region8: #{segment_encoder_forward.9} parent=0 // loop_exit
    _

// kernel: segment_encoder_forward.6
$region0: #{segment_encoder_forward.6}
  #allocation0 [shape = 'u32[]', space=smem, size = 0x4, offset = 0x4, fixed_abs, tag = 'smem constant byte address 0x4 - core index']
  #allocation1 [shape = 'u32[144,128]{1,0:T(1,128)}', space=vmem, size = 0x12000, scoped, tag = 'internal scratch']
  #allocation2 [shape = 'bf16[64,200]{1,0:T(16,128)(2,1)}', space=vmem, size = 0x8000, scoped, tag = 'scratch operand']
  %s0 = inlined_call_operand.vmem [shape: bf16[2,40,10,8], index: 0, kind: input, shape index: {}]
  %s1 = inlined_call_operand.vmem [shape: bf16[200,16], index: 1, kind: input, shape index: {}]
  %s2 = inlined_call_operand.vmem [shape: f32[1,16], index: 2, kind: input, shape index: {}]
  %s3 = inlined_call_operand.vmem [shape: f32[1,16], index: 3, kind: input, shape index: {}]
  %s4 = inlined_call_operand.vmem [shape: f32[1,16], index: 4, kind: input, shape index: {}]
  %s5 = inlined_call_operand.vmem [shape: bf16[8,16], index: 5, kind: input, shape index: {}]
  %s6 = inlined_call_operand.vmem [shape: f32[1,16], index: 6, kind: input, shape index: {}]
  %s7 = inlined_call_operand.vmem [shape: bf16[2,64,16], index: 7, kind: output, shape index: {0}]
  %s8 = inlined_call_operand.vmem [shape: bf16[2,64,16], index: 8, kind: output, shape index: {1}]
  %9 = xla_tuple %s7, %s8
  %s10 = sld [smem:[#allocation0]]
  $region69: #{segment_encoder_forward.6} parent=0
    _
  %s12 = ssub.s32 1, %s10
  %s13 = scalar_select 0, %s12, %s10
  loop: start=0, step=1, limit=4
  $region2: #{segment_encoder_forward.6} parent=0 // loop_pre_header
    _
  $region3: #{segment_encoder_forward.6} parent=0 // loop_header
    %s15 = sphi 0, %s19
    %p16 = scmp.ge.s32.totalorder %s15, 4
    %s25 = sphi 0, %s27
    %s28 = sphi 0, %s25
    %s29 = sphi 0, %s28
    %s45 = sphi 0, %s29
    %s49 = sphi 0, %s49
    %s51 = sphi 0, %s49
    %s52 = sphi 0, %s51
    %s66 = sphi 0, %s52
    %s70 = sphi 0, %s70
    %s72 = sphi 0, %s70
    %s73 = sphi 0, %s72
    %s87 = sphi 0, %s73
    %s91 = sphi 0, %s91
    %s93 = sphi 0, %s91
    %s94 = sphi 0, %s93
    %s108 = sphi 0, %s94
    %s112 = sphi 0, %s112
    %s114 = sphi 0, %s112
    %s115 = sphi 0, %s114
    %s129 = sphi 0, %s115
    %s133 = sphi 0, %s133
    %s135 = sphi 0, %s133
    %s136 = sphi 0, %s135
    %s150 = sphi 0, %s136
    %s154 = sphi 0, %s154
    %s156 = sphi 0, %s154
    %s157 = sphi 0, %s156
    %s171 = sphi 0, %s157
    %s177 = sphi 0, %s179
    %s180 = sphi 0, %s177
    %s181 = sphi 0, %s180
    %s197 = sphi 0, %s181
    %s203 = sphi 0, %s205
    %s206 = sphi 0, %s203
    %s207 = sphi 0, %s206
    %s223 = sphi 0, %s207
  $region4: #{segment_encoder_forward.6} parent=0 // loop_header_branch
    %18 = sbr.rel (%p16) target = $region8
  $region5: #{segment_encoder_forward.6} parent=0 // loop_body
    %s20 = ssub.s32 %s15, 1
    %s21 = ssub.s32 %s15, 2
    %s22 = sadd.s32 %s15, 1
    %s23 = ssub.s32 %s15, %s22
    %p24 = scmp.eq.s32.totalorder %s23, 0
    %s26 = sadd.s32 %s25, 1
    %s27 = scalar_select %p24, %s25, %s26
    %p30 = pneg %p24
    %p31 = scmp.eq.s32.totalorder %s15, 1
    %p32 = por %p30, %p31
    %p33 = scmp.ne.s32.totalorder %s25, %s28
    %p34 = scmp.eq.s32.totalorder %s15, 0
    %p35 = por %p33, %p34
    %p36 = scmp.ne.s32.totalorder %s25, %s28
    %p37 = scmp.eq.s32.totalorder %s20, 1
    %p38 = por %p36, %p37
    %p39 = scmp.ne.s32.totalorder %s28, %s29
    %p40 = scmp.eq.s32.totalorder %s20, 0
    %p41 = por %p39, %p40
    %p42 = scmp.ne.s32.totalorder %s28, %s29
    %p43 = scmp.eq.s32.totalorder %s21, 1
    %p44 = por %p42, %p43
    %p46 = scmp.ne.s32.totalorder %s29, %s45
    %p47 = scmp.eq.s32.totalorder %s21, 0
    %p48 = por %p46, %p47
    %s50 = sadd.s32 %s49, 1
    %p53 = scmp.eq.s32.totalorder %s15, 1
    %p54 = scmp.ne.s32.totalorder %s49, %s51
    %p55 = scmp.eq.s32.totalorder %s15, 0
    %p56 = por %p54, %p55
    %p57 = scmp.ne.s32.totalorder %s49, %s51
    %p58 = scmp.eq.s32.totalorder %s20, 1
    %p59 = por %p57, %p58
    %p60 = scmp.ne.s32.totalorder %s51, %s52
    %p61 = scmp.eq.s32.totalorder %s20, 0
    %p62 = por %p60, %p61
    %p63 = scmp.ne.s32.totalorder %s51, %s52
    %p64 = scmp.eq.s32.totalorder %s21, 1
    %p65 = por %p63, %p64
    %p67 = scmp.ne.s32.totalorder %s52, %s66
    %p68 = scmp.eq.s32.totalorder %s21, 0
    %p69 = por %p67, %p68
    %s71 = sadd.s32 %s70, 1
    %p74 = scmp.eq.s32.totalorder %s15, 1
    %p75 = scmp.ne.s32.totalorder %s70, %s72
    %p76 = scmp.eq.s32.totalorder %s15, 0
    %p77 = por %p75, %p76
    %p78 = scmp.ne.s32.totalorder %s70, %s72
    %p79 = scmp.eq.s32.totalorder %s20, 1
    %p80 = por %p78, %p79
    %p81 = scmp.ne.s32.totalorder %s72, %s73
    %p82 = scmp.eq.s32.totalorder %s20, 0
    %p83 = por %p81, %p82
    %p84 = scmp.ne.s32.totalorder %s72, %s73
    %p85 = scmp.eq.s32.totalorder %s21, 1
    %p86 = por %p84, %p85
    %p88 = scmp.ne.s32.totalorder %s73, %s87
    %p89 = scmp.eq.s32.totalorder %s21, 0
    %p90 = por %p88, %p89
    %s92 = sadd.s32 %s91, 1
    %p95 = scmp.eq.s32.totalorder %s15, 1
    %p96 = scmp.ne.s32.totalorder %s91, %s93
    %p97 = scmp.eq.s32.totalorder %s15, 0
    %p98 = por %p96, %p97
    %p99 = scmp.ne.s32.totalorder %s91, %s93
    %p100 = scmp.eq.s32.totalorder %s20, 1
    %p101 = por %p99, %p100
    %p102 = scmp.ne.s32.totalorder %s93, %s94
    %p103 = scmp.eq.s32.totalorder %s20, 0
    %p104 = por %p102, %p103
    %p105 = scmp.ne.s32.totalorder %s93, %s94
    %p106 = scmp.eq.s32.totalorder %s21, 1
    %p107 = por %p105, %p106
    %p109 = scmp.ne.s32.totalorder %s94, %s108
    %p110 = scmp.eq.s32.totalorder %s21, 0
    %p111 = por %p109, %p110
    %s113 = sadd.s32 %s112, 1
    %p116 = scmp.eq.s32.totalorder %s15, 1
    %p117 = scmp.ne.s32.totalorder %s112, %s114
    %p118 = scmp.eq.s32.totalorder %s15, 0
    %p119 = por %p117, %p118
    %p120 = scmp.ne.s32.totalorder %s112, %s114
    %p121 = scmp.eq.s32.totalorder %s20, 1
    %p122 = por %p120, %p121
    %p123 = scmp.ne.s32.totalorder %s114, %s115
    %p124 = scmp.eq.s32.totalorder %s20, 0
    %p125 = por %p123, %p124
    %p126 = scmp.ne.s32.totalorder %s114, %s115
    %p127 = scmp.eq.s32.totalorder %s21, 1
    %p128 = por %p126, %p127
    %p130 = scmp.ne.s32.totalorder %s115, %s129
    %p131 = scmp.eq.s32.totalorder %s21, 0
    %p132 = por %p130, %p131
    %s134 = sadd.s32 %s133, 1
    %p137 = scmp.eq.s32.totalorder %s15, 1
    %p138 = scmp.ne.s32.totalorder %s133, %s135
    %p139 = scmp.eq.s32.totalorder %s15, 0
    %p140 = por %p138, %p139
    %p141 = scmp.ne.s32.totalorder %s133, %s135
    %p142 = scmp.eq.s32.totalorder %s20, 1
    %p143 = por %p141, %p142
    %p144 = scmp.ne.s32.totalorder %s135, %s136
    %p145 = scmp.eq.s32.totalorder %s20, 0
    %p146 = por %p144, %p145
    %p147 = scmp.ne.s32.totalorder %s135, %s136
    %p148 = scmp.eq.s32.totalorder %s21, 1
    %p149 = por %p147, %p148
    %p151 = scmp.ne.s32.totalorder %s136, %s150
    %p152 = scmp.eq.s32.totalorder %s21, 0
    %p153 = por %p151, %p152
    %s155 = sadd.s32 %s154, 1
    %p158 = scmp.eq.s32.totalorder %s15, 1
    %p159 = scmp.ne.s32.totalorder %s154, %s156
    %p160 = scmp.eq.s32.totalorder %s15, 0
    %p161 = por %p159, %p160
    %p162 = scmp.ne.s32.totalorder %s154, %s156
    %p163 = scmp.eq.s32.totalorder %s20, 1
    %p164 = por %p162, %p163
    %p165 = scmp.ne.s32.totalorder %s156, %s157
    %p166 = scmp.eq.s32.totalorder %s20, 0
    %p167 = por %p165, %p166
    %p168 = scmp.ne.s32.totalorder %s156, %s157
    %p169 = scmp.eq.s32.totalorder %s21, 1
    %p170 = por %p168, %p169
    %p172 = scmp.ne.s32.totalorder %s157, %s171
    %p173 = scmp.eq.s32.totalorder %s21, 0
    %p174 = por %p172, %p173
    %s175 = ssub.s32 %s15, %s22
    %p176 = scmp.eq.s32.totalorder %s175, 0
    %s178 = sadd.s32 %s177, 1
    %s179 = scalar_select %p176, %s177, %s178
    %p182 = pneg %p176
    %p183 = scmp.eq.s32.totalorder %s15, 1
    %p184 = por %p182, %p183
    %p185 = scmp.ne.s32.totalorder %s177, %s180
    %p186 = scmp.eq.s32.totalorder %s15, 0
    %p187 = por %p185, %p186
    %p188 = scmp.ne.s32.totalorder %s177, %s180
    %p189 = scmp.eq.s32.totalorder %s20, 1
    %p190 = por %p188, %p189
    %p191 = scmp.ne.s32.totalorder %s180, %s181
    %p192 = scmp.eq.s32.totalorder %s20, 0
    %p193 = por %p191, %p192
    %p194 = scmp.ne.s32.totalorder %s180, %s181
    %p195 = scmp.eq.s32.totalorder %s21, 1
    %p196 = por %p194, %p195
    %p198 = scmp.ne.s32.totalorder %s181, %s197
    %p199 = scmp.eq.s32.totalorder %s21, 0
    %p200 = por %p198, %p199
    %s201 = ssub.s32 %s15, %s22
    %p202 = scmp.eq.s32.totalorder %s201, 0
    %s204 = sadd.s32 %s203, 1
    %s205 = scalar_select %p202, %s203, %s204
    %p208 = pneg %p202
    %p209 = scmp.eq.s32.totalorder %s15, 1
    %p210 = por %p208, %p209
    %p211 = scmp.ne.s32.totalorder %s203, %s206
    %p212 = scmp.eq.s32.totalorder %s15, 0
    %p213 = por %p211, %p212
    %p214 = scmp.ne.s32.totalorder %s203, %s206
    %p215 = scmp.eq.s32.totalorder %s20, 1
    %p216 = por %p214, %p215
    %p217 = scmp.ne.s32.totalorder %s206, %s207
    %p218 = scmp.eq.s32.totalorder %s20, 0
    %p219 = por %p217, %p218
    %p220 = scmp.ne.s32.totalorder %s206, %s207
    %p221 = scmp.eq.s32.totalorder %s21, 1
    %p222 = por %p220, %p221
    %p224 = scmp.ne.s32.totalorder %s207, %s223
    %p225 = scmp.eq.s32.totalorder %s21, 0
    %p226 = por %p224, %p225
    %p227 = scmp.le.s32.totalorder 1, %s15
    %p228 = scmp.lt.s32.totalorder %s15, 3
    %p229 = pnand %p227, %p228
    %p230 = pneg %p229
    // Predicated region
    $region9: #{segment_encoder_forward.6} parent=5 // pred_check
      _
    $region10: #{segment_encoder_forward.6} parent=5 // pred_check_branch
      %232 = sbr.rel (%p229) target = $region12
    $region11: #{segment_encoder_forward.6} parent=5 // pred_region
      %s233 = ssub.s32 %s15, 1
      // Predicated region
      $region13: #{segment_encoder_forward.6} parent=11 // pred_check
        %p234 = pneg %p62
      $region14: #{segment_encoder_forward.6} parent=11 // pred_check_branch
        %236 = sbr.rel (%p234) target = $region16
      $region15: #{segment_encoder_forward.6} parent=11 // pred_region
        _
      $region16: #{segment_encoder_forward.6} parent=11 // pred_fallthru
        _
      // Predicated region
      $region17: #{segment_encoder_forward.6} parent=11 // pred_check
        %p237 = pneg %p83
      $region18: #{segment_encoder_forward.6} parent=11 // pred_check_branch
        %239 = sbr.rel (%p237) target = $region20
      $region19: #{segment_encoder_forward.6} parent=11 // pred_region
        _
      $region20: #{segment_encoder_forward.6} parent=11 // pred_fallthru
        _
      // Predicated region
      $region21: #{segment_encoder_forward.6} parent=11 // pred_check
        %p240 = pneg %p104
      $region22: #{segment_encoder_forward.6} parent=11 // pred_check_branch
        %242 = sbr.rel (%p240) target = $region24
      $region23: #{segment_encoder_forward.6} parent=11 // pred_region
        _
      $region24: #{segment_encoder_forward.6} parent=11 // pred_fallthru
        _
      // Predicated region
      $region25: #{segment_encoder_forward.6} parent=11 // pred_check
        %p243 = pneg %p125
      $region26: #{segment_encoder_forward.6} parent=11 // pred_check_branch
        %245 = sbr.rel (%p243) target = $region28
      $region27: #{segment_encoder_forward.6} parent=11 // pred_region
        _
      $region28: #{segment_encoder_forward.6} parent=11 // pred_fallthru
        _
      // Predicated region
      $region29: #{segment_encoder_forward.6} parent=11 // pred_check
        %p246 = pneg %p146
      $region30: #{segment_encoder_forward.6} parent=11 // pred_check_branch
        %248 = sbr.rel (%p246) target = $region32
      $region31: #{segment_encoder_forward.6} parent=11 // pred_region
        _
      $region32: #{segment_encoder_forward.6} parent=11 // pred_fallthru
        _
      // Predicated region
      $region33: #{segment_encoder_forward.6} parent=11 // pred_check
        %p249 = pneg %p167
      $region34: #{segment_encoder_forward.6} parent=11 // pred_check_branch
        %251 = sbr.rel (%p249) target = $region36
      $region35: #{segment_encoder_forward.6} parent=11 // pred_region
        _
      $region36: #{segment_encoder_forward.6} parent=11 // pred_fallthru
        _
    $region12: #{segment_encoder_forward.6} parent=5 // pred_fallthru
      _
    %p252 = scmp.lt.s32.totalorder %s15, 2
    // Predicated region
    $region37: #{segment_encoder_forward.6} parent=5 // pred_check
      %p253 = pneg %p252
    $region38: #{segment_encoder_forward.6} parent=5 // pred_check_branch
      %255 = sbr.rel (%p253) target = $region40
    $region39: #{segment_encoder_forward.6} parent=5 // pred_region
      // Predicated region
      $region41: #{segment_encoder_forward.6} parent=39 // pred_check
        %p256 = pneg %p35
      $region42: #{segment_encoder_forward.6} parent=39 // pred_check_branch
        %258 = sbr.rel (%p256) target = $region44
      $region43: #{segment_encoder_forward.6} parent=39 // pred_region
        %p259 = scmp.lt.s32.totalorder %s15, 1
        %s260 = scalar_select %p259, %s15, 1
        %s261 = smul.addr %s260, 80
        %s262 = smul.addr %s261, 4
        %s263 = scalar_lea.vmem %s0, %s262
      $region44: #{segment_encoder_forward.6} parent=39 // pred_fallthru
        _
    $region40: #{segment_encoder_forward.6} parent=5 // pred_fallthru
      _
    %p264 = scmp.le.s32.totalorder 1, %s15
    %p265 = scmp.lt.s32.totalorder %s15, 3
    %p266 = pnand %p264, %p265
    %p267 = pneg %p266
    // Predicated region
    $region45: #{segment_encoder_forward.6} parent=5 // pred_check
      _
    $region46: #{segment_encoder_forward.6} parent=5 // pred_check_branch
      %269 = sbr.rel (%p266) target = $region48
    $region47: #{segment_encoder_forward.6} parent=5 // pred_region
      %s270 = ssub.s32 %s15, 1
      %p271 = scmp.lt.s32.totalorder %s20, 1
      %s272 = scalar_select %p271, %s20, 1
      %s273 = smul.addr %s272, 80
      %s274 = smul.addr %s273, 4
      %s275 = scalar_lea.vmem %s0, %s274
      %p276 = pneg %p41
      %p277 = pneg %p38
      %p278 = pneg %p62
      %p279 = pneg %p59
      %p280 = pneg %p83
      %p281 = pneg %p80
      %p282 = pneg %p104
      %p283 = pneg %p101
      %p284 = pneg %p125
      %p285 = pneg %p122
      %p286 = pneg %p146
      %p287 = pneg %p143
      %p288 = pneg %p167
      %p289 = pneg %p164
      %p290 = pneg %p193
      %p291 = pneg %p190
      %p292 = scmp.lt.s32.totalorder %s20, 1
      %s293 = scalar_select %p292, %s20, 1
      %s294 = smul.addr %s293, 8
      %s295 = smul.addr %s294, 4
      %s296 = scalar_lea.vmem %s7, %s295
      %p297 = pneg %p219
      %p298 = pneg %p216
      %p299 = scmp.lt.s32.totalorder %s20, 1
      %s300 = scalar_select %p299, %s20, 1
      %s301 = smul.addr %s300, 8
      %s302 = smul.addr %s301, 4
      %s303 = scalar_lea.vmem %s8, %s302
      %p304 = scmp.lt.s32.totalorder %s20, 1
      %s305 = scalar_select %p304, %s20, 1
      %s306 = smul.addr %s305, 80
      %s307 = smul.addr %s306, 4
      %s308 = scalar_lea.vmem %s0, %s307
      %p309 = scmp.lt.s32.totalorder %s20, 1
      %s310 = scalar_select %p309, %s20, 1
      %s311 = smul.addr %s310, 8
      %s312 = smul.addr %s311, 4
      %s313 = scalar_lea.vmem %s7, %s312
      %p314 = scmp.lt.s32.totalorder %s20, 1
      %s315 = scalar_select %p314, %s20, 1
      %s316 = smul.addr %s315, 8
      %s317 = smul.addr %s316, 4
      %s318 = scalar_lea.vmem %s8, %s317
      %v320 = vld [vmem:[%s308] sm:$0xf]
      %v321 = vld [vmem:[%s308 + $0x8] sm:$0xf]
      %v322 = vld [vmem:[%s308 + $0x10] sm:$0xf]
      %v323 = vld [vmem:[%s308 + $0x18] sm:$0xf]
      %v324 = vld [vmem:[%s308 + $0x20] sm:$0xf]
      %v325 = vld [vmem:[%s308 + $0x28] sm:$0xf]
      %v326 = vld [vmem:[%s308 + $0x30] sm:$0xf]
      %v327 = vld [vmem:[%s308 + $0x38] sm:$0xf]
      %v336 = vunpack.c.l.b16 %v320
      %v337 = vunpack.c.l.b16 %v321
      %v338 = vunpack.c.l.b16 %v322
      %v339 = vunpack.c.l.b16 %v323
      %v340 = vunpack.c.l.b16 %v324
      %v341 = vunpack.c.l.b16 %v325
      %v342 = vunpack.c.l.b16 %v326
      %v343 = vunpack.c.l.b16 %v327
      %v344 = vpack.c.b16 %v337, %v336
      %v345 = vpack.c.b16 %v339, %v338
      %v346 = vpack.c.b16 %v341, %v340
      %v347 = vpack.c.b16 %v343, %v342
      %vm352 = vcmask 64512
      %353 = vst.msk [vmem:[#allocation2] sm:$0xff] %vm352, %v344
      %354 = vst.msk [vmem:[#allocation2 + $0x10] sm:$0xff] %vm352, %v345
      %355 = vst.msk [vmem:[#allocation2 + $0x20] sm:$0xff] %vm352, %v346
      %356 = vst.msk [vmem:[#allocation2 + $0x30] sm:$0xff] %vm352, %v347
      %s357 = scalar_lea.vmem %s308, 80
      %v358 = vld [vmem:[%s357] sm:$0xf]
      %v359 = vld [vmem:[%s357 + $0x8] sm:$0xf]
      %v360 = vld [vmem:[%s357 + $0x10] sm:$0xf]
      %v361 = vld [vmem:[%s357 + $0x18] sm:$0xf]
      %v362 = vld [vmem:[%s357 + $0x20] sm:$0xf]
      %v363 = vld [vmem:[%s357 + $0x28] sm:$0xf]
      %v364 = vld [vmem:[%s357 + $0x30] sm:$0xf]
      %v365 = vld [vmem:[%s357 + $0x38] sm:$0xf]
      %v374 = vunpack.c.l.b16 %v358
      %v375 = vunpack.c.l.b16 %v359
      %v376 = vunpack.c.l.b16 %v360
      %v377 = vunpack.c.l.b16 %v361
      %v378 = vunpack.c.l.b16 %v362
      %v379 = vunpack.c.l.b16 %v363
      %v380 = vunpack.c.l.b16 %v364
      %v381 = vunpack.c.l.b16 %v365
      %v382 = vpack.c.b16 %v375, %v374
      %v383 = vpack.c.b16 %v377, %v376
      %v384 = vpack.c.b16 %v379, %v378
      %v385 = vpack.c.b16 %v381, %v380
      %386 = vrot.lane.b32.xlu0 %v382, 8
      %v387 = vpop.permute.xlu0 %386
      %388 = vrot.lane.b32.xlu0 %v383, 8
      %v389 = vpop.permute.xlu0 %388
      %390 = vrot.lane.b32.xlu0 %v384, 8
      %v391 = vpop.permute.xlu0 %390
      %392 = vrot.lane.b32.xlu0 %v385, 8
      %v393 = vpop.permute.xlu0 %392
      %vm398 = vcmask 130112
      %399 = vst.msk [vmem:[#allocation2] sm:$0xff] %vm398, %v387
      %400 = vst.msk [vmem:[#allocation2 + $0x10] sm:$0xff] %vm398, %v389
      %401 = vst.msk [vmem:[#allocation2 + $0x20] sm:$0xff] %vm398, %v391
      %402 = vst.msk [vmem:[#allocation2 + $0x30] sm:$0xff] %vm398, %v393
      %v403 = vld [vmem:[%s308] sm:$0xf]
      %v404 = vld [vmem:[%s308 + $0x4] sm:$0x1]
      %v405 = vld [vmem:[%s308 + $0x8] sm:$0xf]
      %v406 = vld [vmem:[%s308 + $0xc] sm:$0x1]
      %v407 = vld [vmem:[%s308 + $0x10] sm:$0xf]
      %v408 = vld [vmem:[%s308 + $0x14] sm:$0x1]
      %v409 = vld [vmem:[%s308 + $0x18] sm:$0xf]
      %v410 = vld [vmem:[%s308 + $0x1c] sm:$0x1]
      %v411 = vld [vmem:[%s308 + $0x20] sm:$0xf]
      %v412 = vld [vmem:[%s308 + $0x24] sm:$0x1]
      %v413 = vld [vmem:[%s308 + $0x28] sm:$0xf]
      %v414 = vld [vmem:[%s308 + $0x2c] sm:$0x1]
      %v415 = vld [vmem:[%s308 + $0x30] sm:$0xf]
      %v416 = vld [vmem:[%s308 + $0x34] sm:$0x1]
      %v417 = vld [vmem:[%s308 + $0x38] sm:$0xf]
      %v418 = vld [vmem:[%s308 + $0x3c] sm:$0x1]
      %vm419 = vsmask.f32 3328
      %vm420 = vsmask.f32 7440
      %vm421 = vmor %vm419, %vm420
      %v423 = vshrl.u32 %v403, 16
      %v425 = vrot.slane %v423, 4
      %v426 = vshll.u32 %v403, 16
      %v428 = vrot.slane %v426, 5
      %v429 = vor.u32 %v425, %v428
      %v430 = vrot.slane %v429, 4
      %v432 = vshll.u32 %v404, 16
      %v434 = vrot.slane %v432, 5
      %v435 = vsel %vm421, %v430, %v434
      %v437 = vshrl.u32 %v405, 16
      %v439 = vrot.slane %v437, 4
      %v440 = vshll.u32 %v405, 16
      %v442 = vrot.slane %v440, 5
      %v443 = vor.u32 %v439, %v442
      %v444 = vrot.slane %v443, 4
      %v446 = vshll.u32 %v406, 16
      %v448 = vrot.slane %v446, 5
      %v449 = vsel %vm421, %v444, %v448
      %v451 = vshrl.u32 %v407, 16
      %v453 = vrot.slane %v451, 4
      %v454 = vshll.u32 %v407, 16
      %v456 = vrot.slane %v454, 5
      %v457 = vor.u32 %v453, %v456
      %v458 = vrot.slane %v457, 4
      %v460 = vshll.u32 %v408, 16
      %v462 = vrot.slane %v460, 5
      %v463 = vsel %vm421, %v458, %v462
      %v465 = vshrl.u32 %v409, 16
      %v467 = vrot.slane %v465, 4
      %v468 = vshll.u32 %v409, 16
      %v470 = vrot.slane %v468, 5
      %v471 = vor.u32 %v467, %v470
      %v472 = vrot.slane %v471, 4
      %v474 = vshll.u32 %v410, 16
      %v476 = vrot.slane %v474, 5
      %v477 = vsel %vm421, %v472, %v476
      %v479 = vshrl.u32 %v411, 16
      %v481 = vrot.slane %v479, 4
      %v482 = vshll.u32 %v411, 16
      %v484 = vrot.slane %v482, 5
      %v485 = vor.u32 %v481, %v484
      %v486 = vrot.slane %v485, 4
      %v488 = vshll.u32 %v412, 16
      %v490 = vrot.slane %v488, 5
      %v491 = vsel %vm421, %v486, %v490
      %v493 = vshrl.u32 %v413, 16
      %v495 = vrot.slane %v493, 4
      %v496 = vshll.u32 %v413, 16
      %v498 = vrot.slane %v496, 5
      %v499 = vor.u32 %v495, %v498
      %v500 = vrot.slane %v499, 4
      %v502 = vshll.u32 %v414, 16
      %v504 = vrot.slane %v502, 5
      %v505 = vsel %vm421, %v500, %v504
      %v507 = vshrl.u32 %v415, 16
      %v509 = vrot.slane %v507, 4
      %v510 = vshll.u32 %v415, 16
      %v512 = vrot.slane %v510, 5
      %v513 = vor.u32 %v509, %v512
      %v514 = vrot.slane %v513, 4
      %v516 = vshll.u32 %v416, 16
      %v518 = vrot.slane %v516, 5
      %v519 = vsel %vm421, %v514, %v518
      %v521 = vshrl.u32 %v417, 16
      %v523 = vrot.slane %v521, 4
      %v524 = vshll.u32 %v417, 16
      %v526 = vrot.slane %v524, 5
      %v527 = vor.u32 %v523, %v526
      %v528 = vrot.slane %v527, 4
      %v530 = vshll.u32 %v418, 16
      %v532 = vrot.slane %v530, 5
      %v533 = vsel %vm421, %v528, %v532
      %v534 = vunpack.c.l.b16 %v435
      %v535 = vunpack.c.l.b16 %v449
      %v536 = vunpack.c.l.b16 %v463
      %v537 = vunpack.c.l.b16 %v477
      %v538 = vunpack.c.l.b16 %v491
      %v539 = vunpack.c.l.b16 %v505
      %v540 = vunpack.c.l.b16 %v519
      %v541 = vunpack.c.l.b16 %v533
      %v542 = vpack.c.b16 %v535, %v534
      %v543 = vpack.c.b16 %v537, %v536
      %v544 = vpack.c.b16 %v539, %v538
      %v545 = vpack.c.b16 %v541, %v540
      %546 = vrot.lane.b32.xlu0 %v542, 16
      %v547 = vpop.permute.xlu0 %546
      %548 = vrot.lane.b32.xlu0 %v543, 16
      %v549 = vpop.permute.xlu0 %548
      %550 = vrot.lane.b32.xlu0 %v544, 16
      %v551 = vpop.permute.xlu0 %550
      %552 = vrot.lane.b32.xlu0 %v545, 16
      %v553 = vpop.permute.xlu0 %552
      %vm558 = vcmask 195712
      %559 = vst.msk [vmem:[#allocation2] sm:$0xff] %vm558, %v547
      %560 = vst.msk [vmem:[#allocation2 + $0x10] sm:$0xff] %vm558, %v549
      %561 = vst.msk [vmem:[#allocation2 + $0x20] sm:$0xff] %vm558, %v551
      %562 = vst.msk [vmem:[#allocation2 + $0x30] sm:$0xff] %vm558, %v553
      %v563 = vld [vmem:[%s357] sm:$0xf]
      %v564 = vld [vmem:[%s357 + $0x4] sm:$0x1]
      %v565 = vld [vmem:[%s357 + $0x8] sm:$0xf]
      %v566 = vld [vmem:[%s357 + $0xc] sm:$0x1]
      %v567 = vld [vmem:[%s357 + $0x10] sm:$0xf]
      %v568 = vld [vmem:[%s357 + $0x14] sm:$0x1]
      %v569 = vld [vmem:[%s357 + $0x18] sm:$0xf]
      %v570 = vld [vmem:[%s357 + $0x1c] sm:$0x1]
      %v571 = vld [vmem:[%s357 + $0x20] sm:$0xf]
      %v572 = vld [vmem:[%s357 + $0x24] sm:$0x1]
      %v573 = vld [vmem:[%s357 + $0x28] sm:$0xf]
      %v574 = vld [vmem:[%s357 + $0x2c] sm:$0x1]
      %v575 = vld [vmem:[%s357 + $0x30] sm:$0xf]
      %v576 = vld [vmem:[%s357 + $0x34] sm:$0x1]
      %v577 = vld [vmem:[%s357 + $0x38] sm:$0xf]
      %v578 = vld [vmem:[%s357 + $0x3c] sm:$0x1]
      %v580 = vshrl.u32 %v563, 16
      %v582 = vrot.slane %v580, 4
      %v583 = vshll.u32 %v563, 16
      %v585 = vrot.slane %v583, 5
      %v586 = vor.u32 %v582, %v585
      %v587 = vrot.slane %v586, 4
      %v589 = vshll.u32 %v564, 16
      %v591 = vrot.slane %v589, 5
      %v592 = vsel %vm421, %v587, %v591
      %v594 = vshrl.u32 %v565, 16
      %v596 = vrot.slane %v594, 4
      %v597 = vshll.u32 %v565, 16
      %v599 = vrot.slane %v597, 5
      %v600 = vor.u32 %v596, %v599
      %v601 = vrot.slane %v600, 4
      %v603 = vshll.u32 %v566, 16
      %v605 = vrot.slane %v603, 5
      %v606 = vsel %vm421, %v601, %v605
      %v608 = vshrl.u32 %v567, 16
      %v610 = vrot.slane %v608, 4
      %v611 = vshll.u32 %v567, 16
      %v613 = vrot.slane %v611, 5
      %v614 = vor.u32 %v610, %v613
      %v615 = vrot.slane %v614, 4
      %v617 = vshll.u32 %v568, 16
      %v619 = vrot.slane %v617, 5
      %v620 = vsel %vm421, %v615, %v619
      %v622 = vshrl.u32 %v569, 16
      %v624 = vrot.slane %v622, 4
      %v625 = vshll.u32 %v569, 16
      %v627 = vrot.slane %v625, 5
      %v628 = vor.u32 %v624, %v627
      %v629 = vrot.slane %v628, 4
      %v631 = vshll.u32 %v570, 16
      %v633 = vrot.slane %v631, 5
      %v634 = vsel %vm421, %v629, %v633
      %v636 = vshrl.u32 %v571, 16
      %v638 = vrot.slane %v636, 4
      %v639 = vshll.u32 %v571, 16
      %v641 = vrot.slane %v639, 5
      %v642 = vor.u32 %v638, %v641
      %v643 = vrot.slane %v642, 4
      %v645 = vshll.u32 %v572, 16
      %v647 = vrot.slane %v645, 5
      %v648 = vsel %vm421, %v643, %v647
      %v650 = vshrl.u32 %v573, 16
      %v652 = vrot.slane %v650, 4
      %v653 = vshll.u32 %v573, 16
      %v655 = vrot.slane %v653, 5
      %v656 = vor.u32 %v652, %v655
      %v657 = vrot.slane %v656, 4
      %v659 = vshll.u32 %v574, 16
      %v661 = vrot.slane %v659, 5
      %v662 = vsel %vm421, %v657, %v661
      %v664 = vshrl.u32 %v575, 16
      %v666 = vrot.slane %v664, 4
      %v667 = vshll.u32 %v575, 16
      %v669 = vrot.slane %v667, 5
      %v670 = vor.u32 %v666, %v669
      %v671 = vrot.slane %v670, 4
      %v673 = vshll.u32 %v576, 16
      %v675 = vrot.slane %v673, 5
      %v676 = vsel %vm421, %v671, %v675
      %v678 = vshrl.u32 %v577, 16
      %v680 = vrot.slane %v678, 4
      %v681 = vshll.u32 %v577, 16
      %v683 = vrot.slane %v681, 5
      %v684 = vor.u32 %v680, %v683
      %v685 = vrot.slane %v684, 4
      %v687 = vshll.u32 %v578, 16
      %v689 = vrot.slane %v687, 5
      %v690 = vsel %vm421, %v685, %v689
      %v691 = vunpack.c.l.b16 %v592
      %v692 = vunpack.c.l.b16 %v606
      %v693 = vunpack.c.l.b16 %v620
      %v694 = vunpack.c.l.b16 %v634
      %v695 = vunpack.c.l.b16 %v648
      %v696 = vunpack.c.l.b16 %v662
      %v697 = vunpack.c.l.b16 %v676
      %v698 = vunpack.c.l.b16 %v690
      %v699 = vpack.c.b16 %v692, %v691
      %v700 = vpack.c.b16 %v694, %v693
      %v701 = vpack.c.b16 %v696, %v695
      %v702 = vpack.c.b16 %v698, %v697
      %703 = vrot.lane.b32.xlu0 %v699, 24
      %v704 = vpop.permute.xlu0 %703
      %705 = vrot.lane.b32.xlu0 %v700, 24
      %v706 = vpop.permute.xlu0 %705
      %707 = vrot.lane.b32.xlu0 %v701, 24
      %v708 = vpop.permute.xlu0 %707
      %709 = vrot.lane.b32.xlu0 %v702, 24
      %v710 = vpop.permute.xlu0 %709
      %vm715 = vcmask 261312
      %716 = vst.msk [vmem:[#allocation2] sm:$0xff] %vm715, %v704
      %717 = vst.msk [vmem:[#allocation2 + $0x10] sm:$0xff] %vm715, %v706
      %718 = vst.msk [vmem:[#allocation2 + $0x20] sm:$0xff] %vm715, %v708
      %719 = vst.msk [vmem:[#allocation2 + $0x30] sm:$0xff] %vm715, %v710
      %v720 = vld [vmem:[%s308] sm:$0xe]
      %v721 = vld [vmem:[%s308 + $0x4] sm:$0x1]
      %v722 = vld [vmem:[%s308 + $0x8] sm:$0xe]
      %v723 = vld [vmem:[%s308 + $0xc] sm:$0x1]
      %v724 = vld [vmem:[%s308 + $0x10] sm:$0xe]
      %v725 = vld [vmem:[%s308 + $0x14] sm:$0x1]
      %v726 = vld [vmem:[%s308 + $0x18] sm:$0xe]
      %v727 = vld [vmem:[%s308 + $0x1c] sm:$0x1]
      %v728 = vld [vmem:[%s308 + $0x20] sm:$0xe]
      %v729 = vld [vmem:[%s308 + $0x24] sm:$0x1]
      %v730 = vld [vmem:[%s308 + $0x28] sm:$0xe]
      %v731 = vld [vmem:[%s308 + $0x2c] sm:$0x1]
      %v732 = vld [vmem:[%s308 + $0x30] sm:$0xe]
      %v733 = vld [vmem:[%s308 + $0x34] sm:$0x1]
      %v734 = vld [vmem:[%s308 + $0x38] sm:$0xe]
      %v735 = vld [vmem:[%s308 + $0x3c] sm:$0x1]
      %vm752 = vcmask 1042432
      %vm753 = vcmask 1046532
      %vm754 = vmor %vm752, %vm753
      %v755 = vrot.slane %v720, 5
      %v756 = vrot.slane %v755, 4
      %v757 = vrot.slane %v721, 5
      %v758 = vsel %vm754, %v756, %v757
      %v759 = vrot.slane %v722, 5
      %v760 = vrot.slane %v759, 4
      %v761 = vrot.slane %v723, 5
      %v762 = vsel %vm754, %v760, %v761
      %v763 = vrot.slane %v724, 5
      %v764 = vrot.slane %v763, 4
      %v765 = vrot.slane %v725, 5
      %v766 = vsel %vm754, %v764, %v765
      %v767 = vrot.slane %v726, 5
      %v768 = vrot.slane %v767, 4
      %v769 = vrot.slane %v727, 5
      %v770 = vsel %vm754, %v768, %v769
      %v771 = vrot.slane %v728, 5
      %v772 = vrot.slane %v771, 4
      %v773 = vrot.slane %v729, 5
      %v774 = vsel %vm754, %v772, %v773
      %v775 = vrot.slane %v730, 5
      %v776 = vrot.slane %v775, 4
      %v777 = vrot.slane %v731, 5
      %v778 = vsel %vm754, %v776, %v777
      %v779 = vrot.slane %v732, 5
      %v780 = vrot.slane %v779, 4
      %v781 = vrot.slane %v733, 5
      %v782 = vsel %vm754, %v780, %v781
      %v783 = vrot.slane %v734, 5
      %v784 = vrot.slane %v783, 4
      %v785 = vrot.slane %v735, 5
      %v786 = vsel %vm754, %v784, %v785
      %v787 = vunpack.c.l.b16 %v758
      %v788 = vunpack.c.l.b16 %v762
      %v789 = vunpack.c.l.b16 %v766
      %v790 = vunpack.c.l.b16 %v770
      %v791 = vunpack.c.l.b16 %v774
      %v792 = vunpack.c.l.b16 %v778
      %v793 = vunpack.c.l.b16 %v782
      %v794 = vunpack.c.l.b16 %v786
      %v795 = vpack.c.b16 %v788, %v787
      %v796 = vpack.c.b16 %v790, %v789
      %v797 = vpack.c.b16 %v792, %v791
      %v798 = vpack.c.b16 %v794, %v793
      %799 = vrot.lane.b32.xlu0 %v795, 32
      %v800 = vpop.permute.xlu0 %799
      %801 = vrot.lane.b32.xlu0 %v796, 32
      %v802 = vpop.permute.xlu0 %801
      %803 = vrot.lane.b32.xlu0 %v797, 32
      %v804 = vpop.permute.xlu0 %803
      %805 = vrot.lane.b32.xlu0 %v798, 32
      %v806 = vpop.permute.xlu0 %805
      %vm811 = vcmask 326912
      %812 = vst.msk [vmem:[#allocation2] sm:$0xff] %vm811, %v800
      %813 = vst.msk [vmem:[#allocation2 + $0x10] sm:$0xff] %vm811, %v802
      %814 = vst.msk [vmem:[#allocation2 + $0x20] sm:$0xff] %vm811, %v804
      %815 = vst.msk [vmem:[#allocation2 + $0x30] sm:$0xff] %vm811, %v806
      %s816 = scalar_lea.vmem %s308, 160
      %v817 = vld [vmem:[%s816] sm:$0xf]
      %v818 = vld [vmem:[%s816 + $0x8] sm:$0xf]
      %v819 = vld [vmem:[%s816 + $0x10] sm:$0xf]
      %v820 = vld [vmem:[%s816 + $0x18] sm:$0xf]
      %v821 = vld [vmem:[%s816 + $0x20] sm:$0xf]
      %v822 = vld [vmem:[%s816 + $0x28] sm:$0xf]
      %v823 = vld [vmem:[%s816 + $0x30] sm:$0xf]
      %v824 = vld [vmem:[%s816 + $0x38] sm:$0xf]
      %v833 = vunpack.c.l.b16 %v817
      %v834 = vunpack.c.l.b16 %v818
      %v835 = vunpack.c.l.b16 %v819
      %v836 = vunpack.c.l.b16 %v820
      %v837 = vunpack.c.l.b16 %v821
      %v838 = vunpack.c.l.b16 %v822
      %v839 = vunpack.c.l.b16 %v823
      %v840 = vunpack.c.l.b16 %v824
      %v841 = vpack.c.b16 %v834, %v833
      %v842 = vpack.c.b16 %v836, %v835
      %v843 = vpack.c.b16 %v838, %v837
      %v844 = vpack.c.b16 %v840, %v839
      %845 = vrot.lane.b32.xlu0 %v841, 40
      %v846 = vpop.permute.xlu0 %845
      %847 = vrot.lane.b32.xlu0 %v842, 40
      %v848 = vpop.permute.xlu0 %847
      %849 = vrot.lane.b32.xlu0 %v843, 40
      %v850 = vpop.permute.xlu0 %849
      %851 = vrot.lane.b32.xlu0 %v844, 40
      %v852 = vpop.permute.xlu0 %851
      %vm857 = vcmask 392512
      %858 = vst.msk [vmem:[#allocation2] sm:$0xff] %vm857, %v846
      %859 = vst.msk [vmem:[#allocation2 + $0x10] sm:$0xff] %vm857, %v848
      %860 = vst.msk [vmem:[#allocation2 + $0x20] sm:$0xff] %vm857, %v850
      %861 = vst.msk [vmem:[#allocation2 + $0x30] sm:$0xff] %vm857, %v852
      %s862 = scalar_lea.vmem %s308, 240
      %v863 = vld [vmem:[%s862] sm:$0xf]
      %v864 = vld [vmem:[%s862 + $0x8] sm:$0xf]
      %v865 = vld [vmem:[%s862 + $0x10] sm:$0xf]
      %v866 = vld [vmem:[%s862 + $0x18] sm:$0xf]
      %v867 = vld [vmem:[%s862 + $0x20] sm:$0xf]
      %v868 = vld [vmem:[%s862 + $0x28] sm:$0xf]
      %v869 = vld [vmem:[%s862 + $0x30] sm:$0xf]
      %v870 = vld [vmem:[%s862 + $0x38] sm:$0xf]
      %v879 = vunpack.c.l.b16 %v863
      %v880 = vunpack.c.l.b16 %v864
      %v881 = vunpack.c.l.b16 %v865
      %v882 = vunpack.c.l.b16 %v866
      %v883 = vunpack.c.l.b16 %v867
      %v884 = vunpack.c.l.b16 %v868
      %v885 = vunpack.c.l.b16 %v869
      %v886 = vunpack.c.l.b16 %v870
      %v887 = vpack.c.b16 %v880, %v879
      %v888 = vpack.c.b16 %v882, %v881
      %v889 = vpack.c.b16 %v884, %v883
      %v890 = vpack.c.b16 %v886, %v885
      %891 = vrot.lane.b32.xlu0 %v887, 48
      %v892 = vpop.permute.xlu0 %891
      %893 = vrot.lane.b32.xlu0 %v888, 48
      %v894 = vpop.permute.xlu0 %893
      %895 = vrot.lane.b32.xlu0 %v889, 48
      %v896 = vpop.permute.xlu0 %895
      %897 = vrot.lane.b32.xlu0 %v890, 48
      %v898 = vpop.permute.xlu0 %897
      %vm903 = vcmask 458112
      %904 = vst.msk [vmem:[#allocation2] sm:$0xff] %vm903, %v892
      %905 = vst.msk [vmem:[#allocation2 + $0x10] sm:$0xff] %vm903, %v894
      %906 = vst.msk [vmem:[#allocation2 + $0x20] sm:$0xff] %vm903, %v896
      %907 = vst.msk [vmem:[#allocation2 + $0x30] sm:$0xff] %vm903, %v898
      %v908 = vld [vmem:[%s816] sm:$0xf]
      %v909 = vld [vmem:[%s816 + $0x4] sm:$0x1]
      %v910 = vld [vmem:[%s816 + $0x8] sm:$0xf]
      %v911 = vld [vmem:[%s816 + $0xc] sm:$0x1]
      %v912 = vld [vmem:[%s816 + $0x10] sm:$0xf]
      %v913 = vld [vmem:[%s816 + $0x14] sm:$0x1]
      %v914 = vld [vmem:[%s816 + $0x18] sm:$0xf]
      %v915 = vld [vmem:[%s816 + $0x1c] sm:$0x1]
      %v916 = vld [vmem:[%s816 + $0x20] sm:$0xf]
      %v917 = vld [vmem:[%s816 + $0x24] sm:$0x1]
      %v918 = vld [vmem:[%s816 + $0x28] sm:$0xf]
      %v919 = vld [vmem:[%s816 + $0x2c] sm:$0x1]
      %v920 = vld [vmem:[%s816 + $0x30] sm:$0xf]
      %v921 = vld [vmem:[%s816 + $0x34] sm:$0x1]
      %v922 = vld [vmem:[%s816 + $0x38] sm:$0xf]
      %v923 = vld [vmem:[%s816 + $0x3c] sm:$0x1]
      %v925 = vshrl.u32 %v908, 16
      %v927 = vrot.slane %v925, 4
      %v928 = vshll.u32 %v908, 16
      %v930 = vrot.slane %v928, 5
      %v931 = vor.u32 %v927, %v930
      %v932 = vrot.slane %v931, 4
      %v934 = vshll.u32 %v909, 16
      %v936 = vrot.slane %v934, 5
      %v937 = vsel %vm421, %v932, %v936
      %v939 = vshrl.u32 %v910, 16
      %v941 = vrot.slane %v939, 4
      %v942 = vshll.u32 %v910, 16
      %v944 = vrot.slane %v942, 5
      %v945 = vor.u32 %v941, %v944
      %v946 = vrot.slane %v945, 4
      %v948 = vshll.u32 %v911, 16
      %v950 = vrot.slane %v948, 5
      %v951 = vsel %vm421, %v946, %v950
      %v953 = vshrl.u32 %v912, 16
      %v955 = vrot.slane %v953, 4
      %v956 = vshll.u32 %v912, 16
      %v958 = vrot.slane %v956, 5
      %v959 = vor.u32 %v955, %v958
      %v960 = vrot.slane %v959, 4
      %v962 = vshll.u32 %v913, 16
      %v964 = vrot.slane %v962, 5
      %v965 = vsel %vm421, %v960, %v964
      %v967 = vshrl.u32 %v914, 16
      %v969 = vrot.slane %v967, 4
      %v970 = vshll.u32 %v914, 16
      %v972 = vrot.slane %v970, 5
      %v973 = vor.u32 %v969, %v972
      %v974 = vrot.slane %v973, 4
      %v976 = vshll.u32 %v915, 16
      %v978 = vrot.slane %v976, 5
      %v979 = vsel %vm421, %v974, %v978
      %v981 = vshrl.u32 %v916, 16
      %v983 = vrot.slane %v981, 4
      %v984 = vshll.u32 %v916, 16
      %v986 = vrot.slane %v984, 5
      %v987 = vor.u32 %v983, %v986
      %v988 = vrot.slane %v987, 4
      %v990 = vshll.u32 %v917, 16
      %v992 = vrot.slane %v990, 5
      %v993 = vsel %vm421, %v988, %v992
      %v995 = vshrl.u32 %v918, 16
      %v997 = vrot.slane %v995, 4
      %v998 = vshll.u32 %v918, 16
      %v1000 = vrot.slane %v998, 5
      %v1001 = vor.u32 %v997, %v1000
      %v1002 = vrot.slane %v1001, 4
      %v1004 = vshll.u32 %v919, 16
      %v1006 = vrot.slane %v1004, 5
      %v1007 = vsel %vm421, %v1002, %v1006
      %v1009 = vshrl.u32 %v920, 16
      %v1011 = vrot.slane %v1009, 4
      %v1012 = vshll.u32 %v920, 16
      %v1014 = vrot.slane %v1012, 5
      %v1015 = vor.u32 %v1011, %v1014
      %v1016 = vrot.slane %v1015, 4
      %v1018 = vshll.u32 %v921, 16
      %v1020 = vrot.slane %v1018, 5
      %v1021 = vsel %vm421, %v1016, %v1020
      %v1023 = vshrl.u32 %v922, 16
      %v1025 = vrot.slane %v1023, 4
      %v1026 = vshll.u32 %v922, 16
      %v1028 = vrot.slane %v1026, 5
      %v1029 = vor.u32 %v1025, %v1028
      %v1030 = vrot.slane %v1029, 4
      %v1032 = vshll.u32 %v923, 16
      %v1034 = vrot.slane %v1032, 5
      %v1035 = vsel %vm421, %v1030, %v1034
      %v1036 = vunpack.c.l.b16 %v937
      %v1037 = vunpack.c.l.b16 %v951
      %v1038 = vunpack.c.l.b16 %v965
      %v1039 = vunpack.c.l.b16 %v979
      %v1040 = vunpack.c.l.b16 %v993
      %v1041 = vunpack.c.l.b16 %v1007
      %v1042 = vunpack.c.l.b16 %v1021
      %v1043 = vunpack.c.l.b16 %v1035
      %v1044 = vpack.c.b16 %v1037, %v1036
      %v1045 = vpack.c.b16 %v1039, %v1038
      %v1046 = vpack.c.b16 %v1041, %v1040
      %v1047 = vpack.c.b16 %v1043, %v1042
      %1048 = vrot.lane.b32.xlu0 %v1044, 56
      %v1049 = vpop.permute.xlu0 %1048
      %1050 = vrot.lane.b32.xlu0 %v1045, 56
      %v1051 = vpop.permute.xlu0 %1050
      %1052 = vrot.lane.b32.xlu0 %v1046, 56
      %v1053 = vpop.permute.xlu0 %1052
      %1054 = vrot.lane.b32.xlu0 %v1047, 56
      %v1055 = vpop.permute.xlu0 %1054
      %vm1060 = vcmask 523712
      %1061 = vst.msk [vmem:[#allocation2] sm:$0xff] %vm1060, %v1049
      %1062 = vst.msk [vmem:[#allocation2 + $0x10] sm:$0xff] %vm1060, %v1051
      %1063 = vst.msk [vmem:[#allocation2 + $0x20] sm:$0xff] %vm1060, %v1053
      %1064 = vst.msk [vmem:[#allocation2 + $0x30] sm:$0xff] %vm1060, %v1055
      %v1065 = vld [vmem:[%s862] sm:$0xf]
      %v1066 = vld [vmem:[%s862 + $0x4] sm:$0x1]
      %v1067 = vld [vmem:[%s862 + $0x8] sm:$0xf]
      %v1068 = vld [vmem:[%s862 + $0xc] sm:$0x1]
      %v1069 = vld [vmem:[%s862 + $0x10] sm:$0xf]
      %v1070 = vld [vmem:[%s862 + $0x14] sm:$0x1]
      %v1071 = vld [vmem:[%s862 + $0x18] sm:$0xf]
      %v1072 = vld [vmem:[%s862 + $0x1c] sm:$0x1]
      %v1073 = vld [vmem:[%s862 + $0x20] sm:$0xf]
      %v1074 = vld [vmem:[%s862 + $0x24] sm:$0x1]
      %v1075 = vld [vmem:[%s862 + $0x28] sm:$0xf]
      %v1076 = vld [vmem:[%s862 + $0x2c] sm:$0x1]
      %v1077 = vld [vmem:[%s862 + $0x30] sm:$0xf]
      %v1078 = vld [vmem:[%s862 + $0x34] sm:$0x1]
      %v1079 = vld [vmem:[%s862 + $0x38] sm:$0xf]
      %v1080 = vld [vmem:[%s862 + $0x3c] sm:$0x1]
      %v1082 = vshrl.u32 %v1065, 16
      %v1084 = vrot.slane %v1082, 4
      %v1085 = vshll.u32 %v1065, 16
      %v1087 = vrot.slane %v1085, 5
      %v1088 = vor.u32 %v1084, %v1087
      %v1089 = vrot.slane %v1088, 4
      %v1091 = vshll.u32 %v1066, 16
      %v1093 = vrot.slane %v1091, 5
      %v1094 = vsel %vm421, %v1089, %v1093
      %v1096 = vshrl.u32 %v1067, 16
      %v1098 = vrot.slane %v1096, 4
      %v1099 = vshll.u32 %v1067, 16
      %v1101 = vrot.slane %v1099, 5
      %v1102 = vor.u32 %v1098, %v1101
      %v1103 = vrot.slane %v1102, 4
      %v1105 = vshll.u32 %v1068, 16
      %v1107 = vrot.slane %v1105, 5
      %v1108 = vsel %vm421, %v1103, %v1107
      %v1110 = vshrl.u32 %v1069, 16
      %v1112 = vrot.slane %v1110, 4
      %v1113 = vshll.u32 %v1069, 16
      %v1115 = vrot.slane %v1113, 5
      %v1116 = vor.u32 %v1112, %v1115
      %v1117 = vrot.slane %v1116, 4
      %v1119 = vshll.u32 %v1070, 16
      %v1121 = vrot.slane %v1119, 5
      %v1122 = vsel %vm421, %v1117, %v1121
      %v1124 = vshrl.u32 %v1071, 16
      %v1126 = vrot.slane %v1124, 4
      %v1127 = vshll.u32 %v1071, 16
      %v1129 = vrot.slane %v1127, 5
      %v1130 = vor.u32 %v1126, %v1129
      %v1131 = vrot.slane %v1130, 4
      %v1133 = vshll.u32 %v1072, 16
      %v1135 = vrot.slane %v1133, 5
      %v1136 = vsel %vm421, %v1131, %v1135
      %v1138 = vshrl.u32 %v1073, 16
      %v1140 = vrot.slane %v1138, 4
      %v1141 = vshll.u32 %v1073, 16
      %v1143 = vrot.slane %v1141, 5
      %v1144 = vor.u32 %v1140, %v1143
      %v1145 = vrot.slane %v1144, 4
      %v1147 = vshll.u32 %v1074, 16
      %v1149 = vrot.slane %v1147, 5
      %v1150 = vsel %vm421, %v1145, %v1149
      %v1152 = vshrl.u32 %v1075, 16
      %v1154 = vrot.slane %v1152, 4
      %v1155 = vshll.u32 %v1075, 16
      %v1157 = vrot.slane %v1155, 5
      %v1158 = vor.u32 %v1154, %v1157
      %v1159 = vrot.slane %v1158, 4
      %v1161 = vshll.u32 %v1076, 16
      %v1163 = vrot.slane %v1161, 5
      %v1164 = vsel %vm421, %v1159, %v1163
      %v1166 = vshrl.u32 %v1077, 16
      %v1168 = vrot.slane %v1166, 4
      %v1169 = vshll.u32 %v1077, 16
      %v1171 = vrot.slane %v1169, 5
      %v1172 = vor.u32 %v1168, %v1171
      %v1173 = vrot.slane %v1172, 4
      %v1175 = vshll.u32 %v1078, 16
      %v1177 = vrot.slane %v1175, 5
      %v1178 = vsel %vm421, %v1173, %v1177
      %v1180 = vshrl.u32 %v1079, 16
      %v1182 = vrot.slane %v1180, 4
      %v1183 = vshll.u32 %v1079, 16
      %v1185 = vrot.slane %v1183, 5
      %v1186 = vor.u32 %v1182, %v1185
      %v1187 = vrot.slane %v1186, 4
      %v1189 = vshll.u32 %v1080, 16
      %v1191 = vrot.slane %v1189, 5
      %v1192 = vsel %vm421, %v1187, %v1191
      %v1193 = vunpack.c.l.b16 %v1094
      %v1194 = vunpack.c.l.b16 %v1108
      %v1195 = vunpack.c.l.b16 %v1122
      %v1196 = vunpack.c.l.b16 %v1136
      %v1197 = vunpack.c.l.b16 %v1150
      %v1198 = vunpack.c.l.b16 %v1164
      %v1199 = vunpack.c.l.b16 %v1178
      %v1200 = vunpack.c.l.b16 %v1192
      %v1201 = vpack.c.b16 %v1194, %v1193
      %v1202 = vpack.c.b16 %v1196, %v1195
      %v1203 = vpack.c.b16 %v1198, %v1197
      %v1204 = vpack.c.b16 %v1200, %v1199
      %1205 = vrot.lane.b32.xlu0 %v1201, 64
      %v1206 = vpop.permute.xlu0 %1205
      %1207 = vrot.lane.b32.xlu0 %v1202, 64
      %v1208 = vpop.permute.xlu0 %1207
      %1209 = vrot.lane.b32.xlu0 %v1203, 64
      %v1210 = vpop.permute.xlu0 %1209
      %1211 = vrot.lane.b32.xlu0 %v1204, 64
      %v1212 = vpop.permute.xlu0 %1211
      %vm1217 = vcmask 589312
      %1218 = vst.msk [vmem:[#allocation2] sm:$0xff] %vm1217, %v1206
      %1219 = vst.msk [vmem:[#allocation2 + $0x10] sm:$0xff] %vm1217, %v1208
      %1220 = vst.msk [vmem:[#allocation2 + $0x20] sm:$0xff] %vm1217, %v1210
      %1221 = vst.msk [vmem:[#allocation2 + $0x30] sm:$0xff] %vm1217, %v1212
      %v1222 = vld [vmem:[%s816] sm:$0xe]
      %v1223 = vld [vmem:[%s816 + $0x4] sm:$0x1]
      %v1224 = vld [vmem:[%s816 + $0x8] sm:$0xe]
      %v1225 = vld [vmem:[%s816 + $0xc] sm:$0x1]
      %v1226 = vld [vmem:[%s816 + $0x10] sm:$0xe]
      %v1227 = vld [vmem:[%s816 + $0x14] sm:$0x1]
      %v1228 = vld [vmem:[%s816 + $0x18] sm:$0xe]
      %v1229 = vld [vmem:[%s816 + $0x1c] sm:$0x1]
      %v1230 = vld [vmem:[%s816 + $0x20] sm:$0xe]
      %v1231 = vld [vmem:[%s816 + $0x24] sm:$0x1]
      %v1232 = vld [vmem:[%s816 + $0x28] sm:$0xe]
      %v1233 = vld [vmem:[%s816 + $0x2c] sm:$0x1]
      %v1234 = vld [vmem:[%s816 + $0x30] sm:$0xe]
      %v1235 = vld [vmem:[%s816 + $0x34] sm:$0x1]
      %v1236 = vld [vmem:[%s816 + $0x38] sm:$0xe]
      %v1237 = vld [vmem:[%s816 + $0x3c] sm:$0x1]
      %v1254 = vrot.slane %v1222, 5
      %v1255 = vrot.slane %v1254, 4
      %v1256 = vrot.slane %v1223, 5
      %v1257 = vsel %vm754, %v1255, %v1256
      %v1258 = vrot.slane %v1224, 5
      %v1259 = vrot.slane %v1258, 4
      %v1260 = vrot.slane %v1225, 5
      %v1261 = vsel %vm754, %v1259, %v1260
      %v1262 = vrot.slane %v1226, 5
      %v1263 = vrot.slane %v1262, 4
      %v1264 = vrot.slane %v1227, 5
      %v1265 = vsel %vm754, %v1263, %v1264
      %v1266 = vrot.slane %v1228, 5
      %v1267 = vrot.slane %v1266, 4
      %v1268 = vrot.slane %v1229, 5
      %v1269 = vsel %vm754, %v1267, %v1268
      %v1270 = vrot.slane %v1230, 5
      %v1271 = vrot.slane %v1270, 4
      %v1272 = vrot.slane %v1231, 5
      %v1273 = vsel %vm754, %v1271, %v1272
      %v1274 = vrot.slane %v1232, 5
      %v1275 = vrot.slane %v1274, 4
      %v1276 = vrot.slane %v1233, 5
      %v1277 = vsel %vm754, %v1275, %v1276
      %v1278 = vrot.slane %v1234, 5
      %v1279 = vrot.slane %v1278, 4
      %v1280 = vrot.slane %v1235, 5
      %v1281 = vsel %vm754, %v1279, %v1280
      %v1282 = vrot.slane %v1236, 5
      %v1283 = vrot.slane %v1282, 4
      %v1284 = vrot.slane %v1237, 5
      %v1285 = vsel %vm754, %v1283, %v1284
      %v1286 = vunpack.c.l.b16 %v1257
      %v1287 = vunpack.c.l.b16 %v1261
      %v1288 = vunpack.c.l.b16 %v1265
      %v1289 = vunpack.c.l.b16 %v1269
      %v1290 = vunpack.c.l.b16 %v1273
      %v1291 = vunpack.c.l.b16 %v1277
      %v1292 = vunpack.c.l.b16 %v1281
      %v1293 = vunpack.c.l.b16 %v1285
      %v1294 = vpack.c.b16 %v1287, %v1286
      %v1295 = vpack.c.b16 %v1289, %v1288
      %v1296 = vpack.c.b16 %v1291, %v1290
      %v1297 = vpack.c.b16 %v1293, %v1292
      %1298 = vrot.lane.b32.xlu0 %v1294, 72
      %v1299 = vpop.permute.xlu0 %1298
      %1300 = vrot.lane.b32.xlu0 %v1295, 72
      %v1301 = vpop.permute.xlu0 %1300
      %1302 = vrot.lane.b32.xlu0 %v1296, 72
      %v1303 = vpop.permute.xlu0 %1302
      %1304 = vrot.lane.b32.xlu0 %v1297, 72
      %v1305 = vpop.permute.xlu0 %1304
      %vm1310 = vcmask 654912
      %1311 = vst.msk [vmem:[#allocation2] sm:$0xff] %vm1310, %v1299
      %1312 = vst.msk [vmem:[#allocation2 + $0x10] sm:$0xff] %vm1310, %v1301
      %1313 = vst.msk [vmem:[#allocation2 + $0x20] sm:$0xff] %vm1310, %v1303
      %1314 = vst.msk [vmem:[#allocation2 + $0x30] sm:$0xff] %vm1310, %v1305
      %s1315 = scalar_lea.vmem %s308, 8
      %v1316 = vld [vmem:[%s1315] sm:$0xf]
      %v1317 = vld [vmem:[%s1315 + $0x8] sm:$0xf]
      %v1318 = vld [vmem:[%s1315 + $0x10] sm:$0xf]
      %v1319 = vld [vmem:[%s1315 + $0x18] sm:$0xf]
      %v1320 = vld [vmem:[%s1315 + $0x20] sm:$0xf]
      %v1321 = vld [vmem:[%s1315 + $0x28] sm:$0xf]
      %v1322 = vld [vmem:[%s1315 + $0x30] sm:$0xf]
      %v1323 = vld [vmem:[%s1315 + $0x38] sm:$0xf]
      %v1332 = vunpack.c.l.b16 %v1316
      %v1333 = vunpack.c.l.b16 %v1317
      %v1334 = vunpack.c.l.b16 %v1318
      %v1335 = vunpack.c.l.b16 %v1319
      %v1336 = vunpack.c.l.b16 %v1320
      %v1337 = vunpack.c.l.b16 %v1321
      %v1338 = vunpack.c.l.b16 %v1322
      %v1339 = vunpack.c.l.b16 %v1323
      %v1340 = vpack.c.b16 %v1333, %v1332
      %v1341 = vpack.c.b16 %v1335, %v1334
      %v1342 = vpack.c.b16 %v1337, %v1336
      %v1343 = vpack.c.b16 %v1339, %v1338
      %1344 = vrot.lane.b32.xlu0 %v1340, 80
      %v1345 = vpop.permute.xlu0 %1344
      %1346 = vrot.lane.b32.xlu0 %v1341, 80
      %v1347 = vpop.permute.xlu0 %1346
      %1348 = vrot.lane.b32.xlu0 %v1342, 80
      %v1349 = vpop.permute.xlu0 %1348
      %1350 = vrot.lane.b32.xlu0 %v1343, 80
      %v1351 = vpop.permute.xlu0 %1350
      %vm1356 = vcmask 720512
      %1357 = vst.msk [vmem:[#allocation2] sm:$0xff] %vm1356, %v1345
      %1358 = vst.msk [vmem:[#allocation2 + $0x10] sm:$0xff] %vm1356, %v1347
      %1359 = vst.msk [vmem:[#allocation2 + $0x20] sm:$0xff] %vm1356, %v1349
      %1360 = vst.msk [vmem:[#allocation2 + $0x30] sm:$0xff] %vm1356, %v1351
      %s1361 = scalar_lea.vmem %s308, 88
      %v1362 = vld [vmem:[%s1361] sm:$0xf]
      %v1363 = vld [vmem:[%s1361 + $0x8] sm:$0xf]
      %v1364 = vld [vmem:[%s1361 + $0x10] sm:$0xf]
      %v1365 = vld [vmem:[%s1361 + $0x18] sm:$0xf]
      %v1366 = vld [vmem:[%s1361 + $0x20] sm:$0xf]
      %v1367 = vld [vmem:[%s1361 + $0x28] sm:$0xf]
      %v1368 = vld [vmem:[%s1361 + $0x30] sm:$0xf]
      %v1369 = vld [vmem:[%s1361 + $0x38] sm:$0xf]
      %v1378 = vunpack.c.l.b16 %v1362
      %v1379 = vunpack.c.l.b16 %v1363
      %v1380 = vunpack.c.l.b16 %v1364
      %v1381 = vunpack.c.l.b16 %v1365
      %v1382 = vunpack.c.l.b16 %v1366
      %v1383 = vunpack.c.l.b16 %v1367
      %v1384 = vunpack.c.l.b16 %v1368
      %v1385 = vunpack.c.l.b16 %v1369
      %v1386 = vpack.c.b16 %v1379, %v1378
      %v1387 = vpack.c.b16 %v1381, %v1380
      %v1388 = vpack.c.b16 %v1383, %v1382
      %v1389 = vpack.c.b16 %v1385, %v1384
      %1390 = vrot.lane.b32.xlu0 %v1386, 88
      %v1391 = vpop.permute.xlu0 %1390
      %1392 = vrot.lane.b32.xlu0 %v1387, 88
      %v1393 = vpop.permute.xlu0 %1392
      %1394 = vrot.lane.b32.xlu0 %v1388, 88
      %v1395 = vpop.permute.xlu0 %1394
      %1396 = vrot.lane.b32.xlu0 %v1389, 88
      %v1397 = vpop.permute.xlu0 %1396
      %vm1402 = vcmask 786112
      %1403 = vst.msk [vmem:[#allocation2] sm:$0xff] %vm1402, %v1391
      %1404 = vst.msk [vmem:[#allocation2 + $0x10] sm:$0xff] %vm1402, %v1393
      %1405 = vst.msk [vmem:[#allocation2 + $0x20] sm:$0xff] %vm1402, %v1395
      %1406 = vst.msk [vmem:[#allocation2 + $0x30] sm:$0xff] %vm1402, %v1397
      %v1407 = vld [vmem:[%s1315] sm:$0xf]
      %v1408 = vld [vmem:[%s1315 + $0x4] sm:$0x1]
      %v1409 = vld [vmem:[%s1315 + $0x8] sm:$0xf]
      %v1410 = vld [vmem:[%s1315 + $0xc] sm:$0x1]
      %v1411 = vld [vmem:[%s1315 + $0x10] sm:$0xf]
      %v1412 = vld [vmem:[%s1315 + $0x14] sm:$0x1]
      %v1413 = vld [vmem:[%s1315 + $0x18] sm:$0xf]
      %v1414 = vld [vmem:[%s1315 + $0x1c] sm:$0x1]
      %v1415 = vld [vmem:[%s1315 + $0x20] sm:$0xf]
      %v1416 = vld [vmem:[%s1315 + $0x24] sm:$0x1]
      %v1417 = vld [vmem:[%s1315 + $0x28] sm:$0xf]
      %v1418 = vld [vmem:[%s1315 + $0x2c] sm:$0x1]
      %v1419 = vld [vmem:[%s1315 + $0x30] sm:$0xf]
      %v1420 = vld [vmem:[%s1315 + $0x34] sm:$0x1]
      %v1421 = vld [vmem:[%s1315 + $0x38] sm:$0xf]
      %v1422 = vld [vmem:[%s1315 + $0x3c] sm:$0x1]
      %v1424 = vshrl.u32 %v1407, 16
      %v1426 = vrot.slane %v1424, 4
      %v1427 = vshll.u32 %v1407, 16
      %v1429 = vrot.slane %v1427, 5
      %v1430 = vor.u32 %v1426, %v1429
      %v1431 = vrot.slane %v1430, 4
      %v1433 = vshll.u32 %v1408, 16
      %v1435 = vrot.slane %v1433, 5
      %v1436 = vsel %vm421, %v1431, %v1435
      %v1438 = vshrl.u32 %v1409, 16
      %v1440 = vrot.slane %v1438, 4
      %v1441 = vshll.u32 %v1409, 16
      %v1443 = vrot.slane %v1441, 5
      %v1444 = vor.u32 %v1440, %v1443
      %v1445 = vrot.slane %v1444, 4
      %v1447 = vshll.u32 %v1410, 16
      %v1449 = vrot.slane %v1447, 5
      %v1450 = vsel %vm421, %v1445, %v1449
      %v1452 = vshrl.u32 %v1411, 16
      %v1454 = vrot.slane %v1452, 4
      %v1455 = vshll.u32 %v1411, 16
      %v1457 = vrot.slane %v1455, 5
      %v1458 = vor.u32 %v1454, %v1457
      %v1459 = vrot.slane %v1458, 4
      %v1461 = vshll.u32 %v1412, 16
      %v1463 = vrot.slane %v1461, 5
      %v1464 = vsel %vm421, %v1459, %v1463
      %v1466 = vshrl.u32 %v1413, 16
      %v1468 = vrot.slane %v1466, 4
      %v1469 = vshll.u32 %v1413, 16
      %v1471 = vrot.slane %v1469, 5
      %v1472 = vor.u32 %v1468, %v1471
      %v1473 = vrot.slane %v1472, 4
      %v1475 = vshll.u32 %v1414, 16
      %v1477 = vrot.slane %v1475, 5
      %v1478 = vsel %vm421, %v1473, %v1477
      %v1480 = vshrl.u32 %v1415, 16
      %v1482 = vrot.slane %v1480, 4
      %v1483 = vshll.u32 %v1415, 16
      %v1485 = vrot.slane %v1483, 5
      %v1486 = vor.u32 %v1482, %v1485
      %v1487 = vrot.slane %v1486, 4
      %v1489 = vshll.u32 %v1416, 16
      %v1491 = vrot.slane %v1489, 5
      %v1492 = vsel %vm421, %v1487, %v1491
      %v1494 = vshrl.u32 %v1417, 16
      %v1496 = vrot.slane %v1494, 4
      %v1497 = vshll.u32 %v1417, 16
      %v1499 = vrot.slane %v1497, 5
      %v1500 = vor.u32 %v1496, %v1499
      %v1501 = vrot.slane %v1500, 4
      %v1503 = vshll.u32 %v1418, 16
      %v1505 = vrot.slane %v1503, 5
      %v1506 = vsel %vm421, %v1501, %v1505
      %v1508 = vshrl.u32 %v1419, 16
      %v1510 = vrot.slane %v1508, 4
      %v1511 = vshll.u32 %v1419, 16
      %v1513 = vrot.slane %v1511, 5
      %v1514 = vor.u32 %v1510, %v1513
      %v1515 = vrot.slane %v1514, 4
      %v1517 = vshll.u32 %v1420, 16
      %v1519 = vrot.slane %v1517, 5
      %v1520 = vsel %vm421, %v1515, %v1519
      %v1522 = vshrl.u32 %v1421, 16
      %v1524 = vrot.slane %v1522, 4
      %v1525 = vshll.u32 %v1421, 16
      %v1527 = vrot.slane %v1525, 5
      %v1528 = vor.u32 %v1524, %v1527
      %v1529 = vrot.slane %v1528, 4
      %v1531 = vshll.u32 %v1422, 16
      %v1533 = vrot.slane %v1531, 5
      %v1534 = vsel %vm421, %v1529, %v1533
      %v1535 = vunpack.c.l.b16 %v1436
      %v1536 = vunpack.c.l.b16 %v1450
      %v1537 = vunpack.c.l.b16 %v1464
      %v1538 = vunpack.c.l.b16 %v1478
      %v1539 = vunpack.c.l.b16 %v1492
      %v1540 = vunpack.c.l.b16 %v1506
      %v1541 = vunpack.c.l.b16 %v1520
      %v1542 = vunpack.c.l.b16 %v1534
      %v1543 = vpack.c.b16 %v1536, %v1535
      %v1544 = vpack.c.b16 %v1538, %v1537
      %v1545 = vpack.c.b16 %v1540, %v1539
      %v1546 = vpack.c.b16 %v1542, %v1541
      %1547 = vrot.lane.b32.xlu0 %v1543, 96
      %v1548 = vpop.permute.xlu0 %1547
      %1549 = vrot.lane.b32.xlu0 %v1544, 96
      %v1550 = vpop.permute.xlu0 %1549
      %1551 = vrot.lane.b32.xlu0 %v1545, 96
      %v1552 = vpop.permute.xlu0 %1551
      %1553 = vrot.lane.b32.xlu0 %v1546, 96
      %v1554 = vpop.permute.xlu0 %1553
      %vm1559 = vcmask 851712
      %1560 = vst.msk [vmem:[#allocation2] sm:$0xff] %vm1559, %v1548
      %1561 = vst.msk [vmem:[#allocation2 + $0x10] sm:$0xff] %vm1559, %v1550
      %1562 = vst.msk [vmem:[#allocation2 + $0x20] sm:$0xff] %vm1559, %v1552
      %1563 = vst.msk [vmem:[#allocation2 + $0x30] sm:$0xff] %vm1559, %v1554
      %v1564 = vld [vmem:[%s1361] sm:$0xf]
      %v1565 = vld [vmem:[%s1361 + $0x4] sm:$0x1]
      %v1566 = vld [vmem:[%s1361 + $0x8] sm:$0xf]
      %v1567 = vld [vmem:[%s1361 + $0xc] sm:$0x1]
      %v1568 = vld [vmem:[%s1361 + $0x10] sm:$0xf]
      %v1569 = vld [vmem:[%s1361 + $0x14] sm:$0x1]
      %v1570 = vld [vmem:[%s1361 + $0x18] sm:$0xf]
      %v1571 = vld [vmem:[%s1361 + $0x1c] sm:$0x1]
      %v1572 = vld [vmem:[%s1361 + $0x20] sm:$0xf]
      %v1573 = vld [vmem:[%s1361 + $0x24] sm:$0x1]
      %v1574 = vld [vmem:[%s1361 + $0x28] sm:$0xf]
      %v1575 = vld [vmem:[%s1361 + $0x2c] sm:$0x1]
      %v1576 = vld [vmem:[%s1361 + $0x30] sm:$0xf]
      %v1577 = vld [vmem:[%s1361 + $0x34] sm:$0x1]
      %v1578 = vld [vmem:[%s1361 + $0x38] sm:$0xf]
      %v1579 = vld [vmem:[%s1361 + $0x3c] sm:$0x1]
      %v1581 = vshrl.u32 %v1564, 16
      %v1583 = vrot.slane %v1581, 4
      %v1584 = vshll.u32 %v1564, 16
      %v1586 = vrot.slane %v1584, 5
      %v1587 = vor.u32 %v1583, %v1586
      %v1588 = vrot.slane %v1587, 4
      %v1590 = vshll.u32 %v1565, 16
      %v1592 = vrot.slane %v1590, 5
      %v1593 = vsel %vm421, %v1588, %v1592
      %v1595 = vshrl.u32 %v1566, 16
      %v1597 = vrot.slane %v1595, 4
      %v1598 = vshll.u32 %v1566, 16
      %v1600 = vrot.slane %v1598, 5
      %v1601 = vor.u32 %v1597, %v1600
      %v1602 = vrot.slane %v1601, 4
      %v1604 = vshll.u32 %v1567, 16
      %v1606 = vrot.slane %v1604, 5
      %v1607 = vsel %vm421, %v1602, %v1606
      %v1609 = vshrl.u32 %v1568, 16
      %v1611 = vrot.slane %v1609, 4
      %v1612 = vshll.u32 %v1568, 16
      %v1614 = vrot.slane %v1612, 5
      %v1615 = vor.u32 %v1611, %v1614
      %v1616 = vrot.slane %v1615, 4
      %v1618 = vshll.u32 %v1569, 16
      %v1620 = vrot.slane %v1618, 5
      %v1621 = vsel %vm421, %v1616, %v1620
      %v1623 = vshrl.u32 %v1570, 16
      %v1625 = vrot.slane %v1623, 4
      %v1626 = vshll.u32 %v1570, 16
      %v1628 = vrot.slane %v1626, 5
      %v1629 = vor.u32 %v1625, %v1628
      %v1630 = vrot.slane %v1629, 4
      %v1632 = vshll.u32 %v1571, 16
      %v1634 = vrot.slane %v1632, 5
      %v1635 = vsel %vm421, %v1630, %v1634
      %v1637 = vshrl.u32 %v1572, 16
      %v1639 = vrot.slane %v1637, 4
      %v1640 = vshll.u32 %v1572, 16
      %v1642 = vrot.slane %v1640, 5
      %v1643 = vor.u32 %v1639, %v1642
      %v1644 = vrot.slane %v1643, 4
      %v1646 = vshll.u32 %v1573, 16
      %v1648 = vrot.slane %v1646, 5
      %v1649 = vsel %vm421, %v1644, %v1648
      %v1651 = vshrl.u32 %v1574, 16
      %v1653 = vrot.slane %v1651, 4
      %v1654 = vshll.u32 %v1574, 16
      %v1656 = vrot.slane %v1654, 5
      %v1657 = vor.u32 %v1653, %v1656
      %v1658 = vrot.slane %v1657, 4
      %v1660 = vshll.u32 %v1575, 16
      %v1662 = vrot.slane %v1660, 5
      %v1663 = vsel %vm421, %v1658, %v1662
      %v1665 = vshrl.u32 %v1576, 16
      %v1667 = vrot.slane %v1665, 4
      %v1668 = vshll.u32 %v1576, 16
      %v1670 = vrot.slane %v1668, 5
      %v1671 = vor.u32 %v1667, %v1670
      %v1672 = vrot.slane %v1671, 4
      %v1674 = vshll.u32 %v1577, 16
      %v1676 = vrot.slane %v1674, 5
      %v1677 = vsel %vm421, %v1672, %v1676
      %v1679 = vshrl.u32 %v1578, 16
      %v1681 = vrot.slane %v1679, 4
      %v1682 = vshll.u32 %v1578, 16
      %v1684 = vrot.slane %v1682, 5
      %v1685 = vor.u32 %v1681, %v1684
      %v1686 = vrot.slane %v1685, 4
      %v1688 = vshll.u32 %v1579, 16
      %v1690 = vrot.slane %v1688, 5
      %v1691 = vsel %vm421, %v1686, %v1690
      %v1692 = vunpack.c.l.b16 %v1593
      %v1693 = vunpack.c.l.b16 %v1607
      %v1694 = vunpack.c.l.b16 %v1621
      %v1695 = vunpack.c.l.b16 %v1635
      %v1696 = vunpack.c.l.b16 %v1649
      %v1697 = vunpack.c.l.b16 %v1663
      %v1698 = vunpack.c.l.b16 %v1677
      %v1699 = vunpack.c.l.b16 %v1691
      %v1700 = vpack.c.b16 %v1693, %v1692
      %v1701 = vpack.c.b16 %v1695, %v1694
      %v1702 = vpack.c.b16 %v1697, %v1696
      %v1703 = vpack.c.b16 %v1699, %v1698
      %1704 = vrot.lane.b32.xlu0 %v1700, 104
      %v1705 = vpop.permute.xlu0 %1704
      %1706 = vrot.lane.b32.xlu0 %v1701, 104
      %v1707 = vpop.permute.xlu0 %1706
      %1708 = vrot.lane.b32.xlu0 %v1702, 104
      %v1709 = vpop.permute.xlu0 %1708
      %1710 = vrot.lane.b32.xlu0 %v1703, 104
      %v1711 = vpop.permute.xlu0 %1710
      %vm1716 = vcmask 917312
      %1717 = vst.msk [vmem:[#allocation2] sm:$0xff] %vm1716, %v1705
      %1718 = vst.msk [vmem:[#allocation2 + $0x10] sm:$0xff] %vm1716, %v1707
      %1719 = vst.msk [vmem:[#allocation2 + $0x20] sm:$0xff] %vm1716, %v1709
      %1720 = vst.msk [vmem:[#allocation2 + $0x30] sm:$0xff] %vm1716, %v1711
      %v1721 = vld [vmem:[%s1315] sm:$0xe]
      %v1722 = vld [vmem:[%s1315 + $0x4] sm:$0x1]
      %v1723 = vld [vmem:[%s1315 + $0x8] sm:$0xe]
      %v1724 = vld [vmem:[%s1315 + $0xc] sm:$0x1]
      %v1725 = vld [vmem:[%s1315 + $0x10] sm:$0xe]
      %v1726 = vld [vmem:[%s1315 + $0x14] sm:$0x1]
      %v1727 = vld [vmem:[%s1315 + $0x18] sm:$0xe]
      %v1728 = vld [vmem:[%s1315 + $0x1c] sm:$0x1]
      %v1729 = vld [vmem:[%s1315 + $0x20] sm:$0xe]
      %v1730 = vld [vmem:[%s1315 + $0x24] sm:$0x1]
      %v1731 = vld [vmem:[%s1315 + $0x28] sm:$0xe]
      %v1732 = vld [vmem:[%s1315 + $0x2c] sm:$0x1]
      %v1733 = vld [vmem:[%s1315 + $0x30] sm:$0xe]
      %v1734 = vld [vmem:[%s1315 + $0x34] sm:$0x1]
      %v1735 = vld [vmem:[%s1315 + $0x38] sm:$0xe]
      %v1736 = vld [vmem:[%s1315 + $0x3c] sm:$0x1]
      %v1753 = vrot.slane %v1721, 5
      %v1754 = vrot.slane %v1753, 4
      %v1755 = vrot.slane %v1722, 5
      %v1756 = vsel %vm754, %v1754, %v1755
      %v1757 = vrot.slane %v1723, 5
      %v1758 = vrot.slane %v1757, 4
      %v1759 = vrot.slane %v1724, 5
      %v1760 = vsel %vm754, %v1758, %v1759
      %v1761 = vrot.slane %v1725, 5
      %v1762 = vrot.slane %v1761, 4
      %v1763 = vrot.slane %v1726, 5
      %v1764 = vsel %vm754, %v1762, %v1763
      %v1765 = vrot.slane %v1727, 5
      %v1766 = vrot.slane %v1765, 4
      %v1767 = vrot.slane %v1728, 5
      %v1768 = vsel %vm754, %v1766, %v1767
      %v1769 = vrot.slane %v1729, 5
      %v1770 = vrot.slane %v1769, 4
      %v1771 = vrot.slane %v1730, 5
      %v1772 = vsel %vm754, %v1770, %v1771
      %v1773 = vrot.slane %v1731, 5
      %v1774 = vrot.slane %v1773, 4
      %v1775 = vrot.slane %v1732, 5
      %v1776 = vsel %vm754, %v1774, %v1775
      %v1777 = vrot.slane %v1733, 5
      %v1778 = vrot.slane %v1777, 4
      %v1779 = vrot.slane %v1734, 5
      %v1780 = vsel %vm754, %v1778, %v1779
      %v1781 = vrot.slane %v1735, 5
      %v1782 = vrot.slane %v1781, 4
      %v1783 = vrot.slane %v1736, 5
      %v1784 = vsel %vm754, %v1782, %v1783
      %v1785 = vunpack.c.l.b16 %v1756
      %v1786 = vunpack.c.l.b16 %v1760
      %v1787 = vunpack.c.l.b16 %v1764
      %v1788 = vunpack.c.l.b16 %v1768
      %v1789 = vunpack.c.l.b16 %v1772
      %v1790 = vunpack.c.l.b16 %v1776
      %v1791 = vunpack.c.l.b16 %v1780
      %v1792 = vunpack.c.l.b16 %v1784
      %v1793 = vpack.c.b16 %v1786, %v1785
      %v1794 = vpack.c.b16 %v1788, %v1787
      %v1795 = vpack.c.b16 %v1790, %v1789
      %v1796 = vpack.c.b16 %v1792, %v1791
      %1797 = vrot.lane.b32.xlu0 %v1793, 112
      %v1798 = vpop.permute.xlu0 %1797
      %1799 = vrot.lane.b32.xlu0 %v1794, 112
      %v1800 = vpop.permute.xlu0 %1799
      %1801 = vrot.lane.b32.xlu0 %v1795, 112
      %v1802 = vpop.permute.xlu0 %1801
      %1803 = vrot.lane.b32.xlu0 %v1796, 112
      %v1804 = vpop.permute.xlu0 %1803
      %vm1809 = vcmask 982912
      %1810 = vst.msk [vmem:[#allocation2] sm:$0xff] %vm1809, %v1798
      %1811 = vst.msk [vmem:[#allocation2 + $0x10] sm:$0xff] %vm1809, %v1800
      %1812 = vst.msk [vmem:[#allocation2 + $0x20] sm:$0xff] %vm1809, %v1802
      %1813 = vst.msk [vmem:[#allocation2 + $0x30] sm:$0xff] %vm1809, %v1804
      %s1814 = scalar_lea.vmem %s308, 168
      %v1815 = vld [vmem:[%s1814] sm:$0xf]
      %v1816 = vld [vmem:[%s1814 + $0x8] sm:$0xf]
      %v1817 = vld [vmem:[%s1814 + $0x10] sm:$0xf]
      %v1818 = vld [vmem:[%s1814 + $0x18] sm:$0xf]
      %v1819 = vld [vmem:[%s1814 + $0x20] sm:$0xf]
      %v1820 = vld [vmem:[%s1814 + $0x28] sm:$0xf]
      %v1821 = vld [vmem:[%s1814 + $0x30] sm:$0xf]
      %v1822 = vld [vmem:[%s1814 + $0x38] sm:$0xf]
      %v1831 = vunpack.c.l.b16 %v1815
      %v1832 = vunpack.c.l.b16 %v1816
      %v1833 = vunpack.c.l.b16 %v1817
      %v1834 = vunpack.c.l.b16 %v1818
      %v1835 = vunpack.c.l.b16 %v1819
      %v1836 = vunpack.c.l.b16 %v1820
      %v1837 = vunpack.c.l.b16 %v1821
      %v1838 = vunpack.c.l.b16 %v1822
      %v1839 = vpack.c.b16 %v1832, %v1831
      %v1840 = vpack.c.b16 %v1834, %v1833
      %v1841 = vpack.c.b16 %v1836, %v1835
      %v1842 = vpack.c.b16 %v1838, %v1837
      %1843 = vrot.lane.b32.xlu0 %v1839, 120
      %v1844 = vpop.permute.xlu0 %1843
      %1845 = vrot.lane.b32.xlu0 %v1840, 120
      %v1846 = vpop.permute.xlu0 %1845
      %1847 = vrot.lane.b32.xlu0 %v1841, 120
      %v1848 = vpop.permute.xlu0 %1847
      %1849 = vrot.lane.b32.xlu0 %v1842, 120
      %v1850 = vpop.permute.xlu0 %1849
      %vm1855 = vcmask 1048512
      %1856 = vst.msk [vmem:[#allocation2] sm:$0xff] %vm1855, %v1844
      %1857 = vst.msk [vmem:[#allocation2 + $0x10] sm:$0xff] %vm1855, %v1846
      %1858 = vst.msk [vmem:[#allocation2 + $0x20] sm:$0xff] %vm1855, %v1848
      %1859 = vst.msk [vmem:[#allocation2 + $0x30] sm:$0xff] %vm1855, %v1850
      %s1860 = scalar_lea.vmem %s308, 248
      %v1861 = vld [vmem:[%s1860] sm:$0xf]
      %v1862 = vld [vmem:[%s1860 + $0x8] sm:$0xf]
      %v1863 = vld [vmem:[%s1860 + $0x10] sm:$0xf]
      %v1864 = vld [vmem:[%s1860 + $0x18] sm:$0xf]
      %v1865 = vld [vmem:[%s1860 + $0x20] sm:$0xf]
      %v1866 = vld [vmem:[%s1860 + $0x28] sm:$0xf]
      %v1867 = vld [vmem:[%s1860 + $0x30] sm:$0xf]
      %v1868 = vld [vmem:[%s1860 + $0x38] sm:$0xf]
      %v1877 = vunpack.c.l.b16 %v1861
      %v1878 = vunpack.c.l.b16 %v1862
      %v1879 = vunpack.c.l.b16 %v1863
      %v1880 = vunpack.c.l.b16 %v1864
      %v1881 = vunpack.c.l.b16 %v1865
      %v1882 = vunpack.c.l.b16 %v1866
      %v1883 = vunpack.c.l.b16 %v1867
      %v1884 = vunpack.c.l.b16 %v1868
      %v1885 = vpack.c.b16 %v1878, %v1877
      %v1886 = vpack.c.b16 %v1880, %v1879
      %v1887 = vpack.c.b16 %v1882, %v1881
      %v1888 = vpack.c.b16 %v1884, %v1883
      %1893 = vst.msk [vmem:[#allocation2 + $0x8] sm:$0xff] %vm352, %v1885
      %1894 = vst.msk [vmem:[#allocation2 + $0x18] sm:$0xff] %vm352, %v1886
      %1895 = vst.msk [vmem:[#allocation2 + $0x28] sm:$0xff] %vm352, %v1887
      %1896 = vst.msk [vmem:[#allocation2 + $0x38] sm:$0xff] %vm352, %v1888
      %v1897 = vld [vmem:[%s1814] sm:$0xf]
      %v1898 = vld [vmem:[%s1814 + $0x4] sm:$0x1]
      %v1899 = vld [vmem:[%s1814 + $0x8] sm:$0xf]
      %v1900 = vld [vmem:[%s1814 + $0xc] sm:$0x1]
      %v1901 = vld [vmem:[%s1814 + $0x10] sm:$0xf]
      %v1902 = vld [vmem:[%s1814 + $0x14] sm:$0x1]
      %v1903 = vld [vmem:[%s1814 + $0x18] sm:$0xf]
      %v1904 = vld [vmem:[%s1814 + $0x1c] sm:$0x1]
      %v1905 = vld [vmem:[%s1814 + $0x20] sm:$0xf]
      %v1906 = vld [vmem:[%s1814 + $0x24] sm:$0x1]
      %v1907 = vld [vmem:[%s1814 + $0x28] sm:$0xf]
      %v1908 = vld [vmem:[%s1814 + $0x2c] sm:$0x1]
      %v1909 = vld [vmem:[%s1814 + $0x30] sm:$0xf]
      %v1910 = vld [vmem:[%s1814 + $0x34] sm:$0x1]
      %v1911 = vld [vmem:[%s1814 + $0x38] sm:$0xf]
      %v1912 = vld [vmem:[%s1814 + $0x3c] sm:$0x1]
      %v1914 = vshrl.u32 %v1897, 16
      %v1916 = vrot.slane %v1914, 4
      %v1917 = vshll.u32 %v1897, 16
      %v1919 = vrot.slane %v1917, 5
      %v1920 = vor.u32 %v1916, %v1919
      %v1921 = vrot.slane %v1920, 4
      %v1923 = vshll.u32 %v1898, 16
      %v1925 = vrot.slane %v1923, 5
      %v1926 = vsel %vm421, %v1921, %v1925
      %v1928 = vshrl.u32 %v1899, 16
      %v1930 = vrot.slane %v1928, 4
      %v1931 = vshll.u32 %v1899, 16
      %v1933 = vrot.slane %v1931, 5
      %v1934 = vor.u32 %v1930, %v1933
      %v1935 = vrot.slane %v1934, 4
      %v1937 = vshll.u32 %v1900, 16
      %v1939 = vrot.slane %v1937, 5
      %v1940 = vsel %vm421, %v1935, %v1939
      %v1942 = vshrl.u32 %v1901, 16
      %v1944 = vrot.slane %v1942, 4
      %v1945 = vshll.u32 %v1901, 16
      %v1947 = vrot.slane %v1945, 5
      %v1948 = vor.u32 %v1944, %v1947
      %v1949 = vrot.slane %v1948, 4
      %v1951 = vshll.u32 %v1902, 16
      %v1953 = vrot.slane %v1951, 5
      %v1954 = vsel %vm421, %v1949, %v1953
      %v1956 = vshrl.u32 %v1903, 16
      %v1958 = vrot.slane %v1956, 4
      %v1959 = vshll.u32 %v1903, 16
      %v1961 = vrot.slane %v1959, 5
      %v1962 = vor.u32 %v1958, %v1961
      %v1963 = vrot.slane %v1962, 4
      %v1965 = vshll.u32 %v1904, 16
      %v1967 = vrot.slane %v1965, 5
      %v1968 = vsel %vm421, %v1963, %v1967
      %v1970 = vshrl.u32 %v1905, 16
      %v1972 = vrot.slane %v1970, 4
      %v1973 = vshll.u32 %v1905, 16
      %v1975 = vrot.slane %v1973, 5
      %v1976 = vor.u32 %v1972, %v1975
      %v1977 = vrot.slane %v1976, 4
      %v1979 = vshll.u32 %v1906, 16
      %v1981 = vrot.slane %v1979, 5
      %v1982 = vsel %vm421, %v1977, %v1981
      %v1984 = vshrl.u32 %v1907, 16
      %v1986 = vrot.slane %v1984, 4
      %v1987 = vshll.u32 %v1907, 16
      %v1989 = vrot.slane %v1987, 5
      %v1990 = vor.u32 %v1986, %v1989
      %v1991 = vrot.slane %v1990, 4
      %v1993 = vshll.u32 %v1908, 16
      %v1995 = vrot.slane %v1993, 5
      %v1996 = vsel %vm421, %v1991, %v1995
      %v1998 = vshrl.u32 %v1909, 16
      %v2000 = vrot.slane %v1998, 4
      %v2001 = vshll.u32 %v1909, 16
      %v2003 = vrot.slane %v2001, 5
      %v2004 = vor.u32 %v2000, %v2003
      %v2005 = vrot.slane %v2004, 4
      %v2007 = vshll.u32 %v1910, 16
      %v2009 = vrot.slane %v2007, 5
      %v2010 = vsel %vm421, %v2005, %v2009
      %v2012 = vshrl.u32 %v1911, 16
      %v2014 = vrot.slane %v2012, 4
      %v2015 = vshll.u32 %v1911, 16
      %v2017 = vrot.slane %v2015, 5
      %v2018 = vor.u32 %v2014, %v2017
      %v2019 = vrot.slane %v2018, 4
      %v2021 = vshll.u32 %v1912, 16
      %v2023 = vrot.slane %v2021, 5
      %v2024 = vsel %vm421, %v2019, %v2023
      %v2025 = vunpack.c.l.b16 %v1926
      %v2026 = vunpack.c.l.b16 %v1940
      %v2027 = vunpack.c.l.b16 %v1954
      %v2028 = vunpack.c.l.b16 %v1968
      %v2029 = vunpack.c.l.b16 %v1982
      %v2030 = vunpack.c.l.b16 %v1996
      %v2031 = vunpack.c.l.b16 %v2010
      %v2032 = vunpack.c.l.b16 %v2024
      %v2033 = vpack.c.b16 %v2026, %v2025
      %v2034 = vpack.c.b16 %v2028, %v2027
      %v2035 = vpack.c.b16 %v2030, %v2029
      %v2036 = vpack.c.b16 %v2032, %v2031
      %2037 = vrot.lane.b32.xlu0 %v2033, 8
      %v2038 = vpop.permute.xlu0 %2037
      %2039 = vrot.lane.b32.xlu0 %v2034, 8
      %v2040 = vpop.permute.xlu0 %2039
      %2041 = vrot.lane.b32.xlu0 %v2035, 8
      %v2042 = vpop.permute.xlu0 %2041
      %2043 = vrot.lane.b32.xlu0 %v2036, 8
      %v2044 = vpop.permute.xlu0 %2043
      %2049 = vst.msk [vmem:[#allocation2 + $0x8] sm:$0xff] %vm398, %v2038
      %2050 = vst.msk [vmem:[#allocation2 + $0x18] sm:$0xff] %vm398, %v2040
      %2051 = vst.msk [vmem:[#allocation2 + $0x28] sm:$0xff] %vm398, %v2042
      %2052 = vst.msk [vmem:[#allocation2 + $0x38] sm:$0xff] %vm398, %v2044
      %v2053 = vld [vmem:[%s1860] sm:$0xf]
      %v2054 = vld [vmem:[%s1860 + $0x4] sm:$0x1]
      %v2055 = vld [vmem:[%s1860 + $0x8] sm:$0xf]
      %v2056 = vld [vmem:[%s1860 + $0xc] sm:$0x1]
      %v2057 = vld [vmem:[%s1860 + $0x10] sm:$0xf]
      %v2058 = vld [vmem:[%s1860 + $0x14] sm:$0x1]
      %v2059 = vld [vmem:[%s1860 + $0x18] sm:$0xf]
      %v2060 = vld [vmem:[%s1860 + $0x1c] sm:$0x1]
      %v2061 = vld [vmem:[%s1860 + $0x20] sm:$0xf]
      %v2062 = vld [vmem:[%s1860 + $0x24] sm:$0x1]
      %v2063 = vld [vmem:[%s1860 + $0x28] sm:$0xf]
      %v2064 = vld [vmem:[%s1860 + $0x2c] sm:$0x1]
      %v2065 = vld [vmem:[%s1860 + $0x30] sm:$0xf]
      %v2066 = vld [vmem:[%s1860 + $0x34] sm:$0x1]
      %v2067 = vld [vmem:[%s1860 + $0x38] sm:$0xf]
      %v2068 = vld [vmem:[%s1860 + $0x3c] sm:$0x1]
      %v2070 = vshrl.u32 %v2053, 16
      %v2072 = vrot.slane %v2070, 4
      %v2073 = vshll.u32 %v2053, 16
      %v2075 = vrot.slane %v2073, 5
      %v2076 = vor.u32 %v2072, %v2075
      %v2077 = vrot.slane %v2076, 4
      %v2079 = vshll.u32 %v2054, 16
      %v2081 = vrot.slane %v2079, 5
      %v2082 = vsel %vm421, %v2077, %v2081
      %v2084 = vshrl.u32 %v2055, 16
      %v2086 = vrot.slane %v2084, 4
      %v2087 = vshll.u32 %v2055, 16
      %v2089 = vrot.slane %v2087, 5
      %v2090 = vor.u32 %v2086, %v2089
      %v2091 = vrot.slane %v2090, 4
      %v2093 = vshll.u32 %v2056, 16
      %v2095 = vrot.slane %v2093, 5
      %v2096 = vsel %vm421, %v2091, %v2095
      %v2098 = vshrl.u32 %v2057, 16
      %v2100 = vrot.slane %v2098, 4
      %v2101 = vshll.u32 %v2057, 16
      %v2103 = vrot.slane %v2101, 5
      %v2104 = vor.u32 %v2100, %v2103
      %v2105 = vrot.slane %v2104, 4
      %v2107 = vshll.u32 %v2058, 16
      %v2109 = vrot.slane %v2107, 5
      %v2110 = vsel %vm421, %v2105, %v2109
      %v2112 = vshrl.u32 %v2059, 16
      %v2114 = vrot.slane %v2112, 4
      %v2115 = vshll.u32 %v2059, 16
      %v2117 = vrot.slane %v2115, 5
      %v2118 = vor.u32 %v2114, %v2117
      %v2119 = vrot.slane %v2118, 4
      %v2121 = vshll.u32 %v2060, 16
      %v2123 = vrot.slane %v2121, 5
      %v2124 = vsel %vm421, %v2119, %v2123
      %v2126 = vshrl.u32 %v2061, 16
      %v2128 = vrot.slane %v2126, 4
      %v2129 = vshll.u32 %v2061, 16
      %v2131 = vrot.slane %v2129, 5
      %v2132 = vor.u32 %v2128, %v2131
      %v2133 = vrot.slane %v2132, 4
      %v2135 = vshll.u32 %v2062, 16
      %v2137 = vrot.slane %v2135, 5
      %v2138 = vsel %vm421, %v2133, %v2137
      %v2140 = vshrl.u32 %v2063, 16
      %v2142 = vrot.slane %v2140, 4
      %v2143 = vshll.u32 %v2063, 16
      %v2145 = vrot.slane %v2143, 5
      %v2146 = vor.u32 %v2142, %v2145
      %v2147 = vrot.slane %v2146, 4
      %v2149 = vshll.u32 %v2064, 16
      %v2151 = vrot.slane %v2149, 5
      %v2152 = vsel %vm421, %v2147, %v2151
      %v2154 = vshrl.u32 %v2065, 16
      %v2156 = vrot.slane %v2154, 4
      %v2157 = vshll.u32 %v2065, 16
      %v2159 = vrot.slane %v2157, 5
      %v2160 = vor.u32 %v2156, %v2159
      %v2161 = vrot.slane %v2160, 4
      %v2163 = vshll.u32 %v2066, 16
      %v2165 = vrot.slane %v2163, 5
      %v2166 = vsel %vm421, %v2161, %v2165
      %v2168 = vshrl.u32 %v2067, 16
      %v2170 = vrot.slane %v2168, 4
      %v2171 = vshll.u32 %v2067, 16
      %v2173 = vrot.slane %v2171, 5
      %v2174 = vor.u32 %v2170, %v2173
      %v2175 = vrot.slane %v2174, 4
      %v2177 = vshll.u32 %v2068, 16
      %v2179 = vrot.slane %v2177, 5
      %v2180 = vsel %vm421, %v2175, %v2179
      %v2181 = vunpack.c.l.b16 %v2082
      %v2182 = vunpack.c.l.b16 %v2096
      %v2183 = vunpack.c.l.b16 %v2110
      %v2184 = vunpack.c.l.b16 %v2124
      %v2185 = vunpack.c.l.b16 %v2138
      %v2186 = vunpack.c.l.b16 %v2152
      %v2187 = vunpack.c.l.b16 %v2166
      %v2188 = vunpack.c.l.b16 %v2180
      %v2189 = vpack.c.b16 %v2182, %v2181
      %v2190 = vpack.c.b16 %v2184, %v2183
      %v2191 = vpack.c.b16 %v2186, %v2185
      %v2192 = vpack.c.b16 %v2188, %v2187
      %2193 = vrot.lane.b32.xlu0 %v2189, 16
      %v2194 = vpop.permute.xlu0 %2193
      %2195 = vrot.lane.b32.xlu0 %v2190, 16
      %v2196 = vpop.permute.xlu0 %2195
      %2197 = vrot.lane.b32.xlu0 %v2191, 16
      %v2198 = vpop.permute.xlu0 %2197
      %2199 = vrot.lane.b32.xlu0 %v2192, 16
      %v2200 = vpop.permute.xlu0 %2199
      %2205 = vst.msk [vmem:[#allocation2 + $0x8] sm:$0xff] %vm558, %v2194
      %2206 = vst.msk [vmem:[#allocation2 + $0x18] sm:$0xff] %vm558, %v2196
      %2207 = vst.msk [vmem:[#allocation2 + $0x28] sm:$0xff] %vm558, %v2198
      %2208 = vst.msk [vmem:[#allocation2 + $0x38] sm:$0xff] %vm558, %v2200
      %v2209 = vld [vmem:[%s1814] sm:$0xe]
      %v2210 = vld [vmem:[%s1814 + $0x4] sm:$0x1]
      %v2211 = vld [vmem:[%s1814 + $0x8] sm:$0xe]
      %v2212 = vld [vmem:[%s1814 + $0xc] sm:$0x1]
      %v2213 = vld [vmem:[%s1814 + $0x10] sm:$0xe]
      %v2214 = vld [vmem:[%s1814 + $0x14] sm:$0x1]
      %v2215 = vld [vmem:[%s1814 + $0x18] sm:$0xe]
      %v2216 = vld [vmem:[%s1814 + $0x1c] sm:$0x1]
      %v2217 = vld [vmem:[%s1814 + $0x20] sm:$0xe]
      %v2218 = vld [vmem:[%s1814 + $0x24] sm:$0x1]
      %v2219 = vld [vmem:[%s1814 + $0x28] sm:$0xe]
      %v2220 = vld [vmem:[%s1814 + $0x2c] sm:$0x1]
      %v2221 = vld [vmem:[%s1814 + $0x30] sm:$0xe]
      %v2222 = vld [vmem:[%s1814 + $0x34] sm:$0x1]
      %v2223 = vld [vmem:[%s1814 + $0x38] sm:$0xe]
      %v2224 = vld [vmem:[%s1814 + $0x3c] sm:$0x1]
      %v2241 = vrot.slane %v2209, 5
      %v2242 = vrot.slane %v2241, 4
      %v2243 = vrot.slane %v2210, 5
      %v2244 = vsel %vm754, %v2242, %v2243
      %v2245 = vrot.slane %v2211, 5
      %v2246 = vrot.slane %v2245, 4
      %v2247 = vrot.slane %v2212, 5
      %v2248 = vsel %vm754, %v2246, %v2247
      %v2249 = vrot.slane %v2213, 5
      %v2250 = vrot.slane %v2249, 4
      %v2251 = vrot.slane %v2214, 5
      %v2252 = vsel %vm754, %v2250, %v2251
      %v2253 = vrot.slane %v2215, 5
      %v2254 = vrot.slane %v2253, 4
      %v2255 = vrot.slane %v2216, 5
      %v2256 = vsel %vm754, %v2254, %v2255
      %v2257 = vrot.slane %v2217, 5
      %v2258 = vrot.slane %v2257, 4
      %v2259 = vrot.slane %v2218, 5
      %v2260 = vsel %vm754, %v2258, %v2259
      %v2261 = vrot.slane %v2219, 5
      %v2262 = vrot.slane %v2261, 4
      %v2263 = vrot.slane %v2220, 5
      %v2264 = vsel %vm754, %v2262, %v2263
      %v2265 = vrot.slane %v2221, 5
      %v2266 = vrot.slane %v2265, 4
      %v2267 = vrot.slane %v2222, 5
      %v2268 = vsel %vm754, %v2266, %v2267
      %v2269 = vrot.slane %v2223, 5
      %v2270 = vrot.slane %v2269, 4
      %v2271 = vrot.slane %v2224, 5
      %v2272 = vsel %vm754, %v2270, %v2271
      %v2273 = vunpack.c.l.b16 %v2244
      %v2274 = vunpack.c.l.b16 %v2248
      %v2275 = vunpack.c.l.b16 %v2252
      %v2276 = vunpack.c.l.b16 %v2256
      %v2277 = vunpack.c.l.b16 %v2260
      %v2278 = vunpack.c.l.b16 %v2264
      %v2279 = vunpack.c.l.b16 %v2268
      %v2280 = vunpack.c.l.b16 %v2272
      %v2281 = vpack.c.b16 %v2274, %v2273
      %v2282 = vpack.c.b16 %v2276, %v2275
      %v2283 = vpack.c.b16 %v2278, %v2277
      %v2284 = vpack.c.b16 %v2280, %v2279
      %2285 = vrot.lane.b32.xlu0 %v2281, 24
      %v2286 = vpop.permute.xlu0 %2285
      %2287 = vrot.lane.b32.xlu0 %v2282, 24
      %v2288 = vpop.permute.xlu0 %2287
      %2289 = vrot.lane.b32.xlu0 %v2283, 24
      %v2290 = vpop.permute.xlu0 %2289
      %2291 = vrot.lane.b32.xlu0 %v2284, 24
      %v2292 = vpop.permute.xlu0 %2291
      %2297 = vst.msk [vmem:[#allocation2 + $0x8] sm:$0xff] %vm715, %v2286
      %2298 = vst.msk [vmem:[#allocation2 + $0x18] sm:$0xff] %vm715, %v2288
      %2299 = vst.msk [vmem:[#allocation2 + $0x28] sm:$0xff] %vm715, %v2290
      %2300 = vst.msk [vmem:[#allocation2 + $0x38] sm:$0xff] %vm715, %v2292
      %s2301 = scalar_lea.vmem %s308, 16
      %v2302 = vld [vmem:[%s2301] sm:$0xf]
      %v2303 = vld [vmem:[%s2301 + $0x8] sm:$0xf]
      %v2304 = vld [vmem:[%s2301 + $0x10] sm:$0xf]
      %v2305 = vld [vmem:[%s2301 + $0x18] sm:$0xf]
      %v2306 = vld [vmem:[%s2301 + $0x20] sm:$0xf]
      %v2307 = vld [vmem:[%s2301 + $0x28] sm:$0xf]
      %v2308 = vld [vmem:[%s2301 + $0x30] sm:$0xf]
      %v2309 = vld [vmem:[%s2301 + $0x38] sm:$0xf]
      %v2318 = vunpack.c.l.b16 %v2302
      %v2319 = vunpack.c.l.b16 %v2303
      %v2320 = vunpack.c.l.b16 %v2304
      %v2321 = vunpack.c.l.b16 %v2305
      %v2322 = vunpack.c.l.b16 %v2306
      %v2323 = vunpack.c.l.b16 %v2307
      %v2324 = vunpack.c.l.b16 %v2308
      %v2325 = vunpack.c.l.b16 %v2309
      %v2326 = vpack.c.b16 %v2319, %v2318
      %v2327 = vpack.c.b16 %v2321, %v2320
      %v2328 = vpack.c.b16 %v2323, %v2322
      %v2329 = vpack.c.b16 %v2325, %v2324
      %2330 = vrot.lane.b32.xlu0 %v2326, 32
      %v2331 = vpop.permute.xlu0 %2330
      %2332 = vrot.lane.b32.xlu0 %v2327, 32
      %v2333 = vpop.permute.xlu0 %2332
      %2334 = vrot.lane.b32.xlu0 %v2328, 32
      %v2335 = vpop.permute.xlu0 %2334
      %2336 = vrot.lane.b32.xlu0 %v2329, 32
      %v2337 = vpop.permute.xlu0 %2336
      %2342 = vst.msk [vmem:[#allocation2 + $0x8] sm:$0xff] %vm811, %v2331
      %2343 = vst.msk [vmem:[#allocation2 + $0x18] sm:$0xff] %vm811, %v2333
      %2344 = vst.msk [vmem:[#allocation2 + $0x28] sm:$0xff] %vm811, %v2335
      %2345 = vst.msk [vmem:[#allocation2 + $0x38] sm:$0xff] %vm811, %v2337
      %s2346 = scalar_lea.vmem %s308, 96
      %v2347 = vld [vmem:[%s2346] sm:$0xf]
      %v2348 = vld [vmem:[%s2346 + $0x8] sm:$0xf]
      %v2349 = vld [vmem:[%s2346 + $0x10] sm:$0xf]
      %v2350 = vld [vmem:[%s2346 + $0x18] sm:$0xf]
      %v2351 = vld [vmem:[%s2346 + $0x20] sm:$0xf]
      %v2352 = vld [vmem:[%s2346 + $0x28] sm:$0xf]
      %v2353 = vld [vmem:[%s2346 + $0x30] sm:$0xf]
      %v2354 = vld [vmem:[%s2346 + $0x38] sm:$0xf]
      %v2363 = vunpack.c.l.b16 %v2347
      %v2364 = vunpack.c.l.b16 %v2348
      %v2365 = vunpack.c.l.b16 %v2349
      %v2366 = vunpack.c.l.b16 %v2350
      %v2367 = vunpack.c.l.b16 %v2351
      %v2368 = vunpack.c.l.b16 %v2352
      %v2369 = vunpack.c.l.b16 %v2353
      %v2370 = vunpack.c.l.b16 %v2354
      %v2371 = vpack.c.b16 %v2364, %v2363
      %v2372 = vpack.c.b16 %v2366, %v2365
      %v2373 = vpack.c.b16 %v2368, %v2367
      %v2374 = vpack.c.b16 %v2370, %v2369
      %2375 = vrot.lane.b32.xlu0 %v2371, 40
      %v2376 = vpop.permute.xlu0 %2375
      %2377 = vrot.lane.b32.xlu0 %v2372, 40
      %v2378 = vpop.permute.xlu0 %2377
      %2379 = vrot.lane.b32.xlu0 %v2373, 40
      %v2380 = vpop.permute.xlu0 %2379
      %2381 = vrot.lane.b32.xlu0 %v2374, 40
      %v2382 = vpop.permute.xlu0 %2381
      %2387 = vst.msk [vmem:[#allocation2 + $0x8] sm:$0xff] %vm857, %v2376
      %2388 = vst.msk [vmem:[#allocation2 + $0x18] sm:$0xff] %vm857, %v2378
      %2389 = vst.msk [vmem:[#allocation2 + $0x28] sm:$0xff] %vm857, %v2380
      %2390 = vst.msk [vmem:[#allocation2 + $0x38] sm:$0xff] %vm857, %v2382
      %v2391 = vld [vmem:[%s2301] sm:$0xf]
      %v2392 = vld [vmem:[%s2301 + $0x4] sm:$0x1]
      %v2393 = vld [vmem:[%s2301 + $0x8] sm:$0xf]
      %v2394 = vld [vmem:[%s2301 + $0xc] sm:$0x1]
      %v2395 = vld [vmem:[%s2301 + $0x10] sm:$0xf]
      %v2396 = vld [vmem:[%s2301 + $0x14] sm:$0x1]
      %v2397 = vld [vmem:[%s2301 + $0x18] sm:$0xf]
      %v2398 = vld [vmem:[%s2301 + $0x1c] sm:$0x1]
      %v2399 = vld [vmem:[%s2301 + $0x20] sm:$0xf]
      %v2400 = vld [vmem:[%s2301 + $0x24] sm:$0x1]
      %v2401 = vld [vmem:[%s2301 + $0x28] sm:$0xf]
      %v2402 = vld [vmem:[%s2301 + $0x2c] sm:$0x1]
      %v2403 = vld [vmem:[%s2301 + $0x30] sm:$0xf]
      %v2404 = vld [vmem:[%s2301 + $0x34] sm:$0x1]
      %v2405 = vld [vmem:[%s2301 + $0x38] sm:$0xf]
      %v2406 = vld [vmem:[%s2301 + $0x3c] sm:$0x1]
      %v2408 = vshrl.u32 %v2391, 16
      %v2410 = vrot.slane %v2408, 4
      %v2411 = vshll.u32 %v2391, 16
      %v2413 = vrot.slane %v2411, 5
      %v2414 = vor.u32 %v2410, %v2413
      %v2415 = vrot.slane %v2414, 4
      %v2417 = vshll.u32 %v2392, 16
      %v2419 = vrot.slane %v2417, 5
      %v2420 = vsel %vm421, %v2415, %v2419
      %v2422 = vshrl.u32 %v2393, 16
      %v2424 = vrot.slane %v2422, 4
      %v2425 = vshll.u32 %v2393, 16
      %v2427 = vrot.slane %v2425, 5
      %v2428 = vor.u32 %v2424, %v2427
      %v2429 = vrot.slane %v2428, 4
      %v2431 = vshll.u32 %v2394, 16
      %v2433 = vrot.slane %v2431, 5
      %v2434 = vsel %vm421, %v2429, %v2433
      %v2436 = vshrl.u32 %v2395, 16
      %v2438 = vrot.slane %v2436, 4
      %v2439 = vshll.u32 %v2395, 16
      %v2441 = vrot.slane %v2439, 5
      %v2442 = vor.u32 %v2438, %v2441
      %v2443 = vrot.slane %v2442, 4
      %v2445 = vshll.u32 %v2396, 16
      %v2447 = vrot.slane %v2445, 5
      %v2448 = vsel %vm421, %v2443, %v2447
      %v2450 = vshrl.u32 %v2397, 16
      %v2452 = vrot.slane %v2450, 4
      %v2453 = vshll.u32 %v2397, 16
      %v2455 = vrot.slane %v2453, 5
      %v2456 = vor.u32 %v2452, %v2455
      %v2457 = vrot.slane %v2456, 4
      %v2459 = vshll.u32 %v2398, 16
      %v2461 = vrot.slane %v2459, 5
      %v2462 = vsel %vm421, %v2457, %v2461
      %v2464 = vshrl.u32 %v2399, 16
      %v2466 = vrot.slane %v2464, 4
      %v2467 = vshll.u32 %v2399, 16
      %v2469 = vrot.slane %v2467, 5
      %v2470 = vor.u32 %v2466, %v2469
      %v2471 = vrot.slane %v2470, 4
      %v2473 = vshll.u32 %v2400, 16
      %v2475 = vrot.slane %v2473, 5
      %v2476 = vsel %vm421, %v2471, %v2475
      %v2478 = vshrl.u32 %v2401, 16
      %v2480 = vrot.slane %v2478, 4
      %v2481 = vshll.u32 %v2401, 16
      %v2483 = vrot.slane %v2481, 5
      %v2484 = vor.u32 %v2480, %v2483
      %v2485 = vrot.slane %v2484, 4
      %v2487 = vshll.u32 %v2402, 16
      %v2489 = vrot.slane %v2487, 5
      %v2490 = vsel %vm421, %v2485, %v2489
      %v2492 = vshrl.u32 %v2403, 16
      %v2494 = vrot.slane %v2492, 4
      %v2495 = vshll.u32 %v2403, 16
      %v2497 = vrot.slane %v2495, 5
      %v2498 = vor.u32 %v2494, %v2497
      %v2499 = vrot.slane %v2498, 4
      %v2501 = vshll.u32 %v2404, 16
      %v2503 = vrot.slane %v2501, 5
      %v2504 = vsel %vm421, %v2499, %v2503
      %v2506 = vshrl.u32 %v2405, 16
      %v2508 = vrot.slane %v2506, 4
      %v2509 = vshll.u32 %v2405, 16
      %v2511 = vrot.slane %v2509, 5
      %v2512 = vor.u32 %v2508, %v2511
      %v2513 = vrot.slane %v2512, 4
      %v2515 = vshll.u32 %v2406, 16
      %v2517 = vrot.slane %v2515, 5
      %v2518 = vsel %vm421, %v2513, %v2517
      %v2519 = vunpack.c.l.b16 %v2420
      %v2520 = vunpack.c.l.b16 %v2434
      %v2521 = vunpack.c.l.b16 %v2448
      %v2522 = vunpack.c.l.b16 %v2462
      %v2523 = vunpack.c.l.b16 %v2476
      %v2524 = vunpack.c.l.b16 %v2490
      %v2525 = vunpack.c.l.b16 %v2504
      %v2526 = vunpack.c.l.b16 %v2518
      %v2527 = vpack.c.b16 %v2520, %v2519
      %v2528 = vpack.c.b16 %v2522, %v2521
      %v2529 = vpack.c.b16 %v2524, %v2523
      %v2530 = vpack.c.b16 %v2526, %v2525
      %2531 = vrot.lane.b32.xlu0 %v2527, 48
      %v2532 = vpop.permute.xlu0 %2531
      %2533 = vrot.lane.b32.xlu0 %v2528, 48
      %v2534 = vpop.permute.xlu0 %2533
      %2535 = vrot.lane.b32.xlu0 %v2529, 48
      %v2536 = vpop.permute.xlu0 %2535
      %2537 = vrot.lane.b32.xlu0 %v2530, 48
      %v2538 = vpop.permute.xlu0 %2537
      %2543 = vst.msk [vmem:[#allocation2 + $0x8] sm:$0xff] %vm903, %v2532
      %2544 = vst.msk [vmem:[#allocation2 + $0x18] sm:$0xff] %vm903, %v2534
      %2545 = vst.msk [vmem:[#allocation2 + $0x28] sm:$0xff] %vm903, %v2536
      %2546 = vst.msk [vmem:[#allocation2 + $0x38] sm:$0xff] %vm903, %v2538
      %v2547 = vld [vmem:[%s2346] sm:$0xf]
      %v2548 = vld [vmem:[%s2346 + $0x4] sm:$0x1]
      %v2549 = vld [vmem:[%s2346 + $0x8] sm:$0xf]
      %v2550 = vld [vmem:[%s2346 + $0xc] sm:$0x1]
      %v2551 = vld [vmem:[%s2346 + $0x10] sm:$0xf]
      %v2552 = vld [vmem:[%s2346 + $0x14] sm:$0x1]
      %v2553 = vld [vmem:[%s2346 + $0x18] sm:$0xf]
      %v2554 = vld [vmem:[%s2346 + $0x1c] sm:$0x1]
      %v2555 = vld [vmem:[%s2346 + $0x20] sm:$0xf]
      %v2556 = vld [vmem:[%s2346 + $0x24] sm:$0x1]
      %v2557 = vld [vmem:[%s2346 + $0x28] sm:$0xf]
      %v2558 = vld [vmem:[%s2346 + $0x2c] sm:$0x1]
      %v2559 = vld [vmem:[%s2346 + $0x30] sm:$0xf]
      %v2560 = vld [vmem:[%s2346 + $0x34] sm:$0x1]
      %v2561 = vld [vmem:[%s2346 + $0x38] sm:$0xf]
      %v2562 = vld [vmem:[%s2346 + $0x3c] sm:$0x1]
      %v2564 = vshrl.u32 %v2547, 16
      %v2566 = vrot.slane %v2564, 4
      %v2567 = vshll.u32 %v2547, 16
      %v2569 = vrot.slane %v2567, 5
      %v2570 = vor.u32 %v2566, %v2569
      %v2571 = vrot.slane %v2570, 4
      %v2573 = vshll.u32 %v2548, 16
      %v2575 = vrot.slane %v2573, 5
      %v2576 = vsel %vm421, %v2571, %v2575
      %v2578 = vshrl.u32 %v2549, 16
      %v2580 = vrot.slane %v2578, 4
      %v2581 = vshll.u32 %v2549, 16
      %v2583 = vrot.slane %v2581, 5
      %v2584 = vor.u32 %v2580, %v2583
      %v2585 = vrot.slane %v2584, 4
      %v2587 = vshll.u32 %v2550, 16
      %v2589 = vrot.slane %v2587, 5
      %v2590 = vsel %vm421, %v2585, %v2589
      %v2592 = vshrl.u32 %v2551, 16
      %v2594 = vrot.slane %v2592, 4
      %v2595 = vshll.u32 %v2551, 16
      %v2597 = vrot.slane %v2595, 5
      %v2598 = vor.u32 %v2594, %v2597
      %v2599 = vrot.slane %v2598, 4
      %v2601 = vshll.u32 %v2552, 16
      %v2603 = vrot.slane %v2601, 5
      %v2604 = vsel %vm421, %v2599, %v2603
      %v2606 = vshrl.u32 %v2553, 16
      %v2608 = vrot.slane %v2606, 4
      %v2609 = vshll.u32 %v2553, 16
      %v2611 = vrot.slane %v2609, 5
      %v2612 = vor.u32 %v2608, %v2611
      %v2613 = vrot.slane %v2612, 4
      %v2615 = vshll.u32 %v2554, 16
      %v2617 = vrot.slane %v2615, 5
      %v2618 = vsel %vm421, %v2613, %v2617
      %v2620 = vshrl.u32 %v2555, 16
      %v2622 = vrot.slane %v2620, 4
      %v2623 = vshll.u32 %v2555, 16
      %v2625 = vrot.slane %v2623, 5
      %v2626 = vor.u32 %v2622, %v2625
      %v2627 = vrot.slane %v2626, 4
      %v2629 = vshll.u32 %v2556, 16
      %v2631 = vrot.slane %v2629, 5
      %v2632 = vsel %vm421, %v2627, %v2631
      %v2634 = vshrl.u32 %v2557, 16
      %v2636 = vrot.slane %v2634, 4
      %v2637 = vshll.u32 %v2557, 16
      %v2639 = vrot.slane %v2637, 5
      %v2640 = vor.u32 %v2636, %v2639
      %v2641 = vrot.slane %v2640, 4
      %v2643 = vshll.u32 %v2558, 16
      %v2645 = vrot.slane %v2643, 5
      %v2646 = vsel %vm421, %v2641, %v2645
      %v2648 = vshrl.u32 %v2559, 16
      %v2650 = vrot.slane %v2648, 4
      %v2651 = vshll.u32 %v2559, 16
      %v2653 = vrot.slane %v2651, 5
      %v2654 = vor.u32 %v2650, %v2653
      %v2655 = vrot.slane %v2654, 4
      %v2657 = vshll.u32 %v2560, 16
      %v2659 = vrot.slane %v2657, 5
      %v2660 = vsel %vm421, %v2655, %v2659
      %v2662 = vshrl.u32 %v2561, 16
      %v2664 = vrot.slane %v2662, 4
      %v2665 = vshll.u32 %v2561, 16
      %v2667 = vrot.slane %v2665, 5
      %v2668 = vor.u32 %v2664, %v2667
      %v2669 = vrot.slane %v2668, 4
      %v2671 = vshll.u32 %v2562, 16
      %v2673 = vrot.slane %v2671, 5
      %v2674 = vsel %vm421, %v2669, %v2673
      %v2675 = vunpack.c.l.b16 %v2576
      %v2676 = vunpack.c.l.b16 %v2590
      %v2677 = vunpack.c.l.b16 %v2604
      %v2678 = vunpack.c.l.b16 %v2618
      %v2679 = vunpack.c.l.b16 %v2632
      %v2680 = vunpack.c.l.b16 %v2646
      %v2681 = vunpack.c.l.b16 %v2660
      %v2682 = vunpack.c.l.b16 %v2674
      %v2683 = vpack.c.b16 %v2676, %v2675
      %v2684 = vpack.c.b16 %v2678, %v2677
      %v2685 = vpack.c.b16 %v2680, %v2679
      %v2686 = vpack.c.b16 %v2682, %v2681
      %2687 = vrot.lane.b32.xlu0 %v2683, 56
      %v2688 = vpop.permute.xlu0 %2687
      %2689 = vrot.lane.b32.xlu0 %v2684, 56
      %v2690 = vpop.permute.xlu0 %2689
      %2691 = vrot.lane.b32.xlu0 %v2685, 56
      %v2692 = vpop.permute.xlu0 %2691
      %2693 = vrot.lane.b32.xlu0 %v2686, 56
      %v2694 = vpop.permute.xlu0 %2693
      %2699 = vst.msk [vmem:[#allocation2 + $0x8] sm:$0xff] %vm1060, %v2688
      %2700 = vst.msk [vmem:[#allocation2 + $0x18] sm:$0xff] %vm1060, %v2690
      %2701 = vst.msk [vmem:[#allocation2 + $0x28] sm:$0xff] %vm1060, %v2692
      %2702 = vst.msk [vmem:[#allocation2 + $0x38] sm:$0xff] %vm1060, %v2694
      %v2703 = vld [vmem:[%s2301] sm:$0xe]
      %v2704 = vld [vmem:[%s2301 + $0x4] sm:$0x1]
      %v2705 = vld [vmem:[%s2301 + $0x8] sm:$0xe]
      %v2706 = vld [vmem:[%s2301 + $0xc] sm:$0x1]
      %v2707 = vld [vmem:[%s2301 + $0x10] sm:$0xe]
      %v2708 = vld [vmem:[%s2301 + $0x14] sm:$0x1]
      %v2709 = vld [vmem:[%s2301 + $0x18] sm:$0xe]
      %v2710 = vld [vmem:[%s2301 + $0x1c] sm:$0x1]
      %v2711 = vld [vmem:[%s2301 + $0x20] sm:$0xe]
      %v2712 = vld [vmem:[%s2301 + $0x24] sm:$0x1]
      %v2713 = vld [vmem:[%s2301 + $0x28] sm:$0xe]
      %v2714 = vld [vmem:[%s2301 + $0x2c] sm:$0x1]
      %v2715 = vld [vmem:[%s2301 + $0x30] sm:$0xe]
      %v2716 = vld [vmem:[%s2301 + $0x34] sm:$0x1]
      %v2717 = vld [vmem:[%s2301 + $0x38] sm:$0xe]
      %v2718 = vld [vmem:[%s2301 + $0x3c] sm:$0x1]
      %v2735 = vrot.slane %v2703, 5
      %v2736 = vrot.slane %v2735, 4
      %v2737 = vrot.slane %v2704, 5
      %v2738 = vsel %vm754, %v2736, %v2737
      %v2739 = vrot.slane %v2705, 5
      %v2740 = vrot.slane %v2739, 4
      %v2741 = vrot.slane %v2706, 5
      %v2742 = vsel %vm754, %v2740, %v2741
      %v2743 = vrot.slane %v2707, 5
      %v2744 = vrot.slane %v2743, 4
      %v2745 = vrot.slane %v2708, 5
      %v2746 = vsel %vm754, %v2744, %v2745
      %v2747 = vrot.slane %v2709, 5
      %v2748 = vrot.slane %v2747, 4
      %v2749 = vrot.slane %v2710, 5
      %v2750 = vsel %vm754, %v2748, %v2749
      %v2751 = vrot.slane %v2711, 5
      %v2752 = vrot.slane %v2751, 4
      %v2753 = vrot.slane %v2712, 5
      %v2754 = vsel %vm754, %v2752, %v2753
      %v2755 = vrot.slane %v2713, 5
      %v2756 = vrot.slane %v2755, 4
      %v2757 = vrot.slane %v2714, 5
      %v2758 = vsel %vm754, %v2756, %v2757
      %v2759 = vrot.slane %v2715, 5
      %v2760 = vrot.slane %v2759, 4
      %v2761 = vrot.slane %v2716, 5
      %v2762 = vsel %vm754, %v2760, %v2761
      %v2763 = vrot.slane %v2717, 5
      %v2764 = vrot.slane %v2763, 4
      %v2765 = vrot.slane %v2718, 5
      %v2766 = vsel %vm754, %v2764, %v2765
      %v2767 = vunpack.c.l.b16 %v2738
      %v2768 = vunpack.c.l.b16 %v2742
      %v2769 = vunpack.c.l.b16 %v2746
      %v2770 = vunpack.c.l.b16 %v2750
      %v2771 = vunpack.c.l.b16 %v2754
      %v2772 = vunpack.c.l.b16 %v2758
      %v2773 = vunpack.c.l.b16 %v2762
      %v2774 = vunpack.c.l.b16 %v2766
      %v2775 = vpack.c.b16 %v2768, %v2767
      %v2776 = vpack.c.b16 %v2770, %v2769
      %v2777 = vpack.c.b16 %v2772, %v2771
      %v2778 = vpack.c.b16 %v2774, %v2773
      %2779 = vrot.lane.b32.xlu0 %v2775, 64
      %v2780 = vpop.permute.xlu0 %2779
      %2781 = vrot.lane.b32.xlu0 %v2776, 64
      %v2782 = vpop.permute.xlu0 %2781
      %2783 = vrot.lane.b32.xlu0 %v2777, 64
      %v2784 = vpop.permute.xlu0 %2783
      %2785 = vrot.lane.b32.xlu0 %v2778, 64
      %v2786 = vpop.permute.xlu0 %2785
      %2791 = vst.msk [vmem:[#allocation2 + $0x8] sm:$0xff] %vm1217, %v2780
      %2792 = vst.msk [vmem:[#allocation2 + $0x18] sm:$0xff] %vm1217, %v2782
      %2793 = vst.msk [vmem:[#allocation2 + $0x28] sm:$0xff] %vm1217, %v2784
      %2794 = vst.msk [vmem:[#allocation2 + $0x38] sm:$0xff] %vm1217, %v2786
      %v2795 = vld [vmem:[#allocation2] sm:$0xff]
      %v2796 = vld [vmem:[#allocation2 + $0x8] sm:$0xff]
      %v2797 = vld [vmem:[#allocation2 + $0x10] sm:$0xff]
      %v2798 = vld [vmem:[#allocation2 + $0x18] sm:$0xff]
      %v2799 = vld [vmem:[#allocation2 + $0x20] sm:$0xff]
      %v2800 = vld [vmem:[#allocation2 + $0x28] sm:$0xff]
      %v2801 = vld [vmem:[#allocation2 + $0x30] sm:$0xff]
      %v2802 = vld [vmem:[#allocation2 + $0x38] sm:$0xff]
      %v2803 = vld [vmem:[%s1] sm:$0xf]
      %v2804 = vld [vmem:[%s1 + $0x4] sm:$0xf]
      %v2805 = vld [vmem:[%s1 + $0x8] sm:$0xf]
      %v2806 = vld [vmem:[%s1 + $0xc] sm:$0xf]
      %v2807 = vld [vmem:[%s1 + $0x10] sm:$0xf]
      %v2808 = vld [vmem:[%s1 + $0x14] sm:$0xf]
      %v2809 = vld [vmem:[%s1 + $0x18] sm:$0xf]
      %v2810 = vld [vmem:[%s1 + $0x1c] sm:$0xf]
      %v2811 = vld [vmem:[%s1 + $0x20] sm:$0xf]
      %v2812 = vld [vmem:[%s1 + $0x24] sm:$0xf]
      %v2813 = vld [vmem:[%s1 + $0x28] sm:$0xf]
      %v2814 = vld [vmem:[%s1 + $0x2c] sm:$0xf]
      %v2815 = vld [vmem:[%s1 + $0x30] sm:$0xf]
      %v2816 = vld [vmem:[%s1 + $0x34] sm:$0xf]
      %v2817 = vld [vmem:[%s1 + $0x38] sm:$0xf]
      %v2818 = vld [vmem:[%s1 + $0x3c] sm:$0xf]
      %v2819 = vld [vmem:[%s1 + $0x40] sm:$0xf]
      %v2820 = vld [vmem:[%s1 + $0x44] sm:$0xf]
      %v2821 = vld [vmem:[%s1 + $0x48] sm:$0xf]
      %v2822 = vld [vmem:[%s1 + $0x4c] sm:$0xf]
      %v2823 = vld [vmem:[%s1 + $0x50] sm:$0xf]
      %v2824 = vld [vmem:[%s1 + $0x54] sm:$0xf]
      %v2825 = vld [vmem:[%s1 + $0x58] sm:$0xf]
      %v2826 = vld [vmem:[%s1 + $0x5c] sm:$0xf]
      %v2827 = vld [vmem:[%s1 + $0x60] sm:$0xf]
      %v2828 = vld [vmem:[%s2] sm:$0x1]
      %v2830 = vlaneseq
      %v2831 = vshrl.u32 %v2830, 7
      %v2832 = vsub.s32 0, %v2831
      %v2833 = vrot.slane %v2828, %v2832
      %v2860 = vunpack.c.l.b16 %v2803
      %v2861 = vunpack.c.l.b16 %v2804
      %v2862 = vunpack.c.l.b16 %v2805
      %v2863 = vunpack.c.l.b16 %v2806
      %v2864 = vunpack.c.l.b16 %v2807
      %v2865 = vunpack.c.l.b16 %v2808
      %v2866 = vunpack.c.l.b16 %v2809
      %v2867 = vunpack.c.l.b16 %v2810
      %v2868 = vunpack.c.l.b16 %v2811
      %v2869 = vunpack.c.l.b16 %v2812
      %v2870 = vunpack.c.l.b16 %v2813
      %v2871 = vunpack.c.l.b16 %v2814
      %v2872 = vunpack.c.l.b16 %v2815
      %v2873 = vunpack.c.l.b16 %v2816
      %v2874 = vunpack.c.l.b16 %v2817
      %v2875 = vunpack.c.l.b16 %v2818
      %v2876 = vunpack.c.l.b16 %v2819
      %v2877 = vunpack.c.l.b16 %v2820
      %v2878 = vunpack.c.l.b16 %v2821
      %v2879 = vunpack.c.l.b16 %v2822
      %v2880 = vunpack.c.l.b16 %v2823
      %v2881 = vunpack.c.l.b16 %v2824
      %v2882 = vunpack.c.l.b16 %v2825
      %v2883 = vunpack.c.l.b16 %v2826
      %v2884 = vunpack.c.l.b16 %v2827
      %v2885 = vpack.c.b16 %v2861, %v2860
      %v2886 = vpack.c.b16 %v2863, %v2862
      %v2887 = vpack.c.b16 %v2865, %v2864
      %v2888 = vpack.c.b16 %v2867, %v2866
      %v2889 = vpack.c.b16 %v2869, %v2868
      %v2890 = vpack.c.b16 %v2871, %v2870
      %v2891 = vpack.c.b16 %v2873, %v2872
      %v2892 = vpack.c.b16 %v2875, %v2874
      %v2893 = vpack.c.b16 %v2877, %v2876
      %v2894 = vpack.c.b16 %v2879, %v2878
      %v2895 = vpack.c.b16 %v2881, %v2880
      %v2896 = vpack.c.b16 %v2883, %v2882
      %v2897 = vpack.c.b16 %v2884, %v2884
      %vm2910 = vcmask 588800
      %v2912 = vsel %vm2910, %v2796, 0
      %v2915 = vsel %vm2910, %v2798, 0
      %v2918 = vsel %vm2910, %v2800, 0
      %v2921 = vsel %vm2910, %v2802, 0
      %vm2923 = vcmask 1043456
      %v2925 = vsel %vm2923, %v2897, 0
      %2927 = vmatprep.subr.bf16.mxu0 0
      %2928 = vmatpush1.bf16.msra.mxu0 %v2885
      %2929 = vmatprep.subr.bf16.mxu0 0
      %2930 = vmatpush1.bf16.msra.mxu0 %v2886
      %2931 = vmatprep.subr.bf16.mxu0 0
      %2932 = vmatpush1.bf16.msra.mxu0 %v2887
      %2933 = vmatprep.subr.bf16.mxu0 0
      %2934 = vmatpush1.bf16.msra.mxu0 %v2888
      %2935 = vmatprep.subr.bf16.mxu0 0
      %2936 = vmatpush1.bf16.msra.mxu0 %v2889
      %2937 = vmatprep.subr.bf16.mxu0 0
      %2938 = vmatpush1.bf16.msra.mxu0 %v2890
      %2939 = vmatprep.subr.bf16.mxu0 0
      %2940 = vmatpush1.bf16.msra.mxu0 %v2891
      %2941 = vmatprep.subr.bf16.mxu0 0
      %2942 = vmatpush1.bf16.msra.mxu0 %v2892
      %2943 = vmatprep.subr.bf16.mxu0 0
      %2944 = vmatpush1.bf16.msra.mxu0 %v2893
      %2945 = vmatprep.subr.bf16.mxu0 0
      %2946 = vmatpush1.bf16.msra.mxu0 %v2894
      %2947 = vmatprep.subr.bf16.mxu0 0
      %2948 = vmatpush1.bf16.msra.mxu0 %v2895
      %2949 = vmatprep.subr.bf16.mxu0 0
      %2950 = vmatpush1.bf16.msra.mxu0 %v2896
      %2951 = vmatprep.subr.bf16.mxu0 0
      %2952 = vmatpush1.bf16.msra.mxu0 %v2925
      %2953 = vmatprep.subr.bf16.mxu0 0
      %2954 = vmatpush1.bf16.msra.mxu0 0
      %2955 = vmatprep.subr.bf16.mxu0 0
      %2956 = vmatpush1.bf16.msra.mxu0 0
      %2957 = vmatprep.subr.bf16.mxu0 0
      %2958 = vmatpush1.bf16.msra.mxu0 0
      %2959 = vmatprep.mubr.bf16.mxu0 %v2912
      %2960 = vmatmul.mubr.bf16.gmra.mrb[0].mxu0 %v2795
      %v2961 = vpop.f32.mrb[0].mxu0
      %v2962 = vadd.f32 %v2833, %v2961
      %v2963 = vpop.f32.mrb[0].mxu0
      %v2964 = vpop.f32.mrb[0].mxu0
      %v2965 = vadd.f32 %v2833, %v2964
      %v2966 = vpop.f32.mrb[0].mxu0
      %2967 = vmatprep.mubr.bf16.mxu0 %v2915
      %2968 = vmatmul.mubr.bf16.gmra.mrb[0].mxu0 %v2797
      %v2969 = vpop.f32.mrb[0].mxu0
      %v2970 = vadd.f32 %v2833, %v2969
      %v2971 = vpop.f32.mrb[0].mxu0
      %v2972 = vpop.f32.mrb[0].mxu0
      %v2973 = vadd.f32 %v2833, %v2972
      %v2974 = vpop.f32.mrb[0].mxu0
      %2975 = vmatprep.mubr.bf16.mxu0 %v2918
      %2976 = vmatmul.mubr.bf16.gmra.mrb[0].mxu0 %v2799
      %v2977 = vpop.f32.mrb[0].mxu0
      %v2978 = vadd.f32 %v2833, %v2977
      %v2979 = vpop.f32.mrb[0].mxu0
      %v2980 = vpop.f32.mrb[0].mxu0
      %v2981 = vadd.f32 %v2833, %v2980
      %v2982 = vpop.f32.mrb[0].mxu0
      %2983 = vmatprep.mubr.bf16.mxu0 %v2921
      %2984 = vmatmul.mubr.bf16.gmra.mrb[0].mxu0 %v2801
      %v2985 = vpop.f32.mrb[0].mxu0
      %v2986 = vadd.f32 %v2833, %v2985
      %v2987 = vpop.f32.mrb[0].mxu0
      %v2988 = vpop.f32.mrb[0].mxu0
      %v2989 = vadd.f32 %v2833, %v2988
      %v2990 = vpop.f32.mrb[0].mxu0
      %2991 = vdwg.mxu0
      %vm2992 = vcmask 130048
      %v2993 = vsel %vm2992, %v2962, 0.0
      %v2994 = vsel %vm2992, %v2965, 0.0
      %v2995 = vadd.f32 %v2993, %v2994
      %v2996 = vsel %vm2992, %v2970, 0.0
      %v2997 = vadd.f32 %v2995, %v2996
      %v2998 = vsel %vm2992, %v2973, 0.0
      %v2999 = vadd.f32 %v2997, %v2998
      %v3000 = vsel %vm2992, %v2978, 0.0
      %v3001 = vadd.f32 %v2999, %v3000
      %v3002 = vsel %vm2992, %v2981, 0.0
      %v3003 = vadd.f32 %v3001, %v3002
      %v3004 = vsel %vm2992, %v2986, 0.0
      %v3005 = vadd.f32 %v3003, %v3004
      %v3006 = vsel %vm2992, %v2989, 0.0
      %v3007 = vadd.f32 %v3005, %v3006
      %v3008 = vrot.slane %v3007, 4
      %v3009 = vadd.f32 %v3007, %v3008
      %v3010 = vrot.slane %v3009, 2
      %v3011 = vadd.f32 %v3009, %v3010
      %v3012 = vrot.slane %v3011, 1
      %v3013 = vadd.f32 %v3011, %v3012
      %v3014 = vrcp.pop 64.0
      %v3015 = vmul.f32 %v3013, %v3014
      %v3016 = vsub.f32 %v2962, %v3015
      %v3017 = vsub.f32 %v2965, %v3015
      %v3018 = vsub.f32 %v2970, %v3015
      %v3019 = vsub.f32 %v2973, %v3015
      %v3020 = vsub.f32 %v2978, %v3015
      %v3021 = vsub.f32 %v2981, %v3015
      %v3022 = vsub.f32 %v2986, %v3015
      %v3023 = vsub.f32 %v2989, %v3015
      %v3024 = vmul.f32 %v3016, %v3016
      %v3025 = vmul.f32 %v3017, %v3017
      %v3026 = vmul.f32 %v3018, %v3018
      %v3027 = vmul.f32 %v3019, %v3019
      %v3028 = vmul.f32 %v3020, %v3020
      %v3029 = vmul.f32 %v3021, %v3021
      %v3030 = vmul.f32 %v3022, %v3022
      %v3031 = vmul.f32 %v3023, %v3023
      %v3032 = vsel %vm2992, %v3024, 0.0
      %v3033 = vsel %vm2992, %v3025, 0.0
      %v3034 = vadd.f32 %v3032, %v3033
      %v3035 = vsel %vm2992, %v3026, 0.0
      %v3036 = vadd.f32 %v3034, %v3035
      %v3037 = vsel %vm2992, %v3027, 0.0
      %v3038 = vadd.f32 %v3036, %v3037
      %v3039 = vsel %vm2992, %v3028, 0.0
      %v3040 = vadd.f32 %v3038, %v3039
      %v3041 = vsel %vm2992, %v3029, 0.0
      %v3042 = vadd.f32 %v3040, %v3041
      %v3043 = vsel %vm2992, %v3030, 0.0
      %v3044 = vadd.f32 %v3042, %v3043
      %v3045 = vsel %vm2992, %v3031, 0.0
      %v3046 = vadd.f32 %v3044, %v3045
      %v3047 = vrot.slane %v3046, 4
      %v3048 = vadd.f32 %v3046, %v3047
      %v3049 = vrot.slane %v3048, 2
      %v3050 = vadd.f32 %v3048, %v3049
      %v3051 = vrot.slane %v3050, 1
      %v3052 = vadd.f32 %v3050, %v3051
      %v3053 = vmul.f32 %v3052, %v3014
      %v3054 = vadd.f32 %v3053, 1e-05
      %v3055 = vrsqrt.pop %v3054
      %v3056 = vmul.f32 %v3016, %v3055
      %v3057 = vmul.f32 %v3017, %v3055
      %v3058 = vmul.f32 %v3018, %v3055
      %v3059 = vmul.f32 %v3019, %v3055
      %v3060 = vmul.f32 %v3020, %v3055
      %v3061 = vmul.f32 %v3021, %v3055
      %v3062 = vmul.f32 %v3022, %v3055
      %v3063 = vmul.f32 %v3023, %v3055
      %v3064 = vld [vmem:[%s3] sm:$0x1]
      %v3066 = vlaneseq
      %v3067 = vshrl.u32 %v3066, 7
      %v3068 = vsub.s32 0, %v3067
      %v3069 = vrot.slane %v3064, %v3068
      %v3071 = vmul.f32 %v3056, %v3069
      %v3072 = vmul.f32 %v3057, %v3069
      %v3073 = vmul.f32 %v3058, %v3069
      %v3074 = vmul.f32 %v3059, %v3069
      %v3075 = vmul.f32 %v3060, %v3069
      %v3076 = vmul.f32 %v3061, %v3069
      %v3077 = vmul.f32 %v3062, %v3069
      %v3078 = vmul.f32 %v3063, %v3069
      %v3079 = vld [vmem:[%s4] sm:$0x1]
      %v3081 = vlaneseq
      %v3082 = vshrl.u32 %v3081, 7
      %v3083 = vsub.s32 0, %v3082
      %v3084 = vrot.slane %v3079, %v3083
      %v3086 = vadd.f32 %v3071, %v3084
      %v3087 = vadd.f32 %v3072, %v3084
      %v3088 = vadd.f32 %v3073, %v3084
      %v3089 = vadd.f32 %v3074, %v3084
      %v3090 = vadd.f32 %v3075, %v3084
      %v3091 = vadd.f32 %v3076, %v3084
      %v3092 = vadd.f32 %v3077, %v3084
      %v3093 = vadd.f32 %v3078, %v3084
      %v3094 = vmul.f32 %v3086, 0.5
      %v3095 = vmul.f32 %v3087, 0.5
      %v3096 = vmul.f32 %v3088, 0.5
      %v3097 = vmul.f32 %v3089, 0.5
      %v3098 = vmul.f32 %v3090, 0.5
      %v3099 = vmul.f32 %v3091, 0.5
      %v3100 = vmul.f32 %v3092, 0.5
      %v3101 = vmul.f32 %v3093, 0.5
      %v3102 = vmul.f32 %v3086, 0.044715
      %v3103 = vmul.f32 %v3087, 0.044715
      %v3104 = vmul.f32 %v3088, 0.044715
      %v3105 = vmul.f32 %v3089, 0.044715
      %v3106 = vmul.f32 %v3090, 0.044715
      %v3107 = vmul.f32 %v3091, 0.044715
      %v3108 = vmul.f32 %v3092, 0.044715
      %v3109 = vmul.f32 %v3093, 0.044715
      %v3110 = vmul.f32 %v3102, %v3086
      %v3111 = vmul.f32 %v3103, %v3087
      %v3112 = vmul.f32 %v3104, %v3088
      %v3113 = vmul.f32 %v3105, %v3089
      %v3114 = vmul.f32 %v3106, %v3090
      %v3115 = vmul.f32 %v3107, %v3091
      %v3116 = vmul.f32 %v3108, %v3092
      %v3117 = vmul.f32 %v3109, %v3093
      %v3118 = vmul.f32 %v3110, %v3086
      %v3119 = vmul.f32 %v3111, %v3087
      %v3120 = vmul.f32 %v3112, %v3088
      %v3121 = vmul.f32 %v3113, %v3089
      %v3122 = vmul.f32 %v3114, %v3090
      %v3123 = vmul.f32 %v3115, %v3091
      %v3124 = vmul.f32 %v3116, %v3092
      %v3125 = vmul.f32 %v3117, %v3093
      %v3126 = vadd.f32 %v3086, %v3118
      %v3127 = vadd.f32 %v3087, %v3119
      %v3128 = vadd.f32 %v3088, %v3120
      %v3129 = vadd.f32 %v3089, %v3121
      %v3130 = vadd.f32 %v3090, %v3122
      %v3131 = vadd.f32 %v3091, %v3123
      %v3132 = vadd.f32 %v3092, %v3124
      %v3133 = vadd.f32 %v3093, %v3125
      %v3134 = vmul.f32 %v3126, 0.7978846
      %v3135 = vmul.f32 %v3127, 0.7978846
      %v3136 = vmul.f32 %v3128, 0.7978846
      %v3137 = vmul.f32 %v3129, 0.7978846
      %v3138 = vmul.f32 %v3130, 0.7978846
      %v3139 = vmul.f32 %v3131, 0.7978846
      %v3140 = vmul.f32 %v3132, 0.7978846
      %v3141 = vmul.f32 %v3133, 0.7978846
      %v3142 = vtanh.pop %v3134
      %v3143 = vtanh.pop %v3135
      %v3144 = vtanh.pop %v3136
      %v3145 = vtanh.pop %v3137
      %v3146 = vtanh.pop %v3138
      %v3147 = vtanh.pop %v3139
      %v3148 = vtanh.pop %v3140
      %v3149 = vtanh.pop %v3141
      %v3150 = vadd.f32 %v3142, 1.0
      %v3151 = vadd.f32 %v3143, 1.0
      %v3152 = vadd.f32 %v3144, 1.0
      %v3153 = vadd.f32 %v3145, 1.0
      %v3154 = vadd.f32 %v3146, 1.0
      %v3155 = vadd.f32 %v3147, 1.0
      %v3156 = vadd.f32 %v3148, 1.0
      %v3157 = vadd.f32 %v3149, 1.0
      %v3158 = vmul.f32 %v3094, %v3150
      %v3159 = vmul.f32 %v3095, %v3151
      %v3160 = vmul.f32 %v3096, %v3152
      %v3161 = vmul.f32 %v3097, %v3153
      %v3162 = vmul.f32 %v3098, %v3154
      %v3163 = vmul.f32 %v3099, %v3155
      %v3164 = vmul.f32 %v3100, %v3156
      %v3165 = vmul.f32 %v3101, %v3157
      %v3166 = vpack.c.bf16 %v3159, %v3158
      %v3167 = vpack.c.bf16 %v3161, %v3160
      %v3168 = vpack.c.bf16 %v3163, %v3162
      %v3169 = vpack.c.bf16 %v3165, %v3164
      %v3174 = vunpack.c.l.b16 %v3166
      %v3175 = vunpack.c.h.b16 %v3166
      %v3176 = vunpack.c.l.b16 %v3167
      %v3177 = vunpack.c.h.b16 %v3167
      %v3178 = vunpack.c.l.b16 %v3168
      %v3179 = vunpack.c.h.b16 %v3168
      %v3180 = vunpack.c.l.b16 %v3169
      %v3181 = vunpack.c.h.b16 %v3169
      %v3182 = vpack.c.b16 %v3174, %v3174
      %v3183 = vpack.c.b16 %v3175, %v3175
      %v3184 = vpack.c.b16 %v3176, %v3176
      %v3185 = vpack.c.b16 %v3177, %v3177
      %v3186 = vpack.c.b16 %v3178, %v3178
      %v3187 = vpack.c.b16 %v3179, %v3179
      %v3188 = vpack.c.b16 %v3180, %v3180
      %v3189 = vpack.c.b16 %v3181, %v3181
      %vm3198 = vcmask 125952
      %3199 = vst.msk [vmem:[%s313] sm:$0xf] %vm3198, %v3182
      %3200 = vst.msk [vmem:[%s313 + $0x4] sm:$0xf] %vm3198, %v3183
      %3201 = vst.msk [vmem:[%s313 + $0x8] sm:$0xf] %vm3198, %v3184
      %3202 = vst.msk [vmem:[%s313 + $0xc] sm:$0xf] %vm3198, %v3185
      %3203 = vst.msk [vmem:[%s313 + $0x10] sm:$0xf] %vm3198, %v3186
      %3204 = vst.msk [vmem:[%s313 + $0x14] sm:$0xf] %vm3198, %v3187
      %3205 = vst.msk [vmem:[%s313 + $0x18] sm:$0xf] %vm3198, %v3188
      %3206 = vst.msk [vmem:[%s313 + $0x1c] sm:$0xf] %vm3198, %v3189
      %v3207 = vld [vmem:[%s5] sm:$0xf]
      %v3208 = vld [vmem:[%s6] sm:$0x1]
      %v3210 = vlaneseq
      %v3211 = vshrl.u32 %v3210, 7
      %v3212 = vsub.s32 0, %v3211
      %v3213 = vrot.slane %v3208, %v3212
      %v3216 = vsel %vm352, %v1543, 0
      %v3219 = vsel %vm352, %v1544, 0
      %v3222 = vsel %vm352, %v1545, 0
      %v3225 = vsel %vm352, %v1546, 0
      %v3228 = vsel %vm2923, %v3207, 0
      %3230 = vmatprep.subr.bf16.mxu0 0
      %3231 = vmatpush1.bf16.msra.mxu0 %v3228
      %3232 = vmatprep.subr.bf16.mxu0 0
      %3233 = vmatpush1.bf16.msra.mxu0 0
      %3234 = vmatprep.subr.bf16.mxu0 0
      %3235 = vmatpush1.bf16.msra.mxu0 0
      %3236 = vmatprep.subr.bf16.mxu0 0
      %3237 = vmatpush1.bf16.msra.mxu0 0
      %3238 = vmatprep.subr.bf16.mxu0 0
      %3239 = vmatpush1.bf16.msra.mxu0 0
      %3240 = vmatprep.subr.bf16.mxu0 0
      %3241 = vmatpush1.bf16.msra.mxu0 0
      %3242 = vmatprep.subr.bf16.mxu0 0
      %3243 = vmatpush1.bf16.msra.mxu0 0
      %3244 = vmatprep.subr.bf16.mxu0 0
      %3245 = vmatpush1.bf16.msra.mxu0 0
      %3246 = vmatprep.subr.bf16.mxu0 0
      %3247 = vmatpush1.bf16.msra.mxu0 0
      %3248 = vmatprep.subr.bf16.mxu0 0
      %3249 = vmatpush1.bf16.msra.mxu0 0
      %3250 = vmatprep.subr.bf16.mxu0 0
      %3251 = vmatpush1.bf16.msra.mxu0 0
      %3252 = vmatprep.subr.bf16.mxu0 0
      %3253 = vmatpush1.bf16.msra.mxu0 0
      %3254 = vmatprep.subr.bf16.mxu0 0
      %3255 = vmatpush1.bf16.msra.mxu0 0
      %3256 = vmatprep.subr.bf16.mxu0 0
      %3257 = vmatpush1.bf16.msra.mxu0 0
      %3258 = vmatprep.subr.bf16.mxu0 0
      %3259 = vmatpush1.bf16.msra.mxu0 0
      %3260 = vmatprep.subr.bf16.mxu0 0
      %3261 = vmatpush1.bf16.msra.mxu0 0
      %3262 = vmatprep.mubr.bf16.mxu0 0
      %3263 = vmatmul.mubr.bf16.gmra.mrb[0].mxu0 %v3216
      %v3264 = vpop.f32.mrb[0].mxu0
      %v3265 = vadd.f32 %v3213, %v3264
      %v3266 = vpop.f32.mrb[0].mxu0
      %v3267 = vpop.f32.mrb[0].mxu0
      %v3268 = vadd.f32 %v3213, %v3267
      %v3269 = vpop.f32.mrb[0].mxu0
      %3270 = vmatprep.mubr.bf16.mxu0 0
      %3271 = vmatmul.mubr.bf16.gmra.mrb[0].mxu0 %v3219
      %v3272 = vpop.f32.mrb[0].mxu0
      %v3273 = vadd.f32 %v3213, %v3272
      %v3274 = vpop.f32.mrb[0].mxu0
      %v3275 = vpop.f32.mrb[0].mxu0
      %v3276 = vadd.f32 %v3213, %v3275
      %v3277 = vpop.f32.mrb[0].mxu0
      %3278 = vmatprep.mubr.bf16.mxu0 0
      %3279 = vmatmul.mubr.bf16.gmra.mrb[0].mxu0 %v3222
      %v3280 = vpop.f32.mrb[0].mxu0
      %v3281 = vadd.f32 %v3213, %v3280
      %v3282 = vpop.f32.mrb[0].mxu0
      %v3283 = vpop.f32.mrb[0].mxu0
      %v3284 = vadd.f32 %v3213, %v3283
      %v3285 = vpop.f32.mrb[0].mxu0
      %3286 = vmatprep.mubr.bf16.mxu0 0
      %3287 = vmatmul.mubr.bf16.gmra.mrb[0].mxu0 %v3225
      %v3288 = vpop.f32.mrb[0].mxu0
      %v3289 = vadd.f32 %v3213, %v3288
      %v3290 = vpop.f32.mrb[0].mxu0
      %v3291 = vpop.f32.mrb[0].mxu0
      %v3292 = vadd.f32 %v3213, %v3291
      %v3293 = vpop.f32.mrb[0].mxu0
      %3294 = vdwg.mxu0
      %v3295 = vpack.c.bf16 %v3268, %v3265
      %v3296 = vpack.c.bf16 %v3276, %v3273
      %v3297 = vpack.c.bf16 %v3284, %v3281
      %v3298 = vpack.c.bf16 %v3292, %v3289
      %v3303 = vunpack.c.l.b16 %v3295
      %v3304 = vunpack.c.h.b16 %v3295
      %v3305 = vunpack.c.l.b16 %v3296
      %v3306 = vunpack.c.h.b16 %v3296
      %v3307 = vunpack.c.l.b16 %v3297
      %v3308 = vunpack.c.h.b16 %v3297
      %v3309 = vunpack.c.l.b16 %v3298
      %v3310 = vunpack.c.h.b16 %v3298
      %v3311 = vpack.c.b16 %v3303, %v3303
      %v3312 = vpack.c.b16 %v3304, %v3304
      %v3313 = vpack.c.b16 %v3305, %v3305
      %v3314 = vpack.c.b16 %v3306, %v3306
      %v3315 = vpack.c.b16 %v3307, %v3307
      %v3316 = vpack.c.b16 %v3308, %v3308
      %v3317 = vpack.c.b16 %v3309, %v3309
      %v3318 = vpack.c.b16 %v3310, %v3310
      %3327 = vst.msk [vmem:[%s318] sm:$0xf] %vm3198, %v3311
      %3328 = vst.msk [vmem:[%s318 + $0x4] sm:$0xf] %vm3198, %v3312
      %3329 = vst.msk [vmem:[%s318 + $0x8] sm:$0xf] %vm3198, %v3313
      %3330 = vst.msk [vmem:[%s318 + $0xc] sm:$0xf] %vm3198, %v3314
      %3331 = vst.msk [vmem:[%s318 + $0x10] sm:$0xf] %vm3198, %v3315
      %3332 = vst.msk [vmem:[%s318 + $0x14] sm:$0xf] %vm3198, %v3316
      %3333 = vst.msk [vmem:[%s318 + $0x18] sm:$0xf] %vm3198, %v3317
      %3334 = vst.msk [vmem:[%s318 + $0x1c] sm:$0xf] %vm3198, %v3318
      %p3335 = scmp.lt.s32.totalorder %s20, 1
      %s3336 = scalar_select %p3335, %s20, 1
      %s3337 = smul.addr %s3336, 8
      %s3338 = smul.addr %s3337, 4
      %s3339 = scalar_lea.vmem %s7, %s3338
      %p3340 = scmp.lt.s32.totalorder %s20, 1
      %s3341 = scalar_select %p3340, %s20, 1
      %s3342 = smul.addr %s3341, 8
      %s3343 = smul.addr %s3342, 4
      %s3344 = scalar_lea.vmem %s8, %s3343
      // Predicated region
      $region49: #{segment_encoder_forward.6} parent=47 // pred_check
        %p3345 = pneg %p190
      $region50: #{segment_encoder_forward.6} parent=47 // pred_check_branch
        %3347 = sbr.rel (%p3345) target = $region52
      $region51: #{segment_encoder_forward.6} parent=47 // pred_region
        _
      $region52: #{segment_encoder_forward.6} parent=47 // pred_fallthru
        _
      // Predicated region
      $region53: #{segment_encoder_forward.6} parent=47 // pred_check
        %p3348 = pneg %p216
      $region54: #{segment_encoder_forward.6} parent=47 // pred_check_branch
        %3350 = sbr.rel (%p3348) target = $region56
      $region55: #{segment_encoder_forward.6} parent=47 // pred_region
        _
      $region56: #{segment_encoder_forward.6} parent=47 // pred_fallthru
        _
    $region48: #{segment_encoder_forward.6} parent=5 // pred_fallthru
      _
    %p3351 = scmp.le.s32.totalorder 2, %s15
    // Predicated region
    $region57: #{segment_encoder_forward.6} parent=5 // pred_check
      %p3352 = pneg %p3351
    $region58: #{segment_encoder_forward.6} parent=5 // pred_check_branch
      %3354 = sbr.rel (%p3352) target = $region60
    $region59: #{segment_encoder_forward.6} parent=5 // pred_region
      %s3355 = ssub.s32 %s15, 2
      // Predicated region
      $region61: #{segment_encoder_forward.6} parent=59 // pred_check
        %p3356 = pneg %p196
      $region62: #{segment_encoder_forward.6} parent=59 // pred_check_branch
        %3358 = sbr.rel (%p3356) target = $region64
      $region63: #{segment_encoder_forward.6} parent=59 // pred_region
        %p3359 = scmp.lt.s32.totalorder %s21, 1
        %s3360 = scalar_select %p3359, %s21, 1
        %s3361 = smul.addr %s3360, 8
        %s3362 = smul.addr %s3361, 4
        %s3363 = scalar_lea.vmem %s7, %s3362
      $region64: #{segment_encoder_forward.6} parent=59 // pred_fallthru
        _
      // Predicated region
      $region65: #{segment_encoder_forward.6} parent=59 // pred_check
        %p3364 = pneg %p222
      $region66: #{segment_encoder_forward.6} parent=59 // pred_check_branch
        %3366 = sbr.rel (%p3364) target = $region68
      $region67: #{segment_encoder_forward.6} parent=59 // pred_region
        %p3367 = scmp.lt.s32.totalorder %s21, 1
        %s3368 = scalar_select %p3367, %s21, 1
        %s3369 = smul.addr %s3368, 8
        %s3370 = smul.addr %s3369, 4
        %s3371 = scalar_lea.vmem %s8, %s3370
      $region68: #{segment_encoder_forward.6} parent=59 // pred_fallthru
        _
    $region60: #{segment_encoder_forward.6} parent=5 // pred_fallthru
      _
  $region6: #{segment_encoder_forward.6} parent=0 // loop_footer
    %s19 = sadd.s32 1, %s15
  $region7: #{segment_encoder_forward.6} parent=0 // loop_footer_branch
    %14 = sbr.rel target = $region3
  $region8: #{segment_encoder_forward.6} parent=0 // loop_exit
    _

// kernel: segment_encoder_forward.7
$region0: #{segment_encoder_forward.7}
  #allocation0 [shape = 'u32[]', space=smem, size = 0x4, offset = 0x4, fixed_abs, tag = 'smem constant byte address 0x4 - core index']
  #allocation1 [shape = 'u32[144,128]{1,0:T(1,128)}', space=vmem, size = 0x12000, scoped, tag = 'internal scratch']
  #allocation2 [shape = 'bf16[64,400]{1,0:T(16,128)(2,1)}', space=vmem, size = 0x10000, scoped, tag = 'scratch operand']
  %s0 = inlined_call_operand.vmem [shape: bf16[2,12,12,16], index: 0, kind: input, shape index: {}]
  %s1 = inlined_call_operand.vmem [shape: bf16[400,16], index: 1, kind: input, shape index: {}]
  %s2 = inlined_call_operand.vmem [shape: f32[1,16], index: 2, kind: input, shape index: {}]
  %s3 = inlined_call_operand.vmem [shape: f32[1,16], index: 3, kind: input, shape index: {}]
  %s4 = inlined_call_operand.vmem [shape: f32[1,16], index: 4, kind: input, shape index: {}]
  %s5 = inlined_call_operand.vmem [shape: bf16[2,64,16], index: 5, kind: input, shape index: {}]
  %s6 = inlined_call_operand.vmem [shape: bf16[2,64,16], index: 6, kind: output, shape index: {}]
  %s7 = sld [smem:[#allocation0]]
  $region57: #{segment_encoder_forward.7} parent=0
    _
  %s9 = ssub.s32 1, %s7
  %s10 = scalar_select 0, %s9, %s7
  loop: start=0, step=1, limit=4
  $region2: #{segment_encoder_forward.7} parent=0 // loop_pre_header
    _
  $region3: #{segment_encoder_forward.7} parent=0 // loop_header
    %s12 = sphi 0, %s16
    %p13 = scmp.ge.s32.totalorder %s12, 4
    %s22 = sphi 0, %s24
    %s25 = sphi 0, %s22
    %s26 = sphi 0, %s25
    %s42 = sphi 0, %s26
    %s46 = sphi 0, %s46
    %s48 = sphi 0, %s46
    %s49 = sphi 0, %s48
    %s63 = sphi 0, %s49
    %s67 = sphi 0, %s67
    %s69 = sphi 0, %s67
    %s70 = sphi 0, %s69
    %s84 = sphi 0, %s70
    %s88 = sphi 0, %s88
    %s90 = sphi 0, %s88
    %s91 = sphi 0, %s90
    %s105 = sphi 0, %s91
    %s109 = sphi 0, %s109
    %s111 = sphi 0, %s109
    %s112 = sphi 0, %s111
    %s126 = sphi 0, %s112
    %s132 = sphi 0, %s134
    %s135 = sphi 0, %s132
    %s136 = sphi 0, %s135
    %s152 = sphi 0, %s136
    %s158 = sphi 0, %s160
    %s161 = sphi 0, %s158
    %s162 = sphi 0, %s161
    %s178 = sphi 0, %s162
  $region4: #{segment_encoder_forward.7} parent=0 // loop_header_branch
    %15 = sbr.rel (%p13) target = $region8
  $region5: #{segment_encoder_forward.7} parent=0 // loop_body
    %s17 = ssub.s32 %s12, 1
    %s18 = ssub.s32 %s12, 2
    %s19 = sadd.s32 %s12, 1
    %s20 = ssub.s32 %s12, %s19
    %p21 = scmp.eq.s32.totalorder %s20, 0
    %s23 = sadd.s32 %s22, 1
    %s24 = scalar_select %p21, %s22, %s23
    %p27 = pneg %p21
    %p28 = scmp.eq.s32.totalorder %s12, 1
    %p29 = por %p27, %p28
    %p30 = scmp.ne.s32.totalorder %s22, %s25
    %p31 = scmp.eq.s32.totalorder %s12, 0
    %p32 = por %p30, %p31
    %p33 = scmp.ne.s32.totalorder %s22, %s25
    %p34 = scmp.eq.s32.totalorder %s17, 1
    %p35 = por %p33, %p34
    %p36 = scmp.ne.s32.totalorder %s25, %s26
    %p37 = scmp.eq.s32.totalorder %s17, 0
    %p38 = por %p36, %p37
    %p39 = scmp.ne.s32.totalorder %s25, %s26
    %p40 = scmp.eq.s32.totalorder %s18, 1
    %p41 = por %p39, %p40
    %p43 = scmp.ne.s32.totalorder %s26, %s42
    %p44 = scmp.eq.s32.totalorder %s18, 0
    %p45 = por %p43, %p44
    %s47 = sadd.s32 %s46, 1
    %p50 = scmp.eq.s32.totalorder %s12, 1
    %p51 = scmp.ne.s32.totalorder %s46, %s48
    %p52 = scmp.eq.s32.totalorder %s12, 0
    %p53 = por %p51, %p52
    %p54 = scmp.ne.s32.totalorder %s46, %s48
    %p55 = scmp.eq.s32.totalorder %s17, 1
    %p56 = por %p54, %p55
    %p57 = scmp.ne.s32.totalorder %s48, %s49
    %p58 = scmp.eq.s32.totalorder %s17, 0
    %p59 = por %p57, %p58
    %p60 = scmp.ne.s32.totalorder %s48, %s49
    %p61 = scmp.eq.s32.totalorder %s18, 1
    %p62 = por %p60, %p61
    %p64 = scmp.ne.s32.totalorder %s49, %s63
    %p65 = scmp.eq.s32.totalorder %s18, 0
    %p66 = por %p64, %p65
    %s68 = sadd.s32 %s67, 1
    %p71 = scmp.eq.s32.totalorder %s12, 1
    %p72 = scmp.ne.s32.totalorder %s67, %s69
    %p73 = scmp.eq.s32.totalorder %s12, 0
    %p74 = por %p72, %p73
    %p75 = scmp.ne.s32.totalorder %s67, %s69
    %p76 = scmp.eq.s32.totalorder %s17, 1
    %p77 = por %p75, %p76
    %p78 = scmp.ne.s32.totalorder %s69, %s70
    %p79 = scmp.eq.s32.totalorder %s17, 0
    %p80 = por %p78, %p79
    %p81 = scmp.ne.s32.totalorder %s69, %s70
    %p82 = scmp.eq.s32.totalorder %s18, 1
    %p83 = por %p81, %p82
    %p85 = scmp.ne.s32.totalorder %s70, %s84
    %p86 = scmp.eq.s32.totalorder %s18, 0
    %p87 = por %p85, %p86
    %s89 = sadd.s32 %s88, 1
    %p92 = scmp.eq.s32.totalorder %s12, 1
    %p93 = scmp.ne.s32.totalorder %s88, %s90
    %p94 = scmp.eq.s32.totalorder %s12, 0
    %p95 = por %p93, %p94
    %p96 = scmp.ne.s32.totalorder %s88, %s90
    %p97 = scmp.eq.s32.totalorder %s17, 1
    %p98 = por %p96, %p97
    %p99 = scmp.ne.s32.totalorder %s90, %s91
    %p100 = scmp.eq.s32.totalorder %s17, 0
    %p101 = por %p99, %p100
    %p102 = scmp.ne.s32.totalorder %s90, %s91
    %p103 = scmp.eq.s32.totalorder %s18, 1
    %p104 = por %p102, %p103
    %p106 = scmp.ne.s32.totalorder %s91, %s105
    %p107 = scmp.eq.s32.totalorder %s18, 0
    %p108 = por %p106, %p107
    %s110 = sadd.s32 %s109, 1
    %p113 = scmp.eq.s32.totalorder %s12, 1
    %p114 = scmp.ne.s32.totalorder %s109, %s111
    %p115 = scmp.eq.s32.totalorder %s12, 0
    %p116 = por %p114, %p115
    %p117 = scmp.ne.s32.totalorder %s109, %s111
    %p118 = scmp.eq.s32.totalorder %s17, 1
    %p119 = por %p117, %p118
    %p120 = scmp.ne.s32.totalorder %s111, %s112
    %p121 = scmp.eq.s32.totalorder %s17, 0
    %p122 = por %p120, %p121
    %p123 = scmp.ne.s32.totalorder %s111, %s112
    %p124 = scmp.eq.s32.totalorder %s18, 1
    %p125 = por %p123, %p124
    %p127 = scmp.ne.s32.totalorder %s112, %s126
    %p128 = scmp.eq.s32.totalorder %s18, 0
    %p129 = por %p127, %p128
    %s130 = ssub.s32 %s12, %s19
    %p131 = scmp.eq.s32.totalorder %s130, 0
    %s133 = sadd.s32 %s132, 1
    %s134 = scalar_select %p131, %s132, %s133
    %p137 = pneg %p131
    %p138 = scmp.eq.s32.totalorder %s12, 1
    %p139 = por %p137, %p138
    %p140 = scmp.ne.s32.totalorder %s132, %s135
    %p141 = scmp.eq.s32.totalorder %s12, 0
    %p142 = por %p140, %p141
    %p143 = scmp.ne.s32.totalorder %s132, %s135
    %p144 = scmp.eq.s32.totalorder %s17, 1
    %p145 = por %p143, %p144
    %p146 = scmp.ne.s32.totalorder %s135, %s136
    %p147 = scmp.eq.s32.totalorder %s17, 0
    %p148 = por %p146, %p147
    %p149 = scmp.ne.s32.totalorder %s135, %s136
    %p150 = scmp.eq.s32.totalorder %s18, 1
    %p151 = por %p149, %p150
    %p153 = scmp.ne.s32.totalorder %s136, %s152
    %p154 = scmp.eq.s32.totalorder %s18, 0
    %p155 = por %p153, %p154
    %s156 = ssub.s32 %s12, %s19
    %p157 = scmp.eq.s32.totalorder %s156, 0
    %s159 = sadd.s32 %s158, 1
    %s160 = scalar_select %p157, %s158, %s159
    %p163 = pneg %p157
    %p164 = scmp.eq.s32.totalorder %s12, 1
    %p165 = por %p163, %p164
    %p166 = scmp.ne.s32.totalorder %s158, %s161
    %p167 = scmp.eq.s32.totalorder %s12, 0
    %p168 = por %p166, %p167
    %p169 = scmp.ne.s32.totalorder %s158, %s161
    %p170 = scmp.eq.s32.totalorder %s17, 1
    %p171 = por %p169, %p170
    %p172 = scmp.ne.s32.totalorder %s161, %s162
    %p173 = scmp.eq.s32.totalorder %s17, 0
    %p174 = por %p172, %p173
    %p175 = scmp.ne.s32.totalorder %s161, %s162
    %p176 = scmp.eq.s32.totalorder %s18, 1
    %p177 = por %p175, %p176
    %p179 = scmp.ne.s32.totalorder %s162, %s178
    %p180 = scmp.eq.s32.totalorder %s18, 0
    %p181 = por %p179, %p180
    %p182 = scmp.le.s32.totalorder 1, %s12
    %p183 = scmp.lt.s32.totalorder %s12, 3
    %p184 = pnand %p182, %p183
    %p185 = pneg %p184
    // Predicated region
    $region9: #{segment_encoder_forward.7} parent=5 // pred_check
      _
    $region10: #{segment_encoder_forward.7} parent=5 // pred_check_branch
      %187 = sbr.rel (%p184) target = $region12
    $region11: #{segment_encoder_forward.7} parent=5 // pred_region
      %s188 = ssub.s32 %s12, 1
      // Predicated region
      $region13: #{segment_encoder_forward.7} parent=11 // pred_check
        %p189 = pneg %p59
      $region14: #{segment_encoder_forward.7} parent=11 // pred_check_branch
        %191 = sbr.rel (%p189) target = $region16
      $region15: #{segment_encoder_forward.7} parent=11 // pred_region
        _
      $region16: #{segment_encoder_forward.7} parent=11 // pred_fallthru
        _
      // Predicated region
      $region17: #{segment_encoder_forward.7} parent=11 // pred_check
        %p192 = pneg %p80
      $region18: #{segment_encoder_forward.7} parent=11 // pred_check_branch
        %194 = sbr.rel (%p192) target = $region20
      $region19: #{segment_encoder_forward.7} parent=11 // pred_region
        _
      $region20: #{segment_encoder_forward.7} parent=11 // pred_fallthru
        _
      // Predicated region
      $region21: #{segment_encoder_forward.7} parent=11 // pred_check
        %p195 = pneg %p101
      $region22: #{segment_encoder_forward.7} parent=11 // pred_check_branch
        %197 = sbr.rel (%p195) target = $region24
      $region23: #{segment_encoder_forward.7} parent=11 // pred_region
        _
      $region24: #{segment_encoder_forward.7} parent=11 // pred_fallthru
        _
      // Predicated region
      $region25: #{segment_encoder_forward.7} parent=11 // pred_check
        %p198 = pneg %p122
      $region26: #{segment_encoder_forward.7} parent=11 // pred_check_branch
        %200 = sbr.rel (%p198) target = $region28
      $region27: #{segment_encoder_forward.7} parent=11 // pred_region
        _
      $region28: #{segment_encoder_forward.7} parent=11 // pred_fallthru
        _
    $region12: #{segment_encoder_forward.7} parent=5 // pred_fallthru
      _
    %p201 = scmp.lt.s32.totalorder %s12, 2
    // Predicated region
    $region29: #{segment_encoder_forward.7} parent=5 // pred_check
      %p202 = pneg %p201
    $region30: #{segment_encoder_forward.7} parent=5 // pred_check_branch
      %204 = sbr.rel (%p202) target = $region32
    $region31: #{segment_encoder_forward.7} parent=5 // pred_region
      // Predicated region
      $region33: #{segment_encoder_forward.7} parent=31 // pred_check
        %p205 = pneg %p32
      $region34: #{segment_encoder_forward.7} parent=31 // pred_check_branch
        %207 = sbr.rel (%p205) target = $region36
      $region35: #{segment_encoder_forward.7} parent=31 // pred_region
        %p208 = scmp.lt.s32.totalorder %s12, 1
        %s209 = scalar_select %p208, %s12, 1
        %s210 = smul.addr %s209, 24
        %s211 = smul.addr %s210, 4
        %s212 = scalar_lea.vmem %s0, %s211
      $region36: #{segment_encoder_forward.7} parent=31 // pred_fallthru
        _
      // Predicated region
      $region37: #{segment_encoder_forward.7} parent=31 // pred_check
        %p213 = pneg %p142
      $region38: #{segment_encoder_forward.7} parent=31 // pred_check_branch
        %215 = sbr.rel (%p213) target = $region40
      $region39: #{segment_encoder_forward.7} parent=31 // pred_region
        %p216 = scmp.lt.s32.totalorder %s12, 1
        %s217 = scalar_select %p216, %s12, 1
        %s218 = smul.addr %s217, 8
        %s219 = smul.addr %s218, 4
        %s220 = scalar_lea.vmem %s5, %s219
      $region40: #{segment_encoder_forward.7} parent=31 // pred_fallthru
        _
    $region32: #{segment_encoder_forward.7} parent=5 // pred_fallthru
      _
    %p221 = scmp.le.s32.totalorder 1, %s12
    %p222 = scmp.lt.s32.totalorder %s12, 3
    %p223 = pnand %p221, %p222
    %p224 = pneg %p223
    // Predicated region
    $region41: #{segment_encoder_forward.7} parent=5 // pred_check
      _
    $region42: #{segment_encoder_forward.7} parent=5 // pred_check_branch
      %226 = sbr.rel (%p223) target = $region44
    $region43: #{segment_encoder_forward.7} parent=5 // pred_region
      %s227 = ssub.s32 %s12, 1
      %p228 = scmp.lt.s32.totalorder %s17, 1
      %s229 = scalar_select %p228, %s17, 1
      %s230 = smul.addr %s229, 24
      %s231 = smul.addr %s230, 4
      %s232 = scalar_lea.vmem %s0, %s231
      %p233 = pneg %p38
      %p234 = pneg %p35
      %p235 = pneg %p59
      %p236 = pneg %p56
      %p237 = pneg %p80
      %p238 = pneg %p77
      %p239 = pneg %p101
      %p240 = pneg %p98
      %p241 = pneg %p122
      %p242 = pneg %p119
      %p243 = scmp.lt.s32.totalorder %s17, 1
      %s244 = scalar_select %p243, %s17, 1
      %s245 = smul.addr %s244, 8
      %s246 = smul.addr %s245, 4
      %s247 = scalar_lea.vmem %s5, %s246
      %p248 = pneg %p148
      %p249 = pneg %p145
      %p250 = pneg %p174
      %p251 = pneg %p171
      %p252 = scmp.lt.s32.totalorder %s17, 1
      %s253 = scalar_select %p252, %s17, 1
      %s254 = smul.addr %s253, 8
      %s255 = smul.addr %s254, 4
      %s256 = scalar_lea.vmem %s6, %s255
      %p257 = scmp.lt.s32.totalorder %s17, 1
      %s258 = scalar_select %p257, %s17, 1
      %s259 = smul.addr %s258, 24
      %s260 = smul.addr %s259, 4
      %s261 = scalar_lea.vmem %s0, %s260
      %p262 = scmp.lt.s32.totalorder %s17, 1
      %s263 = scalar_select %p262, %s17, 1
      %s264 = smul.addr %s263, 8
      %s265 = smul.addr %s264, 4
      %s266 = scalar_lea.vmem %s5, %s265
      %p267 = scmp.lt.s32.totalorder %s17, 1
      %s268 = scalar_select %p267, %s17, 1
      %s269 = smul.addr %s268, 8
      %s270 = smul.addr %s269, 4
      %s271 = scalar_lea.vmem %s6, %s270
      %v273 = vld [vmem:[%s261] sm:$0xf]
      %v274 = vld [vmem:[%s261 + $0x8] sm:$0xf]
      %v275 = vld [vmem:[%s261 + $0x10] sm:$0xf]
      %v276 = vld [vmem:[%s261 + $0x18] sm:$0xf]
      %v277 = vld [vmem:[%s261 + $0x20] sm:$0xf]
      %v278 = vld [vmem:[%s261 + $0x28] sm:$0xf]
      %v279 = vld [vmem:[%s261 + $0x30] sm:$0xf]
      %v280 = vld [vmem:[%s261 + $0x38] sm:$0xf]
      %v289 = vunpack.c.l.b16 %v273
      %v290 = vunpack.c.l.b16 %v274
      %v291 = vunpack.c.l.b16 %v275
      %v292 = vunpack.c.l.b16 %v276
      %v293 = vunpack.c.l.b16 %v277
      %v294 = vunpack.c.l.b16 %v278
      %v295 = vunpack.c.l.b16 %v279
      %v296 = vunpack.c.l.b16 %v280
      %v297 = vpack.c.b16 %v290, %v289
      %v298 = vpack.c.b16 %v292, %v291
      %v299 = vpack.c.b16 %v294, %v293
      %v300 = vpack.c.b16 %v296, %v295
      %vm305 = vcmask 130048
      %306 = vst.msk [vmem:[#allocation2] sm:$0xff] %vm305, %v297
      %307 = vst.msk [vmem:[#allocation2 + $0x20] sm:$0xff] %vm305, %v298
      %308 = vst.msk [vmem:[#allocation2 + $0x40] sm:$0xff] %vm305, %v299
      %309 = vst.msk [vmem:[#allocation2 + $0x60] sm:$0xff] %vm305, %v300
      %v310 = vld [vmem:[%s261] sm:$0xf]
      %v311 = vld [vmem:[%s261 + $0x4] sm:$0x1]
      %v312 = vld [vmem:[%s261 + $0x8] sm:$0xf]
      %v313 = vld [vmem:[%s261 + $0xc] sm:$0x1]
      %v314 = vld [vmem:[%s261 + $0x10] sm:$0xf]
      %v315 = vld [vmem:[%s261 + $0x14] sm:$0x1]
      %v316 = vld [vmem:[%s261 + $0x18] sm:$0xf]
      %v317 = vld [vmem:[%s261 + $0x1c] sm:$0x1]
      %v318 = vld [vmem:[%s261 + $0x20] sm:$0xf]
      %v319 = vld [vmem:[%s261 + $0x24] sm:$0x1]
      %v320 = vld [vmem:[%s261 + $0x28] sm:$0xf]
      %v321 = vld [vmem:[%s261 + $0x2c] sm:$0x1]
      %v322 = vld [vmem:[%s261 + $0x30] sm:$0xf]
      %v323 = vld [vmem:[%s261 + $0x34] sm:$0x1]
      %v324 = vld [vmem:[%s261 + $0x38] sm:$0xf]
      %v325 = vld [vmem:[%s261 + $0x3c] sm:$0x1]
      %vm326 = vsmask.f32 3328
      %vm327 = vsmask.f32 7440
      %vm328 = vmor %vm326, %vm327
      %v330 = vshrl.u32 %v310, 16
      %v332 = vrot.slane %v330, 4
      %v333 = vshll.u32 %v310, 16
      %v335 = vrot.slane %v333, 5
      %v336 = vor.u32 %v332, %v335
      %v337 = vrot.slane %v336, 4
      %v339 = vshll.u32 %v311, 16
      %v341 = vrot.slane %v339, 5
      %v342 = vsel %vm328, %v337, %v341
      %v344 = vshrl.u32 %v312, 16
      %v346 = vrot.slane %v344, 4
      %v347 = vshll.u32 %v312, 16
      %v349 = vrot.slane %v347, 5
      %v350 = vor.u32 %v346, %v349
      %v351 = vrot.slane %v350, 4
      %v353 = vshll.u32 %v313, 16
      %v355 = vrot.slane %v353, 5
      %v356 = vsel %vm328, %v351, %v355
      %v358 = vshrl.u32 %v314, 16
      %v360 = vrot.slane %v358, 4
      %v361 = vshll.u32 %v314, 16
      %v363 = vrot.slane %v361, 5
      %v364 = vor.u32 %v360, %v363
      %v365 = vrot.slane %v364, 4
      %v367 = vshll.u32 %v315, 16
      %v369 = vrot.slane %v367, 5
      %v370 = vsel %vm328, %v365, %v369
      %v372 = vshrl.u32 %v316, 16
      %v374 = vrot.slane %v372, 4
      %v375 = vshll.u32 %v316, 16
      %v377 = vrot.slane %v375, 5
      %v378 = vor.u32 %v374, %v377
      %v379 = vrot.slane %v378, 4
      %v381 = vshll.u32 %v317, 16
      %v383 = vrot.slane %v381, 5
      %v384 = vsel %vm328, %v379, %v383
      %v386 = vshrl.u32 %v318, 16
      %v388 = vrot.slane %v386, 4
      %v389 = vshll.u32 %v318, 16
      %v391 = vrot.slane %v389, 5
      %v392 = vor.u32 %v388, %v391
      %v393 = vrot.slane %v392, 4
      %v395 = vshll.u32 %v319, 16
      %v397 = vrot.slane %v395, 5
      %v398 = vsel %vm328, %v393, %v397
      %v400 = vshrl.u32 %v320, 16
      %v402 = vrot.slane %v400, 4
      %v403 = vshll.u32 %v320, 16
      %v405 = vrot.slane %v403, 5
      %v406 = vor.u32 %v402, %v405
      %v407 = vrot.slane %v406, 4
      %v409 = vshll.u32 %v321, 16
      %v411 = vrot.slane %v409, 5
      %v412 = vsel %vm328, %v407, %v411
      %v414 = vshrl.u32 %v322, 16
      %v416 = vrot.slane %v414, 4
      %v417 = vshll.u32 %v322, 16
      %v419 = vrot.slane %v417, 5
      %v420 = vor.u32 %v416, %v419
      %v421 = vrot.slane %v420, 4
      %v423 = vshll.u32 %v323, 16
      %v425 = vrot.slane %v423, 5
      %v426 = vsel %vm328, %v421, %v425
      %v428 = vshrl.u32 %v324, 16
      %v430 = vrot.slane %v428, 4
      %v431 = vshll.u32 %v324, 16
      %v433 = vrot.slane %v431, 5
      %v434 = vor.u32 %v430, %v433
      %v435 = vrot.slane %v434, 4
      %v437 = vshll.u32 %v325, 16
      %v439 = vrot.slane %v437, 5
      %v440 = vsel %vm328, %v435, %v439
      %v441 = vunpack.c.l.b16 %v342
      %v442 = vunpack.c.l.b16 %v356
      %v443 = vunpack.c.l.b16 %v370
      %v444 = vunpack.c.l.b16 %v384
      %v445 = vunpack.c.l.b16 %v398
      %v446 = vunpack.c.l.b16 %v412
      %v447 = vunpack.c.l.b16 %v426
      %v448 = vunpack.c.l.b16 %v440
      %v449 = vpack.c.b16 %v442, %v441
      %v450 = vpack.c.b16 %v444, %v443
      %v451 = vpack.c.b16 %v446, %v445
      %v452 = vpack.c.b16 %v448, %v447
      %453 = vrot.lane.b32.xlu0 %v449, 16
      %v454 = vpop.permute.xlu0 %453
      %455 = vrot.lane.b32.xlu0 %v450, 16
      %v456 = vpop.permute.xlu0 %455
      %457 = vrot.lane.b32.xlu0 %v451, 16
      %v458 = vpop.permute.xlu0 %457
      %459 = vrot.lane.b32.xlu0 %v452, 16
      %v460 = vpop.permute.xlu0 %459
      %vm465 = vcmask 261248
      %466 = vst.msk [vmem:[#allocation2] sm:$0xff] %vm465, %v454
      %467 = vst.msk [vmem:[#allocation2 + $0x20] sm:$0xff] %vm465, %v456
      %468 = vst.msk [vmem:[#allocation2 + $0x40] sm:$0xff] %vm465, %v458
      %469 = vst.msk [vmem:[#allocation2 + $0x60] sm:$0xff] %vm465, %v460
      %v470 = vld [vmem:[%s261] sm:$0xe]
      %v471 = vld [vmem:[%s261 + $0x4] sm:$0x1]
      %v472 = vld [vmem:[%s261 + $0x8] sm:$0xe]
      %v473 = vld [vmem:[%s261 + $0xc] sm:$0x1]
      %v474 = vld [vmem:[%s261 + $0x10] sm:$0xe]
      %v475 = vld [vmem:[%s261 + $0x14] sm:$0x1]
      %v476 = vld [vmem:[%s261 + $0x18] sm:$0xe]
      %v477 = vld [vmem:[%s261 + $0x1c] sm:$0x1]
      %v478 = vld [vmem:[%s261 + $0x20] sm:$0xe]
      %v479 = vld [vmem:[%s261 + $0x24] sm:$0x1]
      %v480 = vld [vmem:[%s261 + $0x28] sm:$0xe]
      %v481 = vld [vmem:[%s261 + $0x2c] sm:$0x1]
      %v482 = vld [vmem:[%s261 + $0x30] sm:$0xe]
      %v483 = vld [vmem:[%s261 + $0x34] sm:$0x1]
      %v484 = vld [vmem:[%s261 + $0x38] sm:$0xe]
      %v485 = vld [vmem:[%s261 + $0x3c] sm:$0x1]
      %vm502 = vcmask 1042432
      %vm503 = vcmask 1046532
      %vm504 = vmor %vm502, %vm503
      %v505 = vrot.slane %v470, 5
      %v506 = vrot.slane %v505, 4
      %v507 = vrot.slane %v471, 5
      %v508 = vsel %vm504, %v506, %v507
      %v509 = vrot.slane %v472, 5
      %v510 = vrot.slane %v509, 4
      %v511 = vrot.slane %v473, 5
      %v512 = vsel %vm504, %v510, %v511
      %v513 = vrot.slane %v474, 5
      %v514 = vrot.slane %v513, 4
      %v515 = vrot.slane %v475, 5
      %v516 = vsel %vm504, %v514, %v515
      %v517 = vrot.slane %v476, 5
      %v518 = vrot.slane %v517, 4
      %v519 = vrot.slane %v477, 5
      %v520 = vsel %vm504, %v518, %v519
      %v521 = vrot.slane %v478, 5
      %v522 = vrot.slane %v521, 4
      %v523 = vrot.slane %v479, 5
      %v524 = vsel %vm504, %v522, %v523
      %v525 = vrot.slane %v480, 5
      %v526 = vrot.slane %v525, 4
      %v527 = vrot.slane %v481, 5
      %v528 = vsel %vm504, %v526, %v527
      %v529 = vrot.slane %v482, 5
      %v530 = vrot.slane %v529, 4
      %v531 = vrot.slane %v483, 5
      %v532 = vsel %vm504, %v530, %v531
      %v533 = vrot.slane %v484, 5
      %v534 = vrot.slane %v533, 4
      %v535 = vrot.slane %v485, 5
      %v536 = vsel %vm504, %v534, %v535
      %v537 = vunpack.c.l.b16 %v508
      %v538 = vunpack.c.l.b16 %v512
      %v539 = vunpack.c.l.b16 %v516
      %v540 = vunpack.c.l.b16 %v520
      %v541 = vunpack.c.l.b16 %v524
      %v542 = vunpack.c.l.b16 %v528
      %v543 = vunpack.c.l.b16 %v532
      %v544 = vunpack.c.l.b16 %v536
      %v545 = vpack.c.b16 %v538, %v537
      %v546 = vpack.c.b16 %v540, %v539
      %v547 = vpack.c.b16 %v542, %v541
      %v548 = vpack.c.b16 %v544, %v543
      %549 = vrot.lane.b32.xlu0 %v545, 32
      %v550 = vpop.permute.xlu0 %549
      %551 = vrot.lane.b32.xlu0 %v546, 32
      %v552 = vpop.permute.xlu0 %551
      %553 = vrot.lane.b32.xlu0 %v547, 32
      %v554 = vpop.permute.xlu0 %553
      %555 = vrot.lane.b32.xlu0 %v548, 32
      %v556 = vpop.permute.xlu0 %555
      %vm561 = vcmask 392448
      %562 = vst.msk [vmem:[#allocation2] sm:$0xff] %vm561, %v550
      %563 = vst.msk [vmem:[#allocation2 + $0x20] sm:$0xff] %vm561, %v552
      %564 = vst.msk [vmem:[#allocation2 + $0x40] sm:$0xff] %vm561, %v554
      %565 = vst.msk [vmem:[#allocation2 + $0x60] sm:$0xff] %vm561, %v556
      %v566 = vld [vmem:[%s261] sm:$0xe]
      %v567 = vld [vmem:[%s261 + $0x4] sm:$0x3]
      %v568 = vld [vmem:[%s261 + $0x8] sm:$0xe]
      %v569 = vld [vmem:[%s261 + $0xc] sm:$0x3]
      %v570 = vld [vmem:[%s261 + $0x10] sm:$0xe]
      %v571 = vld [vmem:[%s261 + $0x14] sm:$0x3]
      %v572 = vld [vmem:[%s261 + $0x18] sm:$0xe]
      %v573 = vld [vmem:[%s261 + $0x1c] sm:$0x3]
      %v574 = vld [vmem:[%s261 + $0x20] sm:$0xe]
      %v575 = vld [vmem:[%s261 + $0x24] sm:$0x3]
      %v576 = vld [vmem:[%s261 + $0x28] sm:$0xe]
      %v577 = vld [vmem:[%s261 + $0x2c] sm:$0x3]
      %v578 = vld [vmem:[%s261 + $0x30] sm:$0xe]
      %v579 = vld [vmem:[%s261 + $0x34] sm:$0x3]
      %v580 = vld [vmem:[%s261 + $0x38] sm:$0xe]
      %v581 = vld [vmem:[%s261 + $0x3c] sm:$0x3]
      %vm582 = vsmask.f32 2304
      %vm583 = vsmask.f32 6416
      %vm584 = vmor %vm582, %vm583
      %v586 = vshrl.u32 %v566, 16
      %v588 = vrot.slane %v586, 5
      %v589 = vshll.u32 %v566, 16
      %v591 = vrot.slane %v589, 6
      %v592 = vor.u32 %v588, %v591
      %v593 = vrot.slane %v592, 4
      %v595 = vshrl.u32 %v567, 16
      %v597 = vrot.slane %v595, 5
      %v598 = vshll.u32 %v567, 16
      %v600 = vrot.slane %v598, 6
      %v601 = vor.u32 %v597, %v600
      %v602 = vsel %vm584, %v593, %v601
      %v604 = vshrl.u32 %v568, 16
      %v606 = vrot.slane %v604, 5
      %v607 = vshll.u32 %v568, 16
      %v609 = vrot.slane %v607, 6
      %v610 = vor.u32 %v606, %v609
      %v611 = vrot.slane %v610, 4
      %v613 = vshrl.u32 %v569, 16
      %v615 = vrot.slane %v613, 5
      %v616 = vshll.u32 %v569, 16
      %v618 = vrot.slane %v616, 6
      %v619 = vor.u32 %v615, %v618
      %v620 = vsel %vm584, %v611, %v619
      %v622 = vshrl.u32 %v570, 16
      %v624 = vrot.slane %v622, 5
      %v625 = vshll.u32 %v570, 16
      %v627 = vrot.slane %v625, 6
      %v628 = vor.u32 %v624, %v627
      %v629 = vrot.slane %v628, 4
      %v631 = vshrl.u32 %v571, 16
      %v633 = vrot.slane %v631, 5
      %v634 = vshll.u32 %v571, 16
      %v636 = vrot.slane %v634, 6
      %v637 = vor.u32 %v633, %v636
      %v638 = vsel %vm584, %v629, %v637
      %v640 = vshrl.u32 %v572, 16
      %v642 = vrot.slane %v640, 5
      %v643 = vshll.u32 %v572, 16
      %v645 = vrot.slane %v643, 6
      %v646 = vor.u32 %v642, %v645
      %v647 = vrot.slane %v646, 4
      %v649 = vshrl.u32 %v573, 16
      %v651 = vrot.slane %v649, 5
      %v652 = vshll.u32 %v573, 16
      %v654 = vrot.slane %v652, 6
      %v655 = vor.u32 %v651, %v654
      %v656 = vsel %vm584, %v647, %v655
      %v658 = vshrl.u32 %v574, 16
      %v660 = vrot.slane %v658, 5
      %v661 = vshll.u32 %v574, 16
      %v663 = vrot.slane %v661, 6
      %v664 = vor.u32 %v660, %v663
      %v665 = vrot.slane %v664, 4
      %v667 = vshrl.u32 %v575, 16
      %v669 = vrot.slane %v667, 5
      %v670 = vshll.u32 %v575, 16
      %v672 = vrot.slane %v670, 6
      %v673 = vor.u32 %v669, %v672
      %v674 = vsel %vm584, %v665, %v673
      %v676 = vshrl.u32 %v576, 16
      %v678 = vrot.slane %v676, 5
      %v679 = vshll.u32 %v576, 16
      %v681 = vrot.slane %v679, 6
      %v682 = vor.u32 %v678, %v681
      %v683 = vrot.slane %v682, 4
      %v685 = vshrl.u32 %v577, 16
      %v687 = vrot.slane %v685, 5
      %v688 = vshll.u32 %v577, 16
      %v690 = vrot.slane %v688, 6
      %v691 = vor.u32 %v687, %v690
      %v692 = vsel %vm584, %v683, %v691
      %v694 = vshrl.u32 %v578, 16
      %v696 = vrot.slane %v694, 5
      %v697 = vshll.u32 %v578, 16
      %v699 = vrot.slane %v697, 6
      %v700 = vor.u32 %v696, %v699
      %v701 = vrot.slane %v700, 4
      %v703 = vshrl.u32 %v579, 16
      %v705 = vrot.slane %v703, 5
      %v706 = vshll.u32 %v579, 16
      %v708 = vrot.slane %v706, 6
      %v709 = vor.u32 %v705, %v708
      %v710 = vsel %vm584, %v701, %v709
      %v712 = vshrl.u32 %v580, 16
      %v714 = vrot.slane %v712, 5
      %v715 = vshll.u32 %v580, 16
      %v717 = vrot.slane %v715, 6
      %v718 = vor.u32 %v714, %v717
      %v719 = vrot.slane %v718, 4
      %v721 = vshrl.u32 %v581, 16
      %v723 = vrot.slane %v721, 5
      %v724 = vshll.u32 %v581, 16
      %v726 = vrot.slane %v724, 6
      %v727 = vor.u32 %v723, %v726
      %v728 = vsel %vm584, %v719, %v727
      %v729 = vunpack.c.l.b16 %v602
      %v730 = vunpack.c.l.b16 %v620
      %v731 = vunpack.c.l.b16 %v638
      %v732 = vunpack.c.l.b16 %v656
      %v733 = vunpack.c.l.b16 %v674
      %v734 = vunpack.c.l.b16 %v692
      %v735 = vunpack.c.l.b16 %v710
      %v736 = vunpack.c.l.b16 %v728
      %v737 = vpack.c.b16 %v730, %v729
      %v738 = vpack.c.b16 %v732, %v731
      %v739 = vpack.c.b16 %v734, %v733
      %v740 = vpack.c.b16 %v736, %v735
      %741 = vrot.lane.b32.xlu0 %v737, 48
      %v742 = vpop.permute.xlu0 %741
      %743 = vrot.lane.b32.xlu0 %v738, 48
      %v744 = vpop.permute.xlu0 %743
      %745 = vrot.lane.b32.xlu0 %v739, 48
      %v746 = vpop.permute.xlu0 %745
      %747 = vrot.lane.b32.xlu0 %v740, 48
      %v748 = vpop.permute.xlu0 %747
      %vm753 = vcmask 523648
      %754 = vst.msk [vmem:[#allocation2] sm:$0xff] %vm753, %v742
      %755 = vst.msk [vmem:[#allocation2 + $0x20] sm:$0xff] %vm753, %v744
      %756 = vst.msk [vmem:[#allocation2 + $0x40] sm:$0xff] %vm753, %v746
      %757 = vst.msk [vmem:[#allocation2 + $0x60] sm:$0xff] %vm753, %v748
      %v758 = vld [vmem:[%s261] sm:$0xc]
      %v759 = vld [vmem:[%s261 + $0x4] sm:$0x3]
      %v760 = vld [vmem:[%s261 + $0x8] sm:$0xc]
      %v761 = vld [vmem:[%s261 + $0xc] sm:$0x3]
      %v762 = vld [vmem:[%s261 + $0x10] sm:$0xc]
      %v763 = vld [vmem:[%s261 + $0x14] sm:$0x3]
      %v764 = vld [vmem:[%s261 + $0x18] sm:$0xc]
      %v765 = vld [vmem:[%s261 + $0x1c] sm:$0x3]
      %v766 = vld [vmem:[%s261 + $0x20] sm:$0xc]
      %v767 = vld [vmem:[%s261 + $0x24] sm:$0x3]
      %v768 = vld [vmem:[%s261 + $0x28] sm:$0xc]
      %v769 = vld [vmem:[%s261 + $0x2c] sm:$0x3]
      %v770 = vld [vmem:[%s261 + $0x30] sm:$0xc]
      %v771 = vld [vmem:[%s261 + $0x34] sm:$0x3]
      %v772 = vld [vmem:[%s261 + $0x38] sm:$0xc]
      %v773 = vld [vmem:[%s261 + $0x3c] sm:$0x3]
      %vm790 = vcmask 1041408
      %vm791 = vcmask 1045508
      %vm792 = vmor %vm790, %vm791
      %v793 = vrot.slane %v758, 6
      %v794 = vrot.slane %v793, 4
      %v795 = vrot.slane %v759, 6
      %v796 = vsel %vm792, %v794, %v795
      %v797 = vrot.slane %v760, 6
      %v798 = vrot.slane %v797, 4
      %v799 = vrot.slane %v761, 6
      %v800 = vsel %vm792, %v798, %v799
      %v801 = vrot.slane %v762, 6
      %v802 = vrot.slane %v801, 4
      %v803 = vrot.slane %v763, 6
      %v804 = vsel %vm792, %v802, %v803
      %v805 = vrot.slane %v764, 6
      %v806 = vrot.slane %v805, 4
      %v807 = vrot.slane %v765, 6
      %v808 = vsel %vm792, %v806, %v807
      %v809 = vrot.slane %v766, 6
      %v810 = vrot.slane %v809, 4
      %v811 = vrot.slane %v767, 6
      %v812 = vsel %vm792, %v810, %v811
      %v813 = vrot.slane %v768, 6
      %v814 = vrot.slane %v813, 4
      %v815 = vrot.slane %v769, 6
      %v816 = vsel %vm792, %v814, %v815
      %v817 = vrot.slane %v770, 6
      %v818 = vrot.slane %v817, 4
      %v819 = vrot.slane %v771, 6
      %v820 = vsel %vm792, %v818, %v819
      %v821 = vrot.slane %v772, 6
      %v822 = vrot.slane %v821, 4
      %v823 = vrot.slane %v773, 6
      %v824 = vsel %vm792, %v822, %v823
      %v825 = vunpack.c.l.b16 %v796
      %v826 = vunpack.c.l.b16 %v800
      %v827 = vunpack.c.l.b16 %v804
      %v828 = vunpack.c.l.b16 %v808
      %v829 = vunpack.c.l.b16 %v812
      %v830 = vunpack.c.l.b16 %v816
      %v831 = vunpack.c.l.b16 %v820
      %v832 = vunpack.c.l.b16 %v824
      %v833 = vpack.c.b16 %v826, %v825
      %v834 = vpack.c.b16 %v828, %v827
      %v835 = vpack.c.b16 %v830, %v829
      %v836 = vpack.c.b16 %v832, %v831
      %837 = vrot.lane.b32.xlu0 %v833, 64
      %v838 = vpop.permute.xlu0 %837
      %839 = vrot.lane.b32.xlu0 %v834, 64
      %v840 = vpop.permute.xlu0 %839
      %841 = vrot.lane.b32.xlu0 %v835, 64
      %v842 = vpop.permute.xlu0 %841
      %843 = vrot.lane.b32.xlu0 %v836, 64
      %v844 = vpop.permute.xlu0 %843
      %vm849 = vcmask 654848
      %850 = vst.msk [vmem:[#allocation2] sm:$0xff] %vm849, %v838
      %851 = vst.msk [vmem:[#allocation2 + $0x20] sm:$0xff] %vm849, %v840
      %852 = vst.msk [vmem:[#allocation2 + $0x40] sm:$0xff] %vm849, %v842
      %853 = vst.msk [vmem:[#allocation2 + $0x60] sm:$0xff] %vm849, %v844
      %s854 = scalar_lea.vmem %s261, 8
      %v855 = vld [vmem:[%s854] sm:$0xf]
      %v856 = vld [vmem:[%s854 + $0x8] sm:$0xf]
      %v857 = vld [vmem:[%s854 + $0x10] sm:$0xf]
      %v858 = vld [vmem:[%s854 + $0x18] sm:$0xf]
      %v859 = vld [vmem:[%s854 + $0x20] sm:$0xf]
      %v860 = vld [vmem:[%s854 + $0x28] sm:$0xf]
      %v861 = vld [vmem:[%s854 + $0x30] sm:$0xf]
      %v862 = vld [vmem:[%s854 + $0x38] sm:$0xf]
      %v871 = vunpack.c.l.b16 %v855
      %v872 = vunpack.c.l.b16 %v856
      %v873 = vunpack.c.l.b16 %v857
      %v874 = vunpack.c.l.b16 %v858
      %v875 = vunpack.c.l.b16 %v859
      %v876 = vunpack.c.l.b16 %v860
      %v877 = vunpack.c.l.b16 %v861
      %v878 = vunpack.c.l.b16 %v862
      %v879 = vpack.c.b16 %v872, %v871
      %v880 = vpack.c.b16 %v874, %v873
      %v881 = vpack.c.b16 %v876, %v875
      %v882 = vpack.c.b16 %v878, %v877
      %883 = vrot.lane.b32.xlu0 %v879, 80
      %v884 = vpop.permute.xlu0 %883
      %885 = vrot.lane.b32.xlu0 %v880, 80
      %v886 = vpop.permute.xlu0 %885
      %887 = vrot.lane.b32.xlu0 %v881, 80
      %v888 = vpop.permute.xlu0 %887
      %889 = vrot.lane.b32.xlu0 %v882, 80
      %v890 = vpop.permute.xlu0 %889
      %vm895 = vcmask 786048
      %896 = vst.msk [vmem:[#allocation2] sm:$0xff] %vm895, %v884
      %897 = vst.msk [vmem:[#allocation2 + $0x20] sm:$0xff] %vm895, %v886
      %898 = vst.msk [vmem:[#allocation2 + $0x40] sm:$0xff] %vm895, %v888
      %899 = vst.msk [vmem:[#allocation2 + $0x60] sm:$0xff] %vm895, %v890
      %v900 = vld [vmem:[%s854] sm:$0xf]
      %v901 = vld [vmem:[%s854 + $0x4] sm:$0x1]
      %v902 = vld [vmem:[%s854 + $0x8] sm:$0xf]
      %v903 = vld [vmem:[%s854 + $0xc] sm:$0x1]
      %v904 = vld [vmem:[%s854 + $0x10] sm:$0xf]
      %v905 = vld [vmem:[%s854 + $0x14] sm:$0x1]
      %v906 = vld [vmem:[%s854 + $0x18] sm:$0xf]
      %v907 = vld [vmem:[%s854 + $0x1c] sm:$0x1]
      %v908 = vld [vmem:[%s854 + $0x20] sm:$0xf]
      %v909 = vld [vmem:[%s854 + $0x24] sm:$0x1]
      %v910 = vld [vmem:[%s854 + $0x28] sm:$0xf]
      %v911 = vld [vmem:[%s854 + $0x2c] sm:$0x1]
      %v912 = vld [vmem:[%s854 + $0x30] sm:$0xf]
      %v913 = vld [vmem:[%s854 + $0x34] sm:$0x1]
      %v914 = vld [vmem:[%s854 + $0x38] sm:$0xf]
      %v915 = vld [vmem:[%s854 + $0x3c] sm:$0x1]
      %v917 = vshrl.u32 %v900, 16
      %v919 = vrot.slane %v917, 4
      %v920 = vshll.u32 %v900, 16
      %v922 = vrot.slane %v920, 5
      %v923 = vor.u32 %v919, %v922
      %v924 = vrot.slane %v923, 4
      %v926 = vshll.u32 %v901, 16
      %v928 = vrot.slane %v926, 5
      %v929 = vsel %vm328, %v924, %v928
      %v931 = vshrl.u32 %v902, 16
      %v933 = vrot.slane %v931, 4
      %v934 = vshll.u32 %v902, 16
      %v936 = vrot.slane %v934, 5
      %v937 = vor.u32 %v933, %v936
      %v938 = vrot.slane %v937, 4
      %v940 = vshll.u32 %v903, 16
      %v942 = vrot.slane %v940, 5
      %v943 = vsel %vm328, %v938, %v942
      %v945 = vshrl.u32 %v904, 16
      %v947 = vrot.slane %v945, 4
      %v948 = vshll.u32 %v904, 16
      %v950 = vrot.slane %v948, 5
      %v951 = vor.u32 %v947, %v950
      %v952 = vrot.slane %v951, 4
      %v954 = vshll.u32 %v905, 16
      %v956 = vrot.slane %v954, 5
      %v957 = vsel %vm328, %v952, %v956
      %v959 = vshrl.u32 %v906, 16
      %v961 = vrot.slane %v959, 4
      %v962 = vshll.u32 %v906, 16
      %v964 = vrot.slane %v962, 5
      %v965 = vor.u32 %v961, %v964
      %v966 = vrot.slane %v965, 4
      %v968 = vshll.u32 %v907, 16
      %v970 = vrot.slane %v968, 5
      %v971 = vsel %vm328, %v966, %v970
      %v973 = vshrl.u32 %v908, 16
      %v975 = vrot.slane %v973, 4
      %v976 = vshll.u32 %v908, 16
      %v978 = vrot.slane %v976, 5
      %v979 = vor.u32 %v975, %v978
      %v980 = vrot.slane %v979, 4
      %v982 = vshll.u32 %v909, 16
      %v984 = vrot.slane %v982, 5
      %v985 = vsel %vm328, %v980, %v984
      %v987 = vshrl.u32 %v910, 16
      %v989 = vrot.slane %v987, 4
      %v990 = vshll.u32 %v910, 16
      %v992 = vrot.slane %v990, 5
      %v993 = vor.u32 %v989, %v992
      %v994 = vrot.slane %v993, 4
      %v996 = vshll.u32 %v911, 16
      %v998 = vrot.slane %v996, 5
      %v999 = vsel %vm328, %v994, %v998
      %v1001 = vshrl.u32 %v912, 16
      %v1003 = vrot.slane %v1001, 4
      %v1004 = vshll.u32 %v912, 16
      %v1006 = vrot.slane %v1004, 5
      %v1007 = vor.u32 %v1003, %v1006
      %v1008 = vrot.slane %v1007, 4
      %v1010 = vshll.u32 %v913, 16
      %v1012 = vrot.slane %v1010, 5
      %v1013 = vsel %vm328, %v1008, %v1012
      %v1015 = vshrl.u32 %v914, 16
      %v1017 = vrot.slane %v1015, 4
      %v1018 = vshll.u32 %v914, 16
      %v1020 = vrot.slane %v1018, 5
      %v1021 = vor.u32 %v1017, %v1020
      %v1022 = vrot.slane %v1021, 4
      %v1024 = vshll.u32 %v915, 16
      %v1026 = vrot.slane %v1024, 5
      %v1027 = vsel %vm328, %v1022, %v1026
      %v1028 = vunpack.c.l.b16 %v929
      %v1029 = vunpack.c.l.b16 %v943
      %v1030 = vunpack.c.l.b16 %v957
      %v1031 = vunpack.c.l.b16 %v971
      %v1032 = vunpack.c.l.b16 %v985
      %v1033 = vunpack.c.l.b16 %v999
      %v1034 = vunpack.c.l.b16 %v1013
      %v1035 = vunpack.c.l.b16 %v1027
      %v1036 = vpack.c.b16 %v1029, %v1028
      %v1037 = vpack.c.b16 %v1031, %v1030
      %v1038 = vpack.c.b16 %v1033, %v1032
      %v1039 = vpack.c.b16 %v1035, %v1034
      %1040 = vrot.lane.b32.xlu0 %v1036, 96
      %v1041 = vpop.permute.xlu0 %1040
      %1042 = vrot.lane.b32.xlu0 %v1037, 96
      %v1043 = vpop.permute.xlu0 %1042
      %1044 = vrot.lane.b32.xlu0 %v1038, 96
      %v1045 = vpop.permute.xlu0 %1044
      %1046 = vrot.lane.b32.xlu0 %v1039, 96
      %v1047 = vpop.permute.xlu0 %1046
      %vm1052 = vcmask 917248
      %1053 = vst.msk [vmem:[#allocation2] sm:$0xff] %vm1052, %v1041
      %1054 = vst.msk [vmem:[#allocation2 + $0x20] sm:$0xff] %vm1052, %v1043
      %1055 = vst.msk [vmem:[#allocation2 + $0x40] sm:$0xff] %vm1052, %v1045
      %1056 = vst.msk [vmem:[#allocation2 + $0x60] sm:$0xff] %vm1052, %v1047
      %v1057 = vld [vmem:[%s854] sm:$0xe]
      %v1058 = vld [vmem:[%s854 + $0x4] sm:$0x1]
      %v1059 = vld [vmem:[%s854 + $0x8] sm:$0xe]
      %v1060 = vld [vmem:[%s854 + $0xc] sm:$0x1]
      %v1061 = vld [vmem:[%s854 + $0x10] sm:$0xe]
      %v1062 = vld [vmem:[%s854 + $0x14] sm:$0x1]
      %v1063 = vld [vmem:[%s854 + $0x18] sm:$0xe]
      %v1064 = vld [vmem:[%s854 + $0x1c] sm:$0x1]
      %v1065 = vld [vmem:[%s854 + $0x20] sm:$0xe]
      %v1066 = vld [vmem:[%s854 + $0x24] sm:$0x1]
      %v1067 = vld [vmem:[%s854 + $0x28] sm:$0xe]
      %v1068 = vld [vmem:[%s854 + $0x2c] sm:$0x1]
      %v1069 = vld [vmem:[%s854 + $0x30] sm:$0xe]
      %v1070 = vld [vmem:[%s854 + $0x34] sm:$0x1]
      %v1071 = vld [vmem:[%s854 + $0x38] sm:$0xe]
      %v1072 = vld [vmem:[%s854 + $0x3c] sm:$0x1]
      %v1089 = vrot.slane %v1057, 5
      %v1090 = vrot.slane %v1089, 4
      %v1091 = vrot.slane %v1058, 5
      %v1092 = vsel %vm504, %v1090, %v1091
      %v1093 = vrot.slane %v1059, 5
      %v1094 = vrot.slane %v1093, 4
      %v1095 = vrot.slane %v1060, 5
      %v1096 = vsel %vm504, %v1094, %v1095
      %v1097 = vrot.slane %v1061, 5
      %v1098 = vrot.slane %v1097, 4
      %v1099 = vrot.slane %v1062, 5
      %v1100 = vsel %vm504, %v1098, %v1099
      %v1101 = vrot.slane %v1063, 5
      %v1102 = vrot.slane %v1101, 4
      %v1103 = vrot.slane %v1064, 5
      %v1104 = vsel %vm504, %v1102, %v1103
      %v1105 = vrot.slane %v1065, 5
      %v1106 = vrot.slane %v1105, 4
      %v1107 = vrot.slane %v1066, 5
      %v1108 = vsel %vm504, %v1106, %v1107
      %v1109 = vrot.slane %v1067, 5
      %v1110 = vrot.slane %v1109, 4
      %v1111 = vrot.slane %v1068, 5
      %v1112 = vsel %vm504, %v1110, %v1111
      %v1113 = vrot.slane %v1069, 5
      %v1114 = vrot.slane %v1113, 4
      %v1115 = vrot.slane %v1070, 5
      %v1116 = vsel %vm504, %v1114, %v1115
      %v1117 = vrot.slane %v1071, 5
      %v1118 = vrot.slane %v1117, 4
      %v1119 = vrot.slane %v1072, 5
      %v1120 = vsel %vm504, %v1118, %v1119
      %v1121 = vunpack.c.l.b16 %v1092
      %v1122 = vunpack.c.l.b16 %v1096
      %v1123 = vunpack.c.l.b16 %v1100
      %v1124 = vunpack.c.l.b16 %v1104
      %v1125 = vunpack.c.l.b16 %v1108
      %v1126 = vunpack.c.l.b16 %v1112
      %v1127 = vunpack.c.l.b16 %v1116
      %v1128 = vunpack.c.l.b16 %v1120
      %v1129 = vpack.c.b16 %v1122, %v1121
      %v1130 = vpack.c.b16 %v1124, %v1123
      %v1131 = vpack.c.b16 %v1126, %v1125
      %v1132 = vpack.c.b16 %v1128, %v1127
      %1133 = vrot.lane.b32.xlu0 %v1129, 112
      %v1134 = vpop.permute.xlu0 %1133
      %1135 = vrot.lane.b32.xlu0 %v1130, 112
      %v1136 = vpop.permute.xlu0 %1135
      %1137 = vrot.lane.b32.xlu0 %v1131, 112
      %v1138 = vpop.permute.xlu0 %1137
      %1139 = vrot.lane.b32.xlu0 %v1132, 112
      %v1140 = vpop.permute.xlu0 %1139
      %vm1145 = vcmask 1048448
      %1146 = vst.msk [vmem:[#allocation2] sm:$0xff] %vm1145, %v1134
      %1147 = vst.msk [vmem:[#allocation2 + $0x20] sm:$0xff] %vm1145, %v1136
      %1148 = vst.msk [vmem:[#allocation2 + $0x40] sm:$0xff] %vm1145, %v1138
      %1149 = vst.msk [vmem:[#allocation2 + $0x60] sm:$0xff] %vm1145, %v1140
      %v1150 = vld [vmem:[%s854] sm:$0xe]
      %v1151 = vld [vmem:[%s854 + $0x4] sm:$0x3]
      %v1152 = vld [vmem:[%s854 + $0x8] sm:$0xe]
      %v1153 = vld [vmem:[%s854 + $0xc] sm:$0x3]
      %v1154 = vld [vmem:[%s854 + $0x10] sm:$0xe]
      %v1155 = vld [vmem:[%s854 + $0x14] sm:$0x3]
      %v1156 = vld [vmem:[%s854 + $0x18] sm:$0xe]
      %v1157 = vld [vmem:[%s854 + $0x1c] sm:$0x3]
      %v1158 = vld [vmem:[%s854 + $0x20] sm:$0xe]
      %v1159 = vld [vmem:[%s854 + $0x24] sm:$0x3]
      %v1160 = vld [vmem:[%s854 + $0x28] sm:$0xe]
      %v1161 = vld [vmem:[%s854 + $0x2c] sm:$0x3]
      %v1162 = vld [vmem:[%s854 + $0x30] sm:$0xe]
      %v1163 = vld [vmem:[%s854 + $0x34] sm:$0x3]
      %v1164 = vld [vmem:[%s854 + $0x38] sm:$0xe]
      %v1165 = vld [vmem:[%s854 + $0x3c] sm:$0x3]
      %v1167 = vshrl.u32 %v1150, 16
      %v1169 = vrot.slane %v1167, 5
      %v1170 = vshll.u32 %v1150, 16
      %v1172 = vrot.slane %v1170, 6
      %v1173 = vor.u32 %v1169, %v1172
      %v1174 = vrot.slane %v1173, 4
      %v1176 = vshrl.u32 %v1151, 16
      %v1178 = vrot.slane %v1176, 5
      %v1179 = vshll.u32 %v1151, 16
      %v1181 = vrot.slane %v1179, 6
      %v1182 = vor.u32 %v1178, %v1181
      %v1183 = vsel %vm584, %v1174, %v1182
      %v1185 = vshrl.u32 %v1152, 16
      %v1187 = vrot.slane %v1185, 5
      %v1188 = vshll.u32 %v1152, 16
      %v1190 = vrot.slane %v1188, 6
      %v1191 = vor.u32 %v1187, %v1190
      %v1192 = vrot.slane %v1191, 4
      %v1194 = vshrl.u32 %v1153, 16
      %v1196 = vrot.slane %v1194, 5
      %v1197 = vshll.u32 %v1153, 16
      %v1199 = vrot.slane %v1197, 6
      %v1200 = vor.u32 %v1196, %v1199
      %v1201 = vsel %vm584, %v1192, %v1200
      %v1203 = vshrl.u32 %v1154, 16
      %v1205 = vrot.slane %v1203, 5
      %v1206 = vshll.u32 %v1154, 16
      %v1208 = vrot.slane %v1206, 6
      %v1209 = vor.u32 %v1205, %v1208
      %v1210 = vrot.slane %v1209, 4
      %v1212 = vshrl.u32 %v1155, 16
      %v1214 = vrot.slane %v1212, 5
      %v1215 = vshll.u32 %v1155, 16
      %v1217 = vrot.slane %v1215, 6
      %v1218 = vor.u32 %v1214, %v1217
      %v1219 = vsel %vm584, %v1210, %v1218
      %v1221 = vshrl.u32 %v1156, 16
      %v1223 = vrot.slane %v1221, 5
      %v1224 = vshll.u32 %v1156, 16
      %v1226 = vrot.slane %v1224, 6
      %v1227 = vor.u32 %v1223, %v1226
      %v1228 = vrot.slane %v1227, 4
      %v1230 = vshrl.u32 %v1157, 16
      %v1232 = vrot.slane %v1230, 5
      %v1233 = vshll.u32 %v1157, 16
      %v1235 = vrot.slane %v1233, 6
      %v1236 = vor.u32 %v1232, %v1235
      %v1237 = vsel %vm584, %v1228, %v1236
      %v1239 = vshrl.u32 %v1158, 16
      %v1241 = vrot.slane %v1239, 5
      %v1242 = vshll.u32 %v1158, 16
      %v1244 = vrot.slane %v1242, 6
      %v1245 = vor.u32 %v1241, %v1244
      %v1246 = vrot.slane %v1245, 4
      %v1248 = vshrl.u32 %v1159, 16
      %v1250 = vrot.slane %v1248, 5
      %v1251 = vshll.u32 %v1159, 16
      %v1253 = vrot.slane %v1251, 6
      %v1254 = vor.u32 %v1250, %v1253
      %v1255 = vsel %vm584, %v1246, %v1254
      %v1257 = vshrl.u32 %v1160, 16
      %v1259 = vrot.slane %v1257, 5
      %v1260 = vshll.u32 %v1160, 16
      %v1262 = vrot.slane %v1260, 6
      %v1263 = vor.u32 %v1259, %v1262
      %v1264 = vrot.slane %v1263, 4
      %v1266 = vshrl.u32 %v1161, 16
      %v1268 = vrot.slane %v1266, 5
      %v1269 = vshll.u32 %v1161, 16
      %v1271 = vrot.slane %v1269, 6
      %v1272 = vor.u32 %v1268, %v1271
      %v1273 = vsel %vm584, %v1264, %v1272
      %v1275 = vshrl.u32 %v1162, 16
      %v1277 = vrot.slane %v1275, 5
      %v1278 = vshll.u32 %v1162, 16
      %v1280 = vrot.slane %v1278, 6
      %v1281 = vor.u32 %v1277, %v1280
      %v1282 = vrot.slane %v1281, 4
      %v1284 = vshrl.u32 %v1163, 16
      %v1286 = vrot.slane %v1284, 5
      %v1287 = vshll.u32 %v1163, 16
      %v1289 = vrot.slane %v1287, 6
      %v1290 = vor.u32 %v1286, %v1289
      %v1291 = vsel %vm584, %v1282, %v1290
      %v1293 = vshrl.u32 %v1164, 16
      %v1295 = vrot.slane %v1293, 5
      %v1296 = vshll.u32 %v1164, 16
      %v1298 = vrot.slane %v1296, 6
      %v1299 = vor.u32 %v1295, %v1298
      %v1300 = vrot.slane %v1299, 4
      %v1302 = vshrl.u32 %v1165, 16
      %v1304 = vrot.slane %v1302, 5
      %v1305 = vshll.u32 %v1165, 16
      %v1307 = vrot.slane %v1305, 6
      %v1308 = vor.u32 %v1304, %v1307
      %v1309 = vsel %vm584, %v1300, %v1308
      %v1310 = vunpack.c.l.b16 %v1183
      %v1311 = vunpack.c.l.b16 %v1201
      %v1312 = vunpack.c.l.b16 %v1219
      %v1313 = vunpack.c.l.b16 %v1237
      %v1314 = vunpack.c.l.b16 %v1255
      %v1315 = vunpack.c.l.b16 %v1273
      %v1316 = vunpack.c.l.b16 %v1291
      %v1317 = vunpack.c.l.b16 %v1309
      %v1318 = vpack.c.b16 %v1311, %v1310
      %v1319 = vpack.c.b16 %v1313, %v1312
      %v1320 = vpack.c.b16 %v1315, %v1314
      %v1321 = vpack.c.b16 %v1317, %v1316
      %1326 = vst.msk [vmem:[#allocation2 + $0x8] sm:$0xff] %vm305, %v1318
      %1327 = vst.msk [vmem:[#allocation2 + $0x28] sm:$0xff] %vm305, %v1319
      %1328 = vst.msk [vmem:[#allocation2 + $0x48] sm:$0xff] %vm305, %v1320
      %1329 = vst.msk [vmem:[#allocation2 + $0x68] sm:$0xff] %vm305, %v1321
      %v1330 = vld [vmem:[%s854] sm:$0xc]
      %v1331 = vld [vmem:[%s854 + $0x4] sm:$0x3]
      %v1332 = vld [vmem:[%s854 + $0x8] sm:$0xc]
      %v1333 = vld [vmem:[%s854 + $0xc] sm:$0x3]
      %v1334 = vld [vmem:[%s854 + $0x10] sm:$0xc]
      %v1335 = vld [vmem:[%s854 + $0x14] sm:$0x3]
      %v1336 = vld [vmem:[%s854 + $0x18] sm:$0xc]
      %v1337 = vld [vmem:[%s854 + $0x1c] sm:$0x3]
      %v1338 = vld [vmem:[%s854 + $0x20] sm:$0xc]
      %v1339 = vld [vmem:[%s854 + $0x24] sm:$0x3]
      %v1340 = vld [vmem:[%s854 + $0x28] sm:$0xc]
      %v1341 = vld [vmem:[%s854 + $0x2c] sm:$0x3]
      %v1342 = vld [vmem:[%s854 + $0x30] sm:$0xc]
      %v1343 = vld [vmem:[%s854 + $0x34] sm:$0x3]
      %v1344 = vld [vmem:[%s854 + $0x38] sm:$0xc]
      %v1345 = vld [vmem:[%s854 + $0x3c] sm:$0x3]
      %v1362 = vrot.slane %v1330, 6
      %v1363 = vrot.slane %v1362, 4
      %v1364 = vrot.slane %v1331, 6
      %v1365 = vsel %vm792, %v1363, %v1364
      %v1366 = vrot.slane %v1332, 6
      %v1367 = vrot.slane %v1366, 4
      %v1368 = vrot.slane %v1333, 6
      %v1369 = vsel %vm792, %v1367, %v1368
      %v1370 = vrot.slane %v1334, 6
      %v1371 = vrot.slane %v1370, 4
      %v1372 = vrot.slane %v1335, 6
      %v1373 = vsel %vm792, %v1371, %v1372
      %v1374 = vrot.slane %v1336, 6
      %v1375 = vrot.slane %v1374, 4
      %v1376 = vrot.slane %v1337, 6
      %v1377 = vsel %vm792, %v1375, %v1376
      %v1378 = vrot.slane %v1338, 6
      %v1379 = vrot.slane %v1378, 4
      %v1380 = vrot.slane %v1339, 6
      %v1381 = vsel %vm792, %v1379, %v1380
      %v1382 = vrot.slane %v1340, 6
      %v1383 = vrot.slane %v1382, 4
      %v1384 = vrot.slane %v1341, 6
      %v1385 = vsel %vm792, %v1383, %v1384
      %v1386 = vrot.slane %v1342, 6
      %v1387 = vrot.slane %v1386, 4
      %v1388 = vrot.slane %v1343, 6
      %v1389 = vsel %vm792, %v1387, %v1388
      %v1390 = vrot.slane %v1344, 6
      %v1391 = vrot.slane %v1390, 4
      %v1392 = vrot.slane %v1345, 6
      %v1393 = vsel %vm792, %v1391, %v1392
      %v1394 = vunpack.c.l.b16 %v1365
      %v1395 = vunpack.c.l.b16 %v1369
      %v1396 = vunpack.c.l.b16 %v1373
      %v1397 = vunpack.c.l.b16 %v1377
      %v1398 = vunpack.c.l.b16 %v1381
      %v1399 = vunpack.c.l.b16 %v1385
      %v1400 = vunpack.c.l.b16 %v1389
      %v1401 = vunpack.c.l.b16 %v1393
      %v1402 = vpack.c.b16 %v1395, %v1394
      %v1403 = vpack.c.b16 %v1397, %v1396
      %v1404 = vpack.c.b16 %v1399, %v1398
      %v1405 = vpack.c.b16 %v1401, %v1400
      %1406 = vrot.lane.b32.xlu0 %v1402, 16
      %v1407 = vpop.permute.xlu0 %1406
      %1408 = vrot.lane.b32.xlu0 %v1403, 16
      %v1409 = vpop.permute.xlu0 %1408
      %1410 = vrot.lane.b32.xlu0 %v1404, 16
      %v1411 = vpop.permute.xlu0 %1410
      %1412 = vrot.lane.b32.xlu0 %v1405, 16
      %v1413 = vpop.permute.xlu0 %1412
      %1418 = vst.msk [vmem:[#allocation2 + $0x8] sm:$0xff] %vm465, %v1407
      %1419 = vst.msk [vmem:[#allocation2 + $0x28] sm:$0xff] %vm465, %v1409
      %1420 = vst.msk [vmem:[#allocation2 + $0x48] sm:$0xff] %vm465, %v1411
      %1421 = vst.msk [vmem:[#allocation2 + $0x68] sm:$0xff] %vm465, %v1413
      %s1422 = scalar_lea.vmem %s261, 16
      %v1423 = vld [vmem:[%s1422] sm:$0xf]
      %v1424 = vld [vmem:[%s1422 + $0x8] sm:$0xf]
      %v1425 = vld [vmem:[%s1422 + $0x10] sm:$0xf]
      %v1426 = vld [vmem:[%s1422 + $0x18] sm:$0xf]
      %v1427 = vld [vmem:[%s1422 + $0x20] sm:$0xf]
      %v1428 = vld [vmem:[%s1422 + $0x28] sm:$0xf]
      %v1429 = vld [vmem:[%s1422 + $0x30] sm:$0xf]
      %v1430 = vld [vmem:[%s1422 + $0x38] sm:$0xf]
      %v1439 = vunpack.c.l.b16 %v1423
      %v1440 = vunpack.c.l.b16 %v1424
      %v1441 = vunpack.c.l.b16 %v1425
      %v1442 = vunpack.c.l.b16 %v1426
      %v1443 = vunpack.c.l.b16 %v1427
      %v1444 = vunpack.c.l.b16 %v1428
      %v1445 = vunpack.c.l.b16 %v1429
      %v1446 = vunpack.c.l.b16 %v1430
      %v1447 = vpack.c.b16 %v1440, %v1439
      %v1448 = vpack.c.b16 %v1442, %v1441
      %v1449 = vpack.c.b16 %v1444, %v1443
      %v1450 = vpack.c.b16 %v1446, %v1445
      %1451 = vrot.lane.b32.xlu0 %v1447, 32
      %v1452 = vpop.permute.xlu0 %1451
      %1453 = vrot.lane.b32.xlu0 %v1448, 32
      %v1454 = vpop.permute.xlu0 %1453
      %1455 = vrot.lane.b32.xlu0 %v1449, 32
      %v1456 = vpop.permute.xlu0 %1455
      %1457 = vrot.lane.b32.xlu0 %v1450, 32
      %v1458 = vpop.permute.xlu0 %1457
      %1463 = vst.msk [vmem:[#allocation2 + $0x8] sm:$0xff] %vm561, %v1452
      %1464 = vst.msk [vmem:[#allocation2 + $0x28] sm:$0xff] %vm561, %v1454
      %1465 = vst.msk [vmem:[#allocation2 + $0x48] sm:$0xff] %vm561, %v1456
      %1466 = vst.msk [vmem:[#allocation2 + $0x68] sm:$0xff] %vm561, %v1458
      %v1467 = vld [vmem:[%s1422] sm:$0xf]
      %v1468 = vld [vmem:[%s1422 + $0x4] sm:$0x1]
      %v1469 = vld [vmem:[%s1422 + $0x8] sm:$0xf]
      %v1470 = vld [vmem:[%s1422 + $0xc] sm:$0x1]
      %v1471 = vld [vmem:[%s1422 + $0x10] sm:$0xf]
      %v1472 = vld [vmem:[%s1422 + $0x14] sm:$0x1]
      %v1473 = vld [vmem:[%s1422 + $0x18] sm:$0xf]
      %v1474 = vld [vmem:[%s1422 + $0x1c] sm:$0x1]
      %v1475 = vld [vmem:[%s1422 + $0x20] sm:$0xf]
      %v1476 = vld [vmem:[%s1422 + $0x24] sm:$0x1]
      %v1477 = vld [vmem:[%s1422 + $0x28] sm:$0xf]
      %v1478 = vld [vmem:[%s1422 + $0x2c] sm:$0x1]
      %v1479 = vld [vmem:[%s1422 + $0x30] sm:$0xf]
      %v1480 = vld [vmem:[%s1422 + $0x34] sm:$0x1]
      %v1481 = vld [vmem:[%s1422 + $0x38] sm:$0xf]
      %v1482 = vld [vmem:[%s1422 + $0x3c] sm:$0x1]
      %v1484 = vshrl.u32 %v1467, 16
      %v1486 = vrot.slane %v1484, 4
      %v1487 = vshll.u32 %v1467, 16
      %v1489 = vrot.slane %v1487, 5
      %v1490 = vor.u32 %v1486, %v1489
      %v1491 = vrot.slane %v1490, 4
      %v1493 = vshll.u32 %v1468, 16
      %v1495 = vrot.slane %v1493, 5
      %v1496 = vsel %vm328, %v1491, %v1495
      %v1498 = vshrl.u32 %v1469, 16
      %v1500 = vrot.slane %v1498, 4
      %v1501 = vshll.u32 %v1469, 16
      %v1503 = vrot.slane %v1501, 5
      %v1504 = vor.u32 %v1500, %v1503
      %v1505 = vrot.slane %v1504, 4
      %v1507 = vshll.u32 %v1470, 16
      %v1509 = vrot.slane %v1507, 5
      %v1510 = vsel %vm328, %v1505, %v1509
      %v1512 = vshrl.u32 %v1471, 16
      %v1514 = vrot.slane %v1512, 4
      %v1515 = vshll.u32 %v1471, 16
      %v1517 = vrot.slane %v1515, 5
      %v1518 = vor.u32 %v1514, %v1517
      %v1519 = vrot.slane %v1518, 4
      %v1521 = vshll.u32 %v1472, 16
      %v1523 = vrot.slane %v1521, 5
      %v1524 = vsel %vm328, %v1519, %v1523
      %v1526 = vshrl.u32 %v1473, 16
      %v1528 = vrot.slane %v1526, 4
      %v1529 = vshll.u32 %v1473, 16
      %v1531 = vrot.slane %v1529, 5
      %v1532 = vor.u32 %v1528, %v1531
      %v1533 = vrot.slane %v1532, 4
      %v1535 = vshll.u32 %v1474, 16
      %v1537 = vrot.slane %v1535, 5
      %v1538 = vsel %vm328, %v1533, %v1537
      %v1540 = vshrl.u32 %v1475, 16
      %v1542 = vrot.slane %v1540, 4
      %v1543 = vshll.u32 %v1475, 16
      %v1545 = vrot.slane %v1543, 5
      %v1546 = vor.u32 %v1542, %v1545
      %v1547 = vrot.slane %v1546, 4
      %v1549 = vshll.u32 %v1476, 16
      %v1551 = vrot.slane %v1549, 5
      %v1552 = vsel %vm328, %v1547, %v1551
      %v1554 = vshrl.u32 %v1477, 16
      %v1556 = vrot.slane %v1554, 4
      %v1557 = vshll.u32 %v1477, 16
      %v1559 = vrot.slane %v1557, 5
      %v1560 = vor.u32 %v1556, %v1559
      %v1561 = vrot.slane %v1560, 4
      %v1563 = vshll.u32 %v1478, 16
      %v1565 = vrot.slane %v1563, 5
      %v1566 = vsel %vm328, %v1561, %v1565
      %v1568 = vshrl.u32 %v1479, 16
      %v1570 = vrot.slane %v1568, 4
      %v1571 = vshll.u32 %v1479, 16
      %v1573 = vrot.slane %v1571, 5
      %v1574 = vor.u32 %v1570, %v1573
      %v1575 = vrot.slane %v1574, 4
      %v1577 = vshll.u32 %v1480, 16
      %v1579 = vrot.slane %v1577, 5
      %v1580 = vsel %vm328, %v1575, %v1579
      %v1582 = vshrl.u32 %v1481, 16
      %v1584 = vrot.slane %v1582, 4
      %v1585 = vshll.u32 %v1481, 16
      %v1587 = vrot.slane %v1585, 5
      %v1588 = vor.u32 %v1584, %v1587
      %v1589 = vrot.slane %v1588, 4
      %v1591 = vshll.u32 %v1482, 16
      %v1593 = vrot.slane %v1591, 5
      %v1594 = vsel %vm328, %v1589, %v1593
      %v1595 = vunpack.c.l.b16 %v1496
      %v1596 = vunpack.c.l.b16 %v1510
      %v1597 = vunpack.c.l.b16 %v1524
      %v1598 = vunpack.c.l.b16 %v1538
      %v1599 = vunpack.c.l.b16 %v1552
      %v1600 = vunpack.c.l.b16 %v1566
      %v1601 = vunpack.c.l.b16 %v1580
      %v1602 = vunpack.c.l.b16 %v1594
      %v1603 = vpack.c.b16 %v1596, %v1595
      %v1604 = vpack.c.b16 %v1598, %v1597
      %v1605 = vpack.c.b16 %v1600, %v1599
      %v1606 = vpack.c.b16 %v1602, %v1601
      %1607 = vrot.lane.b32.xlu0 %v1603, 48
      %v1608 = vpop.permute.xlu0 %1607
      %1609 = vrot.lane.b32.xlu0 %v1604, 48
      %v1610 = vpop.permute.xlu0 %1609
      %1611 = vrot.lane.b32.xlu0 %v1605, 48
      %v1612 = vpop.permute.xlu0 %1611
      %1613 = vrot.lane.b32.xlu0 %v1606, 48
      %v1614 = vpop.permute.xlu0 %1613
      %1619 = vst.msk [vmem:[#allocation2 + $0x8] sm:$0xff] %vm753, %v1608
      %1620 = vst.msk [vmem:[#allocation2 + $0x28] sm:$0xff] %vm753, %v1610
      %1621 = vst.msk [vmem:[#allocation2 + $0x48] sm:$0xff] %vm753, %v1612
      %1622 = vst.msk [vmem:[#allocation2 + $0x68] sm:$0xff] %vm753, %v1614
      %v1623 = vld [vmem:[%s1422] sm:$0xe]
      %v1624 = vld [vmem:[%s1422 + $0x4] sm:$0x1]
      %v1625 = vld [vmem:[%s1422 + $0x8] sm:$0xe]
      %v1626 = vld [vmem:[%s1422 + $0xc] sm:$0x1]
      %v1627 = vld [vmem:[%s1422 + $0x10] sm:$0xe]
      %v1628 = vld [vmem:[%s1422 + $0x14] sm:$0x1]
      %v1629 = vld [vmem:[%s1422 + $0x18] sm:$0xe]
      %v1630 = vld [vmem:[%s1422 + $0x1c] sm:$0x1]
      %v1631 = vld [vmem:[%s1422 + $0x20] sm:$0xe]
      %v1632 = vld [vmem:[%s1422 + $0x24] sm:$0x1]
      %v1633 = vld [vmem:[%s1422 + $0x28] sm:$0xe]
      %v1634 = vld [vmem:[%s1422 + $0x2c] sm:$0x1]
      %v1635 = vld [vmem:[%s1422 + $0x30] sm:$0xe]
      %v1636 = vld [vmem:[%s1422 + $0x34] sm:$0x1]
      %v1637 = vld [vmem:[%s1422 + $0x38] sm:$0xe]
      %v1638 = vld [vmem:[%s1422 + $0x3c] sm:$0x1]
      %v1655 = vrot.slane %v1623, 5
      %v1656 = vrot.slane %v1655, 4
      %v1657 = vrot.slane %v1624, 5
      %v1658 = vsel %vm504, %v1656, %v1657
      %v1659 = vrot.slane %v1625, 5
      %v1660 = vrot.slane %v1659, 4
      %v1661 = vrot.slane %v1626, 5
      %v1662 = vsel %vm504, %v1660, %v1661
      %v1663 = vrot.slane %v1627, 5
      %v1664 = vrot.slane %v1663, 4
      %v1665 = vrot.slane %v1628, 5
      %v1666 = vsel %vm504, %v1664, %v1665
      %v1667 = vrot.slane %v1629, 5
      %v1668 = vrot.slane %v1667, 4
      %v1669 = vrot.slane %v1630, 5
      %v1670 = vsel %vm504, %v1668, %v1669
      %v1671 = vrot.slane %v1631, 5
      %v1672 = vrot.slane %v1671, 4
      %v1673 = vrot.slane %v1632, 5
      %v1674 = vsel %vm504, %v1672, %v1673
      %v1675 = vrot.slane %v1633, 5
      %v1676 = vrot.slane %v1675, 4
      %v1677 = vrot.slane %v1634, 5
      %v1678 = vsel %vm504, %v1676, %v1677
      %v1679 = vrot.slane %v1635, 5
      %v1680 = vrot.slane %v1679, 4
      %v1681 = vrot.slane %v1636, 5
      %v1682 = vsel %vm504, %v1680, %v1681
      %v1683 = vrot.slane %v1637, 5
      %v1684 = vrot.slane %v1683, 4
      %v1685 = vrot.slane %v1638, 5
      %v1686 = vsel %vm504, %v1684, %v1685
      %v1687 = vunpack.c.l.b16 %v1658
      %v1688 = vunpack.c.l.b16 %v1662
      %v1689 = vunpack.c.l.b16 %v1666
      %v1690 = vunpack.c.l.b16 %v1670
      %v1691 = vunpack.c.l.b16 %v1674
      %v1692 = vunpack.c.l.b16 %v1678
      %v1693 = vunpack.c.l.b16 %v1682
      %v1694 = vunpack.c.l.b16 %v1686
      %v1695 = vpack.c.b16 %v1688, %v1687
      %v1696 = vpack.c.b16 %v1690, %v1689
      %v1697 = vpack.c.b16 %v1692, %v1691
      %v1698 = vpack.c.b16 %v1694, %v1693
      %1699 = vrot.lane.b32.xlu0 %v1695, 64
      %v1700 = vpop.permute.xlu0 %1699
      %1701 = vrot.lane.b32.xlu0 %v1696, 64
      %v1702 = vpop.permute.xlu0 %1701
      %1703 = vrot.lane.b32.xlu0 %v1697, 64
      %v1704 = vpop.permute.xlu0 %1703
      %1705 = vrot.lane.b32.xlu0 %v1698, 64
      %v1706 = vpop.permute.xlu0 %1705
      %1711 = vst.msk [vmem:[#allocation2 + $0x8] sm:$0xff] %vm849, %v1700
      %1712 = vst.msk [vmem:[#allocation2 + $0x28] sm:$0xff] %vm849, %v1702
      %1713 = vst.msk [vmem:[#allocation2 + $0x48] sm:$0xff] %vm849, %v1704
      %1714 = vst.msk [vmem:[#allocation2 + $0x68] sm:$0xff] %vm849, %v1706
      %v1715 = vld [vmem:[%s1422] sm:$0xe]
      %v1716 = vld [vmem:[%s1422 + $0x4] sm:$0x3]
      %v1717 = vld [vmem:[%s1422 + $0x8] sm:$0xe]
      %v1718 = vld [vmem:[%s1422 + $0xc] sm:$0x3]
      %v1719 = vld [vmem:[%s1422 + $0x10] sm:$0xe]
      %v1720 = vld [vmem:[%s1422 + $0x14] sm:$0x3]
      %v1721 = vld [vmem:[%s1422 + $0x18] sm:$0xe]
      %v1722 = vld [vmem:[%s1422 + $0x1c] sm:$0x3]
      %v1723 = vld [vmem:[%s1422 + $0x20] sm:$0xe]
      %v1724 = vld [vmem:[%s1422 + $0x24] sm:$0x3]
      %v1725 = vld [vmem:[%s1422 + $0x28] sm:$0xe]
      %v1726 = vld [vmem:[%s1422 + $0x2c] sm:$0x3]
      %v1727 = vld [vmem:[%s1422 + $0x30] sm:$0xe]
      %v1728 = vld [vmem:[%s1422 + $0x34] sm:$0x3]
      %v1729 = vld [vmem:[%s1422 + $0x38] sm:$0xe]
      %v1730 = vld [vmem:[%s1422 + $0x3c] sm:$0x3]
      %v1732 = vshrl.u32 %v1715, 16
      %v1734 = vrot.slane %v1732, 5
      %v1735 = vshll.u32 %v1715, 16
      %v1737 = vrot.slane %v1735, 6
      %v1738 = vor.u32 %v1734, %v1737
      %v1739 = vrot.slane %v1738, 4
      %v1741 = vshrl.u32 %v1716, 16
      %v1743 = vrot.slane %v1741, 5
      %v1744 = vshll.u32 %v1716, 16
      %v1746 = vrot.slane %v1744, 6
      %v1747 = vor.u32 %v1743, %v1746
      %v1748 = vsel %vm584, %v1739, %v1747
      %v1750 = vshrl.u32 %v1717, 16
      %v1752 = vrot.slane %v1750, 5
      %v1753 = vshll.u32 %v1717, 16
      %v1755 = vrot.slane %v1753, 6
      %v1756 = vor.u32 %v1752, %v1755
      %v1757 = vrot.slane %v1756, 4
      %v1759 = vshrl.u32 %v1718, 16
      %v1761 = vrot.slane %v1759, 5
      %v1762 = vshll.u32 %v1718, 16
      %v1764 = vrot.slane %v1762, 6
      %v1765 = vor.u32 %v1761, %v1764
      %v1766 = vsel %vm584, %v1757, %v1765
      %v1768 = vshrl.u32 %v1719, 16
      %v1770 = vrot.slane %v1768, 5
      %v1771 = vshll.u32 %v1719, 16
      %v1773 = vrot.slane %v1771, 6
      %v1774 = vor.u32 %v1770, %v1773
      %v1775 = vrot.slane %v1774, 4
      %v1777 = vshrl.u32 %v1720, 16
      %v1779 = vrot.slane %v1777, 5
      %v1780 = vshll.u32 %v1720, 16
      %v1782 = vrot.slane %v1780, 6
      %v1783 = vor.u32 %v1779, %v1782
      %v1784 = vsel %vm584, %v1775, %v1783
      %v1786 = vshrl.u32 %v1721, 16
      %v1788 = vrot.slane %v1786, 5
      %v1789 = vshll.u32 %v1721, 16
      %v1791 = vrot.slane %v1789, 6
      %v1792 = vor.u32 %v1788, %v1791
      %v1793 = vrot.slane %v1792, 4
      %v1795 = vshrl.u32 %v1722, 16
      %v1797 = vrot.slane %v1795, 5
      %v1798 = vshll.u32 %v1722, 16
      %v1800 = vrot.slane %v1798, 6
      %v1801 = vor.u32 %v1797, %v1800
      %v1802 = vsel %vm584, %v1793, %v1801
      %v1804 = vshrl.u32 %v1723, 16
      %v1806 = vrot.slane %v1804, 5
      %v1807 = vshll.u32 %v1723, 16
      %v1809 = vrot.slane %v1807, 6
      %v1810 = vor.u32 %v1806, %v1809
      %v1811 = vrot.slane %v1810, 4
      %v1813 = vshrl.u32 %v1724, 16
      %v1815 = vrot.slane %v1813, 5
      %v1816 = vshll.u32 %v1724, 16
      %v1818 = vrot.slane %v1816, 6
      %v1819 = vor.u32 %v1815, %v1818
      %v1820 = vsel %vm584, %v1811, %v1819
      %v1822 = vshrl.u32 %v1725, 16
      %v1824 = vrot.slane %v1822, 5
      %v1825 = vshll.u32 %v1725, 16
      %v1827 = vrot.slane %v1825, 6
      %v1828 = vor.u32 %v1824, %v1827
      %v1829 = vrot.slane %v1828, 4
      %v1831 = vshrl.u32 %v1726, 16
      %v1833 = vrot.slane %v1831, 5
      %v1834 = vshll.u32 %v1726, 16
      %v1836 = vrot.slane %v1834, 6
      %v1837 = vor.u32 %v1833, %v1836
      %v1838 = vsel %vm584, %v1829, %v1837
      %v1840 = vshrl.u32 %v1727, 16
      %v1842 = vrot.slane %v1840, 5
      %v1843 = vshll.u32 %v1727, 16
      %v1845 = vrot.slane %v1843, 6
      %v1846 = vor.u32 %v1842, %v1845
      %v1847 = vrot.slane %v1846, 4
      %v1849 = vshrl.u32 %v1728, 16
      %v1851 = vrot.slane %v1849, 5
      %v1852 = vshll.u32 %v1728, 16
      %v1854 = vrot.slane %v1852, 6
      %v1855 = vor.u32 %v1851, %v1854
      %v1856 = vsel %vm584, %v1847, %v1855
      %v1858 = vshrl.u32 %v1729, 16
      %v1860 = vrot.slane %v1858, 5
      %v1861 = vshll.u32 %v1729, 16
      %v1863 = vrot.slane %v1861, 6
      %v1864 = vor.u32 %v1860, %v1863
      %v1865 = vrot.slane %v1864, 4
      %v1867 = vshrl.u32 %v1730, 16
      %v1869 = vrot.slane %v1867, 5
      %v1870 = vshll.u32 %v1730, 16
      %v1872 = vrot.slane %v1870, 6
      %v1873 = vor.u32 %v1869, %v1872
      %v1874 = vsel %vm584, %v1865, %v1873
      %v1875 = vunpack.c.l.b16 %v1748
      %v1876 = vunpack.c.l.b16 %v1766
      %v1877 = vunpack.c.l.b16 %v1784
      %v1878 = vunpack.c.l.b16 %v1802
      %v1879 = vunpack.c.l.b16 %v1820
      %v1880 = vunpack.c.l.b16 %v1838
      %v1881 = vunpack.c.l.b16 %v1856
      %v1882 = vunpack.c.l.b16 %v1874
      %v1883 = vpack.c.b16 %v1876, %v1875
      %v1884 = vpack.c.b16 %v1878, %v1877
      %v1885 = vpack.c.b16 %v1880, %v1879
      %v1886 = vpack.c.b16 %v1882, %v1881
      %1887 = vrot.lane.b32.xlu0 %v1883, 80
      %v1888 = vpop.permute.xlu0 %1887
      %1889 = vrot.lane.b32.xlu0 %v1884, 80
      %v1890 = vpop.permute.xlu0 %1889
      %1891 = vrot.lane.b32.xlu0 %v1885, 80
      %v1892 = vpop.permute.xlu0 %1891
      %1893 = vrot.lane.b32.xlu0 %v1886, 80
      %v1894 = vpop.permute.xlu0 %1893
      %1899 = vst.msk [vmem:[#allocation2 + $0x8] sm:$0xff] %vm895, %v1888
      %1900 = vst.msk [vmem:[#allocation2 + $0x28] sm:$0xff] %vm895, %v1890
      %1901 = vst.msk [vmem:[#allocation2 + $0x48] sm:$0xff] %vm895, %v1892
      %1902 = vst.msk [vmem:[#allocation2 + $0x68] sm:$0xff] %vm895, %v1894
      %v1903 = vld [vmem:[%s1422] sm:$0xc]
      %v1904 = vld [vmem:[%s1422 + $0x4] sm:$0x3]
      %v1905 = vld [vmem:[%s1422 + $0x8] sm:$0xc]
      %v1906 = vld [vmem:[%s1422 + $0xc] sm:$0x3]
      %v1907 = vld [vmem:[%s1422 + $0x10] sm:$0xc]
      %v1908 = vld [vmem:[%s1422 + $0x14] sm:$0x3]
      %v1909 = vld [vmem:[%s1422 + $0x18] sm:$0xc]
      %v1910 = vld [vmem:[%s1422 + $0x1c] sm:$0x3]
      %v1911 = vld [vmem:[%s1422 + $0x20] sm:$0xc]
      %v1912 = vld [vmem:[%s1422 + $0x24] sm:$0x3]
      %v1913 = vld [vmem:[%s1422 + $0x28] sm:$0xc]
      %v1914 = vld [vmem:[%s1422 + $0x2c] sm:$0x3]
      %v1915 = vld [vmem:[%s1422 + $0x30] sm:$0xc]
      %v1916 = vld [vmem:[%s1422 + $0x34] sm:$0x3]
      %v1917 = vld [vmem:[%s1422 + $0x38] sm:$0xc]
      %v1918 = vld [vmem:[%s1422 + $0x3c] sm:$0x3]
      %v1935 = vrot.slane %v1903, 6
      %v1936 = vrot.slane %v1935, 4
      %v1937 = vrot.slane %v1904, 6
      %v1938 = vsel %vm792, %v1936, %v1937
      %v1939 = vrot.slane %v1905, 6
      %v1940 = vrot.slane %v1939, 4
      %v1941 = vrot.slane %v1906, 6
      %v1942 = vsel %vm792, %v1940, %v1941
      %v1943 = vrot.slane %v1907, 6
      %v1944 = vrot.slane %v1943, 4
      %v1945 = vrot.slane %v1908, 6
      %v1946 = vsel %vm792, %v1944, %v1945
      %v1947 = vrot.slane %v1909, 6
      %v1948 = vrot.slane %v1947, 4
      %v1949 = vrot.slane %v1910, 6
      %v1950 = vsel %vm792, %v1948, %v1949
      %v1951 = vrot.slane %v1911, 6
      %v1952 = vrot.slane %v1951, 4
      %v1953 = vrot.slane %v1912, 6
      %v1954 = vsel %vm792, %v1952, %v1953
      %v1955 = vrot.slane %v1913, 6
      %v1956 = vrot.slane %v1955, 4
      %v1957 = vrot.slane %v1914, 6
      %v1958 = vsel %vm792, %v1956, %v1957
      %v1959 = vrot.slane %v1915, 6
      %v1960 = vrot.slane %v1959, 4
      %v1961 = vrot.slane %v1916, 6
      %v1962 = vsel %vm792, %v1960, %v1961
      %v1963 = vrot.slane %v1917, 6
      %v1964 = vrot.slane %v1963, 4
      %v1965 = vrot.slane %v1918, 6
      %v1966 = vsel %vm792, %v1964, %v1965
      %v1967 = vunpack.c.l.b16 %v1938
      %v1968 = vunpack.c.l.b16 %v1942
      %v1969 = vunpack.c.l.b16 %v1946
      %v1970 = vunpack.c.l.b16 %v1950
      %v1971 = vunpack.c.l.b16 %v1954
      %v1972 = vunpack.c.l.b16 %v1958
      %v1973 = vunpack.c.l.b16 %v1962
      %v1974 = vunpack.c.l.b16 %v1966
      %v1975 = vpack.c.b16 %v1968, %v1967
      %v1976 = vpack.c.b16 %v1970, %v1969
      %v1977 = vpack.c.b16 %v1972, %v1971
      %v1978 = vpack.c.b16 %v1974, %v1973
      %1979 = vrot.lane.b32.xlu0 %v1975, 96
      %v1980 = vpop.permute.xlu0 %1979
      %1981 = vrot.lane.b32.xlu0 %v1976, 96
      %v1982 = vpop.permute.xlu0 %1981
      %1983 = vrot.lane.b32.xlu0 %v1977, 96
      %v1984 = vpop.permute.xlu0 %1983
      %1985 = vrot.lane.b32.xlu0 %v1978, 96
      %v1986 = vpop.permute.xlu0 %1985
      %1991 = vst.msk [vmem:[#allocation2 + $0x8] sm:$0xff] %vm1052, %v1980
      %1992 = vst.msk [vmem:[#allocation2 + $0x28] sm:$0xff] %vm1052, %v1982
      %1993 = vst.msk [vmem:[#allocation2 + $0x48] sm:$0xff] %vm1052, %v1984
      %1994 = vst.msk [vmem:[#allocation2 + $0x68] sm:$0xff] %vm1052, %v1986
      %s1995 = scalar_lea.vmem %s261, 24
      %v1996 = vld [vmem:[%s1995] sm:$0xf]
      %v1997 = vld [vmem:[%s1995 + $0x8] sm:$0xf]
      %v1998 = vld [vmem:[%s1995 + $0x10] sm:$0xf]
      %v1999 = vld [vmem:[%s1995 + $0x18] sm:$0xf]
      %v2000 = vld [vmem:[%s1995 + $0x20] sm:$0xf]
      %v2001 = vld [vmem:[%s1995 + $0x28] sm:$0xf]
      %v2002 = vld [vmem:[%s1995 + $0x30] sm:$0xf]
      %v2003 = vld [vmem:[%s1995 + $0x38] sm:$0xf]
      %v2012 = vunpack.c.l.b16 %v1996
      %v2013 = vunpack.c.l.b16 %v1997
      %v2014 = vunpack.c.l.b16 %v1998
      %v2015 = vunpack.c.l.b16 %v1999
      %v2016 = vunpack.c.l.b16 %v2000
      %v2017 = vunpack.c.l.b16 %v2001
      %v2018 = vunpack.c.l.b16 %v2002
      %v2019 = vunpack.c.l.b16 %v2003
      %v2020 = vpack.c.b16 %v2013, %v2012
      %v2021 = vpack.c.b16 %v2015, %v2014
      %v2022 = vpack.c.b16 %v2017, %v2016
      %v2023 = vpack.c.b16 %v2019, %v2018
      %2024 = vrot.lane.b32.xlu0 %v2020, 112
      %v2025 = vpop.permute.xlu0 %2024
      %2026 = vrot.lane.b32.xlu0 %v2021, 112
      %v2027 = vpop.permute.xlu0 %2026
      %2028 = vrot.lane.b32.xlu0 %v2022, 112
      %v2029 = vpop.permute.xlu0 %2028
      %2030 = vrot.lane.b32.xlu0 %v2023, 112
      %v2031 = vpop.permute.xlu0 %2030
      %2036 = vst.msk [vmem:[#allocation2 + $0x8] sm:$0xff] %vm1145, %v2025
      %2037 = vst.msk [vmem:[#allocation2 + $0x28] sm:$0xff] %vm1145, %v2027
      %2038 = vst.msk [vmem:[#allocation2 + $0x48] sm:$0xff] %vm1145, %v2029
      %2039 = vst.msk [vmem:[#allocation2 + $0x68] sm:$0xff] %vm1145, %v2031
      %v2040 = vld [vmem:[%s1995] sm:$0xf]
      %v2041 = vld [vmem:[%s1995 + $0x4] sm:$0x1]
      %v2042 = vld [vmem:[%s1995 + $0x8] sm:$0xf]
      %v2043 = vld [vmem:[%s1995 + $0xc] sm:$0x1]
      %v2044 = vld [vmem:[%s1995 + $0x10] sm:$0xf]
      %v2045 = vld [vmem:[%s1995 + $0x14] sm:$0x1]
      %v2046 = vld [vmem:[%s1995 + $0x18] sm:$0xf]
      %v2047 = vld [vmem:[%s1995 + $0x1c] sm:$0x1]
      %v2048 = vld [vmem:[%s1995 + $0x20] sm:$0xf]
      %v2049 = vld [vmem:[%s1995 + $0x24] sm:$0x1]
      %v2050 = vld [vmem:[%s1995 + $0x28] sm:$0xf]
      %v2051 = vld [vmem:[%s1995 + $0x2c] sm:$0x1]
      %v2052 = vld [vmem:[%s1995 + $0x30] sm:$0xf]
      %v2053 = vld [vmem:[%s1995 + $0x34] sm:$0x1]
      %v2054 = vld [vmem:[%s1995 + $0x38] sm:$0xf]
      %v2055 = vld [vmem:[%s1995 + $0x3c] sm:$0x1]
      %v2057 = vshrl.u32 %v2040, 16
      %v2059 = vrot.slane %v2057, 4
      %v2060 = vshll.u32 %v2040, 16
      %v2062 = vrot.slane %v2060, 5
      %v2063 = vor.u32 %v2059, %v2062
      %v2064 = vrot.slane %v2063, 4
      %v2066 = vshll.u32 %v2041, 16
      %v2068 = vrot.slane %v2066, 5
      %v2069 = vsel %vm328, %v2064, %v2068
      %v2071 = vshrl.u32 %v2042, 16
      %v2073 = vrot.slane %v2071, 4
      %v2074 = vshll.u32 %v2042, 16
      %v2076 = vrot.slane %v2074, 5
      %v2077 = vor.u32 %v2073, %v2076
      %v2078 = vrot.slane %v2077, 4
      %v2080 = vshll.u32 %v2043, 16
      %v2082 = vrot.slane %v2080, 5
      %v2083 = vsel %vm328, %v2078, %v2082
      %v2085 = vshrl.u32 %v2044, 16
      %v2087 = vrot.slane %v2085, 4
      %v2088 = vshll.u32 %v2044, 16
      %v2090 = vrot.slane %v2088, 5
      %v2091 = vor.u32 %v2087, %v2090
      %v2092 = vrot.slane %v2091, 4
      %v2094 = vshll.u32 %v2045, 16
      %v2096 = vrot.slane %v2094, 5
      %v2097 = vsel %vm328, %v2092, %v2096
      %v2099 = vshrl.u32 %v2046, 16
      %v2101 = vrot.slane %v2099, 4
      %v2102 = vshll.u32 %v2046, 16
      %v2104 = vrot.slane %v2102, 5
      %v2105 = vor.u32 %v2101, %v2104
      %v2106 = vrot.slane %v2105, 4
      %v2108 = vshll.u32 %v2047, 16
      %v2110 = vrot.slane %v2108, 5
      %v2111 = vsel %vm328, %v2106, %v2110
      %v2113 = vshrl.u32 %v2048, 16
      %v2115 = vrot.slane %v2113, 4
      %v2116 = vshll.u32 %v2048, 16
      %v2118 = vrot.slane %v2116, 5
      %v2119 = vor.u32 %v2115, %v2118
      %v2120 = vrot.slane %v2119, 4
      %v2122 = vshll.u32 %v2049, 16
      %v2124 = vrot.slane %v2122, 5
      %v2125 = vsel %vm328, %v2120, %v2124
      %v2127 = vshrl.u32 %v2050, 16
      %v2129 = vrot.slane %v2127, 4
      %v2130 = vshll.u32 %v2050, 16
      %v2132 = vrot.slane %v2130, 5
      %v2133 = vor.u32 %v2129, %v2132
      %v2134 = vrot.slane %v2133, 4
      %v2136 = vshll.u32 %v2051, 16
      %v2138 = vrot.slane %v2136, 5
      %v2139 = vsel %vm328, %v2134, %v2138
      %v2141 = vshrl.u32 %v2052, 16
      %v2143 = vrot.slane %v2141, 4
      %v2144 = vshll.u32 %v2052, 16
      %v2146 = vrot.slane %v2144, 5
      %v2147 = vor.u32 %v2143, %v2146
      %v2148 = vrot.slane %v2147, 4
      %v2150 = vshll.u32 %v2053, 16
      %v2152 = vrot.slane %v2150, 5
      %v2153 = vsel %vm328, %v2148, %v2152
      %v2155 = vshrl.u32 %v2054, 16
      %v2157 = vrot.slane %v2155, 4
      %v2158 = vshll.u32 %v2054, 16
      %v2160 = vrot.slane %v2158, 5
      %v2161 = vor.u32 %v2157, %v2160
      %v2162 = vrot.slane %v2161, 4
      %v2164 = vshll.u32 %v2055, 16
      %v2166 = vrot.slane %v2164, 5
      %v2167 = vsel %vm328, %v2162, %v2166
      %v2168 = vunpack.c.l.b16 %v2069
      %v2169 = vunpack.c.l.b16 %v2083
      %v2170 = vunpack.c.l.b16 %v2097
      %v2171 = vunpack.c.l.b16 %v2111
      %v2172 = vunpack.c.l.b16 %v2125
      %v2173 = vunpack.c.l.b16 %v2139
      %v2174 = vunpack.c.l.b16 %v2153
      %v2175 = vunpack.c.l.b16 %v2167
      %v2176 = vpack.c.b16 %v2169, %v2168
      %v2177 = vpack.c.b16 %v2171, %v2170
      %v2178 = vpack.c.b16 %v2173, %v2172
      %v2179 = vpack.c.b16 %v2175, %v2174
      %2184 = vst.msk [vmem:[#allocation2 + $0x10] sm:$0xff] %vm305, %v2176
      %2185 = vst.msk [vmem:[#allocation2 + $0x30] sm:$0xff] %vm305, %v2177
      %2186 = vst.msk [vmem:[#allocation2 + $0x50] sm:$0xff] %vm305, %v2178
      %2187 = vst.msk [vmem:[#allocation2 + $0x70] sm:$0xff] %vm305, %v2179
      %v2188 = vld [vmem:[%s1995] sm:$0xe]
      %v2189 = vld [vmem:[%s1995 + $0x4] sm:$0x1]
      %v2190 = vld [vmem:[%s1995 + $0x8] sm:$0xe]
      %v2191 = vld [vmem:[%s1995 + $0xc] sm:$0x1]
      %v2192 = vld [vmem:[%s1995 + $0x10] sm:$0xe]
      %v2193 = vld [vmem:[%s1995 + $0x14] sm:$0x1]
      %v2194 = vld [vmem:[%s1995 + $0x18] sm:$0xe]
      %v2195 = vld [vmem:[%s1995 + $0x1c] sm:$0x1]
      %v2196 = vld [vmem:[%s1995 + $0x20] sm:$0xe]
      %v2197 = vld [vmem:[%s1995 + $0x24] sm:$0x1]
      %v2198 = vld [vmem:[%s1995 + $0x28] sm:$0xe]
      %v2199 = vld [vmem:[%s1995 + $0x2c] sm:$0x1]
      %v2200 = vld [vmem:[%s1995 + $0x30] sm:$0xe]
      %v2201 = vld [vmem:[%s1995 + $0x34] sm:$0x1]
      %v2202 = vld [vmem:[%s1995 + $0x38] sm:$0xe]
      %v2203 = vld [vmem:[%s1995 + $0x3c] sm:$0x1]
      %v2220 = vrot.slane %v2188, 5
      %v2221 = vrot.slane %v2220, 4
      %v2222 = vrot.slane %v2189, 5
      %v2223 = vsel %vm504, %v2221, %v2222
      %v2224 = vrot.slane %v2190, 5
      %v2225 = vrot.slane %v2224, 4
      %v2226 = vrot.slane %v2191, 5
      %v2227 = vsel %vm504, %v2225, %v2226
      %v2228 = vrot.slane %v2192, 5
      %v2229 = vrot.slane %v2228, 4
      %v2230 = vrot.slane %v2193, 5
      %v2231 = vsel %vm504, %v2229, %v2230
      %v2232 = vrot.slane %v2194, 5
      %v2233 = vrot.slane %v2232, 4
      %v2234 = vrot.slane %v2195, 5
      %v2235 = vsel %vm504, %v2233, %v2234
      %v2236 = vrot.slane %v2196, 5
      %v2237 = vrot.slane %v2236, 4
      %v2238 = vrot.slane %v2197, 5
      %v2239 = vsel %vm504, %v2237, %v2238
      %v2240 = vrot.slane %v2198, 5
      %v2241 = vrot.slane %v2240, 4
      %v2242 = vrot.slane %v2199, 5
      %v2243 = vsel %vm504, %v2241, %v2242
      %v2244 = vrot.slane %v2200, 5
      %v2245 = vrot.slane %v2244, 4
      %v2246 = vrot.slane %v2201, 5
      %v2247 = vsel %vm504, %v2245, %v2246
      %v2248 = vrot.slane %v2202, 5
      %v2249 = vrot.slane %v2248, 4
      %v2250 = vrot.slane %v2203, 5
      %v2251 = vsel %vm504, %v2249, %v2250
      %v2252 = vunpack.c.l.b16 %v2223
      %v2253 = vunpack.c.l.b16 %v2227
      %v2254 = vunpack.c.l.b16 %v2231
      %v2255 = vunpack.c.l.b16 %v2235
      %v2256 = vunpack.c.l.b16 %v2239
      %v2257 = vunpack.c.l.b16 %v2243
      %v2258 = vunpack.c.l.b16 %v2247
      %v2259 = vunpack.c.l.b16 %v2251
      %v2260 = vpack.c.b16 %v2253, %v2252
      %v2261 = vpack.c.b16 %v2255, %v2254
      %v2262 = vpack.c.b16 %v2257, %v2256
      %v2263 = vpack.c.b16 %v2259, %v2258
      %2264 = vrot.lane.b32.xlu0 %v2260, 16
      %v2265 = vpop.permute.xlu0 %2264
      %2266 = vrot.lane.b32.xlu0 %v2261, 16
      %v2267 = vpop.permute.xlu0 %2266
      %2268 = vrot.lane.b32.xlu0 %v2262, 16
      %v2269 = vpop.permute.xlu0 %2268
      %2270 = vrot.lane.b32.xlu0 %v2263, 16
      %v2271 = vpop.permute.xlu0 %2270
      %2276 = vst.msk [vmem:[#allocation2 + $0x10] sm:$0xff] %vm465, %v2265
      %2277 = vst.msk [vmem:[#allocation2 + $0x30] sm:$0xff] %vm465, %v2267
      %2278 = vst.msk [vmem:[#allocation2 + $0x50] sm:$0xff] %vm465, %v2269
      %2279 = vst.msk [vmem:[#allocation2 + $0x70] sm:$0xff] %vm465, %v2271
      %v2280 = vld [vmem:[%s1995] sm:$0xe]
      %v2281 = vld [vmem:[%s1995 + $0x4] sm:$0x3]
      %v2282 = vld [vmem:[%s1995 + $0x8] sm:$0xe]
      %v2283 = vld [vmem:[%s1995 + $0xc] sm:$0x3]
      %v2284 = vld [vmem:[%s1995 + $0x10] sm:$0xe]
      %v2285 = vld [vmem:[%s1995 + $0x14] sm:$0x3]
      %v2286 = vld [vmem:[%s1995 + $0x18] sm:$0xe]
      %v2287 = vld [vmem:[%s1995 + $0x1c] sm:$0x3]
      %v2288 = vld [vmem:[%s1995 + $0x20] sm:$0xe]
      %v2289 = vld [vmem:[%s1995 + $0x24] sm:$0x3]
      %v2290 = vld [vmem:[%s1995 + $0x28] sm:$0xe]
      %v2291 = vld [vmem:[%s1995 + $0x2c] sm:$0x3]
      %v2292 = vld [vmem:[%s1995 + $0x30] sm:$0xe]
      %v2293 = vld [vmem:[%s1995 + $0x34] sm:$0x3]
      %v2294 = vld [vmem:[%s1995 + $0x38] sm:$0xe]
      %v2295 = vld [vmem:[%s1995 + $0x3c] sm:$0x3]
      %v2297 = vshrl.u32 %v2280, 16
      %v2299 = vrot.slane %v2297, 5
      %v2300 = vshll.u32 %v2280, 16
      %v2302 = vrot.slane %v2300, 6
      %v2303 = vor.u32 %v2299, %v2302
      %v2304 = vrot.slane %v2303, 4
      %v2306 = vshrl.u32 %v2281, 16
      %v2308 = vrot.slane %v2306, 5
      %v2309 = vshll.u32 %v2281, 16
      %v2311 = vrot.slane %v2309, 6
      %v2312 = vor.u32 %v2308, %v2311
      %v2313 = vsel %vm584, %v2304, %v2312
      %v2315 = vshrl.u32 %v2282, 16
      %v2317 = vrot.slane %v2315, 5
      %v2318 = vshll.u32 %v2282, 16
      %v2320 = vrot.slane %v2318, 6
      %v2321 = vor.u32 %v2317, %v2320
      %v2322 = vrot.slane %v2321, 4
      %v2324 = vshrl.u32 %v2283, 16
      %v2326 = vrot.slane %v2324, 5
      %v2327 = vshll.u32 %v2283, 16
      %v2329 = vrot.slane %v2327, 6
      %v2330 = vor.u32 %v2326, %v2329
      %v2331 = vsel %vm584, %v2322, %v2330
      %v2333 = vshrl.u32 %v2284, 16
      %v2335 = vrot.slane %v2333, 5
      %v2336 = vshll.u32 %v2284, 16
      %v2338 = vrot.slane %v2336, 6
      %v2339 = vor.u32 %v2335, %v2338
      %v2340 = vrot.slane %v2339, 4
      %v2342 = vshrl.u32 %v2285, 16
      %v2344 = vrot.slane %v2342, 5
      %v2345 = vshll.u32 %v2285, 16
      %v2347 = vrot.slane %v2345, 6
      %v2348 = vor.u32 %v2344, %v2347
      %v2349 = vsel %vm584, %v2340, %v2348
      %v2351 = vshrl.u32 %v2286, 16
      %v2353 = vrot.slane %v2351, 5
      %v2354 = vshll.u32 %v2286, 16
      %v2356 = vrot.slane %v2354, 6
      %v2357 = vor.u32 %v2353, %v2356
      %v2358 = vrot.slane %v2357, 4
      %v2360 = vshrl.u32 %v2287, 16
      %v2362 = vrot.slane %v2360, 5
      %v2363 = vshll.u32 %v2287, 16
      %v2365 = vrot.slane %v2363, 6
      %v2366 = vor.u32 %v2362, %v2365
      %v2367 = vsel %vm584, %v2358, %v2366
      %v2369 = vshrl.u32 %v2288, 16
      %v2371 = vrot.slane %v2369, 5
      %v2372 = vshll.u32 %v2288, 16
      %v2374 = vrot.slane %v2372, 6
      %v2375 = vor.u32 %v2371, %v2374
      %v2376 = vrot.slane %v2375, 4
      %v2378 = vshrl.u32 %v2289, 16
      %v2380 = vrot.slane %v2378, 5
      %v2381 = vshll.u32 %v2289, 16
      %v2383 = vrot.slane %v2381, 6
      %v2384 = vor.u32 %v2380, %v2383
      %v2385 = vsel %vm584, %v2376, %v2384
      %v2387 = vshrl.u32 %v2290, 16
      %v2389 = vrot.slane %v2387, 5
      %v2390 = vshll.u32 %v2290, 16
      %v2392 = vrot.slane %v2390, 6
      %v2393 = vor.u32 %v2389, %v2392
      %v2394 = vrot.slane %v2393, 4
      %v2396 = vshrl.u32 %v2291, 16
      %v2398 = vrot.slane %v2396, 5
      %v2399 = vshll.u32 %v2291, 16
      %v2401 = vrot.slane %v2399, 6
      %v2402 = vor.u32 %v2398, %v2401
      %v2403 = vsel %vm584, %v2394, %v2402
      %v2405 = vshrl.u32 %v2292, 16
      %v2407 = vrot.slane %v2405, 5
      %v2408 = vshll.u32 %v2292, 16
      %v2410 = vrot.slane %v2408, 6
      %v2411 = vor.u32 %v2407, %v2410
      %v2412 = vrot.slane %v2411, 4
      %v2414 = vshrl.u32 %v2293, 16
      %v2416 = vrot.slane %v2414, 5
      %v2417 = vshll.u32 %v2293, 16
      %v2419 = vrot.slane %v2417, 6
      %v2420 = vor.u32 %v2416, %v2419
      %v2421 = vsel %vm584, %v2412, %v2420
      %v2423 = vshrl.u32 %v2294, 16
      %v2425 = vrot.slane %v2423, 5
      %v2426 = vshll.u32 %v2294, 16
      %v2428 = vrot.slane %v2426, 6
      %v2429 = vor.u32 %v2425, %v2428
      %v2430 = vrot.slane %v2429, 4
      %v2432 = vshrl.u32 %v2295, 16
      %v2434 = vrot.slane %v2432, 5
      %v2435 = vshll.u32 %v2295, 16
      %v2437 = vrot.slane %v2435, 6
      %v2438 = vor.u32 %v2434, %v2437
      %v2439 = vsel %vm584, %v2430, %v2438
      %v2440 = vunpack.c.l.b16 %v2313
      %v2441 = vunpack.c.l.b16 %v2331
      %v2442 = vunpack.c.l.b16 %v2349
      %v2443 = vunpack.c.l.b16 %v2367
      %v2444 = vunpack.c.l.b16 %v2385
      %v2445 = vunpack.c.l.b16 %v2403
      %v2446 = vunpack.c.l.b16 %v2421
      %v2447 = vunpack.c.l.b16 %v2439
      %v2448 = vpack.c.b16 %v2441, %v2440
      %v2449 = vpack.c.b16 %v2443, %v2442
      %v2450 = vpack.c.b16 %v2445, %v2444
      %v2451 = vpack.c.b16 %v2447, %v2446
      %2452 = vrot.lane.b32.xlu0 %v2448, 32
      %v2453 = vpop.permute.xlu0 %2452
      %2454 = vrot.lane.b32.xlu0 %v2449, 32
      %v2455 = vpop.permute.xlu0 %2454
      %2456 = vrot.lane.b32.xlu0 %v2450, 32
      %v2457 = vpop.permute.xlu0 %2456
      %2458 = vrot.lane.b32.xlu0 %v2451, 32
      %v2459 = vpop.permute.xlu0 %2458
      %2464 = vst.msk [vmem:[#allocation2 + $0x10] sm:$0xff] %vm561, %v2453
      %2465 = vst.msk [vmem:[#allocation2 + $0x30] sm:$0xff] %vm561, %v2455
      %2466 = vst.msk [vmem:[#allocation2 + $0x50] sm:$0xff] %vm561, %v2457
      %2467 = vst.msk [vmem:[#allocation2 + $0x70] sm:$0xff] %vm561, %v2459
      %v2468 = vld [vmem:[%s1995] sm:$0xc]
      %v2469 = vld [vmem:[%s1995 + $0x4] sm:$0x3]
      %v2470 = vld [vmem:[%s1995 + $0x8] sm:$0xc]
      %v2471 = vld [vmem:[%s1995 + $0xc] sm:$0x3]
      %v2472 = vld [vmem:[%s1995 + $0x10] sm:$0xc]
      %v2473 = vld [vmem:[%s1995 + $0x14] sm:$0x3]
      %v2474 = vld [vmem:[%s1995 + $0x18] sm:$0xc]
      %v2475 = vld [vmem:[%s1995 + $0x1c] sm:$0x3]
      %v2476 = vld [vmem:[%s1995 + $0x20] sm:$0xc]
      %v2477 = vld [vmem:[%s1995 + $0x24] sm:$0x3]
      %v2478 = vld [vmem:[%s1995 + $0x28] sm:$0xc]
      %v2479 = vld [vmem:[%s1995 + $0x2c] sm:$0x3]
      %v2480 = vld [vmem:[%s1995 + $0x30] sm:$0xc]
      %v2481 = vld [vmem:[%s1995 + $0x34] sm:$0x3]
      %v2482 = vld [vmem:[%s1995 + $0x38] sm:$0xc]
      %v2483 = vld [vmem:[%s1995 + $0x3c] sm:$0x3]
      %v2500 = vrot.slane %v2468, 6
      %v2501 = vrot.slane %v2500, 4
      %v2502 = vrot.slane %v2469, 6
      %v2503 = vsel %vm792, %v2501, %v2502
      %v2504 = vrot.slane %v2470, 6
      %v2505 = vrot.slane %v2504, 4
      %v2506 = vrot.slane %v2471, 6
      %v2507 = vsel %vm792, %v2505, %v2506
      %v2508 = vrot.slane %v2472, 6
      %v2509 = vrot.slane %v2508, 4
      %v2510 = vrot.slane %v2473, 6
      %v2511 = vsel %vm792, %v2509, %v2510
      %v2512 = vrot.slane %v2474, 6
      %v2513 = vrot.slane %v2512, 4
      %v2514 = vrot.slane %v2475, 6
      %v2515 = vsel %vm792, %v2513, %v2514
      %v2516 = vrot.slane %v2476, 6
      %v2517 = vrot.slane %v2516, 4
      %v2518 = vrot.slane %v2477, 6
      %v2519 = vsel %vm792, %v2517, %v2518
      %v2520 = vrot.slane %v2478, 6
      %v2521 = vrot.slane %v2520, 4
      %v2522 = vrot.slane %v2479, 6
      %v2523 = vsel %vm792, %v2521, %v2522
      %v2524 = vrot.slane %v2480, 6
      %v2525 = vrot.slane %v2524, 4
      %v2526 = vrot.slane %v2481, 6
      %v2527 = vsel %vm792, %v2525, %v2526
      %v2528 = vrot.slane %v2482, 6
      %v2529 = vrot.slane %v2528, 4
      %v2530 = vrot.slane %v2483, 6
      %v2531 = vsel %vm792, %v2529, %v2530
      %v2532 = vunpack.c.l.b16 %v2503
      %v2533 = vunpack.c.l.b16 %v2507
      %v2534 = vunpack.c.l.b16 %v2511
      %v2535 = vunpack.c.l.b16 %v2515
      %v2536 = vunpack.c.l.b16 %v2519
      %v2537 = vunpack.c.l.b16 %v2523
      %v2538 = vunpack.c.l.b16 %v2527
      %v2539 = vunpack.c.l.b16 %v2531
      %v2540 = vpack.c.b16 %v2533, %v2532
      %v2541 = vpack.c.b16 %v2535, %v2534
      %v2542 = vpack.c.b16 %v2537, %v2536
      %v2543 = vpack.c.b16 %v2539, %v2538
      %2544 = vrot.lane.b32.xlu0 %v2540, 48
      %v2545 = vpop.permute.xlu0 %2544
      %2546 = vrot.lane.b32.xlu0 %v2541, 48
      %v2547 = vpop.permute.xlu0 %2546
      %2548 = vrot.lane.b32.xlu0 %v2542, 48
      %v2549 = vpop.permute.xlu0 %2548
      %2550 = vrot.lane.b32.xlu0 %v2543, 48
      %v2551 = vpop.permute.xlu0 %2550
      %2556 = vst.msk [vmem:[#allocation2 + $0x10] sm:$0xff] %vm753, %v2545
      %2557 = vst.msk [vmem:[#allocation2 + $0x30] sm:$0xff] %vm753, %v2547
      %2558 = vst.msk [vmem:[#allocation2 + $0x50] sm:$0xff] %vm753, %v2549
      %2559 = vst.msk [vmem:[#allocation2 + $0x70] sm:$0xff] %vm753, %v2551
      %s2560 = scalar_lea.vmem %s261, 32
      %v2561 = vld [vmem:[%s2560] sm:$0xf]
      %v2562 = vld [vmem:[%s2560 + $0x8] sm:$0xf]
      %v2563 = vld [vmem:[%s2560 + $0x10] sm:$0xf]
      %v2564 = vld [vmem:[%s2560 + $0x18] sm:$0xf]
      %v2565 = vld [vmem:[%s2560 + $0x20] sm:$0xf]
      %v2566 = vld [vmem:[%s2560 + $0x28] sm:$0xf]
      %v2567 = vld [vmem:[%s2560 + $0x30] sm:$0xf]
      %v2568 = vld [vmem:[%s2560 + $0x38] sm:$0xf]
      %v2577 = vunpack.c.l.b16 %v2561
      %v2578 = vunpack.c.l.b16 %v2562
      %v2579 = vunpack.c.l.b16 %v2563
      %v2580 = vunpack.c.l.b16 %v2564
      %v2581 = vunpack.c.l.b16 %v2565
      %v2582 = vunpack.c.l.b16 %v2566
      %v2583 = vunpack.c.l.b16 %v2567
      %v2584 = vunpack.c.l.b16 %v2568
      %v2585 = vpack.c.b16 %v2578, %v2577
      %v2586 = vpack.c.b16 %v2580, %v2579
      %v2587 = vpack.c.b16 %v2582, %v2581
      %v2588 = vpack.c.b16 %v2584, %v2583
      %2589 = vrot.lane.b32.xlu0 %v2585, 64
      %v2590 = vpop.permute.xlu0 %2589
      %2591 = vrot.lane.b32.xlu0 %v2586, 64
      %v2592 = vpop.permute.xlu0 %2591
      %2593 = vrot.lane.b32.xlu0 %v2587, 64
      %v2594 = vpop.permute.xlu0 %2593
      %2595 = vrot.lane.b32.xlu0 %v2588, 64
      %v2596 = vpop.permute.xlu0 %2595
      %2601 = vst.msk [vmem:[#allocation2 + $0x10] sm:$0xff] %vm849, %v2590
      %2602 = vst.msk [vmem:[#allocation2 + $0x30] sm:$0xff] %vm849, %v2592
      %2603 = vst.msk [vmem:[#allocation2 + $0x50] sm:$0xff] %vm849, %v2594
      %2604 = vst.msk [vmem:[#allocation2 + $0x70] sm:$0xff] %vm849, %v2596
      %v2605 = vld [vmem:[%s2560] sm:$0xf]
      %v2606 = vld [vmem:[%s2560 + $0x4] sm:$0x1]
      %v2607 = vld [vmem:[%s2560 + $0x8] sm:$0xf]
      %v2608 = vld [vmem:[%s2560 + $0xc] sm:$0x1]
      %v2609 = vld [vmem:[%s2560 + $0x10] sm:$0xf]
      %v2610 = vld [vmem:[%s2560 + $0x14] sm:$0x1]
      %v2611 = vld [vmem:[%s2560 + $0x18] sm:$0xf]
      %v2612 = vld [vmem:[%s2560 + $0x1c] sm:$0x1]
      %v2613 = vld [vmem:[%s2560 + $0x20] sm:$0xf]
      %v2614 = vld [vmem:[%s2560 + $0x24] sm:$0x1]
      %v2615 = vld [vmem:[%s2560 + $0x28] sm:$0xf]
      %v2616 = vld [vmem:[%s2560 + $0x2c] sm:$0x1]
      %v2617 = vld [vmem:[%s2560 + $0x30] sm:$0xf]
      %v2618 = vld [vmem:[%s2560 + $0x34] sm:$0x1]
      %v2619 = vld [vmem:[%s2560 + $0x38] sm:$0xf]
      %v2620 = vld [vmem:[%s2560 + $0x3c] sm:$0x1]
      %v2622 = vshrl.u32 %v2605, 16
      %v2624 = vrot.slane %v2622, 4
      %v2625 = vshll.u32 %v2605, 16
      %v2627 = vrot.slane %v2625, 5
      %v2628 = vor.u32 %v2624, %v2627
      %v2629 = vrot.slane %v2628, 4
      %v2631 = vshll.u32 %v2606, 16
      %v2633 = vrot.slane %v2631, 5
      %v2634 = vsel %vm328, %v2629, %v2633
      %v2636 = vshrl.u32 %v2607, 16
      %v2638 = vrot.slane %v2636, 4
      %v2639 = vshll.u32 %v2607, 16
      %v2641 = vrot.slane %v2639, 5
      %v2642 = vor.u32 %v2638, %v2641
      %v2643 = vrot.slane %v2642, 4
      %v2645 = vshll.u32 %v2608, 16
      %v2647 = vrot.slane %v2645, 5
      %v2648 = vsel %vm328, %v2643, %v2647
      %v2650 = vshrl.u32 %v2609, 16
      %v2652 = vrot.slane %v2650, 4
      %v2653 = vshll.u32 %v2609, 16
      %v2655 = vrot.slane %v2653, 5
      %v2656 = vor.u32 %v2652, %v2655
      %v2657 = vrot.slane %v2656, 4
      %v2659 = vshll.u32 %v2610, 16
      %v2661 = vrot.slane %v2659, 5
      %v2662 = vsel %vm328, %v2657, %v2661
      %v2664 = vshrl.u32 %v2611, 16
      %v2666 = vrot.slane %v2664, 4
      %v2667 = vshll.u32 %v2611, 16
      %v2669 = vrot.slane %v2667, 5
      %v2670 = vor.u32 %v2666, %v2669
      %v2671 = vrot.slane %v2670, 4
      %v2673 = vshll.u32 %v2612, 16
      %v2675 = vrot.slane %v2673, 5
      %v2676 = vsel %vm328, %v2671, %v2675
      %v2678 = vshrl.u32 %v2613, 16
      %v2680 = vrot.slane %v2678, 4
      %v2681 = vshll.u32 %v2613, 16
      %v2683 = vrot.slane %v2681, 5
      %v2684 = vor.u32 %v2680, %v2683
      %v2685 = vrot.slane %v2684, 4
      %v2687 = vshll.u32 %v2614, 16
      %v2689 = vrot.slane %v2687, 5
      %v2690 = vsel %vm328, %v2685, %v2689
      %v2692 = vshrl.u32 %v2615, 16
      %v2694 = vrot.slane %v2692, 4
      %v2695 = vshll.u32 %v2615, 16
      %v2697 = vrot.slane %v2695, 5
      %v2698 = vor.u32 %v2694, %v2697
      %v2699 = vrot.slane %v2698, 4
      %v2701 = vshll.u32 %v2616, 16
      %v2703 = vrot.slane %v2701, 5
      %v2704 = vsel %vm328, %v2699, %v2703
      %v2706 = vshrl.u32 %v2617, 16
      %v2708 = vrot.slane %v2706, 4
      %v2709 = vshll.u32 %v2617, 16
      %v2711 = vrot.slane %v2709, 5
      %v2712 = vor.u32 %v2708, %v2711
      %v2713 = vrot.slane %v2712, 4
      %v2715 = vshll.u32 %v2618, 16
      %v2717 = vrot.slane %v2715, 5
      %v2718 = vsel %vm328, %v2713, %v2717
      %v2720 = vshrl.u32 %v2619, 16
      %v2722 = vrot.slane %v2720, 4
      %v2723 = vshll.u32 %v2619, 16
      %v2725 = vrot.slane %v2723, 5
      %v2726 = vor.u32 %v2722, %v2725
      %v2727 = vrot.slane %v2726, 4
      %v2729 = vshll.u32 %v2620, 16
      %v2731 = vrot.slane %v2729, 5
      %v2732 = vsel %vm328, %v2727, %v2731
      %v2733 = vunpack.c.l.b16 %v2634
      %v2734 = vunpack.c.l.b16 %v2648
      %v2735 = vunpack.c.l.b16 %v2662
      %v2736 = vunpack.c.l.b16 %v2676
      %v2737 = vunpack.c.l.b16 %v2690
      %v2738 = vunpack.c.l.b16 %v2704
      %v2739 = vunpack.c.l.b16 %v2718
      %v2740 = vunpack.c.l.b16 %v2732
      %v2741 = vpack.c.b16 %v2734, %v2733
      %v2742 = vpack.c.b16 %v2736, %v2735
      %v2743 = vpack.c.b16 %v2738, %v2737
      %v2744 = vpack.c.b16 %v2740, %v2739
      %2745 = vrot.lane.b32.xlu0 %v2741, 80
      %v2746 = vpop.permute.xlu0 %2745
      %2747 = vrot.lane.b32.xlu0 %v2742, 80
      %v2748 = vpop.permute.xlu0 %2747
      %2749 = vrot.lane.b32.xlu0 %v2743, 80
      %v2750 = vpop.permute.xlu0 %2749
      %2751 = vrot.lane.b32.xlu0 %v2744, 80
      %v2752 = vpop.permute.xlu0 %2751
      %2757 = vst.msk [vmem:[#allocation2 + $0x10] sm:$0xff] %vm895, %v2746
      %2758 = vst.msk [vmem:[#allocation2 + $0x30] sm:$0xff] %vm895, %v2748
      %2759 = vst.msk [vmem:[#allocation2 + $0x50] sm:$0xff] %vm895, %v2750
      %2760 = vst.msk [vmem:[#allocation2 + $0x70] sm:$0xff] %vm895, %v2752
      %v2761 = vld [vmem:[%s2560] sm:$0xe]
      %v2762 = vld [vmem:[%s2560 + $0x4] sm:$0x1]
      %v2763 = vld [vmem:[%s2560 + $0x8] sm:$0xe]
      %v2764 = vld [vmem:[%s2560 + $0xc] sm:$0x1]
      %v2765 = vld [vmem:[%s2560 + $0x10] sm:$0xe]
      %v2766 = vld [vmem:[%s2560 + $0x14] sm:$0x1]
      %v2767 = vld [vmem:[%s2560 + $0x18] sm:$0xe]
      %v2768 = vld [vmem:[%s2560 + $0x1c] sm:$0x1]
      %v2769 = vld [vmem:[%s2560 + $0x20] sm:$0xe]
      %v2770 = vld [vmem:[%s2560 + $0x24] sm:$0x1]
      %v2771 = vld [vmem:[%s2560 + $0x28] sm:$0xe]
      %v2772 = vld [vmem:[%s2560 + $0x2c] sm:$0x1]
      %v2773 = vld [vmem:[%s2560 + $0x30] sm:$0xe]
      %v2774 = vld [vmem:[%s2560 + $0x34] sm:$0x1]
      %v2775 = vld [vmem:[%s2560 + $0x38] sm:$0xe]
      %v2776 = vld [vmem:[%s2560 + $0x3c] sm:$0x1]
      %v2793 = vrot.slane %v2761, 5
      %v2794 = vrot.slane %v2793, 4
      %v2795 = vrot.slane %v2762, 5
      %v2796 = vsel %vm504, %v2794, %v2795
      %v2797 = vrot.slane %v2763, 5
      %v2798 = vrot.slane %v2797, 4
      %v2799 = vrot.slane %v2764, 5
      %v2800 = vsel %vm504, %v2798, %v2799
      %v2801 = vrot.slane %v2765, 5
      %v2802 = vrot.slane %v2801, 4
      %v2803 = vrot.slane %v2766, 5
      %v2804 = vsel %vm504, %v2802, %v2803
      %v2805 = vrot.slane %v2767, 5
      %v2806 = vrot.slane %v2805, 4
      %v2807 = vrot.slane %v2768, 5
      %v2808 = vsel %vm504, %v2806, %v2807
      %v2809 = vrot.slane %v2769, 5
      %v2810 = vrot.slane %v2809, 4
      %v2811 = vrot.slane %v2770, 5
      %v2812 = vsel %vm504, %v2810, %v2811
      %v2813 = vrot.slane %v2771, 5
      %v2814 = vrot.slane %v2813, 4
      %v2815 = vrot.slane %v2772, 5
      %v2816 = vsel %vm504, %v2814, %v2815
      %v2817 = vrot.slane %v2773, 5
      %v2818 = vrot.slane %v2817, 4
      %v2819 = vrot.slane %v2774, 5
      %v2820 = vsel %vm504, %v2818, %v2819
      %v2821 = vrot.slane %v2775, 5
      %v2822 = vrot.slane %v2821, 4
      %v2823 = vrot.slane %v2776, 5
      %v2824 = vsel %vm504, %v2822, %v2823
      %v2825 = vunpack.c.l.b16 %v2796
      %v2826 = vunpack.c.l.b16 %v2800
      %v2827 = vunpack.c.l.b16 %v2804
      %v2828 = vunpack.c.l.b16 %v2808
      %v2829 = vunpack.c.l.b16 %v2812
      %v2830 = vunpack.c.l.b16 %v2816
      %v2831 = vunpack.c.l.b16 %v2820
      %v2832 = vunpack.c.l.b16 %v2824
      %v2833 = vpack.c.b16 %v2826, %v2825
      %v2834 = vpack.c.b16 %v2828, %v2827
      %v2835 = vpack.c.b16 %v2830, %v2829
      %v2836 = vpack.c.b16 %v2832, %v2831
      %2837 = vrot.lane.b32.xlu0 %v2833, 96
      %v2838 = vpop.permute.xlu0 %2837
      %2839 = vrot.lane.b32.xlu0 %v2834, 96
      %v2840 = vpop.permute.xlu0 %2839
      %2841 = vrot.lane.b32.xlu0 %v2835, 96
      %v2842 = vpop.permute.xlu0 %2841
      %2843 = vrot.lane.b32.xlu0 %v2836, 96
      %v2844 = vpop.permute.xlu0 %2843
      %2849 = vst.msk [vmem:[#allocation2 + $0x10] sm:$0xff] %vm1052, %v2838
      %2850 = vst.msk [vmem:[#allocation2 + $0x30] sm:$0xff] %vm1052, %v2840
      %2851 = vst.msk [vmem:[#allocation2 + $0x50] sm:$0xff] %vm1052, %v2842
      %2852 = vst.msk [vmem:[#allocation2 + $0x70] sm:$0xff] %vm1052, %v2844
      %v2853 = vld [vmem:[%s2560] sm:$0xe]
      %v2854 = vld [vmem:[%s2560 + $0x4] sm:$0x3]
      %v2855 = vld [vmem:[%s2560 + $0x8] sm:$0xe]
      %v2856 = vld [vmem:[%s2560 + $0xc] sm:$0x3]
      %v2857 = vld [vmem:[%s2560 + $0x10] sm:$0xe]
      %v2858 = vld [vmem:[%s2560 + $0x14] sm:$0x3]
      %v2859 = vld [vmem:[%s2560 + $0x18] sm:$0xe]
      %v2860 = vld [vmem:[%s2560 + $0x1c] sm:$0x3]
      %v2861 = vld [vmem:[%s2560 + $0x20] sm:$0xe]
      %v2862 = vld [vmem:[%s2560 + $0x24] sm:$0x3]
      %v2863 = vld [vmem:[%s2560 + $0x28] sm:$0xe]
      %v2864 = vld [vmem:[%s2560 + $0x2c] sm:$0x3]
      %v2865 = vld [vmem:[%s2560 + $0x30] sm:$0xe]
      %v2866 = vld [vmem:[%s2560 + $0x34] sm:$0x3]
      %v2867 = vld [vmem:[%s2560 + $0x38] sm:$0xe]
      %v2868 = vld [vmem:[%s2560 + $0x3c] sm:$0x3]
      %v2870 = vshrl.u32 %v2853, 16
      %v2872 = vrot.slane %v2870, 5
      %v2873 = vshll.u32 %v2853, 16
      %v2875 = vrot.slane %v2873, 6
      %v2876 = vor.u32 %v2872, %v2875
      %v2877 = vrot.slane %v2876, 4
      %v2879 = vshrl.u32 %v2854, 16
      %v2881 = vrot.slane %v2879, 5
      %v2882 = vshll.u32 %v2854, 16
      %v2884 = vrot.slane %v2882, 6
      %v2885 = vor.u32 %v2881, %v2884
      %v2886 = vsel %vm584, %v2877, %v2885
      %v2888 = vshrl.u32 %v2855, 16
      %v2890 = vrot.slane %v2888, 5
      %v2891 = vshll.u32 %v2855, 16
      %v2893 = vrot.slane %v2891, 6
      %v2894 = vor.u32 %v2890, %v2893
      %v2895 = vrot.slane %v2894, 4
      %v2897 = vshrl.u32 %v2856, 16
      %v2899 = vrot.slane %v2897, 5
      %v2900 = vshll.u32 %v2856, 16
      %v2902 = vrot.slane %v2900, 6
      %v2903 = vor.u32 %v2899, %v2902
      %v2904 = vsel %vm584, %v2895, %v2903
      %v2906 = vshrl.u32 %v2857, 16
      %v2908 = vrot.slane %v2906, 5
      %v2909 = vshll.u32 %v2857, 16
      %v2911 = vrot.slane %v2909, 6
      %v2912 = vor.u32 %v2908, %v2911
      %v2913 = vrot.slane %v2912, 4
      %v2915 = vshrl.u32 %v2858, 16
      %v2917 = vrot.slane %v2915, 5
      %v2918 = vshll.u32 %v2858, 16
      %v2920 = vrot.slane %v2918, 6
      %v2921 = vor.u32 %v2917, %v2920
      %v2922 = vsel %vm584, %v2913, %v2921
      %v2924 = vshrl.u32 %v2859, 16
      %v2926 = vrot.slane %v2924, 5
      %v2927 = vshll.u32 %v2859, 16
      %v2929 = vrot.slane %v2927, 6
      %v2930 = vor.u32 %v2926, %v2929
      %v2931 = vrot.slane %v2930, 4
      %v2933 = vshrl.u32 %v2860, 16
      %v2935 = vrot.slane %v2933, 5
      %v2936 = vshll.u32 %v2860, 16
      %v2938 = vrot.slane %v2936, 6
      %v2939 = vor.u32 %v2935, %v2938
      %v2940 = vsel %vm584, %v2931, %v2939
      %v2942 = vshrl.u32 %v2861, 16
      %v2944 = vrot.slane %v2942, 5
      %v2945 = vshll.u32 %v2861, 16
      %v2947 = vrot.slane %v2945, 6
      %v2948 = vor.u32 %v2944, %v2947
      %v2949 = vrot.slane %v2948, 4
      %v2951 = vshrl.u32 %v2862, 16
      %v2953 = vrot.slane %v2951, 5
      %v2954 = vshll.u32 %v2862, 16
      %v2956 = vrot.slane %v2954, 6
      %v2957 = vor.u32 %v2953, %v2956
      %v2958 = vsel %vm584, %v2949, %v2957
      %v2960 = vshrl.u32 %v2863, 16
      %v2962 = vrot.slane %v2960, 5
      %v2963 = vshll.u32 %v2863, 16
      %v2965 = vrot.slane %v2963, 6
      %v2966 = vor.u32 %v2962, %v2965
      %v2967 = vrot.slane %v2966, 4
      %v2969 = vshrl.u32 %v2864, 16
      %v2971 = vrot.slane %v2969, 5
      %v2972 = vshll.u32 %v2864, 16
      %v2974 = vrot.slane %v2972, 6
      %v2975 = vor.u32 %v2971, %v2974
      %v2976 = vsel %vm584, %v2967, %v2975
      %v2978 = vshrl.u32 %v2865, 16
      %v2980 = vrot.slane %v2978, 5
      %v2981 = vshll.u32 %v2865, 16
      %v2983 = vrot.slane %v2981, 6
      %v2984 = vor.u32 %v2980, %v2983
      %v2985 = vrot.slane %v2984, 4
      %v2987 = vshrl.u32 %v2866, 16
      %v2989 = vrot.slane %v2987, 5
      %v2990 = vshll.u32 %v2866, 16
      %v2992 = vrot.slane %v2990, 6
      %v2993 = vor.u32 %v2989, %v2992
      %v2994 = vsel %vm584, %v2985, %v2993
      %v2996 = vshrl.u32 %v2867, 16
      %v2998 = vrot.slane %v2996, 5
      %v2999 = vshll.u32 %v2867, 16
      %v3001 = vrot.slane %v2999, 6
      %v3002 = vor.u32 %v2998, %v3001
      %v3003 = vrot.slane %v3002, 4
      %v3005 = vshrl.u32 %v2868, 16
      %v3007 = vrot.slane %v3005, 5
      %v3008 = vshll.u32 %v2868, 16
      %v3010 = vrot.slane %v3008, 6
      %v3011 = vor.u32 %v3007, %v3010
      %v3012 = vsel %vm584, %v3003, %v3011
      %v3013 = vunpack.c.l.b16 %v2886
      %v3014 = vunpack.c.l.b16 %v2904
      %v3015 = vunpack.c.l.b16 %v2922
      %v3016 = vunpack.c.l.b16 %v2940
      %v3017 = vunpack.c.l.b16 %v2958
      %v3018 = vunpack.c.l.b16 %v2976
      %v3019 = vunpack.c.l.b16 %v2994
      %v3020 = vunpack.c.l.b16 %v3012
      %v3021 = vpack.c.b16 %v3014, %v3013
      %v3022 = vpack.c.b16 %v3016, %v3015
      %v3023 = vpack.c.b16 %v3018, %v3017
      %v3024 = vpack.c.b16 %v3020, %v3019
      %3025 = vrot.lane.b32.xlu0 %v3021, 112
      %v3026 = vpop.permute.xlu0 %3025
      %3027 = vrot.lane.b32.xlu0 %v3022, 112
      %v3028 = vpop.permute.xlu0 %3027
      %3029 = vrot.lane.b32.xlu0 %v3023, 112
      %v3030 = vpop.permute.xlu0 %3029
      %3031 = vrot.lane.b32.xlu0 %v3024, 112
      %v3032 = vpop.permute.xlu0 %3031
      %3037 = vst.msk [vmem:[#allocation2 + $0x10] sm:$0xff] %vm1145, %v3026
      %3038 = vst.msk [vmem:[#allocation2 + $0x30] sm:$0xff] %vm1145, %v3028
      %3039 = vst.msk [vmem:[#allocation2 + $0x50] sm:$0xff] %vm1145, %v3030
      %3040 = vst.msk [vmem:[#allocation2 + $0x70] sm:$0xff] %vm1145, %v3032
      %v3041 = vld [vmem:[%s2560] sm:$0xc]
      %v3042 = vld [vmem:[%s2560 + $0x4] sm:$0x3]
      %v3043 = vld [vmem:[%s2560 + $0x8] sm:$0xc]
      %v3044 = vld [vmem:[%s2560 + $0xc] sm:$0x3]
      %v3045 = vld [vmem:[%s2560 + $0x10] sm:$0xc]
      %v3046 = vld [vmem:[%s2560 + $0x14] sm:$0x3]
      %v3047 = vld [vmem:[%s2560 + $0x18] sm:$0xc]
      %v3048 = vld [vmem:[%s2560 + $0x1c] sm:$0x3]
      %v3049 = vld [vmem:[%s2560 + $0x20] sm:$0xc]
      %v3050 = vld [vmem:[%s2560 + $0x24] sm:$0x3]
      %v3051 = vld [vmem:[%s2560 + $0x28] sm:$0xc]
      %v3052 = vld [vmem:[%s2560 + $0x2c] sm:$0x3]
      %v3053 = vld [vmem:[%s2560 + $0x30] sm:$0xc]
      %v3054 = vld [vmem:[%s2560 + $0x34] sm:$0x3]
      %v3055 = vld [vmem:[%s2560 + $0x38] sm:$0xc]
      %v3056 = vld [vmem:[%s2560 + $0x3c] sm:$0x3]
      %v3073 = vrot.slane %v3041, 6
      %v3074 = vrot.slane %v3073, 4
      %v3075 = vrot.slane %v3042, 6
      %v3076 = vsel %vm792, %v3074, %v3075
      %v3077 = vrot.slane %v3043, 6
      %v3078 = vrot.slane %v3077, 4
      %v3079 = vrot.slane %v3044, 6
      %v3080 = vsel %vm792, %v3078, %v3079
      %v3081 = vrot.slane %v3045, 6
      %v3082 = vrot.slane %v3081, 4
      %v3083 = vrot.slane %v3046, 6
      %v3084 = vsel %vm792, %v3082, %v3083
      %v3085 = vrot.slane %v3047, 6
      %v3086 = vrot.slane %v3085, 4
      %v3087 = vrot.slane %v3048, 6
      %v3088 = vsel %vm792, %v3086, %v3087
      %v3089 = vrot.slane %v3049, 6
      %v3090 = vrot.slane %v3089, 4
      %v3091 = vrot.slane %v3050, 6
      %v3092 = vsel %vm792, %v3090, %v3091
      %v3093 = vrot.slane %v3051, 6
      %v3094 = vrot.slane %v3093, 4
      %v3095 = vrot.slane %v3052, 6
      %v3096 = vsel %vm792, %v3094, %v3095
      %v3097 = vrot.slane %v3053, 6
      %v3098 = vrot.slane %v3097, 4
      %v3099 = vrot.slane %v3054, 6
      %v3100 = vsel %vm792, %v3098, %v3099
      %v3101 = vrot.slane %v3055, 6
      %v3102 = vrot.slane %v3101, 4
      %v3103 = vrot.slane %v3056, 6
      %v3104 = vsel %vm792, %v3102, %v3103
      %v3105 = vunpack.c.l.b16 %v3076
      %v3106 = vunpack.c.l.b16 %v3080
      %v3107 = vunpack.c.l.b16 %v3084
      %v3108 = vunpack.c.l.b16 %v3088
      %v3109 = vunpack.c.l.b16 %v3092
      %v3110 = vunpack.c.l.b16 %v3096
      %v3111 = vunpack.c.l.b16 %v3100
      %v3112 = vunpack.c.l.b16 %v3104
      %v3113 = vpack.c.b16 %v3106, %v3105
      %v3114 = vpack.c.b16 %v3108, %v3107
      %v3115 = vpack.c.b16 %v3110, %v3109
      %v3116 = vpack.c.b16 %v3112, %v3111
      %3121 = vst.msk [vmem:[#allocation2 + $0x18] sm:$0xff] %vm305, %v3113
      %3122 = vst.msk [vmem:[#allocation2 + $0x38] sm:$0xff] %vm305, %v3114
      %3123 = vst.msk [vmem:[#allocation2 + $0x58] sm:$0xff] %vm305, %v3115
      %3124 = vst.msk [vmem:[#allocation2 + $0x78] sm:$0xff] %vm305, %v3116
      %v3125 = vld [vmem:[#allocation2] sm:$0xff]
      %v3126 = vld [vmem:[#allocation2 + $0x8] sm:$0xff]
      %v3127 = vld [vmem:[#allocation2 + $0x10] sm:$0xff]
      %v3128 = vld [vmem:[#allocation2 + $0x18] sm:$0xff]
      %v3129 = vld [vmem:[#allocation2 + $0x20] sm:$0xff]
      %v3130 = vld [vmem:[#allocation2 + $0x28] sm:$0xff]
      %v3131 = vld [vmem:[#allocation2 + $0x30] sm:$0xff]
      %v3132 = vld [vmem:[#allocation2 + $0x38] sm:$0xff]
      %v3133 = vld [vmem:[#allocation2 + $0x40] sm:$0xff]
      %v3134 = vld [vmem:[#allocation2 + $0x48] sm:$0xff]
      %v3135 = vld [vmem:[#allocation2 + $0x50] sm:$0xff]
      %v3136 = vld [vmem:[#allocation2 + $0x58] sm:$0xff]
      %v3137 = vld [vmem:[#allocation2 + $0x60] sm:$0xff]
      %v3138 = vld [vmem:[#allocation2 + $0x68] sm:$0xff]
      %v3139 = vld [vmem:[#allocation2 + $0x70] sm:$0xff]
      %v3140 = vld [vmem:[#allocation2 + $0x78] sm:$0xff]
      %v3141 = vld [vmem:[%s1] sm:$0xf]
      %v3142 = vld [vmem:[%s1 + $0x4] sm:$0xf]
      %v3143 = vld [vmem:[%s1 + $0x8] sm:$0xf]
      %v3144 = vld [vmem:[%s1 + $0xc] sm:$0xf]
      %v3145 = vld [vmem:[%s1 + $0x10] sm:$0xf]
      %v3146 = vld [vmem:[%s1 + $0x14] sm:$0xf]
      %v3147 = vld [vmem:[%s1 + $0x18] sm:$0xf]
      %v3148 = vld [vmem:[%s1 + $0x1c] sm:$0xf]
      %v3149 = vld [vmem:[%s1 + $0x20] sm:$0xf]
      %v3150 = vld [vmem:[%s1 + $0x24] sm:$0xf]
      %v3151 = vld [vmem:[%s1 + $0x28] sm:$0xf]
      %v3152 = vld [vmem:[%s1 + $0x2c] sm:$0xf]
      %v3153 = vld [vmem:[%s1 + $0x30] sm:$0xf]
      %v3154 = vld [vmem:[%s1 + $0x34] sm:$0xf]
      %v3155 = vld [vmem:[%s1 + $0x38] sm:$0xf]
      %v3156 = vld [vmem:[%s1 + $0x3c] sm:$0xf]
      %v3157 = vld [vmem:[%s1 + $0x40] sm:$0xf]
      %v3158 = vld [vmem:[%s1 + $0x44] sm:$0xf]
      %v3159 = vld [vmem:[%s1 + $0x48] sm:$0xf]
      %v3160 = vld [vmem:[%s1 + $0x4c] sm:$0xf]
      %v3161 = vld [vmem:[%s1 + $0x50] sm:$0xf]
      %v3162 = vld [vmem:[%s1 + $0x54] sm:$0xf]
      %v3163 = vld [vmem:[%s1 + $0x58] sm:$0xf]
      %v3164 = vld [vmem:[%s1 + $0x5c] sm:$0xf]
      %v3165 = vld [vmem:[%s1 + $0x60] sm:$0xf]
      %v3166 = vld [vmem:[%s1 + $0x64] sm:$0xf]
      %v3167 = vld [vmem:[%s1 + $0x68] sm:$0xf]
      %v3168 = vld [vmem:[%s1 + $0x6c] sm:$0xf]
      %v3169 = vld [vmem:[%s1 + $0x70] sm:$0xf]
      %v3170 = vld [vmem:[%s1 + $0x74] sm:$0xf]
      %v3171 = vld [vmem:[%s1 + $0x78] sm:$0xf]
      %v3172 = vld [vmem:[%s1 + $0x7c] sm:$0xf]
      %v3173 = vld [vmem:[%s1 + $0x80] sm:$0xf]
      %v3174 = vld [vmem:[%s1 + $0x84] sm:$0xf]
      %v3175 = vld [vmem:[%s1 + $0x88] sm:$0xf]
      %v3176 = vld [vmem:[%s1 + $0x8c] sm:$0xf]
      %v3177 = vld [vmem:[%s1 + $0x90] sm:$0xf]
      %v3178 = vld [vmem:[%s1 + $0x94] sm:$0xf]
      %v3179 = vld [vmem:[%s1 + $0x98] sm:$0xf]
      %v3180 = vld [vmem:[%s1 + $0x9c] sm:$0xf]
      %v3181 = vld [vmem:[%s1 + $0xa0] sm:$0xf]
      %v3182 = vld [vmem:[%s1 + $0xa4] sm:$0xf]
      %v3183 = vld [vmem:[%s1 + $0xa8] sm:$0xf]
      %v3184 = vld [vmem:[%s1 + $0xac] sm:$0xf]
      %v3185 = vld [vmem:[%s1 + $0xb0] sm:$0xf]
      %v3186 = vld [vmem:[%s1 + $0xb4] sm:$0xf]
      %v3187 = vld [vmem:[%s1 + $0xb8] sm:$0xf]
      %v3188 = vld [vmem:[%s1 + $0xbc] sm:$0xf]
      %v3189 = vld [vmem:[%s1 + $0xc0] sm:$0xf]
      %v3190 = vld [vmem:[%s1 + $0xc4] sm:$0xf]
      %v3191 = vld [vmem:[%s2] sm:$0x1]
      %v3193 = vlaneseq
      %v3194 = vshrl.u32 %v3193, 7
      %v3195 = vsub.s32 0, %v3194
      %v3196 = vrot.slane %v3191, %v3195
      %v3248 = vunpack.c.l.b16 %v3141
      %v3249 = vunpack.c.l.b16 %v3142
      %v3250 = vunpack.c.l.b16 %v3143
      %v3251 = vunpack.c.l.b16 %v3144
      %v3252 = vunpack.c.l.b16 %v3145
      %v3253 = vunpack.c.l.b16 %v3146
      %v3254 = vunpack.c.l.b16 %v3147
      %v3255 = vunpack.c.l.b16 %v3148
      %v3256 = vunpack.c.l.b16 %v3149
      %v3257 = vunpack.c.l.b16 %v3150
      %v3258 = vunpack.c.l.b16 %v3151
      %v3259 = vunpack.c.l.b16 %v3152
      %v3260 = vunpack.c.l.b16 %v3153
      %v3261 = vunpack.c.l.b16 %v3154
      %v3262 = vunpack.c.l.b16 %v3155
      %v3263 = vunpack.c.l.b16 %v3156
      %v3264 = vunpack.c.l.b16 %v3157
      %v3265 = vunpack.c.l.b16 %v3158
      %v3266 = vunpack.c.l.b16 %v3159
      %v3267 = vunpack.c.l.b16 %v3160
      %v3268 = vunpack.c.l.b16 %v3161
      %v3269 = vunpack.c.l.b16 %v3162
      %v3270 = vunpack.c.l.b16 %v3163
      %v3271 = vunpack.c.l.b16 %v3164
      %v3272 = vunpack.c.l.b16 %v3165
      %v3273 = vunpack.c.l.b16 %v3166
      %v3274 = vunpack.c.l.b16 %v3167
      %v3275 = vunpack.c.l.b16 %v3168
      %v3276 = vunpack.c.l.b16 %v3169
      %v3277 = vunpack.c.l.b16 %v3170
      %v3278 = vunpack.c.l.b16 %v3171
      %v3279 = vunpack.c.l.b16 %v3172
      %v3280 = vunpack.c.l.b16 %v3173
      %v3281 = vunpack.c.l.b16 %v3174
      %v3282 = vunpack.c.l.b16 %v3175
      %v3283 = vunpack.c.l.b16 %v3176
      %v3284 = vunpack.c.l.b16 %v3177
      %v3285 = vunpack.c.l.b16 %v3178
      %v3286 = vunpack.c.l.b16 %v3179
      %v3287 = vunpack.c.l.b16 %v3180
      %v3288 = vunpack.c.l.b16 %v3181
      %v3289 = vunpack.c.l.b16 %v3182
      %v3290 = vunpack.c.l.b16 %v3183
      %v3291 = vunpack.c.l.b16 %v3184
      %v3292 = vunpack.c.l.b16 %v3185
      %v3293 = vunpack.c.l.b16 %v3186
      %v3294 = vunpack.c.l.b16 %v3187
      %v3295 = vunpack.c.l.b16 %v3188
      %v3296 = vunpack.c.l.b16 %v3189
      %v3297 = vunpack.c.l.b16 %v3190
      %v3298 = vpack.c.b16 %v3249, %v3248
      %v3299 = vpack.c.b16 %v3251, %v3250
      %v3300 = vpack.c.b16 %v3253, %v3252
      %v3301 = vpack.c.b16 %v3255, %v3254
      %v3302 = vpack.c.b16 %v3257, %v3256
      %v3303 = vpack.c.b16 %v3259, %v3258
      %v3304 = vpack.c.b16 %v3261, %v3260
      %v3305 = vpack.c.b16 %v3263, %v3262
      %v3306 = vpack.c.b16 %v3265, %v3264
      %v3307 = vpack.c.b16 %v3267, %v3266
      %v3308 = vpack.c.b16 %v3269, %v3268
      %v3309 = vpack.c.b16 %v3271, %v3270
      %v3310 = vpack.c.b16 %v3273, %v3272
      %v3311 = vpack.c.b16 %v3275, %v3274
      %v3312 = vpack.c.b16 %v3277, %v3276
      %v3313 = vpack.c.b16 %v3279, %v3278
      %v3314 = vpack.c.b16 %v3281, %v3280
      %v3315 = vpack.c.b16 %v3283, %v3282
      %v3316 = vpack.c.b16 %v3285, %v3284
      %v3317 = vpack.c.b16 %v3287, %v3286
      %v3318 = vpack.c.b16 %v3289, %v3288
      %v3319 = vpack.c.b16 %v3291, %v3290
      %v3320 = vpack.c.b16 %v3293, %v3292
      %v3321 = vpack.c.b16 %v3295, %v3294
      %v3322 = vpack.c.b16 %v3297, %v3296
      %v3349 = vsel %vm305, %v3128, 0
      %v3352 = vsel %vm305, %v3132, 0
      %v3355 = vsel %vm305, %v3136, 0
      %v3358 = vsel %vm305, %v3140, 0
      %3360 = vmatprep.subr.bf16.mxu0 0
      %3361 = vmatpush1.bf16.msra.mxu0 %v3298
      %3362 = vmatprep.subr.bf16.mxu0 0
      %3363 = vmatpush1.bf16.msra.mxu0 %v3299
      %3364 = vmatprep.subr.bf16.mxu0 0
      %3365 = vmatpush1.bf16.msra.mxu0 %v3300
      %3366 = vmatprep.subr.bf16.mxu0 0
      %3367 = vmatpush1.bf16.msra.mxu0 %v3301
      %3368 = vmatprep.subr.bf16.mxu0 0
      %3369 = vmatpush1.bf16.msra.mxu0 %v3302
      %3370 = vmatprep.subr.bf16.mxu0 0
      %3371 = vmatpush1.bf16.msra.mxu0 %v3303
      %3372 = vmatprep.subr.bf16.mxu0 0
      %3373 = vmatpush1.bf16.msra.mxu0 %v3304
      %3374 = vmatprep.subr.bf16.mxu0 0
      %3375 = vmatpush1.bf16.msra.mxu0 %v3305
      %3376 = vmatprep.subr.bf16.mxu0 0
      %3377 = vmatpush1.bf16.msra.mxu0 %v3306
      %3378 = vmatprep.subr.bf16.mxu0 0
      %3379 = vmatpush1.bf16.msra.mxu0 %v3307
      %3380 = vmatprep.subr.bf16.mxu0 0
      %3381 = vmatpush1.bf16.msra.mxu0 %v3308
      %3382 = vmatprep.subr.bf16.mxu0 0
      %3383 = vmatpush1.bf16.msra.mxu0 %v3309
      %3384 = vmatprep.subr.bf16.mxu0 0
      %3385 = vmatpush1.bf16.msra.mxu0 %v3310
      %3386 = vmatprep.subr.bf16.mxu0 0
      %3387 = vmatpush1.bf16.msra.mxu0 %v3311
      %3388 = vmatprep.subr.bf16.mxu0 0
      %3389 = vmatpush1.bf16.msra.mxu0 %v3312
      %3390 = vmatprep.subr.bf16.mxu0 0
      %3391 = vmatpush1.bf16.msra.mxu0 %v3313
      %3392 = vmatprep.mubr.bf16.mxu0 %v3126
      %3393 = vmatmul.mubr.bf16.gmra.mrb[0].mxu0 %v3125
      %v3394 = vpop.f32.mrb[0].mxu0
      %v3395 = vadd.f32 %v3196, %v3394
      %v3396 = vpop.f32.mrb[0].mxu0
      %v3397 = vpop.f32.mrb[0].mxu0
      %v3398 = vadd.f32 %v3196, %v3397
      %v3399 = vpop.f32.mrb[0].mxu0
      %3400 = vmatprep.mubr.bf16.mxu0 %v3130
      %3401 = vmatmul.mubr.bf16.gmra.mrb[0].mxu0 %v3129
      %v3402 = vpop.f32.mrb[0].mxu0
      %v3403 = vadd.f32 %v3196, %v3402
      %v3404 = vpop.f32.mrb[0].mxu0
      %v3405 = vpop.f32.mrb[0].mxu0
      %v3406 = vadd.f32 %v3196, %v3405
      %v3407 = vpop.f32.mrb[0].mxu0
      %3408 = vmatprep.mubr.bf16.mxu0 %v3134
      %3409 = vmatmul.mubr.bf16.gmra.mrb[0].mxu0 %v3133
      %v3410 = vpop.f32.mrb[0].mxu0
      %v3411 = vadd.f32 %v3196, %v3410
      %v3412 = vpop.f32.mrb[0].mxu0
      %v3413 = vpop.f32.mrb[0].mxu0
      %v3414 = vadd.f32 %v3196, %v3413
      %v3415 = vpop.f32.mrb[0].mxu0
      %3416 = vmatprep.mubr.bf16.mxu0 %v3138
      %3417 = vmatmul.mubr.bf16.gmra.mrb[0].mxu0 %v3137
      %v3418 = vpop.f32.mrb[0].mxu0
      %v3419 = vadd.f32 %v3196, %v3418
      %v3420 = vpop.f32.mrb[0].mxu0
      %v3421 = vpop.f32.mrb[0].mxu0
      %v3422 = vadd.f32 %v3196, %v3421
      %v3423 = vpop.f32.mrb[0].mxu0
      %3424 = vdwg.mxu0
      %3425 = vmatprep.subr.bf16.mxu0 0
      %3426 = vmatpush1.bf16.msra.mxu0 %v3314
      %3427 = vmatprep.subr.bf16.mxu0 0
      %3428 = vmatpush1.bf16.msra.mxu0 %v3315
      %3429 = vmatprep.subr.bf16.mxu0 0
      %3430 = vmatpush1.bf16.msra.mxu0 %v3316
      %3431 = vmatprep.subr.bf16.mxu0 0
      %3432 = vmatpush1.bf16.msra.mxu0 %v3317
      %3433 = vmatprep.subr.bf16.mxu0 0
      %3434 = vmatpush1.bf16.msra.mxu0 %v3318
      %3435 = vmatprep.subr.bf16.mxu0 0
      %3436 = vmatpush1.bf16.msra.mxu0 %v3319
      %3437 = vmatprep.subr.bf16.mxu0 0
      %3438 = vmatpush1.bf16.msra.mxu0 %v3320
      %3439 = vmatprep.subr.bf16.mxu0 0
      %3440 = vmatpush1.bf16.msra.mxu0 %v3321
      %3441 = vmatprep.subr.bf16.mxu0 0
      %3442 = vmatpush1.bf16.msra.mxu0 %v3322
      %3443 = vmatprep.subr.bf16.mxu0 0
      %3444 = vmatpush1.bf16.msra.mxu0 0
      %3445 = vmatprep.subr.bf16.mxu0 0
      %3446 = vmatpush1.bf16.msra.mxu0 0
      %3447 = vmatprep.subr.bf16.mxu0 0
      %3448 = vmatpush1.bf16.msra.mxu0 0
      %3449 = vmatprep.subr.bf16.mxu0 0
      %3450 = vmatpush1.bf16.msra.mxu0 0
      %3451 = vmatprep.subr.bf16.mxu0 0
      %3452 = vmatpush1.bf16.msra.mxu0 0
      %3453 = vmatprep.subr.bf16.mxu0 0
      %3454 = vmatpush1.bf16.msra.mxu0 0
      %3455 = vmatprep.subr.bf16.mxu0 0
      %3456 = vmatpush1.bf16.msra.mxu0 0
      %3457 = vmatprep.mubr.bf16.mxu0 %v3349
      %3458 = vmatmul.mubr.bf16.gmra.mrb[0].mxu0 %v3127
      %v3459 = vpop.f32.mrb[0].mxu0
      %v3460 = vadd.f32 %v3395, %v3459
      %v3461 = vpop.f32.mrb[0].mxu0
      %v3462 = vpop.f32.mrb[0].mxu0
      %v3463 = vadd.f32 %v3398, %v3462
      %v3464 = vpop.f32.mrb[0].mxu0
      %3465 = vmatprep.mubr.bf16.mxu0 %v3352
      %3466 = vmatmul.mubr.bf16.gmra.mrb[0].mxu0 %v3131
      %v3467 = vpop.f32.mrb[0].mxu0
      %v3468 = vadd.f32 %v3403, %v3467
      %v3469 = vpop.f32.mrb[0].mxu0
      %v3470 = vpop.f32.mrb[0].mxu0
      %v3471 = vadd.f32 %v3406, %v3470
      %v3472 = vpop.f32.mrb[0].mxu0
      %3473 = vmatprep.mubr.bf16.mxu0 %v3355
      %3474 = vmatmul.mubr.bf16.gmra.mrb[0].mxu0 %v3135
      %v3475 = vpop.f32.mrb[0].mxu0
      %v3476 = vadd.f32 %v3411, %v3475
      %v3477 = vpop.f32.mrb[0].mxu0
      %v3478 = vpop.f32.mrb[0].mxu0
      %v3479 = vadd.f32 %v3414, %v3478
      %v3480 = vpop.f32.mrb[0].mxu0
      %3481 = vmatprep.mubr.bf16.mxu0 %v3358
      %3482 = vmatmul.mubr.bf16.gmra.mrb[0].mxu0 %v3139
      %v3483 = vpop.f32.mrb[0].mxu0
      %v3484 = vadd.f32 %v3419, %v3483
      %v3485 = vpop.f32.mrb[0].mxu0
      %v3486 = vpop.f32.mrb[0].mxu0
      %v3487 = vadd.f32 %v3422, %v3486
      %v3488 = vpop.f32.mrb[0].mxu0
      %3489 = vdwg.mxu0
      %v3490 = vsel %vm305, %v3460, 0.0
      %v3491 = vsel %vm305, %v3463, 0.0
      %v3492 = vadd.f32 %v3490, %v3491
      %v3493 = vsel %vm305, %v3468, 0.0
      %v3494 = vadd.f32 %v3492, %v3493
      %v3495 = vsel %vm305, %v3471, 0.0
      %v3496 = vadd.f32 %v3494, %v3495
      %v3497 = vsel %vm305, %v3476, 0.0
      %v3498 = vadd.f32 %v3496, %v3497
      %v3499 = vsel %vm305, %v3479, 0.0
      %v3500 = vadd.f32 %v3498, %v3499
      %v3501 = vsel %vm305, %v3484, 0.0
      %v3502 = vadd.f32 %v3500, %v3501
      %v3503 = vsel %vm305, %v3487, 0.0
      %v3504 = vadd.f32 %v3502, %v3503
      %v3505 = vrot.slane %v3504, 4
      %v3506 = vadd.f32 %v3504, %v3505
      %v3507 = vrot.slane %v3506, 2
      %v3508 = vadd.f32 %v3506, %v3507
      %v3509 = vrot.slane %v3508, 1
      %v3510 = vadd.f32 %v3508, %v3509
      %v3511 = vrcp.pop 64.0
      %v3512 = vmul.f32 %v3510, %v3511
      %v3513 = vsub.f32 %v3460, %v3512
      %v3514 = vsub.f32 %v3463, %v3512
      %v3515 = vsub.f32 %v3468, %v3512
      %v3516 = vsub.f32 %v3471, %v3512
      %v3517 = vsub.f32 %v3476, %v3512
      %v3518 = vsub.f32 %v3479, %v3512
      %v3519 = vsub.f32 %v3484, %v3512
      %v3520 = vsub.f32 %v3487, %v3512
      %v3521 = vmul.f32 %v3513, %v3513
      %v3522 = vmul.f32 %v3514, %v3514
      %v3523 = vmul.f32 %v3515, %v3515
      %v3524 = vmul.f32 %v3516, %v3516
      %v3525 = vmul.f32 %v3517, %v3517
      %v3526 = vmul.f32 %v3518, %v3518
      %v3527 = vmul.f32 %v3519, %v3519
      %v3528 = vmul.f32 %v3520, %v3520
      %v3529 = vsel %vm305, %v3521, 0.0
      %v3530 = vsel %vm305, %v3522, 0.0
      %v3531 = vadd.f32 %v3529, %v3530
      %v3532 = vsel %vm305, %v3523, 0.0
      %v3533 = vadd.f32 %v3531, %v3532
      %v3534 = vsel %vm305, %v3524, 0.0
      %v3535 = vadd.f32 %v3533, %v3534
      %v3536 = vsel %vm305, %v3525, 0.0
      %v3537 = vadd.f32 %v3535, %v3536
      %v3538 = vsel %vm305, %v3526, 0.0
      %v3539 = vadd.f32 %v3537, %v3538
      %v3540 = vsel %vm305, %v3527, 0.0
      %v3541 = vadd.f32 %v3539, %v3540
      %v3542 = vsel %vm305, %v3528, 0.0
      %v3543 = vadd.f32 %v3541, %v3542
      %v3544 = vrot.slane %v3543, 4
      %v3545 = vadd.f32 %v3543, %v3544
      %v3546 = vrot.slane %v3545, 2
      %v3547 = vadd.f32 %v3545, %v3546
      %v3548 = vrot.slane %v3547, 1
      %v3549 = vadd.f32 %v3547, %v3548
      %v3550 = vmul.f32 %v3549, %v3511
      %v3551 = vadd.f32 %v3550, 1e-05
      %v3552 = vrsqrt.pop %v3551
      %v3553 = vmul.f32 %v3513, %v3552
      %v3554 = vmul.f32 %v3514, %v3552
      %v3555 = vmul.f32 %v3515, %v3552
      %v3556 = vmul.f32 %v3516, %v3552
      %v3557 = vmul.f32 %v3517, %v3552
      %v3558 = vmul.f32 %v3518, %v3552
      %v3559 = vmul.f32 %v3519, %v3552
      %v3560 = vmul.f32 %v3520, %v3552
      %v3561 = vld [vmem:[%s3] sm:$0x1]
      %v3563 = vlaneseq
      %v3564 = vshrl.u32 %v3563, 7
      %v3565 = vsub.s32 0, %v3564
      %v3566 = vrot.slane %v3561, %v3565
      %v3568 = vmul.f32 %v3553, %v3566
      %v3569 = vmul.f32 %v3554, %v3566
      %v3570 = vmul.f32 %v3555, %v3566
      %v3571 = vmul.f32 %v3556, %v3566
      %v3572 = vmul.f32 %v3557, %v3566
      %v3573 = vmul.f32 %v3558, %v3566
      %v3574 = vmul.f32 %v3559, %v3566
      %v3575 = vmul.f32 %v3560, %v3566
      %v3576 = vld [vmem:[%s4] sm:$0x1]
      %v3578 = vlaneseq
      %v3579 = vshrl.u32 %v3578, 7
      %v3580 = vsub.s32 0, %v3579
      %v3581 = vrot.slane %v3576, %v3580
      %v3583 = vadd.f32 %v3568, %v3581
      %v3584 = vadd.f32 %v3569, %v3581
      %v3585 = vadd.f32 %v3570, %v3581
      %v3586 = vadd.f32 %v3571, %v3581
      %v3587 = vadd.f32 %v3572, %v3581
      %v3588 = vadd.f32 %v3573, %v3581
      %v3589 = vadd.f32 %v3574, %v3581
      %v3590 = vadd.f32 %v3575, %v3581
      %v3591 = vmul.f32 %v3583, 0.5
      %v3592 = vmul.f32 %v3584, 0.5
      %v3593 = vmul.f32 %v3585, 0.5
      %v3594 = vmul.f32 %v3586, 0.5
      %v3595 = vmul.f32 %v3587, 0.5
      %v3596 = vmul.f32 %v3588, 0.5
      %v3597 = vmul.f32 %v3589, 0.5
      %v3598 = vmul.f32 %v3590, 0.5
      %v3599 = vmul.f32 %v3583, 0.044715
      %v3600 = vmul.f32 %v3584, 0.044715
      %v3601 = vmul.f32 %v3585, 0.044715
      %v3602 = vmul.f32 %v3586, 0.044715
      %v3603 = vmul.f32 %v3587, 0.044715
      %v3604 = vmul.f32 %v3588, 0.044715
      %v3605 = vmul.f32 %v3589, 0.044715
      %v3606 = vmul.f32 %v3590, 0.044715
      %v3607 = vmul.f32 %v3599, %v3583
      %v3608 = vmul.f32 %v3600, %v3584
      %v3609 = vmul.f32 %v3601, %v3585
      %v3610 = vmul.f32 %v3602, %v3586
      %v3611 = vmul.f32 %v3603, %v3587
      %v3612 = vmul.f32 %v3604, %v3588
      %v3613 = vmul.f32 %v3605, %v3589
      %v3614 = vmul.f32 %v3606, %v3590
      %v3615 = vmul.f32 %v3607, %v3583
      %v3616 = vmul.f32 %v3608, %v3584
      %v3617 = vmul.f32 %v3609, %v3585
      %v3618 = vmul.f32 %v3610, %v3586
      %v3619 = vmul.f32 %v3611, %v3587
      %v3620 = vmul.f32 %v3612, %v3588
      %v3621 = vmul.f32 %v3613, %v3589
      %v3622 = vmul.f32 %v3614, %v3590
      %v3623 = vadd.f32 %v3583, %v3615
      %v3624 = vadd.f32 %v3584, %v3616
      %v3625 = vadd.f32 %v3585, %v3617
      %v3626 = vadd.f32 %v3586, %v3618
      %v3627 = vadd.f32 %v3587, %v3619
      %v3628 = vadd.f32 %v3588, %v3620
      %v3629 = vadd.f32 %v3589, %v3621
      %v3630 = vadd.f32 %v3590, %v3622
      %v3631 = vmul.f32 %v3623, 0.7978846
      %v3632 = vmul.f32 %v3624, 0.7978846
      %v3633 = vmul.f32 %v3625, 0.7978846
      %v3634 = vmul.f32 %v3626, 0.7978846
      %v3635 = vmul.f32 %v3627, 0.7978846
      %v3636 = vmul.f32 %v3628, 0.7978846
      %v3637 = vmul.f32 %v3629, 0.7978846
      %v3638 = vmul.f32 %v3630, 0.7978846
      %v3639 = vtanh.pop %v3631
      %v3640 = vtanh.pop %v3632
      %v3641 = vtanh.pop %v3633
      %v3642 = vtanh.pop %v3634
      %v3643 = vtanh.pop %v3635
      %v3644 = vtanh.pop %v3636
      %v3645 = vtanh.pop %v3637
      %v3646 = vtanh.pop %v3638
      %v3647 = vadd.f32 %v3639, 1.0
      %v3648 = vadd.f32 %v3640, 1.0
      %v3649 = vadd.f32 %v3641, 1.0
      %v3650 = vadd.f32 %v3642, 1.0
      %v3651 = vadd.f32 %v3643, 1.0
      %v3652 = vadd.f32 %v3644, 1.0
      %v3653 = vadd.f32 %v3645, 1.0
      %v3654 = vadd.f32 %v3646, 1.0
      %v3655 = vmul.f32 %v3591, %v3647
      %v3656 = vmul.f32 %v3592, %v3648
      %v3657 = vmul.f32 %v3593, %v3649
      %v3658 = vmul.f32 %v3594, %v3650
      %v3659 = vmul.f32 %v3595, %v3651
      %v3660 = vmul.f32 %v3596, %v3652
      %v3661 = vmul.f32 %v3597, %v3653
      %v3662 = vmul.f32 %v3598, %v3654
      %v3663 = vld [vmem:[%s266] sm:$0xf]
      %v3664 = vld [vmem:[%s266 + $0x4] sm:$0xf]
      %v3665 = vld [vmem:[%s266 + $0x8] sm:$0xf]
      %v3666 = vld [vmem:[%s266 + $0xc] sm:$0xf]
      %v3667 = vld [vmem:[%s266 + $0x10] sm:$0xf]
      %v3668 = vld [vmem:[%s266 + $0x14] sm:$0xf]
      %v3669 = vld [vmem:[%s266 + $0x18] sm:$0xf]
      %v3670 = vld [vmem:[%s266 + $0x1c] sm:$0xf]
      %v3671 = vunpack.c.l.bf16 %v3663
      %v3672 = vunpack.c.l.bf16 %v3664
      %v3673 = vunpack.c.l.bf16 %v3665
      %v3674 = vunpack.c.l.bf16 %v3666
      %v3675 = vunpack.c.l.bf16 %v3667
      %v3676 = vunpack.c.l.bf16 %v3668
      %v3677 = vunpack.c.l.bf16 %v3669
      %v3678 = vunpack.c.l.bf16 %v3670
      %v3679 = vadd.f32 %v3655, %v3671
      %v3680 = vadd.f32 %v3656, %v3672
      %v3681 = vadd.f32 %v3657, %v3673
      %v3682 = vadd.f32 %v3658, %v3674
      %v3683 = vadd.f32 %v3659, %v3675
      %v3684 = vadd.f32 %v3660, %v3676
      %v3685 = vadd.f32 %v3661, %v3677
      %v3686 = vadd.f32 %v3662, %v3678
      %v3687 = vmul.f32 %v3679, 0.5
      %v3688 = vmul.f32 %v3680, 0.5
      %v3689 = vmul.f32 %v3681, 0.5
      %v3690 = vmul.f32 %v3682, 0.5
      %v3691 = vmul.f32 %v3683, 0.5
      %v3692 = vmul.f32 %v3684, 0.5
      %v3693 = vmul.f32 %v3685, 0.5
      %v3694 = vmul.f32 %v3686, 0.5
      %v3695 = vmul.f32 %v3679, 0.044715
      %v3696 = vmul.f32 %v3680, 0.044715
      %v3697 = vmul.f32 %v3681, 0.044715
      %v3698 = vmul.f32 %v3682, 0.044715
      %v3699 = vmul.f32 %v3683, 0.044715
      %v3700 = vmul.f32 %v3684, 0.044715
      %v3701 = vmul.f32 %v3685, 0.044715
      %v3702 = vmul.f32 %v3686, 0.044715
      %v3703 = vmul.f32 %v3695, %v3679
      %v3704 = vmul.f32 %v3696, %v3680
      %v3705 = vmul.f32 %v3697, %v3681
      %v3706 = vmul.f32 %v3698, %v3682
      %v3707 = vmul.f32 %v3699, %v3683
      %v3708 = vmul.f32 %v3700, %v3684
      %v3709 = vmul.f32 %v3701, %v3685
      %v3710 = vmul.f32 %v3702, %v3686
      %v3711 = vmul.f32 %v3703, %v3679
      %v3712 = vmul.f32 %v3704, %v3680
      %v3713 = vmul.f32 %v3705, %v3681
      %v3714 = vmul.f32 %v3706, %v3682
      %v3715 = vmul.f32 %v3707, %v3683
      %v3716 = vmul.f32 %v3708, %v3684
      %v3717 = vmul.f32 %v3709, %v3685
      %v3718 = vmul.f32 %v3710, %v3686
      %v3719 = vadd.f32 %v3679, %v3711
      %v3720 = vadd.f32 %v3680, %v3712
      %v3721 = vadd.f32 %v3681, %v3713
      %v3722 = vadd.f32 %v3682, %v3714
      %v3723 = vadd.f32 %v3683, %v3715
      %v3724 = vadd.f32 %v3684, %v3716
      %v3725 = vadd.f32 %v3685, %v3717
      %v3726 = vadd.f32 %v3686, %v3718
      %v3727 = vmul.f32 %v3719, 0.7978846
      %v3728 = vmul.f32 %v3720, 0.7978846
      %v3729 = vmul.f32 %v3721, 0.7978846
      %v3730 = vmul.f32 %v3722, 0.7978846
      %v3731 = vmul.f32 %v3723, 0.7978846
      %v3732 = vmul.f32 %v3724, 0.7978846
      %v3733 = vmul.f32 %v3725, 0.7978846
      %v3734 = vmul.f32 %v3726, 0.7978846
      %v3735 = vtanh.pop %v3727
      %v3736 = vtanh.pop %v3728
      %v3737 = vtanh.pop %v3729
      %v3738 = vtanh.pop %v3730
      %v3739 = vtanh.pop %v3731
      %v3740 = vtanh.pop %v3732
      %v3741 = vtanh.pop %v3733
      %v3742 = vtanh.pop %v3734
      %v3743 = vadd.f32 %v3735, 1.0
      %v3744 = vadd.f32 %v3736, 1.0
      %v3745 = vadd.f32 %v3737, 1.0
      %v3746 = vadd.f32 %v3738, 1.0
      %v3747 = vadd.f32 %v3739, 1.0
      %v3748 = vadd.f32 %v3740, 1.0
      %v3749 = vadd.f32 %v3741, 1.0
      %v3750 = vadd.f32 %v3742, 1.0
      %v3751 = vmul.f32 %v3687, %v3743
      %v3752 = vmul.f32 %v3688, %v3744
      %v3753 = vmul.f32 %v3689, %v3745
      %v3754 = vmul.f32 %v3690, %v3746
      %v3755 = vmul.f32 %v3691, %v3747
      %v3756 = vmul.f32 %v3692, %v3748
      %v3757 = vmul.f32 %v3693, %v3749
      %v3758 = vmul.f32 %v3694, %v3750
      %v3759 = vpack.c.bf16 %v3752, %v3751
      %v3760 = vpack.c.bf16 %v3754, %v3753
      %v3761 = vpack.c.bf16 %v3756, %v3755
      %v3762 = vpack.c.bf16 %v3758, %v3757
      %v3767 = vunpack.c.l.b16 %v3759
      %v3768 = vunpack.c.h.b16 %v3759
      %v3769 = vunpack.c.l.b16 %v3760
      %v3770 = vunpack.c.h.b16 %v3760
      %v3771 = vunpack.c.l.b16 %v3761
      %v3772 = vunpack.c.h.b16 %v3761
      %v3773 = vunpack.c.l.b16 %v3762
      %v3774 = vunpack.c.h.b16 %v3762
      %v3775 = vpack.c.b16 %v3767, %v3767
      %v3776 = vpack.c.b16 %v3768, %v3768
      %v3777 = vpack.c.b16 %v3769, %v3769
      %v3778 = vpack.c.b16 %v3770, %v3770
      %v3779 = vpack.c.b16 %v3771, %v3771
      %v3780 = vpack.c.b16 %v3772, %v3772
      %v3781 = vpack.c.b16 %v3773, %v3773
      %v3782 = vpack.c.b16 %v3774, %v3774
      %vm3791 = vcmask 125952
      %3792 = vst.msk [vmem:[%s271] sm:$0xf] %vm3791, %v3775
      %3793 = vst.msk [vmem:[%s271 + $0x4] sm:$0xf] %vm3791, %v3776
      %3794 = vst.msk [vmem:[%s271 + $0x8] sm:$0xf] %vm3791, %v3777
      %3795 = vst.msk [vmem:[%s271 + $0xc] sm:$0xf] %vm3791, %v3778
      %3796 = vst.msk [vmem:[%s271 + $0x10] sm:$0xf] %vm3791, %v3779
      %3797 = vst.msk [vmem:[%s271 + $0x14] sm:$0xf] %vm3791, %v3780
      %3798 = vst.msk [vmem:[%s271 + $0x18] sm:$0xf] %vm3791, %v3781
      %3799 = vst.msk [vmem:[%s271 + $0x1c] sm:$0xf] %vm3791, %v3782
      %p3800 = scmp.lt.s32.totalorder %s17, 1
      %s3801 = scalar_select %p3800, %s17, 1
      %s3802 = smul.addr %s3801, 8
      %s3803 = smul.addr %s3802, 4
      %s3804 = scalar_lea.vmem %s6, %s3803
      // Predicated region
      $region45: #{segment_encoder_forward.7} parent=43 // pred_check
        %p3805 = pneg %p171
      $region46: #{segment_encoder_forward.7} parent=43 // pred_check_branch
        %3807 = sbr.rel (%p3805) target = $region48
      $region47: #{segment_encoder_forward.7} parent=43 // pred_region
        _
      $region48: #{segment_encoder_forward.7} parent=43 // pred_fallthru
        _
    $region44: #{segment_encoder_forward.7} parent=5 // pred_fallthru
      _
    %p3808 = scmp.le.s32.totalorder 2, %s12
    // Predicated region
    $region49: #{segment_encoder_forward.7} parent=5 // pred_check
      %p3809 = pneg %p3808
    $region50: #{segment_encoder_forward.7} parent=5 // pred_check_branch
      %3811 = sbr.rel (%p3809) target = $region52
    $region51: #{segment_encoder_forward.7} parent=5 // pred_region
      %s3812 = ssub.s32 %s12, 2
      // Predicated region
      $region53: #{segment_encoder_forward.7} parent=51 // pred_check
        %p3813 = pneg %p177
      $region54: #{segment_encoder_forward.7} parent=51 // pred_check_branch
        %3815 = sbr.rel (%p3813) target = $region56
      $region55: #{segment_encoder_forward.7} parent=51 // pred_region
        %p3816 = scmp.lt.s32.totalorder %s18, 1
        %s3817 = scalar_select %p3816, %s18, 1
        %s3818 = smul.addr %s3817, 8
        %s3819 = smul.addr %s3818, 4
        %s3820 = scalar_lea.vmem %s6, %s3819
      $region56: #{segment_encoder_forward.7} parent=51 // pred_fallthru
        _
    $region52: #{segment_encoder_forward.7} parent=5 // pred_fallthru
      _
  $region6: #{segment_encoder_forward.7} parent=0 // loop_footer
    %s16 = sadd.s32 1, %s12
  $region7: #{segment_encoder_forward.7} parent=0 // loop_footer_branch
    %11 = sbr.rel target = $region3
  $region8: #{segment_encoder_forward.7} parent=0 // loop_exit
    _

</llo_original>
